<compile_context>
chip_gen: v7x
topology: tpu7x:2x2x1
jax: 0.10.0
libtpu: 0.0.40
codegen_flags: <defaults>
</compile_context>

<pallas_src>
import jax
import jax.numpy as jnp
from jax.experimental import pallas as pl
from jax.experimental.pallas import tpu as pltpu

HEADS = 8
NEG_SLOPE = 0.2          # GATv2Conv default negative_slope
MASK_BIG = 1e30          # additive softmax mask magnitude


# ----------------------- fused GATv2 layer (all heads) -----------------------
def _gatv2_heads_fused(x, adj_add, w_cat, b_cat, att_a, att_b, *, heads):
    """All-heads GATv2 layer on in-VMEM values.

    x:       [N, F]   f32 activations
    adj_add: [N, N]   f32 additive mask (0 on edges, -1e30 elsewhere)
    w_cat:   [F, 2*H*C] bf16, lane-stacked [W_l heads | W_r heads]
    b_cat:   [1, 2*H*C] f32
    att_a:   [H, C]   f32, att * (1+slope)/2   (rank-1 part)
    att_b:   [H, C]   f32, att * (1-slope)/2   (pairwise |z| part)
    Returns the mean-over-heads aggregation, [N, C] f32 (bias/relu by caller).
    """
    n = x.shape[0]
    hc = w_cat.shape[1] // 2
    c = hc // heads

    # One lane-dense bf16 MXU matmul computes lin_l and lin_r for every head.
    xlr = jnp.dot(x.astype(jnp.bfloat16), w_cat,
                  preferred_element_type=jnp.float32) + b_cat        # [N, 2HC]
    xl_all = xlr[:, :hc]                                             # [N, H*C]
    xr_all = xlr[:, hc:]                                             # [N, H*C]
    # One transpose per layer: source-node (j) axis onto lanes for the
    # lane-dense pairwise passes below.
    xl_all_t = xl_all.T                                              # [H*C, N]

    acc = jnp.zeros((n, c), jnp.float32)
    for h in range(heads):
        xl_h = xl_all[:, h * c:(h + 1) * c]                          # [N, C]
        xr_h = xr_all[:, h * c:(h + 1) * c]                          # [N, C]
        xl_t_h = xl_all_t[h * c:(h + 1) * c, :]                      # [C, N]
        att_a_row = att_a[h:h + 1, :]                                # [1, C]

        # rank-1 (a*z) part of the LeakyReLU-decomposed logits:
        # LeakyReLU(z) = a*z + b*|z|, a = (1+s)/2, b = (1-s)/2 (folded on host).
        r_col = jnp.sum(xr_h * att_a_row, axis=-1, keepdims=True)    # [N, 1]
        l_row = jnp.dot(att_a_row, xl_t_h,
                        preferred_element_type=jnp.float32)          # [1, N]

        # additive adjacency mask + rank-1 part initialize the [N, N] slab
        logits = adj_add + r_col + l_row                             # [N, N]
        # pairwise |z| part: C lane-dense elementwise passes over [N, N]
        for cc in range(c):
            logits = logits + att_b[h:h + 1, cc:cc + 1] * jnp.abs(
                xr_h[:, cc:cc + 1] + xl_t_h[cc:cc + 1, :])

        # softmax over source nodes j (per target i); the additive -1e30 mask
        # already zeroes non-edges through exp underflow (single guard).
        m = jnp.max(logits, axis=-1, keepdims=True)
        p = jnp.exp(logits - m)
        denom = jnp.sum(p, axis=-1, keepdims=True)
        alpha = p * pl.reciprocal(denom, approx=True)                # [N, N]

        # per-head aggregation accumulated in f32 (no alpha concat -> lower
        # peak VMEM); bf16 MXU operands, f32 accumulation.
        acc = acc + jnp.dot(alpha.astype(jnp.bfloat16),
                            xl_h.astype(jnp.bfloat16),
                            preferred_element_type=jnp.float32)

    return acc * (1.0 / heads)                                       # head mean


# ------------------------ whole-model fused kernel ---------------------------
def _gat_fused_kernel(
    x_ref, adj_ref,
    w1_ref, b1_ref, a1a_ref, a1b_ref, bias1_ref,
    w2_ref, b2_ref, a2a_ref, a2b_ref, bias2_ref,
    linw_ref, linb_ref,
    out_ref,
):
    x = x_ref[...]
    # adj streamed as bf16 (0/1 exact); expand the additive mask ONCE and
    # reuse it across both layers and all 16 head-softmaxes.
    adj_add = (adj_ref[...].astype(jnp.float32) - 1.0) * MASK_BIG    # 0 / -1e30

    # Residual branch (lin1), bf16 MXU with f32 accumulation.
    residual = (
        jnp.dot(x.astype(jnp.bfloat16), linw_ref[...],
                preferred_element_type=jnp.float32)
        + linb_ref[...]
    )

    # conv1 (+ bias + relu)
    h1 = _gatv2_heads_fused(
        x, adj_add, w1_ref[...], b1_ref[...], a1a_ref[...], a1b_ref[...],
        heads=HEADS,
    )
    h1 = jnp.maximum(h1 + bias1_ref[...], 0.0)
    # TODO(synk): Dropout(p=0.25) is identity (eval mode); training-mode mask
    # would use pltpu.prng_seed / pltpu.prng_random_bits.

    # conv2 (+ bias) + residual, single store of the output.
    h2 = _gatv2_heads_fused(
        h1, adj_add, w2_ref[...], b2_ref[...], a2a_ref[...], a2b_ref[...],
        heads=HEADS,
    )
    out_ref[...] = h2 + bias2_ref[...] + residual


def _pack_heads(wl, bl, wr, br, att):
    """Per-head [H,F,C] params -> lane-stacked bf16 [F, 2*H*C], f32 [1, 2*H*C],
    and two pre-scaled att tensors [H, C] (LeakyReLU coefficients folded in)."""
    h, f, c = wl.shape
    w_cat = jnp.concatenate(
        [jnp.transpose(wl, (1, 0, 2)).reshape(f, h * c),
         jnp.transpose(wr, (1, 0, 2)).reshape(f, h * c)],
        axis=1,
    ).astype(jnp.bfloat16)
    b_cat = jnp.concatenate(
        [bl.reshape(1, h * c), br.reshape(1, h * c)], axis=1
    ).astype(jnp.float32)
    a_coef = 0.5 * (1.0 + NEG_SLOPE)
    b_coef = 0.5 * (1.0 - NEG_SLOPE)
    att2 = att.reshape(h, c).astype(jnp.float32)
    return w_cat, b_cat, a_coef * att2, b_coef * att2


@jax.jit
def gat_forward(x, adj, params):
    n = x.shape[0]
    num_classes = params["lin1_w"].shape[1]
    w1, b1, a1a, a1b = _pack_heads(params["c1_wl"], params["c1_bl"],
                                   params["c1_wr"], params["c1_br"],
                                   params["c1_att"])
    w2, b2, a2a, a2b = _pack_heads(params["c2_wl"], params["c2_bl"],
                                   params["c2_wr"], params["c2_br"],
                                   params["c2_att"])
    return pl.pallas_call(
        _gat_fused_kernel,
        out_shape=jax.ShapeDtypeStruct((n, num_classes), jnp.float32),
        # No grid at this size (single fused invocation, everything VMEM
        # resident). 32 MiB scoped VMEM is safe on v5e/v6e/v7x.
        compiler_params=pltpu.CompilerParams(vmem_limit_bytes=32 * 1024 * 1024),
    )(
        x,
        adj.astype(jnp.bfloat16),            # 0/1 mask exact in bf16
        w1, b1, a1a, a1b, params["c1_bias"],
        w2, b2, a2a, a2b, params["c2_bias"],
        params["lin1_w"].astype(jnp.bfloat16),
        params["lin1_b"].reshape(1, num_classes),
    )


# ------------------------- pure-JAX reference (check) ------------------------
def _gatv2_ref(x, adj, wl, bl, wr, br, att):
    outs = []
    for h in range(wl.shape[0]):
        xl = x @ wl[h] + bl[h]
        xr = x @ wr[h] + br[h]
        s = xr[:, None, :] + xl[None, :, :]
        s = jnp.where(s >= 0, s, NEG_SLOPE * s)
        logits = jnp.sum(s * att[h, 0], axis=-1)
        logits = jnp.where(adj > 0, logits, -jnp.inf)
        alpha = jax.nn.softmax(logits, axis=-1)
        outs.append(alpha @ xl)
    return sum(outs) / wl.shape[0]


def gat_forward_ref(x, adj, params):
    residual = x @ params["lin1_w"] + params["lin1_b"]
    out = _gatv2_ref(x, adj, params["c1_wl"], params["c1_bl"],
                     params["c1_wr"], params["c1_br"], params["c1_att"])
    out = jax.nn.relu(out + params["c1_bias"])
    out = _gatv2_ref(out, adj, params["c2_wl"], params["c2_bl"],
                     params["c2_wr"], params["c2_br"], params["c2_att"])
    return out + params["c2_bias"] + residual


# ----------------------------------- main ------------------------------------
if __name__ == "__main__":
    key = jax.random.PRNGKey(0)
    N = 16
    num_features = 8
    hidden_channels = 8
    num_classes = 4

    keys = jax.random.split(key, 20)

    def init(k, shape, scale=0.1):
        return (scale * jax.random.normal(k, shape)).astype(jnp.float32)

    # node features
    x = init(keys[0], (N, num_features), scale=1.0)

    # deterministic edge list (two rings), no duplicates, no self loops
    src = jnp.concatenate([jnp.arange(N), jnp.arange(N)])
    dst = jnp.concatenate([(jnp.arange(N) + 1) % N, (jnp.arange(N) + 3) % N])
    edge_index = jnp.stack([src, dst]).astype(jnp.int32)  # [2, E], E = 32

    # dense adjacency mask with self loops (GATv2Conv default add_self_loops)
    adj = jnp.zeros((N, N), jnp.float32)
    adj = adj.at[edge_index[1], edge_index[0]].set(1.0)   # adj[target, source]
    adj = adj.at[jnp.arange(N), jnp.arange(N)].set(1.0)

    params = {
        # conv1: in=num_features, out=hidden_channels, heads=8
        "c1_wl": init(keys[1], (HEADS, num_features, hidden_channels)),
        "c1_bl": init(keys[2], (HEADS, 1, hidden_channels)),
        "c1_wr": init(keys[3], (HEADS, num_features, hidden_channels)),
        "c1_br": init(keys[4], (HEADS, 1, hidden_channels)),
        "c1_att": init(keys[5], (HEADS, 1, hidden_channels)),
        "c1_bias": init(keys[6], (1, hidden_channels)),
        # conv2: in=hidden_channels, out=num_classes, heads=8
        "c2_wl": init(keys[7], (HEADS, hidden_channels, num_classes)),
        "c2_bl": init(keys[8], (HEADS, 1, num_classes)),
        "c2_wr": init(keys[9], (HEADS, hidden_channels, num_classes)),
        "c2_br": init(keys[10], (HEADS, 1, num_classes)),
        "c2_att": init(keys[11], (HEADS, 1, num_classes)),
        "c2_bias": init(keys[12], (1, num_classes)),
        # lin1: num_features -> num_classes
        "lin1_w": init(keys[13], (num_features, num_classes)),
        "lin1_b": init(keys[14], (num_classes,)),
    }

    out = gat_forward(x, adj, params)
    jax.block_until_ready(out)
    assert out.shape == (N, num_classes)

    ref = gat_forward_ref(x, adj, params)
    err = float(jnp.max(jnp.abs(out - ref)))
    assert err < 1e-2, f"max abs error vs reference: {err}"

    print("KERNEL_OK")
</pallas_src>

<mosaic_0001>
module attributes {stable_mosaic.version = 11 : i64} {
  func.func @_gat_fused_kernel(%arg0: memref<16x8xf32, #tpu.memory_space<vmem>>, %arg1: memref<16x16xbf16, #tpu.memory_space<vmem>>, %arg2: memref<8x128xbf16, #tpu.memory_space<vmem>>, %arg3: memref<1x128xf32, #tpu.memory_space<vmem>>, %arg4: memref<8x8xf32, #tpu.memory_space<vmem>>, %arg5: memref<8x8xf32, #tpu.memory_space<vmem>>, %arg6: memref<1x8xf32, #tpu.memory_space<vmem>>, %arg7: memref<8x64xbf16, #tpu.memory_space<vmem>>, %arg8: memref<1x64xf32, #tpu.memory_space<vmem>>, %arg9: memref<8x4xf32, #tpu.memory_space<vmem>>, %arg10: memref<8x4xf32, #tpu.memory_space<vmem>>, %arg11: memref<1x4xf32, #tpu.memory_space<vmem>>, %arg12: memref<8x4xbf16, #tpu.memory_space<vmem>>, %arg13: memref<1x4xf32, #tpu.memory_space<vmem>>, %arg14: memref<16x4xf32, #tpu.memory_space<vmem>>) attributes {dimension_semantics = [], scalar_prefetch = 0 : i64, scratch_operands = 0 : i64, tpu.core_type = #tpu.core_type<tc>} {
    %c0 = arith.constant 0 : index
    %c0_0 = arith.constant 0 : index
    %0 = vector.load %arg0[%c0, %c0_0] : memref<16x8xf32, #tpu.memory_space<vmem>>, vector<16x8xf32>
    %c0_1 = arith.constant 0 : index
    %c0_2 = arith.constant 0 : index
    %1 = vector.load %arg1[%c0_1, %c0_2] : memref<16x16xbf16, #tpu.memory_space<vmem>>, vector<16x16xbf16>
    %2 = arith.extf %1 : vector<16x16xbf16> to vector<16x16xf32>
    %cst = arith.constant 1.000000e+00 : f32
    %3 = vector.broadcast %cst : f32 to vector<16x16xf32>
    %4 = arith.subf %2, %3 : vector<16x16xf32>
    %cst_3 = arith.constant 1.000000e+30 : f32
    %5 = vector.broadcast %cst_3 : f32 to vector<16x16xf32>
    %6 = arith.mulf %4, %5 : vector<16x16xf32>
    %7 = arith.truncf %0 : vector<16x8xf32> to vector<16x8xbf16>
    %c0_4 = arith.constant 0 : index
    %c0_5 = arith.constant 0 : index
    %8 = vector.load %arg12[%c0_4, %c0_5] : memref<8x4xbf16, #tpu.memory_space<vmem>>, vector<8x4xbf16>
    %cst_6 = arith.constant dense<0.000000e+00> : vector<16x4xf32>
    %9 = tpu.matmul %7, %8, %cst_6 {dimension_numbers = #tpu.dot_dimension_numbers<[1], [0], [0], [1], [0, 0, 1, 1], [], []>} : vector<16x8xbf16>, vector<8x4xbf16>, vector<16x4xf32> -> vector<16x4xf32>
    %c0_7 = arith.constant 0 : index
    %c0_8 = arith.constant 0 : index
    %10 = vector.load %arg13[%c0_7, %c0_8] : memref<1x4xf32, #tpu.memory_space<vmem>>, vector<1x4xf32>
    %11 = vector.broadcast %10 : vector<1x4xf32> to vector<16x4xf32>
    %12 = arith.addf %9, %11 : vector<16x4xf32>
    %c0_9 = arith.constant 0 : index
    %c0_10 = arith.constant 0 : index
    %13 = vector.load %arg2[%c0_9, %c0_10] : memref<8x128xbf16, #tpu.memory_space<vmem>>, vector<8x128xbf16>
    %c0_11 = arith.constant 0 : index
    %c0_12 = arith.constant 0 : index
    %14 = vector.load %arg3[%c0_11, %c0_12] : memref<1x128xf32, #tpu.memory_space<vmem>>, vector<1x128xf32>
    %c0_13 = arith.constant 0 : index
    %c0_14 = arith.constant 0 : index
    %15 = vector.load %arg4[%c0_13, %c0_14] : memref<8x8xf32, #tpu.memory_space<vmem>>, vector<8x8xf32>
    %c0_15 = arith.constant 0 : index
    %c0_16 = arith.constant 0 : index
    %16 = vector.load %arg5[%c0_15, %c0_16] : memref<8x8xf32, #tpu.memory_space<vmem>>, vector<8x8xf32>
    %17 = arith.truncf %0 : vector<16x8xf32> to vector<16x8xbf16>
    %cst_17 = arith.constant dense<0.000000e+00> : vector<16x128xf32>
    %18 = tpu.matmul %17, %13, %cst_17 {dimension_numbers = #tpu.dot_dimension_numbers<[1], [0], [0], [1], [0, 0, 1, 1], [], []>} : vector<16x8xbf16>, vector<8x128xbf16>, vector<16x128xf32> -> vector<16x128xf32>
    %19 = vector.broadcast %14 : vector<1x128xf32> to vector<16x128xf32>
    %20 = arith.addf %18, %19 : vector<16x128xf32>
    %21 = vector.extract_strided_slice %20 {offsets = [0, 0], sizes = [16, 64], strides = [1, 1]} : vector<16x128xf32> to vector<16x64xf32>
    %22 = vector.extract_strided_slice %20 {offsets = [0, 64], sizes = [16, 64], strides = [1, 1]} : vector<16x128xf32> to vector<16x64xf32>
    %23 = tpu.transpose %21, [1, 0] : vector<16x64xf32> -> vector<64x16xf32>
    %cst_18 = arith.constant 0.000000e+00 : f32
    %24 = vector.broadcast %cst_18 : f32 to vector<16x8xf32>
    %25 = vector.extract_strided_slice %21 {offsets = [0, 0], sizes = [16, 8], strides = [1, 1]} : vector<16x64xf32> to vector<16x8xf32>
    %26 = vector.extract_strided_slice %22 {offsets = [0, 0], sizes = [16, 8], strides = [1, 1]} : vector<16x64xf32> to vector<16x8xf32>
    %27 = vector.extract_strided_slice %23 {offsets = [0, 0], sizes = [8, 16], strides = [1, 1]} : vector<64x16xf32> to vector<8x16xf32>
    %28 = vector.extract_strided_slice %15 {offsets = [0, 0], sizes = [1, 8], strides = [1, 1]} : vector<8x8xf32> to vector<1x8xf32>
    %29 = vector.broadcast %28 : vector<1x8xf32> to vector<16x8xf32>
    %30 = arith.mulf %26, %29 : vector<16x8xf32>
    %cst_19 = arith.constant dense<0.000000e+00> : vector<16xf32>
    %31 = vector.multi_reduction <add>, %30, %cst_19 [1] : vector<16x8xf32> to vector<16xf32>
    %32 = vector.shape_cast %31 : vector<16xf32> to vector<16x1xf32>
    %cst_20 = arith.constant dense<0.000000e+00> : vector<1x16xf32>
    %33 = tpu.matmul %28, %27, %cst_20 {dimension_numbers = #tpu.dot_dimension_numbers<[1], [0], [0], [1], [0, 0, 1, 1], [], []>} : vector<1x8xf32>, vector<8x16xf32>, vector<1x16xf32> -> vector<1x16xf32>
    %34 = vector.broadcast %32 : vector<16x1xf32> to vector<16x16xf32>
    %35 = arith.addf %6, %34 : vector<16x16xf32>
    %36 = vector.broadcast %33 : vector<1x16xf32> to vector<16x16xf32>
    %37 = arith.addf %35, %36 : vector<16x16xf32>
    %38 = vector.extract_strided_slice %16 {offsets = [0, 0], sizes = [1, 1], strides = [1, 1]} : vector<8x8xf32> to vector<1x1xf32>
    %39 = vector.extract_strided_slice %26 {offsets = [0, 0], sizes = [16, 1], strides = [1, 1]} : vector<16x8xf32> to vector<16x1xf32>
    %40 = vector.extract_strided_slice %27 {offsets = [0, 0], sizes = [1, 16], strides = [1, 1]} : vector<8x16xf32> to vector<1x16xf32>
    %41 = vector.broadcast %39 : vector<16x1xf32> to vector<16x16xf32>
    %42 = vector.broadcast %40 : vector<1x16xf32> to vector<16x16xf32>
    %43 = arith.addf %41, %42 : vector<16x16xf32>
    %44 = math.absf %43 : vector<16x16xf32>
    %45 = vector.broadcast %38 : vector<1x1xf32> to vector<16x16xf32>
    %46 = arith.mulf %45, %44 : vector<16x16xf32>
    %47 = arith.addf %37, %46 : vector<16x16xf32>
    %48 = vector.extract_strided_slice %16 {offsets = [0, 1], sizes = [1, 1], strides = [1, 1]} : vector<8x8xf32> to vector<1x1xf32>
    %49 = vector.extract_strided_slice %26 {offsets = [0, 1], sizes = [16, 1], strides = [1, 1]} : vector<16x8xf32> to vector<16x1xf32>
    %50 = vector.extract_strided_slice %27 {offsets = [1, 0], sizes = [1, 16], strides = [1, 1]} : vector<8x16xf32> to vector<1x16xf32>
    %51 = vector.broadcast %49 : vector<16x1xf32> to vector<16x16xf32>
    %52 = vector.broadcast %50 : vector<1x16xf32> to vector<16x16xf32>
    %53 = arith.addf %51, %52 : vector<16x16xf32>
    %54 = math.absf %53 : vector<16x16xf32>
    %55 = vector.broadcast %48 : vector<1x1xf32> to vector<16x16xf32>
    %56 = arith.mulf %55, %54 : vector<16x16xf32>
    %57 = arith.addf %47, %56 : vector<16x16xf32>
    %58 = vector.extract_strided_slice %16 {offsets = [0, 2], sizes = [1, 1], strides = [1, 1]} : vector<8x8xf32> to vector<1x1xf32>
    %59 = vector.extract_strided_slice %26 {offsets = [0, 2], sizes = [16, 1], strides = [1, 1]} : vector<16x8xf32> to vector<16x1xf32>
    %60 = vector.extract_strided_slice %27 {offsets = [2, 0], sizes = [1, 16], strides = [1, 1]} : vector<8x16xf32> to vector<1x16xf32>
    %61 = vector.broadcast %59 : vector<16x1xf32> to vector<16x16xf32>
    %62 = vector.broadcast %60 : vector<1x16xf32> to vector<16x16xf32>
    %63 = arith.addf %61, %62 : vector<16x16xf32>
    %64 = math.absf %63 : vector<16x16xf32>
    %65 = vector.broadcast %58 : vector<1x1xf32> to vector<16x16xf32>
    %66 = arith.mulf %65, %64 : vector<16x16xf32>
    %67 = arith.addf %57, %66 : vector<16x16xf32>
    %68 = vector.extract_strided_slice %16 {offsets = [0, 3], sizes = [1, 1], strides = [1, 1]} : vector<8x8xf32> to vector<1x1xf32>
    %69 = vector.extract_strided_slice %26 {offsets = [0, 3], sizes = [16, 1], strides = [1, 1]} : vector<16x8xf32> to vector<16x1xf32>
    %70 = vector.extract_strided_slice %27 {offsets = [3, 0], sizes = [1, 16], strides = [1, 1]} : vector<8x16xf32> to vector<1x16xf32>
    %71 = vector.broadcast %69 : vector<16x1xf32> to vector<16x16xf32>
    %72 = vector.broadcast %70 : vector<1x16xf32> to vector<16x16xf32>
    %73 = arith.addf %71, %72 : vector<16x16xf32>
    %74 = math.absf %73 : vector<16x16xf32>
    %75 = vector.broadcast %68 : vector<1x1xf32> to vector<16x16xf32>
    %76 = arith.mulf %75, %74 : vector<16x16xf32>
    %77 = arith.addf %67, %76 : vector<16x16xf32>
    %78 = vector.extract_strided_slice %16 {offsets = [0, 4], sizes = [1, 1], strides = [1, 1]} : vector<8x8xf32> to vector<1x1xf32>
    %79 = vector.extract_strided_slice %26 {offsets = [0, 4], sizes = [16, 1], strides = [1, 1]} : vector<16x8xf32> to vector<16x1xf32>
    %80 = vector.extract_strided_slice %27 {offsets = [4, 0], sizes = [1, 16], strides = [1, 1]} : vector<8x16xf32> to vector<1x16xf32>
    %81 = vector.broadcast %79 : vector<16x1xf32> to vector<16x16xf32>
    %82 = vector.broadcast %80 : vector<1x16xf32> to vector<16x16xf32>
    %83 = arith.addf %81, %82 : vector<16x16xf32>
    %84 = math.absf %83 : vector<16x16xf32>
    %85 = vector.broadcast %78 : vector<1x1xf32> to vector<16x16xf32>
    %86 = arith.mulf %85, %84 : vector<16x16xf32>
    %87 = arith.addf %77, %86 : vector<16x16xf32>
    %88 = vector.extract_strided_slice %16 {offsets = [0, 5], sizes = [1, 1], strides = [1, 1]} : vector<8x8xf32> to vector<1x1xf32>
    %89 = vector.extract_strided_slice %26 {offsets = [0, 5], sizes = [16, 1], strides = [1, 1]} : vector<16x8xf32> to vector<16x1xf32>
    %90 = vector.extract_strided_slice %27 {offsets = [5, 0], sizes = [1, 16], strides = [1, 1]} : vector<8x16xf32> to vector<1x16xf32>
    %91 = vector.broadcast %89 : vector<16x1xf32> to vector<16x16xf32>
    %92 = vector.broadcast %90 : vector<1x16xf32> to vector<16x16xf32>
    %93 = arith.addf %91, %92 : vector<16x16xf32>
    %94 = math.absf %93 : vector<16x16xf32>
    %95 = vector.broadcast %88 : vector<1x1xf32> to vector<16x16xf32>
    %96 = arith.mulf %95, %94 : vector<16x16xf32>
    %97 = arith.addf %87, %96 : vector<16x16xf32>
    %98 = vector.extract_strided_slice %16 {offsets = [0, 6], sizes = [1, 1], strides = [1, 1]} : vector<8x8xf32> to vector<1x1xf32>
    %99 = vector.extract_strided_slice %26 {offsets = [0, 6], sizes = [16, 1], strides = [1, 1]} : vector<16x8xf32> to vector<16x1xf32>
    %100 = vector.extract_strided_slice %27 {offsets = [6, 0], sizes = [1, 16], strides = [1, 1]} : vector<8x16xf32> to vector<1x16xf32>
    %101 = vector.broadcast %99 : vector<16x1xf32> to vector<16x16xf32>
    %102 = vector.broadcast %100 : vector<1x16xf32> to vector<16x16xf32>
    %103 = arith.addf %101, %102 : vector<16x16xf32>
    %104 = math.absf %103 : vector<16x16xf32>
    %105 = vector.broadcast %98 : vector<1x1xf32> to vector<16x16xf32>
    %106 = arith.mulf %105, %104 : vector<16x16xf32>
    %107 = arith.addf %97, %106 : vector<16x16xf32>
    %108 = vector.extract_strided_slice %16 {offsets = [0, 7], sizes = [1, 1], strides = [1, 1]} : vector<8x8xf32> to vector<1x1xf32>
    %109 = vector.extract_strided_slice %26 {offsets = [0, 7], sizes = [16, 1], strides = [1, 1]} : vector<16x8xf32> to vector<16x1xf32>
    %110 = vector.extract_strided_slice %27 {offsets = [7, 0], sizes = [1, 16], strides = [1, 1]} : vector<8x16xf32> to vector<1x16xf32>
    %111 = vector.broadcast %109 : vector<16x1xf32> to vector<16x16xf32>
    %112 = vector.broadcast %110 : vector<1x16xf32> to vector<16x16xf32>
    %113 = arith.addf %111, %112 : vector<16x16xf32>
    %114 = math.absf %113 : vector<16x16xf32>
    %115 = vector.broadcast %108 : vector<1x1xf32> to vector<16x16xf32>
    %116 = arith.mulf %115, %114 : vector<16x16xf32>
    %117 = arith.addf %107, %116 : vector<16x16xf32>
    %cst_21 = arith.constant dense<0xFF800000> : vector<16xf32>
    %118 = vector.multi_reduction <maximumf>, %117, %cst_21 [1] : vector<16x16xf32> to vector<16xf32>
    %119 = vector.shape_cast %118 : vector<16xf32> to vector<16x1xf32>
    %120 = vector.broadcast %119 : vector<16x1xf32> to vector<16x16xf32>
    %121 = arith.subf %117, %120 : vector<16x16xf32>
    %122 = math.exp %121 : vector<16x16xf32>
    %cst_22 = arith.constant dense<0.000000e+00> : vector<16xf32>
    %123 = vector.multi_reduction <add>, %122, %cst_22 [1] : vector<16x16xf32> to vector<16xf32>
    %124 = vector.shape_cast %123 : vector<16xf32> to vector<16x1xf32>
    %125 = tpu.reciprocal %124 {approx = true} : vector<16x1xf32> -> vector<16x1xf32>
    %126 = vector.broadcast %125 : vector<16x1xf32> to vector<16x16xf32>
    %127 = arith.mulf %122, %126 : vector<16x16xf32>
    %128 = arith.truncf %127 : vector<16x16xf32> to vector<16x16xbf16>
    %129 = arith.truncf %25 : vector<16x8xf32> to vector<16x8xbf16>
    %cst_23 = arith.constant dense<0.000000e+00> : vector<16x8xf32>
    %130 = tpu.matmul %128, %129, %cst_23 {dimension_numbers = #tpu.dot_dimension_numbers<[1], [0], [0], [1], [0, 0, 1, 1], [], []>} : vector<16x16xbf16>, vector<16x8xbf16>, vector<16x8xf32> -> vector<16x8xf32>
    %131 = arith.addf %24, %130 : vector<16x8xf32>
    %132 = vector.extract_strided_slice %21 {offsets = [0, 8], sizes = [16, 8], strides = [1, 1]} : vector<16x64xf32> to vector<16x8xf32>
    %133 = vector.extract_strided_slice %22 {offsets = [0, 8], sizes = [16, 8], strides = [1, 1]} : vector<16x64xf32> to vector<16x8xf32>
    %134 = vector.extract_strided_slice %23 {offsets = [8, 0], sizes = [8, 16], strides = [1, 1]} : vector<64x16xf32> to vector<8x16xf32>
    %135 = vector.extract_strided_slice %15 {offsets = [1, 0], sizes = [1, 8], strides = [1, 1]} : vector<8x8xf32> to vector<1x8xf32>
    %136 = vector.broadcast %135 : vector<1x8xf32> to vector<16x8xf32>
    %137 = arith.mulf %133, %136 : vector<16x8xf32>
    %cst_24 = arith.constant dense<0.000000e+00> : vector<16xf32>
    %138 = vector.multi_reduction <add>, %137, %cst_24 [1] : vector<16x8xf32> to vector<16xf32>
    %139 = vector.shape_cast %138 : vector<16xf32> to vector<16x1xf32>
    %cst_25 = arith.constant dense<0.000000e+00> : vector<1x16xf32>
    %140 = tpu.matmul %135, %134, %cst_25 {dimension_numbers = #tpu.dot_dimension_numbers<[1], [0], [0], [1], [0, 0, 1, 1], [], []>} : vector<1x8xf32>, vector<8x16xf32>, vector<1x16xf32> -> vector<1x16xf32>
    %141 = vector.broadcast %139 : vector<16x1xf32> to vector<16x16xf32>
    %142 = arith.addf %6, %141 : vector<16x16xf32>
    %143 = vector.broadcast %140 : vector<1x16xf32> to vector<16x16xf32>
    %144 = arith.addf %142, %143 : vector<16x16xf32>
    %145 = vector.extract_strided_slice %16 {offsets = [1, 0], sizes = [1, 1], strides = [1, 1]} : vector<8x8xf32> to vector<1x1xf32>
    %146 = vector.extract_strided_slice %133 {offsets = [0, 0], sizes = [16, 1], strides = [1, 1]} : vector<16x8xf32> to vector<16x1xf32>
    %147 = vector.extract_strided_slice %134 {offsets = [0, 0], sizes = [1, 16], strides = [1, 1]} : vector<8x16xf32> to vector<1x16xf32>
    %148 = vector.broadcast %146 : vector<16x1xf32> to vector<16x16xf32>
    %149 = vector.broadcast %147 : vector<1x16xf32> to vector<16x16xf32>
    %150 = arith.addf %148, %149 : vector<16x16xf32>
    %151 = math.absf %150 : vector<16x16xf32>
    %152 = vector.broadcast %145 : vector<1x1xf32> to vector<16x16xf32>
    %153 = arith.mulf %152, %151 : vector<16x16xf32>
    %154 = arith.addf %144, %153 : vector<16x16xf32>
    %155 = vector.extract_strided_slice %16 {offsets = [1, 1], sizes = [1, 1], strides = [1, 1]} : vector<8x8xf32> to vector<1x1xf32>
    %156 = vector.extract_strided_slice %133 {offsets = [0, 1], sizes = [16, 1], strides = [1, 1]} : vector<16x8xf32> to vector<16x1xf32>
    %157 = vector.extract_strided_slice %134 {offsets = [1, 0], sizes = [1, 16], strides = [1, 1]} : vector<8x16xf32> to vector<1x16xf32>
    %158 = vector.broadcast %156 : vector<16x1xf32> to vector<16x16xf32>
    %159 = vector.broadcast %157 : vector<1x16xf32> to vector<16x16xf32>
    %160 = arith.addf %158, %159 : vector<16x16xf32>
    %161 = math.absf %160 : vector<16x16xf32>
    %162 = vector.broadcast %155 : vector<1x1xf32> to vector<16x16xf32>
    %163 = arith.mulf %162, %161 : vector<16x16xf32>
    %164 = arith.addf %154, %163 : vector<16x16xf32>
    %165 = vector.extract_strided_slice %16 {offsets = [1, 2], sizes = [1, 1], strides = [1, 1]} : vector<8x8xf32> to vector<1x1xf32>
    %166 = vector.extract_strided_slice %133 {offsets = [0, 2], sizes = [16, 1], strides = [1, 1]} : vector<16x8xf32> to vector<16x1xf32>
    %167 = vector.extract_strided_slice %134 {offsets = [2, 0], sizes = [1, 16], strides = [1, 1]} : vector<8x16xf32> to vector<1x16xf32>
    %168 = vector.broadcast %166 : vector<16x1xf32> to vector<16x16xf32>
    %169 = vector.broadcast %167 : vector<1x16xf32> to vector<16x16xf32>
    %170 = arith.addf %168, %169 : vector<16x16xf32>
    %171 = math.absf %170 : vector<16x16xf32>
    %172 = vector.broadcast %165 : vector<1x1xf32> to vector<16x16xf32>
    %173 = arith.mulf %172, %171 : vector<16x16xf32>
    %174 = arith.addf %164, %173 : vector<16x16xf32>
    %175 = vector.extract_strided_slice %16 {offsets = [1, 3], sizes = [1, 1], strides = [1, 1]} : vector<8x8xf32> to vector<1x1xf32>
    %176 = vector.extract_strided_slice %133 {offsets = [0, 3], sizes = [16, 1], strides = [1, 1]} : vector<16x8xf32> to vector<16x1xf32>
    %177 = vector.extract_strided_slice %134 {offsets = [3, 0], sizes = [1, 16], strides = [1, 1]} : vector<8x16xf32> to vector<1x16xf32>
    %178 = vector.broadcast %176 : vector<16x1xf32> to vector<16x16xf32>
    %179 = vector.broadcast %177 : vector<1x16xf32> to vector<16x16xf32>
    %180 = arith.addf %178, %179 : vector<16x16xf32>
    %181 = math.absf %180 : vector<16x16xf32>
    %182 = vector.broadcast %175 : vector<1x1xf32> to vector<16x16xf32>
    %183 = arith.mulf %182, %181 : vector<16x16xf32>
    %184 = arith.addf %174, %183 : vector<16x16xf32>
    %185 = vector.extract_strided_slice %16 {offsets = [1, 4], sizes = [1, 1], strides = [1, 1]} : vector<8x8xf32> to vector<1x1xf32>
    %186 = vector.extract_strided_slice %133 {offsets = [0, 4], sizes = [16, 1], strides = [1, 1]} : vector<16x8xf32> to vector<16x1xf32>
    %187 = vector.extract_strided_slice %134 {offsets = [4, 0], sizes = [1, 16], strides = [1, 1]} : vector<8x16xf32> to vector<1x16xf32>
    %188 = vector.broadcast %186 : vector<16x1xf32> to vector<16x16xf32>
    %189 = vector.broadcast %187 : vector<1x16xf32> to vector<16x16xf32>
    %190 = arith.addf %188, %189 : vector<16x16xf32>
    %191 = math.absf %190 : vector<16x16xf32>
    %192 = vector.broadcast %185 : vector<1x1xf32> to vector<16x16xf32>
    %193 = arith.mulf %192, %191 : vector<16x16xf32>
    %194 = arith.addf %184, %193 : vector<16x16xf32>
    %195 = vector.extract_strided_slice %16 {offsets = [1, 5], sizes = [1, 1], strides = [1, 1]} : vector<8x8xf32> to vector<1x1xf32>
    %196 = vector.extract_strided_slice %133 {offsets = [0, 5], sizes = [16, 1], strides = [1, 1]} : vector<16x8xf32> to vector<16x1xf32>
    %197 = vector.extract_strided_slice %134 {offsets = [5, 0], sizes = [1, 16], strides = [1, 1]} : vector<8x16xf32> to vector<1x16xf32>
    %198 = vector.broadcast %196 : vector<16x1xf32> to vector<16x16xf32>
    %199 = vector.broadcast %197 : vector<1x16xf32> to vector<16x16xf32>
    %200 = arith.addf %198, %199 : vector<16x16xf32>
    %201 = math.absf %200 : vector<16x16xf32>
    %202 = vector.broadcast %195 : vector<1x1xf32> to vector<16x16xf32>
    %203 = arith.mulf %202, %201 : vector<16x16xf32>
    %204 = arith.addf %194, %203 : vector<16x16xf32>
    %205 = vector.extract_strided_slice %16 {offsets = [1, 6], sizes = [1, 1], strides = [1, 1]} : vector<8x8xf32> to vector<1x1xf32>
    %206 = vector.extract_strided_slice %133 {offsets = [0, 6], sizes = [16, 1], strides = [1, 1]} : vector<16x8xf32> to vector<16x1xf32>
    %207 = vector.extract_strided_slice %134 {offsets = [6, 0], sizes = [1, 16], strides = [1, 1]} : vector<8x16xf32> to vector<1x16xf32>
    %208 = vector.broadcast %206 : vector<16x1xf32> to vector<16x16xf32>
    %209 = vector.broadcast %207 : vector<1x16xf32> to vector<16x16xf32>
    %210 = arith.addf %208, %209 : vector<16x16xf32>
    %211 = math.absf %210 : vector<16x16xf32>
    %212 = vector.broadcast %205 : vector<1x1xf32> to vector<16x16xf32>
    %213 = arith.mulf %212, %211 : vector<16x16xf32>
    %214 = arith.addf %204, %213 : vector<16x16xf32>
    %215 = vector.extract_strided_slice %16 {offsets = [1, 7], sizes = [1, 1], strides = [1, 1]} : vector<8x8xf32> to vector<1x1xf32>
    %216 = vector.extract_strided_slice %133 {offsets = [0, 7], sizes = [16, 1], strides = [1, 1]} : vector<16x8xf32> to vector<16x1xf32>
    %217 = vector.extract_strided_slice %134 {offsets = [7, 0], sizes = [1, 16], strides = [1, 1]} : vector<8x16xf32> to vector<1x16xf32>
    %218 = vector.broadcast %216 : vector<16x1xf32> to vector<16x16xf32>
    %219 = vector.broadcast %217 : vector<1x16xf32> to vector<16x16xf32>
    %220 = arith.addf %218, %219 : vector<16x16xf32>
    %221 = math.absf %220 : vector<16x16xf32>
    %222 = vector.broadcast %215 : vector<1x1xf32> to vector<16x16xf32>
    %223 = arith.mulf %222, %221 : vector<16x16xf32>
    %224 = arith.addf %214, %223 : vector<16x16xf32>
    %cst_26 = arith.constant dense<0xFF800000> : vector<16xf32>
    %225 = vector.multi_reduction <maximumf>, %224, %cst_26 [1] : vector<16x16xf32> to vector<16xf32>
    %226 = vector.shape_cast %225 : vector<16xf32> to vector<16x1xf32>
    %227 = vector.broadcast %226 : vector<16x1xf32> to vector<16x16xf32>
    %228 = arith.subf %224, %227 : vector<16x16xf32>
    %229 = math.exp %228 : vector<16x16xf32>
    %cst_27 = arith.constant dense<0.000000e+00> : vector<16xf32>
    %230 = vector.multi_reduction <add>, %229, %cst_27 [1] : vector<16x16xf32> to vector<16xf32>
    %231 = vector.shape_cast %230 : vector<16xf32> to vector<16x1xf32>
    %232 = tpu.reciprocal %231 {approx = true} : vector<16x1xf32> -> vector<16x1xf32>
    %233 = vector.broadcast %232 : vector<16x1xf32> to vector<16x16xf32>
    %234 = arith.mulf %229, %233 : vector<16x16xf32>
    %235 = arith.truncf %234 : vector<16x16xf32> to vector<16x16xbf16>
    %236 = arith.truncf %132 : vector<16x8xf32> to vector<16x8xbf16>
    %cst_28 = arith.constant dense<0.000000e+00> : vector<16x8xf32>
    %237 = tpu.matmul %235, %236, %cst_28 {dimension_numbers = #tpu.dot_dimension_numbers<[1], [0], [0], [1], [0, 0, 1, 1], [], []>} : vector<16x16xbf16>, vector<16x8xbf16>, vector<16x8xf32> -> vector<16x8xf32>
    %238 = arith.addf %131, %237 : vector<16x8xf32>
    %239 = vector.extract_strided_slice %21 {offsets = [0, 16], sizes = [16, 8], strides = [1, 1]} : vector<16x64xf32> to vector<16x8xf32>
    %240 = vector.extract_strided_slice %22 {offsets = [0, 16], sizes = [16, 8], strides = [1, 1]} : vector<16x64xf32> to vector<16x8xf32>
    %241 = vector.extract_strided_slice %23 {offsets = [16, 0], sizes = [8, 16], strides = [1, 1]} : vector<64x16xf32> to vector<8x16xf32>
    %242 = vector.extract_strided_slice %15 {offsets = [2, 0], sizes = [1, 8], strides = [1, 1]} : vector<8x8xf32> to vector<1x8xf32>
    %243 = vector.broadcast %242 : vector<1x8xf32> to vector<16x8xf32>
    %244 = arith.mulf %240, %243 : vector<16x8xf32>
    %cst_29 = arith.constant dense<0.000000e+00> : vector<16xf32>
    %245 = vector.multi_reduction <add>, %244, %cst_29 [1] : vector<16x8xf32> to vector<16xf32>
    %246 = vector.shape_cast %245 : vector<16xf32> to vector<16x1xf32>
    %cst_30 = arith.constant dense<0.000000e+00> : vector<1x16xf32>
    %247 = tpu.matmul %242, %241, %cst_30 {dimension_numbers = #tpu.dot_dimension_numbers<[1], [0], [0], [1], [0, 0, 1, 1], [], []>} : vector<1x8xf32>, vector<8x16xf32>, vector<1x16xf32> -> vector<1x16xf32>
    %248 = vector.broadcast %246 : vector<16x1xf32> to vector<16x16xf32>
    %249 = arith.addf %6, %248 : vector<16x16xf32>
    %250 = vector.broadcast %247 : vector<1x16xf32> to vector<16x16xf32>
    %251 = arith.addf %249, %250 : vector<16x16xf32>
    %252 = vector.extract_strided_slice %16 {offsets = [2, 0], sizes = [1, 1], strides = [1, 1]} : vector<8x8xf32> to vector<1x1xf32>
    %253 = vector.extract_strided_slice %240 {offsets = [0, 0], sizes = [16, 1], strides = [1, 1]} : vector<16x8xf32> to vector<16x1xf32>
    %254 = vector.extract_strided_slice %241 {offsets = [0, 0], sizes = [1, 16], strides = [1, 1]} : vector<8x16xf32> to vector<1x16xf32>
    %255 = vector.broadcast %253 : vector<16x1xf32> to vector<16x16xf32>
    %256 = vector.broadcast %254 : vector<1x16xf32> to vector<16x16xf32>
    %257 = arith.addf %255, %256 : vector<16x16xf32>
    %258 = math.absf %257 : vector<16x16xf32>
    %259 = vector.broadcast %252 : vector<1x1xf32> to vector<16x16xf32>
    %260 = arith.mulf %259, %258 : vector<16x16xf32>
    %261 = arith.addf %251, %260 : vector<16x16xf32>
    %262 = vector.extract_strided_slice %16 {offsets = [2, 1], sizes = [1, 1], strides = [1, 1]} : vector<8x8xf32> to vector<1x1xf32>
    %263 = vector.extract_strided_slice %240 {offsets = [0, 1], sizes = [16, 1], strides = [1, 1]} : vector<16x8xf32> to vector<16x1xf32>
    %264 = vector.extract_strided_slice %241 {offsets = [1, 0], sizes = [1, 16], strides = [1, 1]} : vector<8x16xf32> to vector<1x16xf32>
    %265 = vector.broadcast %263 : vector<16x1xf32> to vector<16x16xf32>
    %266 = vector.broadcast %264 : vector<1x16xf32> to vector<16x16xf32>
    %267 = arith.addf %265, %266 : vector<16x16xf32>
    %268 = math.absf %267 : vector<16x16xf32>
    %269 = vector.broadcast %262 : vector<1x1xf32> to vector<16x16xf32>
    %270 = arith.mulf %269, %268 : vector<16x16xf32>
    %271 = arith.addf %261, %270 : vector<16x16xf32>
    %272 = vector.extract_strided_slice %16 {offsets = [2, 2], sizes = [1, 1], strides = [1, 1]} : vector<8x8xf32> to vector<1x1xf32>
    %273 = vector.extract_strided_slice %240 {offsets = [0, 2], sizes = [16, 1], strides = [1, 1]} : vector<16x8xf32> to vector<16x1xf32>
    %274 = vector.extract_strided_slice %241 {offsets = [2, 0], sizes = [1, 16], strides = [1, 1]} : vector<8x16xf32> to vector<1x16xf32>
    %275 = vector.broadcast %273 : vector<16x1xf32> to vector<16x16xf32>
    %276 = vector.broadcast %274 : vector<1x16xf32> to vector<16x16xf32>
    %277 = arith.addf %275, %276 : vector<16x16xf32>
    %278 = math.absf %277 : vector<16x16xf32>
    %279 = vector.broadcast %272 : vector<1x1xf32> to vector<16x16xf32>
    %280 = arith.mulf %279, %278 : vector<16x16xf32>
    %281 = arith.addf %271, %280 : vector<16x16xf32>
    %282 = vector.extract_strided_slice %16 {offsets = [2, 3], sizes = [1, 1], strides = [1, 1]} : vector<8x8xf32> to vector<1x1xf32>
    %283 = vector.extract_strided_slice %240 {offsets = [0, 3], sizes = [16, 1], strides = [1, 1]} : vector<16x8xf32> to vector<16x1xf32>
    %284 = vector.extract_strided_slice %241 {offsets = [3, 0], sizes = [1, 16], strides = [1, 1]} : vector<8x16xf32> to vector<1x16xf32>
    %285 = vector.broadcast %283 : vector<16x1xf32> to vector<16x16xf32>
    %286 = vector.broadcast %284 : vector<1x16xf32> to vector<16x16xf32>
    %287 = arith.addf %285, %286 : vector<16x16xf32>
    %288 = math.absf %287 : vector<16x16xf32>
    %289 = vector.broadcast %282 : vector<1x1xf32> to vector<16x16xf32>
    %290 = arith.mulf %289, %288 : vector<16x16xf32>
    %291 = arith.addf %281, %290 : vector<16x16xf32>
    %292 = vector.extract_strided_slice %16 {offsets = [2, 4], sizes = [1, 1], strides = [1, 1]} : vector<8x8xf32> to vector<1x1xf32>
    %293 = vector.extract_strided_slice %240 {offsets = [0, 4], sizes = [16, 1], strides = [1, 1]} : vector<16x8xf32> to vector<16x1xf32>
    %294 = vector.extract_strided_slice %241 {offsets = [4, 0], sizes = [1, 16], strides = [1, 1]} : vector<8x16xf32> to vector<1x16xf32>
    %295 = vector.broadcast %293 : vector<16x1xf32> to vector<16x16xf32>
    %296 = vector.broadcast %294 : vector<1x16xf32> to vector<16x16xf32>
    %297 = arith.addf %295, %296 : vector<16x16xf32>
    %298 = math.absf %297 : vector<16x16xf32>
    %299 = vector.broadcast %292 : vector<1x1xf32> to vector<16x16xf32>
    %300 = arith.mulf %299, %298 : vector<16x16xf32>
    %301 = arith.addf %291, %300 : vector<16x16xf32>
    %302 = vector.extract_strided_slice %16 {offsets = [2, 5], sizes = [1, 1], strides = [1, 1]} : vector<8x8xf32> to vector<1x1xf32>
    %303 = vector.extract_strided_slice %240 {offsets = [0, 5], sizes = [16, 1], strides = [1, 1]} : vector<16x8xf32> to vector<16x1xf32>
    %304 = vector.extract_strided_slice %241 {offsets = [5, 0], sizes = [1, 16], strides = [1, 1]} : vector<8x16xf32> to vector<1x16xf32>
    %305 = vector.broadcast %303 : vector<16x1xf32> to vector<16x16xf32>
    %306 = vector.broadcast %304 : vector<1x16xf32> to vector<16x16xf32>
    %307 = arith.addf %305, %306 : vector<16x16xf32>
    %308 = math.absf %307 : vector<16x16xf32>
    %309 = vector.broadcast %302 : vector<1x1xf32> to vector<16x16xf32>
    %310 = arith.mulf %309, %308 : vector<16x16xf32>
    %311 = arith.addf %301, %310 : vector<16x16xf32>
    %312 = vector.extract_strided_slice %16 {offsets = [2, 6], sizes = [1, 1], strides = [1, 1]} : vector<8x8xf32> to vector<1x1xf32>
    %313 = vector.extract_strided_slice %240 {offsets = [0, 6], sizes = [16, 1], strides = [1, 1]} : vector<16x8xf32> to vector<16x1xf32>
    %314 = vector.extract_strided_slice %241 {offsets = [6, 0], sizes = [1, 16], strides = [1, 1]} : vector<8x16xf32> to vector<1x16xf32>
    %315 = vector.broadcast %313 : vector<16x1xf32> to vector<16x16xf32>
    %316 = vector.broadcast %314 : vector<1x16xf32> to vector<16x16xf32>
    %317 = arith.addf %315, %316 : vector<16x16xf32>
    %318 = math.absf %317 : vector<16x16xf32>
    %319 = vector.broadcast %312 : vector<1x1xf32> to vector<16x16xf32>
    %320 = arith.mulf %319, %318 : vector<16x16xf32>
    %321 = arith.addf %311, %320 : vector<16x16xf32>
    %322 = vector.extract_strided_slice %16 {offsets = [2, 7], sizes = [1, 1], strides = [1, 1]} : vector<8x8xf32> to vector<1x1xf32>
    %323 = vector.extract_strided_slice %240 {offsets = [0, 7], sizes = [16, 1], strides = [1, 1]} : vector<16x8xf32> to vector<16x1xf32>
    %324 = vector.extract_strided_slice %241 {offsets = [7, 0], sizes = [1, 16], strides = [1, 1]} : vector<8x16xf32> to vector<1x16xf32>
    %325 = vector.broadcast %323 : vector<16x1xf32> to vector<16x16xf32>
    %326 = vector.broadcast %324 : vector<1x16xf32> to vector<16x16xf32>
    %327 = arith.addf %325, %326 : vector<16x16xf32>
    %328 = math.absf %327 : vector<16x16xf32>
    %329 = vector.broadcast %322 : vector<1x1xf32> to vector<16x16xf32>
    %330 = arith.mulf %329, %328 : vector<16x16xf32>
    %331 = arith.addf %321, %330 : vector<16x16xf32>
    %cst_31 = arith.constant dense<0xFF800000> : vector<16xf32>
    %332 = vector.multi_reduction <maximumf>, %331, %cst_31 [1] : vector<16x16xf32> to vector<16xf32>
    %333 = vector.shape_cast %332 : vector<16xf32> to vector<16x1xf32>
    %334 = vector.broadcast %333 : vector<16x1xf32> to vector<16x16xf32>
    %335 = arith.subf %331, %334 : vector<16x16xf32>
    %336 = math.exp %335 : vector<16x16xf32>
    %cst_32 = arith.constant dense<0.000000e+00> : vector<16xf32>
    %337 = vector.multi_reduction <add>, %336, %cst_32 [1] : vector<16x16xf32> to vector<16xf32>
    %338 = vector.shape_cast %337 : vector<16xf32> to vector<16x1xf32>
    %339 = tpu.reciprocal %338 {approx = true} : vector<16x1xf32> -> vector<16x1xf32>
    %340 = vector.broadcast %339 : vector<16x1xf32> to vector<16x16xf32>
    %341 = arith.mulf %336, %340 : vector<16x16xf32>
    %342 = arith.truncf %341 : vector<16x16xf32> to vector<16x16xbf16>
    %343 = arith.truncf %239 : vector<16x8xf32> to vector<16x8xbf16>
    %cst_33 = arith.constant dense<0.000000e+00> : vector<16x8xf32>
    %344 = tpu.matmul %342, %343, %cst_33 {dimension_numbers = #tpu.dot_dimension_numbers<[1], [0], [0], [1], [0, 0, 1, 1], [], []>} : vector<16x16xbf16>, vector<16x8xbf16>, vector<16x8xf32> -> vector<16x8xf32>
    %345 = arith.addf %238, %344 : vector<16x8xf32>
    %346 = vector.extract_strided_slice %21 {offsets = [0, 24], sizes = [16, 8], strides = [1, 1]} : vector<16x64xf32> to vector<16x8xf32>
    %347 = vector.extract_strided_slice %22 {offsets = [0, 24], sizes = [16, 8], strides = [1, 1]} : vector<16x64xf32> to vector<16x8xf32>
    %348 = vector.extract_strided_slice %23 {offsets = [24, 0], sizes = [8, 16], strides = [1, 1]} : vector<64x16xf32> to vector<8x16xf32>
    %349 = vector.extract_strided_slice %15 {offsets = [3, 0], sizes = [1, 8], strides = [1, 1]} : vector<8x8xf32> to vector<1x8xf32>
    %350 = vector.broadcast %349 : vector<1x8xf32> to vector<16x8xf32>
    %351 = arith.mulf %347, %350 : vector<16x8xf32>
    %cst_34 = arith.constant dense<0.000000e+00> : vector<16xf32>
    %352 = vector.multi_reduction <add>, %351, %cst_34 [1] : vector<16x8xf32> to vector<16xf32>
    %353 = vector.shape_cast %352 : vector<16xf32> to vector<16x1xf32>
    %cst_35 = arith.constant dense<0.000000e+00> : vector<1x16xf32>
    %354 = tpu.matmul %349, %348, %cst_35 {dimension_numbers = #tpu.dot_dimension_numbers<[1], [0], [0], [1], [0, 0, 1, 1], [], []>} : vector<1x8xf32>, vector<8x16xf32>, vector<1x16xf32> -> vector<1x16xf32>
    %355 = vector.broadcast %353 : vector<16x1xf32> to vector<16x16xf32>
    %356 = arith.addf %6, %355 : vector<16x16xf32>
    %357 = vector.broadcast %354 : vector<1x16xf32> to vector<16x16xf32>
    %358 = arith.addf %356, %357 : vector<16x16xf32>
    %359 = vector.extract_strided_slice %16 {offsets = [3, 0], sizes = [1, 1], strides = [1, 1]} : vector<8x8xf32> to vector<1x1xf32>
    %360 = vector.extract_strided_slice %347 {offsets = [0, 0], sizes = [16, 1], strides = [1, 1]} : vector<16x8xf32> to vector<16x1xf32>
    %361 = vector.extract_strided_slice %348 {offsets = [0, 0], sizes = [1, 16], strides = [1, 1]} : vector<8x16xf32> to vector<1x16xf32>
    %362 = vector.broadcast %360 : vector<16x1xf32> to vector<16x16xf32>
    %363 = vector.broadcast %361 : vector<1x16xf32> to vector<16x16xf32>
    %364 = arith.addf %362, %363 : vector<16x16xf32>
    %365 = math.absf %364 : vector<16x16xf32>
    %366 = vector.broadcast %359 : vector<1x1xf32> to vector<16x16xf32>
    %367 = arith.mulf %366, %365 : vector<16x16xf32>
    %368 = arith.addf %358, %367 : vector<16x16xf32>
    %369 = vector.extract_strided_slice %16 {offsets = [3, 1], sizes = [1, 1], strides = [1, 1]} : vector<8x8xf32> to vector<1x1xf32>
    %370 = vector.extract_strided_slice %347 {offsets = [0, 1], sizes = [16, 1], strides = [1, 1]} : vector<16x8xf32> to vector<16x1xf32>
    %371 = vector.extract_strided_slice %348 {offsets = [1, 0], sizes = [1, 16], strides = [1, 1]} : vector<8x16xf32> to vector<1x16xf32>
    %372 = vector.broadcast %370 : vector<16x1xf32> to vector<16x16xf32>
    %373 = vector.broadcast %371 : vector<1x16xf32> to vector<16x16xf32>
    %374 = arith.addf %372, %373 : vector<16x16xf32>
    %375 = math.absf %374 : vector<16x16xf32>
    %376 = vector.broadcast %369 : vector<1x1xf32> to vector<16x16xf32>
    %377 = arith.mulf %376, %375 : vector<16x16xf32>
    %378 = arith.addf %368, %377 : vector<16x16xf32>
    %379 = vector.extract_strided_slice %16 {offsets = [3, 2], sizes = [1, 1], strides = [1, 1]} : vector<8x8xf32> to vector<1x1xf32>
    %380 = vector.extract_strided_slice %347 {offsets = [0, 2], sizes = [16, 1], strides = [1, 1]} : vector<16x8xf32> to vector<16x1xf32>
    %381 = vector.extract_strided_slice %348 {offsets = [2, 0], sizes = [1, 16], strides = [1, 1]} : vector<8x16xf32> to vector<1x16xf32>
    %382 = vector.broadcast %380 : vector<16x1xf32> to vector<16x16xf32>
    %383 = vector.broadcast %381 : vector<1x16xf32> to vector<16x16xf32>
    %384 = arith.addf %382, %383 : vector<16x16xf32>
    %385 = math.absf %384 : vector<16x16xf32>
    %386 = vector.broadcast %379 : vector<1x1xf32> to vector<16x16xf32>
    %387 = arith.mulf %386, %385 : vector<16x16xf32>
    %388 = arith.addf %378, %387 : vector<16x16xf32>
    %389 = vector.extract_strided_slice %16 {offsets = [3, 3], sizes = [1, 1], strides = [1, 1]} : vector<8x8xf32> to vector<1x1xf32>
    %390 = vector.extract_strided_slice %347 {offsets = [0, 3], sizes = [16, 1], strides = [1, 1]} : vector<16x8xf32> to vector<16x1xf32>
    %391 = vector.extract_strided_slice %348 {offsets = [3, 0], sizes = [1, 16], strides = [1, 1]} : vector<8x16xf32> to vector<1x16xf32>
    %392 = vector.broadcast %390 : vector<16x1xf32> to vector<16x16xf32>
    %393 = vector.broadcast %391 : vector<1x16xf32> to vector<16x16xf32>
    %394 = arith.addf %392, %393 : vector<16x16xf32>
    %395 = math.absf %394 : vector<16x16xf32>
    %396 = vector.broadcast %389 : vector<1x1xf32> to vector<16x16xf32>
    %397 = arith.mulf %396, %395 : vector<16x16xf32>
    %398 = arith.addf %388, %397 : vector<16x16xf32>
    %399 = vector.extract_strided_slice %16 {offsets = [3, 4], sizes = [1, 1], strides = [1, 1]} : vector<8x8xf32> to vector<1x1xf32>
    %400 = vector.extract_strided_slice %347 {offsets = [0, 4], sizes = [16, 1], strides = [1, 1]} : vector<16x8xf32> to vector<16x1xf32>
    %401 = vector.extract_strided_slice %348 {offsets = [4, 0], sizes = [1, 16], strides = [1, 1]} : vector<8x16xf32> to vector<1x16xf32>
    %402 = vector.broadcast %400 : vector<16x1xf32> to vector<16x16xf32>
    %403 = vector.broadcast %401 : vector<1x16xf32> to vector<16x16xf32>
    %404 = arith.addf %402, %403 : vector<16x16xf32>
    %405 = math.absf %404 : vector<16x16xf32>
    %406 = vector.broadcast %399 : vector<1x1xf32> to vector<16x16xf32>
    %407 = arith.mulf %406, %405 : vector<16x16xf32>
    %408 = arith.addf %398, %407 : vector<16x16xf32>
    %409 = vector.extract_strided_slice %16 {offsets = [3, 5], sizes = [1, 1], strides = [1, 1]} : vector<8x8xf32> to vector<1x1xf32>
    %410 = vector.extract_strided_slice %347 {offsets = [0, 5], sizes = [16, 1], strides = [1, 1]} : vector<16x8xf32> to vector<16x1xf32>
    %411 = vector.extract_strided_slice %348 {offsets = [5, 0], sizes = [1, 16], strides = [1, 1]} : vector<8x16xf32> to vector<1x16xf32>
    %412 = vector.broadcast %410 : vector<16x1xf32> to vector<16x16xf32>
    %413 = vector.broadcast %411 : vector<1x16xf32> to vector<16x16xf32>
    %414 = arith.addf %412, %413 : vector<16x16xf32>
    %415 = math.absf %414 : vector<16x16xf32>
    %416 = vector.broadcast %409 : vector<1x1xf32> to vector<16x16xf32>
    %417 = arith.mulf %416, %415 : vector<16x16xf32>
    %418 = arith.addf %408, %417 : vector<16x16xf32>
    %419 = vector.extract_strided_slice %16 {offsets = [3, 6], sizes = [1, 1], strides = [1, 1]} : vector<8x8xf32> to vector<1x1xf32>
    %420 = vector.extract_strided_slice %347 {offsets = [0, 6], sizes = [16, 1], strides = [1, 1]} : vector<16x8xf32> to vector<16x1xf32>
    %421 = vector.extract_strided_slice %348 {offsets = [6, 0], sizes = [1, 16], strides = [1, 1]} : vector<8x16xf32> to vector<1x16xf32>
    %422 = vector.broadcast %420 : vector<16x1xf32> to vector<16x16xf32>
    %423 = vector.broadcast %421 : vector<1x16xf32> to vector<16x16xf32>
    %424 = arith.addf %422, %423 : vector<16x16xf32>
    %425 = math.absf %424 : vector<16x16xf32>
    %426 = vector.broadcast %419 : vector<1x1xf32> to vector<16x16xf32>
    %427 = arith.mulf %426, %425 : vector<16x16xf32>
    %428 = arith.addf %418, %427 : vector<16x16xf32>
    %429 = vector.extract_strided_slice %16 {offsets = [3, 7], sizes = [1, 1], strides = [1, 1]} : vector<8x8xf32> to vector<1x1xf32>
    %430 = vector.extract_strided_slice %347 {offsets = [0, 7], sizes = [16, 1], strides = [1, 1]} : vector<16x8xf32> to vector<16x1xf32>
    %431 = vector.extract_strided_slice %348 {offsets = [7, 0], sizes = [1, 16], strides = [1, 1]} : vector<8x16xf32> to vector<1x16xf32>
    %432 = vector.broadcast %430 : vector<16x1xf32> to vector<16x16xf32>
    %433 = vector.broadcast %431 : vector<1x16xf32> to vector<16x16xf32>
    %434 = arith.addf %432, %433 : vector<16x16xf32>
    %435 = math.absf %434 : vector<16x16xf32>
    %436 = vector.broadcast %429 : vector<1x1xf32> to vector<16x16xf32>
    %437 = arith.mulf %436, %435 : vector<16x16xf32>
    %438 = arith.addf %428, %437 : vector<16x16xf32>
    %cst_36 = arith.constant dense<0xFF800000> : vector<16xf32>
    %439 = vector.multi_reduction <maximumf>, %438, %cst_36 [1] : vector<16x16xf32> to vector<16xf32>
    %440 = vector.shape_cast %439 : vector<16xf32> to vector<16x1xf32>
    %441 = vector.broadcast %440 : vector<16x1xf32> to vector<16x16xf32>
    %442 = arith.subf %438, %441 : vector<16x16xf32>
    %443 = math.exp %442 : vector<16x16xf32>
    %cst_37 = arith.constant dense<0.000000e+00> : vector<16xf32>
    %444 = vector.multi_reduction <add>, %443, %cst_37 [1] : vector<16x16xf32> to vector<16xf32>
    %445 = vector.shape_cast %444 : vector<16xf32> to vector<16x1xf32>
    %446 = tpu.reciprocal %445 {approx = true} : vector<16x1xf32> -> vector<16x1xf32>
    %447 = vector.broadcast %446 : vector<16x1xf32> to vector<16x16xf32>
    %448 = arith.mulf %443, %447 : vector<16x16xf32>
    %449 = arith.truncf %448 : vector<16x16xf32> to vector<16x16xbf16>
    %450 = arith.truncf %346 : vector<16x8xf32> to vector<16x8xbf16>
    %cst_38 = arith.constant dense<0.000000e+00> : vector<16x8xf32>
    %451 = tpu.matmul %449, %450, %cst_38 {dimension_numbers = #tpu.dot_dimension_numbers<[1], [0], [0], [1], [0, 0, 1, 1], [], []>} : vector<16x16xbf16>, vector<16x8xbf16>, vector<16x8xf32> -> vector<16x8xf32>
    %452 = arith.addf %345, %451 : vector<16x8xf32>
    %453 = vector.extract_strided_slice %21 {offsets = [0, 32], sizes = [16, 8], strides = [1, 1]} : vector<16x64xf32> to vector<16x8xf32>
    %454 = vector.extract_strided_slice %22 {offsets = [0, 32], sizes = [16, 8], strides = [1, 1]} : vector<16x64xf32> to vector<16x8xf32>
    %455 = vector.extract_strided_slice %23 {offsets = [32, 0], sizes = [8, 16], strides = [1, 1]} : vector<64x16xf32> to vector<8x16xf32>
    %456 = vector.extract_strided_slice %15 {offsets = [4, 0], sizes = [1, 8], strides = [1, 1]} : vector<8x8xf32> to vector<1x8xf32>
    %457 = vector.broadcast %456 : vector<1x8xf32> to vector<16x8xf32>
    %458 = arith.mulf %454, %457 : vector<16x8xf32>
    %cst_39 = arith.constant dense<0.000000e+00> : vector<16xf32>
    %459 = vector.multi_reduction <add>, %458, %cst_39 [1] : vector<16x8xf32> to vector<16xf32>
    %460 = vector.shape_cast %459 : vector<16xf32> to vector<16x1xf32>
    %cst_40 = arith.constant dense<0.000000e+00> : vector<1x16xf32>
    %461 = tpu.matmul %456, %455, %cst_40 {dimension_numbers = #tpu.dot_dimension_numbers<[1], [0], [0], [1], [0, 0, 1, 1], [], []>} : vector<1x8xf32>, vector<8x16xf32>, vector<1x16xf32> -> vector<1x16xf32>
    %462 = vector.broadcast %460 : vector<16x1xf32> to vector<16x16xf32>
    %463 = arith.addf %6, %462 : vector<16x16xf32>
    %464 = vector.broadcast %461 : vector<1x16xf32> to vector<16x16xf32>
    %465 = arith.addf %463, %464 : vector<16x16xf32>
    %466 = vector.extract_strided_slice %16 {offsets = [4, 0], sizes = [1, 1], strides = [1, 1]} : vector<8x8xf32> to vector<1x1xf32>
    %467 = vector.extract_strided_slice %454 {offsets = [0, 0], sizes = [16, 1], strides = [1, 1]} : vector<16x8xf32> to vector<16x1xf32>
    %468 = vector.extract_strided_slice %455 {offsets = [0, 0], sizes = [1, 16], strides = [1, 1]} : vector<8x16xf32> to vector<1x16xf32>
    %469 = vector.broadcast %467 : vector<16x1xf32> to vector<16x16xf32>
    %470 = vector.broadcast %468 : vector<1x16xf32> to vector<16x16xf32>
    %471 = arith.addf %469, %470 : vector<16x16xf32>
    %472 = math.absf %471 : vector<16x16xf32>
    %473 = vector.broadcast %466 : vector<1x1xf32> to vector<16x16xf32>
    %474 = arith.mulf %473, %472 : vector<16x16xf32>
    %475 = arith.addf %465, %474 : vector<16x16xf32>
    %476 = vector.extract_strided_slice %16 {offsets = [4, 1], sizes = [1, 1], strides = [1, 1]} : vector<8x8xf32> to vector<1x1xf32>
    %477 = vector.extract_strided_slice %454 {offsets = [0, 1], sizes = [16, 1], strides = [1, 1]} : vector<16x8xf32> to vector<16x1xf32>
    %478 = vector.extract_strided_slice %455 {offsets = [1, 0], sizes = [1, 16], strides = [1, 1]} : vector<8x16xf32> to vector<1x16xf32>
    %479 = vector.broadcast %477 : vector<16x1xf32> to vector<16x16xf32>
    %480 = vector.broadcast %478 : vector<1x16xf32> to vector<16x16xf32>
    %481 = arith.addf %479, %480 : vector<16x16xf32>
    %482 = math.absf %481 : vector<16x16xf32>
    %483 = vector.broadcast %476 : vector<1x1xf32> to vector<16x16xf32>
    %484 = arith.mulf %483, %482 : vector<16x16xf32>
    %485 = arith.addf %475, %484 : vector<16x16xf32>
    %486 = vector.extract_strided_slice %16 {offsets = [4, 2], sizes = [1, 1], strides = [1, 1]} : vector<8x8xf32> to vector<1x1xf32>
    %487 = vector.extract_strided_slice %454 {offsets = [0, 2], sizes = [16, 1], strides = [1, 1]} : vector<16x8xf32> to vector<16x1xf32>
    %488 = vector.extract_strided_slice %455 {offsets = [2, 0], sizes = [1, 16], strides = [1, 1]} : vector<8x16xf32> to vector<1x16xf32>
    %489 = vector.broadcast %487 : vector<16x1xf32> to vector<16x16xf32>
    %490 = vector.broadcast %488 : vector<1x16xf32> to vector<16x16xf32>
    %491 = arith.addf %489, %490 : vector<16x16xf32>
    %492 = math.absf %491 : vector<16x16xf32>
    %493 = vector.broadcast %486 : vector<1x1xf32> to vector<16x16xf32>
    %494 = arith.mulf %493, %492 : vector<16x16xf32>
    %495 = arith.addf %485, %494 : vector<16x16xf32>
    %496 = vector.extract_strided_slice %16 {offsets = [4, 3], sizes = [1, 1], strides = [1, 1]} : vector<8x8xf32> to vector<1x1xf32>
    %497 = vector.extract_strided_slice %454 {offsets = [0, 3], sizes = [16, 1], strides = [1, 1]} : vector<16x8xf32> to vector<16x1xf32>
    %498 = vector.extract_strided_slice %455 {offsets = [3, 0], sizes = [1, 16], strides = [1, 1]} : vector<8x16xf32> to vector<1x16xf32>
    %499 = vector.broadcast %497 : vector<16x1xf32> to vector<16x16xf32>
    %500 = vector.broadcast %498 : vector<1x16xf32> to vector<16x16xf32>
    %501 = arith.addf %499, %500 : vector<16x16xf32>
    %502 = math.absf %501 : vector<16x16xf32>
    %503 = vector.broadcast %496 : vector<1x1xf32> to vector<16x16xf32>
    %504 = arith.mulf %503, %502 : vector<16x16xf32>
    %505 = arith.addf %495, %504 : vector<16x16xf32>
    %506 = vector.extract_strided_slice %16 {offsets = [4, 4], sizes = [1, 1], strides = [1, 1]} : vector<8x8xf32> to vector<1x1xf32>
    %507 = vector.extract_strided_slice %454 {offsets = [0, 4], sizes = [16, 1], strides = [1, 1]} : vector<16x8xf32> to vector<16x1xf32>
    %508 = vector.extract_strided_slice %455 {offsets = [4, 0], sizes = [1, 16], strides = [1, 1]} : vector<8x16xf32> to vector<1x16xf32>
    %509 = vector.broadcast %507 : vector<16x1xf32> to vector<16x16xf32>
    %510 = vector.broadcast %508 : vector<1x16xf32> to vector<16x16xf32>
    %511 = arith.addf %509, %510 : vector<16x16xf32>
    %512 = math.absf %511 : vector<16x16xf32>
    %513 = vector.broadcast %506 : vector<1x1xf32> to vector<16x16xf32>
    %514 = arith.mulf %513, %512 : vector<16x16xf32>
    %515 = arith.addf %505, %514 : vector<16x16xf32>
    %516 = vector.extract_strided_slice %16 {offsets = [4, 5], sizes = [1, 1], strides = [1, 1]} : vector<8x8xf32> to vector<1x1xf32>
    %517 = vector.extract_strided_slice %454 {offsets = [0, 5], sizes = [16, 1], strides = [1, 1]} : vector<16x8xf32> to vector<16x1xf32>
    %518 = vector.extract_strided_slice %455 {offsets = [5, 0], sizes = [1, 16], strides = [1, 1]} : vector<8x16xf32> to vector<1x16xf32>
    %519 = vector.broadcast %517 : vector<16x1xf32> to vector<16x16xf32>
    %520 = vector.broadcast %518 : vector<1x16xf32> to vector<16x16xf32>
    %521 = arith.addf %519, %520 : vector<16x16xf32>
    %522 = math.absf %521 : vector<16x16xf32>
    %523 = vector.broadcast %516 : vector<1x1xf32> to vector<16x16xf32>
    %524 = arith.mulf %523, %522 : vector<16x16xf32>
    %525 = arith.addf %515, %524 : vector<16x16xf32>
    %526 = vector.extract_strided_slice %16 {offsets = [4, 6], sizes = [1, 1], strides = [1, 1]} : vector<8x8xf32> to vector<1x1xf32>
    %527 = vector.extract_strided_slice %454 {offsets = [0, 6], sizes = [16, 1], strides = [1, 1]} : vector<16x8xf32> to vector<16x1xf32>
    %528 = vector.extract_strided_slice %455 {offsets = [6, 0], sizes = [1, 16], strides = [1, 1]} : vector<8x16xf32> to vector<1x16xf32>
    %529 = vector.broadcast %527 : vector<16x1xf32> to vector<16x16xf32>
    %530 = vector.broadcast %528 : vector<1x16xf32> to vector<16x16xf32>
    %531 = arith.addf %529, %530 : vector<16x16xf32>
    %532 = math.absf %531 : vector<16x16xf32>
    %533 = vector.broadcast %526 : vector<1x1xf32> to vector<16x16xf32>
    %534 = arith.mulf %533, %532 : vector<16x16xf32>
    %535 = arith.addf %525, %534 : vector<16x16xf32>
    %536 = vector.extract_strided_slice %16 {offsets = [4, 7], sizes = [1, 1], strides = [1, 1]} : vector<8x8xf32> to vector<1x1xf32>
    %537 = vector.extract_strided_slice %454 {offsets = [0, 7], sizes = [16, 1], strides = [1, 1]} : vector<16x8xf32> to vector<16x1xf32>
    %538 = vector.extract_strided_slice %455 {offsets = [7, 0], sizes = [1, 16], strides = [1, 1]} : vector<8x16xf32> to vector<1x16xf32>
    %539 = vector.broadcast %537 : vector<16x1xf32> to vector<16x16xf32>
    %540 = vector.broadcast %538 : vector<1x16xf32> to vector<16x16xf32>
    %541 = arith.addf %539, %540 : vector<16x16xf32>
    %542 = math.absf %541 : vector<16x16xf32>
    %543 = vector.broadcast %536 : vector<1x1xf32> to vector<16x16xf32>
    %544 = arith.mulf %543, %542 : vector<16x16xf32>
    %545 = arith.addf %535, %544 : vector<16x16xf32>
    %cst_41 = arith.constant dense<0xFF800000> : vector<16xf32>
    %546 = vector.multi_reduction <maximumf>, %545, %cst_41 [1] : vector<16x16xf32> to vector<16xf32>
    %547 = vector.shape_cast %546 : vector<16xf32> to vector<16x1xf32>
    %548 = vector.broadcast %547 : vector<16x1xf32> to vector<16x16xf32>
    %549 = arith.subf %545, %548 : vector<16x16xf32>
    %550 = math.exp %549 : vector<16x16xf32>
    %cst_42 = arith.constant dense<0.000000e+00> : vector<16xf32>
    %551 = vector.multi_reduction <add>, %550, %cst_42 [1] : vector<16x16xf32> to vector<16xf32>
    %552 = vector.shape_cast %551 : vector<16xf32> to vector<16x1xf32>
    %553 = tpu.reciprocal %552 {approx = true} : vector<16x1xf32> -> vector<16x1xf32>
    %554 = vector.broadcast %553 : vector<16x1xf32> to vector<16x16xf32>
    %555 = arith.mulf %550, %554 : vector<16x16xf32>
    %556 = arith.truncf %555 : vector<16x16xf32> to vector<16x16xbf16>
    %557 = arith.truncf %453 : vector<16x8xf32> to vector<16x8xbf16>
    %cst_43 = arith.constant dense<0.000000e+00> : vector<16x8xf32>
    %558 = tpu.matmul %556, %557, %cst_43 {dimension_numbers = #tpu.dot_dimension_numbers<[1], [0], [0], [1], [0, 0, 1, 1], [], []>} : vector<16x16xbf16>, vector<16x8xbf16>, vector<16x8xf32> -> vector<16x8xf32>
    %559 = arith.addf %452, %558 : vector<16x8xf32>
    %560 = vector.extract_strided_slice %21 {offsets = [0, 40], sizes = [16, 8], strides = [1, 1]} : vector<16x64xf32> to vector<16x8xf32>
    %561 = vector.extract_strided_slice %22 {offsets = [0, 40], sizes = [16, 8], strides = [1, 1]} : vector<16x64xf32> to vector<16x8xf32>
    %562 = vector.extract_strided_slice %23 {offsets = [40, 0], sizes = [8, 16], strides = [1, 1]} : vector<64x16xf32> to vector<8x16xf32>
    %563 = vector.extract_strided_slice %15 {offsets = [5, 0], sizes = [1, 8], strides = [1, 1]} : vector<8x8xf32> to vector<1x8xf32>
    %564 = vector.broadcast %563 : vector<1x8xf32> to vector<16x8xf32>
    %565 = arith.mulf %561, %564 : vector<16x8xf32>
    %cst_44 = arith.constant dense<0.000000e+00> : vector<16xf32>
    %566 = vector.multi_reduction <add>, %565, %cst_44 [1] : vector<16x8xf32> to vector<16xf32>
    %567 = vector.shape_cast %566 : vector<16xf32> to vector<16x1xf32>
    %cst_45 = arith.constant dense<0.000000e+00> : vector<1x16xf32>
    %568 = tpu.matmul %563, %562, %cst_45 {dimension_numbers = #tpu.dot_dimension_numbers<[1], [0], [0], [1], [0, 0, 1, 1], [], []>} : vector<1x8xf32>, vector<8x16xf32>, vector<1x16xf32> -> vector<1x16xf32>
    %569 = vector.broadcast %567 : vector<16x1xf32> to vector<16x16xf32>
    %570 = arith.addf %6, %569 : vector<16x16xf32>
    %571 = vector.broadcast %568 : vector<1x16xf32> to vector<16x16xf32>
    %572 = arith.addf %570, %571 : vector<16x16xf32>
    %573 = vector.extract_strided_slice %16 {offsets = [5, 0], sizes = [1, 1], strides = [1, 1]} : vector<8x8xf32> to vector<1x1xf32>
    %574 = vector.extract_strided_slice %561 {offsets = [0, 0], sizes = [16, 1], strides = [1, 1]} : vector<16x8xf32> to vector<16x1xf32>
    %575 = vector.extract_strided_slice %562 {offsets = [0, 0], sizes = [1, 16], strides = [1, 1]} : vector<8x16xf32> to vector<1x16xf32>
    %576 = vector.broadcast %574 : vector<16x1xf32> to vector<16x16xf32>
    %577 = vector.broadcast %575 : vector<1x16xf32> to vector<16x16xf32>
    %578 = arith.addf %576, %577 : vector<16x16xf32>
    %579 = math.absf %578 : vector<16x16xf32>
    %580 = vector.broadcast %573 : vector<1x1xf32> to vector<16x16xf32>
    %581 = arith.mulf %580, %579 : vector<16x16xf32>
    %582 = arith.addf %572, %581 : vector<16x16xf32>
    %583 = vector.extract_strided_slice %16 {offsets = [5, 1], sizes = [1, 1], strides = [1, 1]} : vector<8x8xf32> to vector<1x1xf32>
    %584 = vector.extract_strided_slice %561 {offsets = [0, 1], sizes = [16, 1], strides = [1, 1]} : vector<16x8xf32> to vector<16x1xf32>
    %585 = vector.extract_strided_slice %562 {offsets = [1, 0], sizes = [1, 16], strides = [1, 1]} : vector<8x16xf32> to vector<1x16xf32>
    %586 = vector.broadcast %584 : vector<16x1xf32> to vector<16x16xf32>
    %587 = vector.broadcast %585 : vector<1x16xf32> to vector<16x16xf32>
    %588 = arith.addf %586, %587 : vector<16x16xf32>
    %589 = math.absf %588 : vector<16x16xf32>
    %590 = vector.broadcast %583 : vector<1x1xf32> to vector<16x16xf32>
    %591 = arith.mulf %590, %589 : vector<16x16xf32>
    %592 = arith.addf %582, %591 : vector<16x16xf32>
    %593 = vector.extract_strided_slice %16 {offsets = [5, 2], sizes = [1, 1], strides = [1, 1]} : vector<8x8xf32> to vector<1x1xf32>
    %594 = vector.extract_strided_slice %561 {offsets = [0, 2], sizes = [16, 1], strides = [1, 1]} : vector<16x8xf32> to vector<16x1xf32>
    %595 = vector.extract_strided_slice %562 {offsets = [2, 0], sizes = [1, 16], strides = [1, 1]} : vector<8x16xf32> to vector<1x16xf32>
    %596 = vector.broadcast %594 : vector<16x1xf32> to vector<16x16xf32>
    %597 = vector.broadcast %595 : vector<1x16xf32> to vector<16x16xf32>
    %598 = arith.addf %596, %597 : vector<16x16xf32>
    %599 = math.absf %598 : vector<16x16xf32>
    %600 = vector.broadcast %593 : vector<1x1xf32> to vector<16x16xf32>
    %601 = arith.mulf %600, %599 : vector<16x16xf32>
    %602 = arith.addf %592, %601 : vector<16x16xf32>
    %603 = vector.extract_strided_slice %16 {offsets = [5, 3], sizes = [1, 1], strides = [1, 1]} : vector<8x8xf32> to vector<1x1xf32>
    %604 = vector.extract_strided_slice %561 {offsets = [0, 3], sizes = [16, 1], strides = [1, 1]} : vector<16x8xf32> to vector<16x1xf32>
    %605 = vector.extract_strided_slice %562 {offsets = [3, 0], sizes = [1, 16], strides = [1, 1]} : vector<8x16xf32> to vector<1x16xf32>
    %606 = vector.broadcast %604 : vector<16x1xf32> to vector<16x16xf32>
    %607 = vector.broadcast %605 : vector<1x16xf32> to vector<16x16xf32>
    %608 = arith.addf %606, %607 : vector<16x16xf32>
    %609 = math.absf %608 : vector<16x16xf32>
    %610 = vector.broadcast %603 : vector<1x1xf32> to vector<16x16xf32>
    %611 = arith.mulf %610, %609 : vector<16x16xf32>
    %612 = arith.addf %602, %611 : vector<16x16xf32>
    %613 = vector.extract_strided_slice %16 {offsets = [5, 4], sizes = [1, 1], strides = [1, 1]} : vector<8x8xf32> to vector<1x1xf32>
    %614 = vector.extract_strided_slice %561 {offsets = [0, 4], sizes = [16, 1], strides = [1, 1]} : vector<16x8xf32> to vector<16x1xf32>
    %615 = vector.extract_strided_slice %562 {offsets = [4, 0], sizes = [1, 16], strides = [1, 1]} : vector<8x16xf32> to vector<1x16xf32>
    %616 = vector.broadcast %614 : vector<16x1xf32> to vector<16x16xf32>
    %617 = vector.broadcast %615 : vector<1x16xf32> to vector<16x16xf32>
    %618 = arith.addf %616, %617 : vector<16x16xf32>
    %619 = math.absf %618 : vector<16x16xf32>
    %620 = vector.broadcast %613 : vector<1x1xf32> to vector<16x16xf32>
    %621 = arith.mulf %620, %619 : vector<16x16xf32>
    %622 = arith.addf %612, %621 : vector<16x16xf32>
    %623 = vector.extract_strided_slice %16 {offsets = [5, 5], sizes = [1, 1], strides = [1, 1]} : vector<8x8xf32> to vector<1x1xf32>
    %624 = vector.extract_strided_slice %561 {offsets = [0, 5], sizes = [16, 1], strides = [1, 1]} : vector<16x8xf32> to vector<16x1xf32>
    %625 = vector.extract_strided_slice %562 {offsets = [5, 0], sizes = [1, 16], strides = [1, 1]} : vector<8x16xf32> to vector<1x16xf32>
    %626 = vector.broadcast %624 : vector<16x1xf32> to vector<16x16xf32>
    %627 = vector.broadcast %625 : vector<1x16xf32> to vector<16x16xf32>
    %628 = arith.addf %626, %627 : vector<16x16xf32>
    %629 = math.absf %628 : vector<16x16xf32>
    %630 = vector.broadcast %623 : vector<1x1xf32> to vector<16x16xf32>
    %631 = arith.mulf %630, %629 : vector<16x16xf32>
    %632 = arith.addf %622, %631 : vector<16x16xf32>
    %633 = vector.extract_strided_slice %16 {offsets = [5, 6], sizes = [1, 1], strides = [1, 1]} : vector<8x8xf32> to vector<1x1xf32>
    %634 = vector.extract_strided_slice %561 {offsets = [0, 6], sizes = [16, 1], strides = [1, 1]} : vector<16x8xf32> to vector<16x1xf32>
    %635 = vector.extract_strided_slice %562 {offsets = [6, 0], sizes = [1, 16], strides = [1, 1]} : vector<8x16xf32> to vector<1x16xf32>
    %636 = vector.broadcast %634 : vector<16x1xf32> to vector<16x16xf32>
    %637 = vector.broadcast %635 : vector<1x16xf32> to vector<16x16xf32>
    %638 = arith.addf %636, %637 : vector<16x16xf32>
    %639 = math.absf %638 : vector<16x16xf32>
    %640 = vector.broadcast %633 : vector<1x1xf32> to vector<16x16xf32>
    %641 = arith.mulf %640, %639 : vector<16x16xf32>
    %642 = arith.addf %632, %641 : vector<16x16xf32>
    %643 = vector.extract_strided_slice %16 {offsets = [5, 7], sizes = [1, 1], strides = [1, 1]} : vector<8x8xf32> to vector<1x1xf32>
    %644 = vector.extract_strided_slice %561 {offsets = [0, 7], sizes = [16, 1], strides = [1, 1]} : vector<16x8xf32> to vector<16x1xf32>
    %645 = vector.extract_strided_slice %562 {offsets = [7, 0], sizes = [1, 16], strides = [1, 1]} : vector<8x16xf32> to vector<1x16xf32>
    %646 = vector.broadcast %644 : vector<16x1xf32> to vector<16x16xf32>
    %647 = vector.broadcast %645 : vector<1x16xf32> to vector<16x16xf32>
    %648 = arith.addf %646, %647 : vector<16x16xf32>
    %649 = math.absf %648 : vector<16x16xf32>
    %650 = vector.broadcast %643 : vector<1x1xf32> to vector<16x16xf32>
    %651 = arith.mulf %650, %649 : vector<16x16xf32>
    %652 = arith.addf %642, %651 : vector<16x16xf32>
    %cst_46 = arith.constant dense<0xFF800000> : vector<16xf32>
    %653 = vector.multi_reduction <maximumf>, %652, %cst_46 [1] : vector<16x16xf32> to vector<16xf32>
    %654 = vector.shape_cast %653 : vector<16xf32> to vector<16x1xf32>
    %655 = vector.broadcast %654 : vector<16x1xf32> to vector<16x16xf32>
    %656 = arith.subf %652, %655 : vector<16x16xf32>
    %657 = math.exp %656 : vector<16x16xf32>
    %cst_47 = arith.constant dense<0.000000e+00> : vector<16xf32>
    %658 = vector.multi_reduction <add>, %657, %cst_47 [1] : vector<16x16xf32> to vector<16xf32>
    %659 = vector.shape_cast %658 : vector<16xf32> to vector<16x1xf32>
    %660 = tpu.reciprocal %659 {approx = true} : vector<16x1xf32> -> vector<16x1xf32>
    %661 = vector.broadcast %660 : vector<16x1xf32> to vector<16x16xf32>
    %662 = arith.mulf %657, %661 : vector<16x16xf32>
    %663 = arith.truncf %662 : vector<16x16xf32> to vector<16x16xbf16>
    %664 = arith.truncf %560 : vector<16x8xf32> to vector<16x8xbf16>
    %cst_48 = arith.constant dense<0.000000e+00> : vector<16x8xf32>
    %665 = tpu.matmul %663, %664, %cst_48 {dimension_numbers = #tpu.dot_dimension_numbers<[1], [0], [0], [1], [0, 0, 1, 1], [], []>} : vector<16x16xbf16>, vector<16x8xbf16>, vector<16x8xf32> -> vector<16x8xf32>
    %666 = arith.addf %559, %665 : vector<16x8xf32>
    %667 = vector.extract_strided_slice %21 {offsets = [0, 48], sizes = [16, 8], strides = [1, 1]} : vector<16x64xf32> to vector<16x8xf32>
    %668 = vector.extract_strided_slice %22 {offsets = [0, 48], sizes = [16, 8], strides = [1, 1]} : vector<16x64xf32> to vector<16x8xf32>
    %669 = vector.extract_strided_slice %23 {offsets = [48, 0], sizes = [8, 16], strides = [1, 1]} : vector<64x16xf32> to vector<8x16xf32>
    %670 = vector.extract_strided_slice %15 {offsets = [6, 0], sizes = [1, 8], strides = [1, 1]} : vector<8x8xf32> to vector<1x8xf32>
    %671 = vector.broadcast %670 : vector<1x8xf32> to vector<16x8xf32>
    %672 = arith.mulf %668, %671 : vector<16x8xf32>
    %cst_49 = arith.constant dense<0.000000e+00> : vector<16xf32>
    %673 = vector.multi_reduction <add>, %672, %cst_49 [1] : vector<16x8xf32> to vector<16xf32>
    %674 = vector.shape_cast %673 : vector<16xf32> to vector<16x1xf32>
    %cst_50 = arith.constant dense<0.000000e+00> : vector<1x16xf32>
    %675 = tpu.matmul %670, %669, %cst_50 {dimension_numbers = #tpu.dot_dimension_numbers<[1], [0], [0], [1], [0, 0, 1, 1], [], []>} : vector<1x8xf32>, vector<8x16xf32>, vector<1x16xf32> -> vector<1x16xf32>
    %676 = vector.broadcast %674 : vector<16x1xf32> to vector<16x16xf32>
    %677 = arith.addf %6, %676 : vector<16x16xf32>
    %678 = vector.broadcast %675 : vector<1x16xf32> to vector<16x16xf32>
    %679 = arith.addf %677, %678 : vector<16x16xf32>
    %680 = vector.extract_strided_slice %16 {offsets = [6, 0], sizes = [1, 1], strides = [1, 1]} : vector<8x8xf32> to vector<1x1xf32>
    %681 = vector.extract_strided_slice %668 {offsets = [0, 0], sizes = [16, 1], strides = [1, 1]} : vector<16x8xf32> to vector<16x1xf32>
    %682 = vector.extract_strided_slice %669 {offsets = [0, 0], sizes = [1, 16], strides = [1, 1]} : vector<8x16xf32> to vector<1x16xf32>
    %683 = vector.broadcast %681 : vector<16x1xf32> to vector<16x16xf32>
    %684 = vector.broadcast %682 : vector<1x16xf32> to vector<16x16xf32>
    %685 = arith.addf %683, %684 : vector<16x16xf32>
    %686 = math.absf %685 : vector<16x16xf32>
    %687 = vector.broadcast %680 : vector<1x1xf32> to vector<16x16xf32>
    %688 = arith.mulf %687, %686 : vector<16x16xf32>
    %689 = arith.addf %679, %688 : vector<16x16xf32>
    %690 = vector.extract_strided_slice %16 {offsets = [6, 1], sizes = [1, 1], strides = [1, 1]} : vector<8x8xf32> to vector<1x1xf32>
    %691 = vector.extract_strided_slice %668 {offsets = [0, 1], sizes = [16, 1], strides = [1, 1]} : vector<16x8xf32> to vector<16x1xf32>
    %692 = vector.extract_strided_slice %669 {offsets = [1, 0], sizes = [1, 16], strides = [1, 1]} : vector<8x16xf32> to vector<1x16xf32>
    %693 = vector.broadcast %691 : vector<16x1xf32> to vector<16x16xf32>
    %694 = vector.broadcast %692 : vector<1x16xf32> to vector<16x16xf32>
    %695 = arith.addf %693, %694 : vector<16x16xf32>
    %696 = math.absf %695 : vector<16x16xf32>
    %697 = vector.broadcast %690 : vector<1x1xf32> to vector<16x16xf32>
    %698 = arith.mulf %697, %696 : vector<16x16xf32>
    %699 = arith.addf %689, %698 : vector<16x16xf32>
    %700 = vector.extract_strided_slice %16 {offsets = [6, 2], sizes = [1, 1], strides = [1, 1]} : vector<8x8xf32> to vector<1x1xf32>
    %701 = vector.extract_strided_slice %668 {offsets = [0, 2], sizes = [16, 1], strides = [1, 1]} : vector<16x8xf32> to vector<16x1xf32>
    %702 = vector.extract_strided_slice %669 {offsets = [2, 0], sizes = [1, 16], strides = [1, 1]} : vector<8x16xf32> to vector<1x16xf32>
    %703 = vector.broadcast %701 : vector<16x1xf32> to vector<16x16xf32>
    %704 = vector.broadcast %702 : vector<1x16xf32> to vector<16x16xf32>
    %705 = arith.addf %703, %704 : vector<16x16xf32>
    %706 = math.absf %705 : vector<16x16xf32>
    %707 = vector.broadcast %700 : vector<1x1xf32> to vector<16x16xf32>
    %708 = arith.mulf %707, %706 : vector<16x16xf32>
    %709 = arith.addf %699, %708 : vector<16x16xf32>
    %710 = vector.extract_strided_slice %16 {offsets = [6, 3], sizes = [1, 1], strides = [1, 1]} : vector<8x8xf32> to vector<1x1xf32>
    %711 = vector.extract_strided_slice %668 {offsets = [0, 3], sizes = [16, 1], strides = [1, 1]} : vector<16x8xf32> to vector<16x1xf32>
    %712 = vector.extract_strided_slice %669 {offsets = [3, 0], sizes = [1, 16], strides = [1, 1]} : vector<8x16xf32> to vector<1x16xf32>
    %713 = vector.broadcast %711 : vector<16x1xf32> to vector<16x16xf32>
    %714 = vector.broadcast %712 : vector<1x16xf32> to vector<16x16xf32>
    %715 = arith.addf %713, %714 : vector<16x16xf32>
    %716 = math.absf %715 : vector<16x16xf32>
    %717 = vector.broadcast %710 : vector<1x1xf32> to vector<16x16xf32>
    %718 = arith.mulf %717, %716 : vector<16x16xf32>
    %719 = arith.addf %709, %718 : vector<16x16xf32>
    %720 = vector.extract_strided_slice %16 {offsets = [6, 4], sizes = [1, 1], strides = [1, 1]} : vector<8x8xf32> to vector<1x1xf32>
    %721 = vector.extract_strided_slice %668 {offsets = [0, 4], sizes = [16, 1], strides = [1, 1]} : vector<16x8xf32> to vector<16x1xf32>
    %722 = vector.extract_strided_slice %669 {offsets = [4, 0], sizes = [1, 16], strides = [1, 1]} : vector<8x16xf32> to vector<1x16xf32>
    %723 = vector.broadcast %721 : vector<16x1xf32> to vector<16x16xf32>
    %724 = vector.broadcast %722 : vector<1x16xf32> to vector<16x16xf32>
    %725 = arith.addf %723, %724 : vector<16x16xf32>
    %726 = math.absf %725 : vector<16x16xf32>
    %727 = vector.broadcast %720 : vector<1x1xf32> to vector<16x16xf32>
    %728 = arith.mulf %727, %726 : vector<16x16xf32>
    %729 = arith.addf %719, %728 : vector<16x16xf32>
    %730 = vector.extract_strided_slice %16 {offsets = [6, 5], sizes = [1, 1], strides = [1, 1]} : vector<8x8xf32> to vector<1x1xf32>
    %731 = vector.extract_strided_slice %668 {offsets = [0, 5], sizes = [16, 1], strides = [1, 1]} : vector<16x8xf32> to vector<16x1xf32>
    %732 = vector.extract_strided_slice %669 {offsets = [5, 0], sizes = [1, 16], strides = [1, 1]} : vector<8x16xf32> to vector<1x16xf32>
    %733 = vector.broadcast %731 : vector<16x1xf32> to vector<16x16xf32>
    %734 = vector.broadcast %732 : vector<1x16xf32> to vector<16x16xf32>
    %735 = arith.addf %733, %734 : vector<16x16xf32>
    %736 = math.absf %735 : vector<16x16xf32>
    %737 = vector.broadcast %730 : vector<1x1xf32> to vector<16x16xf32>
    %738 = arith.mulf %737, %736 : vector<16x16xf32>
    %739 = arith.addf %729, %738 : vector<16x16xf32>
    %740 = vector.extract_strided_slice %16 {offsets = [6, 6], sizes = [1, 1], strides = [1, 1]} : vector<8x8xf32> to vector<1x1xf32>
    %741 = vector.extract_strided_slice %668 {offsets = [0, 6], sizes = [16, 1], strides = [1, 1]} : vector<16x8xf32> to vector<16x1xf32>
    %742 = vector.extract_strided_slice %669 {offsets = [6, 0], sizes = [1, 16], strides = [1, 1]} : vector<8x16xf32> to vector<1x16xf32>
    %743 = vector.broadcast %741 : vector<16x1xf32> to vector<16x16xf32>
    %744 = vector.broadcast %742 : vector<1x16xf32> to vector<16x16xf32>
    %745 = arith.addf %743, %744 : vector<16x16xf32>
    %746 = math.absf %745 : vector<16x16xf32>
    %747 = vector.broadcast %740 : vector<1x1xf32> to vector<16x16xf32>
    %748 = arith.mulf %747, %746 : vector<16x16xf32>
    %749 = arith.addf %739, %748 : vector<16x16xf32>
    %750 = vector.extract_strided_slice %16 {offsets = [6, 7], sizes = [1, 1], strides = [1, 1]} : vector<8x8xf32> to vector<1x1xf32>
    %751 = vector.extract_strided_slice %668 {offsets = [0, 7], sizes = [16, 1], strides = [1, 1]} : vector<16x8xf32> to vector<16x1xf32>
    %752 = vector.extract_strided_slice %669 {offsets = [7, 0], sizes = [1, 16], strides = [1, 1]} : vector<8x16xf32> to vector<1x16xf32>
    %753 = vector.broadcast %751 : vector<16x1xf32> to vector<16x16xf32>
    %754 = vector.broadcast %752 : vector<1x16xf32> to vector<16x16xf32>
    %755 = arith.addf %753, %754 : vector<16x16xf32>
    %756 = math.absf %755 : vector<16x16xf32>
    %757 = vector.broadcast %750 : vector<1x1xf32> to vector<16x16xf32>
    %758 = arith.mulf %757, %756 : vector<16x16xf32>
    %759 = arith.addf %749, %758 : vector<16x16xf32>
    %cst_51 = arith.constant dense<0xFF800000> : vector<16xf32>
    %760 = vector.multi_reduction <maximumf>, %759, %cst_51 [1] : vector<16x16xf32> to vector<16xf32>
    %761 = vector.shape_cast %760 : vector<16xf32> to vector<16x1xf32>
    %762 = vector.broadcast %761 : vector<16x1xf32> to vector<16x16xf32>
    %763 = arith.subf %759, %762 : vector<16x16xf32>
    %764 = math.exp %763 : vector<16x16xf32>
    %cst_52 = arith.constant dense<0.000000e+00> : vector<16xf32>
    %765 = vector.multi_reduction <add>, %764, %cst_52 [1] : vector<16x16xf32> to vector<16xf32>
    %766 = vector.shape_cast %765 : vector<16xf32> to vector<16x1xf32>
    %767 = tpu.reciprocal %766 {approx = true} : vector<16x1xf32> -> vector<16x1xf32>
    %768 = vector.broadcast %767 : vector<16x1xf32> to vector<16x16xf32>
    %769 = arith.mulf %764, %768 : vector<16x16xf32>
    %770 = arith.truncf %769 : vector<16x16xf32> to vector<16x16xbf16>
    %771 = arith.truncf %667 : vector<16x8xf32> to vector<16x8xbf16>
    %cst_53 = arith.constant dense<0.000000e+00> : vector<16x8xf32>
    %772 = tpu.matmul %770, %771, %cst_53 {dimension_numbers = #tpu.dot_dimension_numbers<[1], [0], [0], [1], [0, 0, 1, 1], [], []>} : vector<16x16xbf16>, vector<16x8xbf16>, vector<16x8xf32> -> vector<16x8xf32>
    %773 = arith.addf %666, %772 : vector<16x8xf32>
    %774 = vector.extract_strided_slice %21 {offsets = [0, 56], sizes = [16, 8], strides = [1, 1]} : vector<16x64xf32> to vector<16x8xf32>
    %775 = vector.extract_strided_slice %22 {offsets = [0, 56], sizes = [16, 8], strides = [1, 1]} : vector<16x64xf32> to vector<16x8xf32>
    %776 = vector.extract_strided_slice %23 {offsets = [56, 0], sizes = [8, 16], strides = [1, 1]} : vector<64x16xf32> to vector<8x16xf32>
    %777 = vector.extract_strided_slice %15 {offsets = [7, 0], sizes = [1, 8], strides = [1, 1]} : vector<8x8xf32> to vector<1x8xf32>
    %778 = vector.broadcast %777 : vector<1x8xf32> to vector<16x8xf32>
    %779 = arith.mulf %775, %778 : vector<16x8xf32>
    %cst_54 = arith.constant dense<0.000000e+00> : vector<16xf32>
    %780 = vector.multi_reduction <add>, %779, %cst_54 [1] : vector<16x8xf32> to vector<16xf32>
    %781 = vector.shape_cast %780 : vector<16xf32> to vector<16x1xf32>
    %cst_55 = arith.constant dense<0.000000e+00> : vector<1x16xf32>
    %782 = tpu.matmul %777, %776, %cst_55 {dimension_numbers = #tpu.dot_dimension_numbers<[1], [0], [0], [1], [0, 0, 1, 1], [], []>} : vector<1x8xf32>, vector<8x16xf32>, vector<1x16xf32> -> vector<1x16xf32>
    %783 = vector.broadcast %781 : vector<16x1xf32> to vector<16x16xf32>
    %784 = arith.addf %6, %783 : vector<16x16xf32>
    %785 = vector.broadcast %782 : vector<1x16xf32> to vector<16x16xf32>
    %786 = arith.addf %784, %785 : vector<16x16xf32>
    %787 = vector.extract_strided_slice %16 {offsets = [7, 0], sizes = [1, 1], strides = [1, 1]} : vector<8x8xf32> to vector<1x1xf32>
    %788 = vector.extract_strided_slice %775 {offsets = [0, 0], sizes = [16, 1], strides = [1, 1]} : vector<16x8xf32> to vector<16x1xf32>
    %789 = vector.extract_strided_slice %776 {offsets = [0, 0], sizes = [1, 16], strides = [1, 1]} : vector<8x16xf32> to vector<1x16xf32>
    %790 = vector.broadcast %788 : vector<16x1xf32> to vector<16x16xf32>
    %791 = vector.broadcast %789 : vector<1x16xf32> to vector<16x16xf32>
    %792 = arith.addf %790, %791 : vector<16x16xf32>
    %793 = math.absf %792 : vector<16x16xf32>
    %794 = vector.broadcast %787 : vector<1x1xf32> to vector<16x16xf32>
    %795 = arith.mulf %794, %793 : vector<16x16xf32>
    %796 = arith.addf %786, %795 : vector<16x16xf32>
    %797 = vector.extract_strided_slice %16 {offsets = [7, 1], sizes = [1, 1], strides = [1, 1]} : vector<8x8xf32> to vector<1x1xf32>
    %798 = vector.extract_strided_slice %775 {offsets = [0, 1], sizes = [16, 1], strides = [1, 1]} : vector<16x8xf32> to vector<16x1xf32>
    %799 = vector.extract_strided_slice %776 {offsets = [1, 0], sizes = [1, 16], strides = [1, 1]} : vector<8x16xf32> to vector<1x16xf32>
    %800 = vector.broadcast %798 : vector<16x1xf32> to vector<16x16xf32>
    %801 = vector.broadcast %799 : vector<1x16xf32> to vector<16x16xf32>
    %802 = arith.addf %800, %801 : vector<16x16xf32>
    %803 = math.absf %802 : vector<16x16xf32>
    %804 = vector.broadcast %797 : vector<1x1xf32> to vector<16x16xf32>
    %805 = arith.mulf %804, %803 : vector<16x16xf32>
    %806 = arith.addf %796, %805 : vector<16x16xf32>
    %807 = vector.extract_strided_slice %16 {offsets = [7, 2], sizes = [1, 1], strides = [1, 1]} : vector<8x8xf32> to vector<1x1xf32>
    %808 = vector.extract_strided_slice %775 {offsets = [0, 2], sizes = [16, 1], strides = [1, 1]} : vector<16x8xf32> to vector<16x1xf32>
    %809 = vector.extract_strided_slice %776 {offsets = [2, 0], sizes = [1, 16], strides = [1, 1]} : vector<8x16xf32> to vector<1x16xf32>
    %810 = vector.broadcast %808 : vector<16x1xf32> to vector<16x16xf32>
    %811 = vector.broadcast %809 : vector<1x16xf32> to vector<16x16xf32>
    %812 = arith.addf %810, %811 : vector<16x16xf32>
    %813 = math.absf %812 : vector<16x16xf32>
    %814 = vector.broadcast %807 : vector<1x1xf32> to vector<16x16xf32>
    %815 = arith.mulf %814, %813 : vector<16x16xf32>
    %816 = arith.addf %806, %815 : vector<16x16xf32>
    %817 = vector.extract_strided_slice %16 {offsets = [7, 3], sizes = [1, 1], strides = [1, 1]} : vector<8x8xf32> to vector<1x1xf32>
    %818 = vector.extract_strided_slice %775 {offsets = [0, 3], sizes = [16, 1], strides = [1, 1]} : vector<16x8xf32> to vector<16x1xf32>
    %819 = vector.extract_strided_slice %776 {offsets = [3, 0], sizes = [1, 16], strides = [1, 1]} : vector<8x16xf32> to vector<1x16xf32>
    %820 = vector.broadcast %818 : vector<16x1xf32> to vector<16x16xf32>
    %821 = vector.broadcast %819 : vector<1x16xf32> to vector<16x16xf32>
    %822 = arith.addf %820, %821 : vector<16x16xf32>
    %823 = math.absf %822 : vector<16x16xf32>
    %824 = vector.broadcast %817 : vector<1x1xf32> to vector<16x16xf32>
    %825 = arith.mulf %824, %823 : vector<16x16xf32>
    %826 = arith.addf %816, %825 : vector<16x16xf32>
    %827 = vector.extract_strided_slice %16 {offsets = [7, 4], sizes = [1, 1], strides = [1, 1]} : vector<8x8xf32> to vector<1x1xf32>
    %828 = vector.extract_strided_slice %775 {offsets = [0, 4], sizes = [16, 1], strides = [1, 1]} : vector<16x8xf32> to vector<16x1xf32>
    %829 = vector.extract_strided_slice %776 {offsets = [4, 0], sizes = [1, 16], strides = [1, 1]} : vector<8x16xf32> to vector<1x16xf32>
    %830 = vector.broadcast %828 : vector<16x1xf32> to vector<16x16xf32>
    %831 = vector.broadcast %829 : vector<1x16xf32> to vector<16x16xf32>
    %832 = arith.addf %830, %831 : vector<16x16xf32>
    %833 = math.absf %832 : vector<16x16xf32>
    %834 = vector.broadcast %827 : vector<1x1xf32> to vector<16x16xf32>
    %835 = arith.mulf %834, %833 : vector<16x16xf32>
    %836 = arith.addf %826, %835 : vector<16x16xf32>
    %837 = vector.extract_strided_slice %16 {offsets = [7, 5], sizes = [1, 1], strides = [1, 1]} : vector<8x8xf32> to vector<1x1xf32>
    %838 = vector.extract_strided_slice %775 {offsets = [0, 5], sizes = [16, 1], strides = [1, 1]} : vector<16x8xf32> to vector<16x1xf32>
    %839 = vector.extract_strided_slice %776 {offsets = [5, 0], sizes = [1, 16], strides = [1, 1]} : vector<8x16xf32> to vector<1x16xf32>
    %840 = vector.broadcast %838 : vector<16x1xf32> to vector<16x16xf32>
    %841 = vector.broadcast %839 : vector<1x16xf32> to vector<16x16xf32>
    %842 = arith.addf %840, %841 : vector<16x16xf32>
    %843 = math.absf %842 : vector<16x16xf32>
    %844 = vector.broadcast %837 : vector<1x1xf32> to vector<16x16xf32>
    %845 = arith.mulf %844, %843 : vector<16x16xf32>
    %846 = arith.addf %836, %845 : vector<16x16xf32>
    %847 = vector.extract_strided_slice %16 {offsets = [7, 6], sizes = [1, 1], strides = [1, 1]} : vector<8x8xf32> to vector<1x1xf32>
    %848 = vector.extract_strided_slice %775 {offsets = [0, 6], sizes = [16, 1], strides = [1, 1]} : vector<16x8xf32> to vector<16x1xf32>
    %849 = vector.extract_strided_slice %776 {offsets = [6, 0], sizes = [1, 16], strides = [1, 1]} : vector<8x16xf32> to vector<1x16xf32>
    %850 = vector.broadcast %848 : vector<16x1xf32> to vector<16x16xf32>
    %851 = vector.broadcast %849 : vector<1x16xf32> to vector<16x16xf32>
    %852 = arith.addf %850, %851 : vector<16x16xf32>
    %853 = math.absf %852 : vector<16x16xf32>
    %854 = vector.broadcast %847 : vector<1x1xf32> to vector<16x16xf32>
    %855 = arith.mulf %854, %853 : vector<16x16xf32>
    %856 = arith.addf %846, %855 : vector<16x16xf32>
    %857 = vector.extract_strided_slice %16 {offsets = [7, 7], sizes = [1, 1], strides = [1, 1]} : vector<8x8xf32> to vector<1x1xf32>
    %858 = vector.extract_strided_slice %775 {offsets = [0, 7], sizes = [16, 1], strides = [1, 1]} : vector<16x8xf32> to vector<16x1xf32>
    %859 = vector.extract_strided_slice %776 {offsets = [7, 0], sizes = [1, 16], strides = [1, 1]} : vector<8x16xf32> to vector<1x16xf32>
    %860 = vector.broadcast %858 : vector<16x1xf32> to vector<16x16xf32>
    %861 = vector.broadcast %859 : vector<1x16xf32> to vector<16x16xf32>
    %862 = arith.addf %860, %861 : vector<16x16xf32>
    %863 = math.absf %862 : vector<16x16xf32>
    %864 = vector.broadcast %857 : vector<1x1xf32> to vector<16x16xf32>
    %865 = arith.mulf %864, %863 : vector<16x16xf32>
    %866 = arith.addf %856, %865 : vector<16x16xf32>
    %cst_56 = arith.constant dense<0xFF800000> : vector<16xf32>
    %867 = vector.multi_reduction <maximumf>, %866, %cst_56 [1] : vector<16x16xf32> to vector<16xf32>
    %868 = vector.shape_cast %867 : vector<16xf32> to vector<16x1xf32>
    %869 = vector.broadcast %868 : vector<16x1xf32> to vector<16x16xf32>
    %870 = arith.subf %866, %869 : vector<16x16xf32>
    %871 = math.exp %870 : vector<16x16xf32>
    %cst_57 = arith.constant dense<0.000000e+00> : vector<16xf32>
    %872 = vector.multi_reduction <add>, %871, %cst_57 [1] : vector<16x16xf32> to vector<16xf32>
    %873 = vector.shape_cast %872 : vector<16xf32> to vector<16x1xf32>
    %874 = tpu.reciprocal %873 {approx = true} : vector<16x1xf32> -> vector<16x1xf32>
    %875 = vector.broadcast %874 : vector<16x1xf32> to vector<16x16xf32>
    %876 = arith.mulf %871, %875 : vector<16x16xf32>
    %877 = arith.truncf %876 : vector<16x16xf32> to vector<16x16xbf16>
    %878 = arith.truncf %774 : vector<16x8xf32> to vector<16x8xbf16>
    %cst_58 = arith.constant dense<0.000000e+00> : vector<16x8xf32>
    %879 = tpu.matmul %877, %878, %cst_58 {dimension_numbers = #tpu.dot_dimension_numbers<[1], [0], [0], [1], [0, 0, 1, 1], [], []>} : vector<16x16xbf16>, vector<16x8xbf16>, vector<16x8xf32> -> vector<16x8xf32>
    %880 = arith.addf %773, %879 : vector<16x8xf32>
    %cst_59 = arith.constant 1.250000e-01 : f32
    %881 = vector.broadcast %cst_59 : f32 to vector<16x8xf32>
    %882 = arith.mulf %880, %881 : vector<16x8xf32>
    %c0_60 = arith.constant 0 : index
    %c0_61 = arith.constant 0 : index
    %883 = vector.load %arg6[%c0_60, %c0_61] : memref<1x8xf32, #tpu.memory_space<vmem>>, vector<1x8xf32>
    %884 = vector.broadcast %883 : vector<1x8xf32> to vector<16x8xf32>
    %885 = arith.addf %882, %884 : vector<16x8xf32>
    %cst_62 = arith.constant 0.000000e+00 : f32
    %886 = vector.broadcast %cst_62 : f32 to vector<16x8xf32>
    %887 = arith.maximumf %885, %886 : vector<16x8xf32>
    %c0_63 = arith.constant 0 : index
    %c0_64 = arith.constant 0 : index
    %888 = vector.load %arg7[%c0_63, %c0_64] : memref<8x64xbf16, #tpu.memory_space<vmem>>, vector<8x64xbf16>
    %c0_65 = arith.constant 0 : index
    %c0_66 = arith.constant 0 : index
    %889 = vector.load %arg8[%c0_65, %c0_66] : memref<1x64xf32, #tpu.memory_space<vmem>>, vector<1x64xf32>
    %c0_67 = arith.constant 0 : index
    %c0_68 = arith.constant 0 : index
    %890 = vector.load %arg9[%c0_67, %c0_68] : memref<8x4xf32, #tpu.memory_space<vmem>>, vector<8x4xf32>
    %c0_69 = arith.constant 0 : index
    %c0_70 = arith.constant 0 : index
    %891 = vector.load %arg10[%c0_69, %c0_70] : memref<8x4xf32, #tpu.memory_space<vmem>>, vector<8x4xf32>
    %892 = arith.truncf %887 : vector<16x8xf32> to vector<16x8xbf16>
    %cst_71 = arith.constant dense<0.000000e+00> : vector<16x64xf32>
    %893 = tpu.matmul %892, %888, %cst_71 {dimension_numbers = #tpu.dot_dimension_numbers<[1], [0], [0], [1], [0, 0, 1, 1], [], []>} : vector<16x8xbf16>, vector<8x64xbf16>, vector<16x64xf32> -> vector<16x64xf32>
    %894 = vector.broadcast %889 : vector<1x64xf32> to vector<16x64xf32>
    %895 = arith.addf %893, %894 : vector<16x64xf32>
    %896 = vector.extract_strided_slice %895 {offsets = [0, 0], sizes = [16, 32], strides = [1, 1]} : vector<16x64xf32> to vector<16x32xf32>
    %897 = vector.extract_strided_slice %895 {offsets = [0, 32], sizes = [16, 32], strides = [1, 1]} : vector<16x64xf32> to vector<16x32xf32>
    %898 = tpu.transpose %896, [1, 0] : vector<16x32xf32> -> vector<32x16xf32>
    %cst_72 = arith.constant 0.000000e+00 : f32
    %899 = vector.broadcast %cst_72 : f32 to vector<16x4xf32>
    %900 = vector.extract_strided_slice %896 {offsets = [0, 0], sizes = [16, 4], strides = [1, 1]} : vector<16x32xf32> to vector<16x4xf32>
    %901 = vector.extract_strided_slice %897 {offsets = [0, 0], sizes = [16, 4], strides = [1, 1]} : vector<16x32xf32> to vector<16x4xf32>
    %902 = vector.extract_strided_slice %898 {offsets = [0, 0], sizes = [4, 16], strides = [1, 1]} : vector<32x16xf32> to vector<4x16xf32>
    %903 = vector.extract_strided_slice %890 {offsets = [0, 0], sizes = [1, 4], strides = [1, 1]} : vector<8x4xf32> to vector<1x4xf32>
    %904 = vector.broadcast %903 : vector<1x4xf32> to vector<16x4xf32>
    %905 = arith.mulf %901, %904 : vector<16x4xf32>
    %cst_73 = arith.constant dense<0.000000e+00> : vector<16xf32>
    %906 = vector.multi_reduction <add>, %905, %cst_73 [1] : vector<16x4xf32> to vector<16xf32>
    %907 = vector.shape_cast %906 : vector<16xf32> to vector<16x1xf32>
    %cst_74 = arith.constant dense<0.000000e+00> : vector<1x16xf32>
    %908 = tpu.matmul %903, %902, %cst_74 {dimension_numbers = #tpu.dot_dimension_numbers<[1], [0], [0], [1], [0, 0, 1, 1], [], []>} : vector<1x4xf32>, vector<4x16xf32>, vector<1x16xf32> -> vector<1x16xf32>
    %909 = vector.broadcast %907 : vector<16x1xf32> to vector<16x16xf32>
    %910 = arith.addf %6, %909 : vector<16x16xf32>
    %911 = vector.broadcast %908 : vector<1x16xf32> to vector<16x16xf32>
    %912 = arith.addf %910, %911 : vector<16x16xf32>
    %913 = vector.extract_strided_slice %891 {offsets = [0, 0], sizes = [1, 1], strides = [1, 1]} : vector<8x4xf32> to vector<1x1xf32>
    %914 = vector.extract_strided_slice %901 {offsets = [0, 0], sizes = [16, 1], strides = [1, 1]} : vector<16x4xf32> to vector<16x1xf32>
    %915 = vector.extract_strided_slice %902 {offsets = [0, 0], sizes = [1, 16], strides = [1, 1]} : vector<4x16xf32> to vector<1x16xf32>
    %916 = vector.broadcast %914 : vector<16x1xf32> to vector<16x16xf32>
    %917 = vector.broadcast %915 : vector<1x16xf32> to vector<16x16xf32>
    %918 = arith.addf %916, %917 : vector<16x16xf32>
    %919 = math.absf %918 : vector<16x16xf32>
    %920 = vector.broadcast %913 : vector<1x1xf32> to vector<16x16xf32>
    %921 = arith.mulf %920, %919 : vector<16x16xf32>
    %922 = arith.addf %912, %921 : vector<16x16xf32>
    %923 = vector.extract_strided_slice %891 {offsets = [0, 1], sizes = [1, 1], strides = [1, 1]} : vector<8x4xf32> to vector<1x1xf32>
    %924 = vector.extract_strided_slice %901 {offsets = [0, 1], sizes = [16, 1], strides = [1, 1]} : vector<16x4xf32> to vector<16x1xf32>
    %925 = vector.extract_strided_slice %902 {offsets = [1, 0], sizes = [1, 16], strides = [1, 1]} : vector<4x16xf32> to vector<1x16xf32>
    %926 = vector.broadcast %924 : vector<16x1xf32> to vector<16x16xf32>
    %927 = vector.broadcast %925 : vector<1x16xf32> to vector<16x16xf32>
    %928 = arith.addf %926, %927 : vector<16x16xf32>
    %929 = math.absf %928 : vector<16x16xf32>
    %930 = vector.broadcast %923 : vector<1x1xf32> to vector<16x16xf32>
    %931 = arith.mulf %930, %929 : vector<16x16xf32>
    %932 = arith.addf %922, %931 : vector<16x16xf32>
    %933 = vector.extract_strided_slice %891 {offsets = [0, 2], sizes = [1, 1], strides = [1, 1]} : vector<8x4xf32> to vector<1x1xf32>
    %934 = vector.extract_strided_slice %901 {offsets = [0, 2], sizes = [16, 1], strides = [1, 1]} : vector<16x4xf32> to vector<16x1xf32>
    %935 = vector.extract_strided_slice %902 {offsets = [2, 0], sizes = [1, 16], strides = [1, 1]} : vector<4x16xf32> to vector<1x16xf32>
    %936 = vector.broadcast %934 : vector<16x1xf32> to vector<16x16xf32>
    %937 = vector.broadcast %935 : vector<1x16xf32> to vector<16x16xf32>
    %938 = arith.addf %936, %937 : vector<16x16xf32>
    %939 = math.absf %938 : vector<16x16xf32>
    %940 = vector.broadcast %933 : vector<1x1xf32> to vector<16x16xf32>
    %941 = arith.mulf %940, %939 : vector<16x16xf32>
    %942 = arith.addf %932, %941 : vector<16x16xf32>
    %943 = vector.extract_strided_slice %891 {offsets = [0, 3], sizes = [1, 1], strides = [1, 1]} : vector<8x4xf32> to vector<1x1xf32>
    %944 = vector.extract_strided_slice %901 {offsets = [0, 3], sizes = [16, 1], strides = [1, 1]} : vector<16x4xf32> to vector<16x1xf32>
    %945 = vector.extract_strided_slice %902 {offsets = [3, 0], sizes = [1, 16], strides = [1, 1]} : vector<4x16xf32> to vector<1x16xf32>
    %946 = vector.broadcast %944 : vector<16x1xf32> to vector<16x16xf32>
    %947 = vector.broadcast %945 : vector<1x16xf32> to vector<16x16xf32>
    %948 = arith.addf %946, %947 : vector<16x16xf32>
    %949 = math.absf %948 : vector<16x16xf32>
    %950 = vector.broadcast %943 : vector<1x1xf32> to vector<16x16xf32>
    %951 = arith.mulf %950, %949 : vector<16x16xf32>
    %952 = arith.addf %942, %951 : vector<16x16xf32>
    %cst_75 = arith.constant dense<0xFF800000> : vector<16xf32>
    %953 = vector.multi_reduction <maximumf>, %952, %cst_75 [1] : vector<16x16xf32> to vector<16xf32>
    %954 = vector.shape_cast %953 : vector<16xf32> to vector<16x1xf32>
    %955 = vector.broadcast %954 : vector<16x1xf32> to vector<16x16xf32>
    %956 = arith.subf %952, %955 : vector<16x16xf32>
    %957 = math.exp %956 : vector<16x16xf32>
    %cst_76 = arith.constant dense<0.000000e+00> : vector<16xf32>
    %958 = vector.multi_reduction <add>, %957, %cst_76 [1] : vector<16x16xf32> to vector<16xf32>
    %959 = vector.shape_cast %958 : vector<16xf32> to vector<16x1xf32>
    %960 = tpu.reciprocal %959 {approx = true} : vector<16x1xf32> -> vector<16x1xf32>
    %961 = vector.broadcast %960 : vector<16x1xf32> to vector<16x16xf32>
    %962 = arith.mulf %957, %961 : vector<16x16xf32>
    %963 = arith.truncf %962 : vector<16x16xf32> to vector<16x16xbf16>
    %964 = arith.truncf %900 : vector<16x4xf32> to vector<16x4xbf16>
    %cst_77 = arith.constant dense<0.000000e+00> : vector<16x4xf32>
    %965 = tpu.matmul %963, %964, %cst_77 {dimension_numbers = #tpu.dot_dimension_numbers<[1], [0], [0], [1], [0, 0, 1, 1], [], []>} : vector<16x16xbf16>, vector<16x4xbf16>, vector<16x4xf32> -> vector<16x4xf32>
    %966 = arith.addf %899, %965 : vector<16x4xf32>
    %967 = vector.extract_strided_slice %896 {offsets = [0, 4], sizes = [16, 4], strides = [1, 1]} : vector<16x32xf32> to vector<16x4xf32>
    %968 = vector.extract_strided_slice %897 {offsets = [0, 4], sizes = [16, 4], strides = [1, 1]} : vector<16x32xf32> to vector<16x4xf32>
    %969 = vector.extract_strided_slice %898 {offsets = [4, 0], sizes = [4, 16], strides = [1, 1]} : vector<32x16xf32> to vector<4x16xf32>
    %970 = vector.extract_strided_slice %890 {offsets = [1, 0], sizes = [1, 4], strides = [1, 1]} : vector<8x4xf32> to vector<1x4xf32>
    %971 = vector.broadcast %970 : vector<1x4xf32> to vector<16x4xf32>
    %972 = arith.mulf %968, %971 : vector<16x4xf32>
    %cst_78 = arith.constant dense<0.000000e+00> : vector<16xf32>
    %973 = vector.multi_reduction <add>, %972, %cst_78 [1] : vector<16x4xf32> to vector<16xf32>
    %974 = vector.shape_cast %973 : vector<16xf32> to vector<16x1xf32>
    %cst_79 = arith.constant dense<0.000000e+00> : vector<1x16xf32>
    %975 = tpu.matmul %970, %969, %cst_79 {dimension_numbers = #tpu.dot_dimension_numbers<[1], [0], [0], [1], [0, 0, 1, 1], [], []>} : vector<1x4xf32>, vector<4x16xf32>, vector<1x16xf32> -> vector<1x16xf32>
    %976 = vector.broadcast %974 : vector<16x1xf32> to vector<16x16xf32>
    %977 = arith.addf %6, %976 : vector<16x16xf32>
    %978 = vector.broadcast %975 : vector<1x16xf32> to vector<16x16xf32>
    %979 = arith.addf %977, %978 : vector<16x16xf32>
    %980 = vector.extract_strided_slice %891 {offsets = [1, 0], sizes = [1, 1], strides = [1, 1]} : vector<8x4xf32> to vector<1x1xf32>
    %981 = vector.extract_strided_slice %968 {offsets = [0, 0], sizes = [16, 1], strides = [1, 1]} : vector<16x4xf32> to vector<16x1xf32>
    %982 = vector.extract_strided_slice %969 {offsets = [0, 0], sizes = [1, 16], strides = [1, 1]} : vector<4x16xf32> to vector<1x16xf32>
    %983 = vector.broadcast %981 : vector<16x1xf32> to vector<16x16xf32>
    %984 = vector.broadcast %982 : vector<1x16xf32> to vector<16x16xf32>
    %985 = arith.addf %983, %984 : vector<16x16xf32>
    %986 = math.absf %985 : vector<16x16xf32>
    %987 = vector.broadcast %980 : vector<1x1xf32> to vector<16x16xf32>
    %988 = arith.mulf %987, %986 : vector<16x16xf32>
    %989 = arith.addf %979, %988 : vector<16x16xf32>
    %990 = vector.extract_strided_slice %891 {offsets = [1, 1], sizes = [1, 1], strides = [1, 1]} : vector<8x4xf32> to vector<1x1xf32>
    %991 = vector.extract_strided_slice %968 {offsets = [0, 1], sizes = [16, 1], strides = [1, 1]} : vector<16x4xf32> to vector<16x1xf32>
    %992 = vector.extract_strided_slice %969 {offsets = [1, 0], sizes = [1, 16], strides = [1, 1]} : vector<4x16xf32> to vector<1x16xf32>
    %993 = vector.broadcast %991 : vector<16x1xf32> to vector<16x16xf32>
    %994 = vector.broadcast %992 : vector<1x16xf32> to vector<16x16xf32>
    %995 = arith.addf %993, %994 : vector<16x16xf32>
    %996 = math.absf %995 : vector<16x16xf32>
    %997 = vector.broadcast %990 : vector<1x1xf32> to vector<16x16xf32>
    %998 = arith.mulf %997, %996 : vector<16x16xf32>
    %999 = arith.addf %989, %998 : vector<16x16xf32>
    %1000 = vector.extract_strided_slice %891 {offsets = [1, 2], sizes = [1, 1], strides = [1, 1]} : vector<8x4xf32> to vector<1x1xf32>
    %1001 = vector.extract_strided_slice %968 {offsets = [0, 2], sizes = [16, 1], strides = [1, 1]} : vector<16x4xf32> to vector<16x1xf32>
    %1002 = vector.extract_strided_slice %969 {offsets = [2, 0], sizes = [1, 16], strides = [1, 1]} : vector<4x16xf32> to vector<1x16xf32>
    %1003 = vector.broadcast %1001 : vector<16x1xf32> to vector<16x16xf32>
    %1004 = vector.broadcast %1002 : vector<1x16xf32> to vector<16x16xf32>
    %1005 = arith.addf %1003, %1004 : vector<16x16xf32>
    %1006 = math.absf %1005 : vector<16x16xf32>
    %1007 = vector.broadcast %1000 : vector<1x1xf32> to vector<16x16xf32>
    %1008 = arith.mulf %1007, %1006 : vector<16x16xf32>
    %1009 = arith.addf %999, %1008 : vector<16x16xf32>
    %1010 = vector.extract_strided_slice %891 {offsets = [1, 3], sizes = [1, 1], strides = [1, 1]} : vector<8x4xf32> to vector<1x1xf32>
    %1011 = vector.extract_strided_slice %968 {offsets = [0, 3], sizes = [16, 1], strides = [1, 1]} : vector<16x4xf32> to vector<16x1xf32>
    %1012 = vector.extract_strided_slice %969 {offsets = [3, 0], sizes = [1, 16], strides = [1, 1]} : vector<4x16xf32> to vector<1x16xf32>
    %1013 = vector.broadcast %1011 : vector<16x1xf32> to vector<16x16xf32>
    %1014 = vector.broadcast %1012 : vector<1x16xf32> to vector<16x16xf32>
    %1015 = arith.addf %1013, %1014 : vector<16x16xf32>
    %1016 = math.absf %1015 : vector<16x16xf32>
    %1017 = vector.broadcast %1010 : vector<1x1xf32> to vector<16x16xf32>
    %1018 = arith.mulf %1017, %1016 : vector<16x16xf32>
    %1019 = arith.addf %1009, %1018 : vector<16x16xf32>
    %cst_80 = arith.constant dense<0xFF800000> : vector<16xf32>
    %1020 = vector.multi_reduction <maximumf>, %1019, %cst_80 [1] : vector<16x16xf32> to vector<16xf32>
    %1021 = vector.shape_cast %1020 : vector<16xf32> to vector<16x1xf32>
    %1022 = vector.broadcast %1021 : vector<16x1xf32> to vector<16x16xf32>
    %1023 = arith.subf %1019, %1022 : vector<16x16xf32>
    %1024 = math.exp %1023 : vector<16x16xf32>
    %cst_81 = arith.constant dense<0.000000e+00> : vector<16xf32>
    %1025 = vector.multi_reduction <add>, %1024, %cst_81 [1] : vector<16x16xf32> to vector<16xf32>
    %1026 = vector.shape_cast %1025 : vector<16xf32> to vector<16x1xf32>
    %1027 = tpu.reciprocal %1026 {approx = true} : vector<16x1xf32> -> vector<16x1xf32>
    %1028 = vector.broadcast %1027 : vector<16x1xf32> to vector<16x16xf32>
    %1029 = arith.mulf %1024, %1028 : vector<16x16xf32>
    %1030 = arith.truncf %1029 : vector<16x16xf32> to vector<16x16xbf16>
    %1031 = arith.truncf %967 : vector<16x4xf32> to vector<16x4xbf16>
    %cst_82 = arith.constant dense<0.000000e+00> : vector<16x4xf32>
    %1032 = tpu.matmul %1030, %1031, %cst_82 {dimension_numbers = #tpu.dot_dimension_numbers<[1], [0], [0], [1], [0, 0, 1, 1], [], []>} : vector<16x16xbf16>, vector<16x4xbf16>, vector<16x4xf32> -> vector<16x4xf32>
    %1033 = arith.addf %966, %1032 : vector<16x4xf32>
    %1034 = vector.extract_strided_slice %896 {offsets = [0, 8], sizes = [16, 4], strides = [1, 1]} : vector<16x32xf32> to vector<16x4xf32>
    %1035 = vector.extract_strided_slice %897 {offsets = [0, 8], sizes = [16, 4], strides = [1, 1]} : vector<16x32xf32> to vector<16x4xf32>
    %1036 = vector.extract_strided_slice %898 {offsets = [8, 0], sizes = [4, 16], strides = [1, 1]} : vector<32x16xf32> to vector<4x16xf32>
    %1037 = vector.extract_strided_slice %890 {offsets = [2, 0], sizes = [1, 4], strides = [1, 1]} : vector<8x4xf32> to vector<1x4xf32>
    %1038 = vector.broadcast %1037 : vector<1x4xf32> to vector<16x4xf32>
    %1039 = arith.mulf %1035, %1038 : vector<16x4xf32>
    %cst_83 = arith.constant dense<0.000000e+00> : vector<16xf32>
    %1040 = vector.multi_reduction <add>, %1039, %cst_83 [1] : vector<16x4xf32> to vector<16xf32>
    %1041 = vector.shape_cast %1040 : vector<16xf32> to vector<16x1xf32>
    %cst_84 = arith.constant dense<0.000000e+00> : vector<1x16xf32>
    %1042 = tpu.matmul %1037, %1036, %cst_84 {dimension_numbers = #tpu.dot_dimension_numbers<[1], [0], [0], [1], [0, 0, 1, 1], [], []>} : vector<1x4xf32>, vector<4x16xf32>, vector<1x16xf32> -> vector<1x16xf32>
    %1043 = vector.broadcast %1041 : vector<16x1xf32> to vector<16x16xf32>
    %1044 = arith.addf %6, %1043 : vector<16x16xf32>
    %1045 = vector.broadcast %1042 : vector<1x16xf32> to vector<16x16xf32>
    %1046 = arith.addf %1044, %1045 : vector<16x16xf32>
    %1047 = vector.extract_strided_slice %891 {offsets = [2, 0], sizes = [1, 1], strides = [1, 1]} : vector<8x4xf32> to vector<1x1xf32>
    %1048 = vector.extract_strided_slice %1035 {offsets = [0, 0], sizes = [16, 1], strides = [1, 1]} : vector<16x4xf32> to vector<16x1xf32>
    %1049 = vector.extract_strided_slice %1036 {offsets = [0, 0], sizes = [1, 16], strides = [1, 1]} : vector<4x16xf32> to vector<1x16xf32>
    %1050 = vector.broadcast %1048 : vector<16x1xf32> to vector<16x16xf32>
    %1051 = vector.broadcast %1049 : vector<1x16xf32> to vector<16x16xf32>
    %1052 = arith.addf %1050, %1051 : vector<16x16xf32>
    %1053 = math.absf %1052 : vector<16x16xf32>
    %1054 = vector.broadcast %1047 : vector<1x1xf32> to vector<16x16xf32>
    %1055 = arith.mulf %1054, %1053 : vector<16x16xf32>
    %1056 = arith.addf %1046, %1055 : vector<16x16xf32>
    %1057 = vector.extract_strided_slice %891 {offsets = [2, 1], sizes = [1, 1], strides = [1, 1]} : vector<8x4xf32> to vector<1x1xf32>
    %1058 = vector.extract_strided_slice %1035 {offsets = [0, 1], sizes = [16, 1], strides = [1, 1]} : vector<16x4xf32> to vector<16x1xf32>
    %1059 = vector.extract_strided_slice %1036 {offsets = [1, 0], sizes = [1, 16], strides = [1, 1]} : vector<4x16xf32> to vector<1x16xf32>
    %1060 = vector.broadcast %1058 : vector<16x1xf32> to vector<16x16xf32>
    %1061 = vector.broadcast %1059 : vector<1x16xf32> to vector<16x16xf32>
    %1062 = arith.addf %1060, %1061 : vector<16x16xf32>
    %1063 = math.absf %1062 : vector<16x16xf32>
    %1064 = vector.broadcast %1057 : vector<1x1xf32> to vector<16x16xf32>
    %1065 = arith.mulf %1064, %1063 : vector<16x16xf32>
    %1066 = arith.addf %1056, %1065 : vector<16x16xf32>
    %1067 = vector.extract_strided_slice %891 {offsets = [2, 2], sizes = [1, 1], strides = [1, 1]} : vector<8x4xf32> to vector<1x1xf32>
    %1068 = vector.extract_strided_slice %1035 {offsets = [0, 2], sizes = [16, 1], strides = [1, 1]} : vector<16x4xf32> to vector<16x1xf32>
    %1069 = vector.extract_strided_slice %1036 {offsets = [2, 0], sizes = [1, 16], strides = [1, 1]} : vector<4x16xf32> to vector<1x16xf32>
    %1070 = vector.broadcast %1068 : vector<16x1xf32> to vector<16x16xf32>
    %1071 = vector.broadcast %1069 : vector<1x16xf32> to vector<16x16xf32>
    %1072 = arith.addf %1070, %1071 : vector<16x16xf32>
    %1073 = math.absf %1072 : vector<16x16xf32>
    %1074 = vector.broadcast %1067 : vector<1x1xf32> to vector<16x16xf32>
    %1075 = arith.mulf %1074, %1073 : vector<16x16xf32>
    %1076 = arith.addf %1066, %1075 : vector<16x16xf32>
    %1077 = vector.extract_strided_slice %891 {offsets = [2, 3], sizes = [1, 1], strides = [1, 1]} : vector<8x4xf32> to vector<1x1xf32>
    %1078 = vector.extract_strided_slice %1035 {offsets = [0, 3], sizes = [16, 1], strides = [1, 1]} : vector<16x4xf32> to vector<16x1xf32>
    %1079 = vector.extract_strided_slice %1036 {offsets = [3, 0], sizes = [1, 16], strides = [1, 1]} : vector<4x16xf32> to vector<1x16xf32>
    %1080 = vector.broadcast %1078 : vector<16x1xf32> to vector<16x16xf32>
    %1081 = vector.broadcast %1079 : vector<1x16xf32> to vector<16x16xf32>
    %1082 = arith.addf %1080, %1081 : vector<16x16xf32>
    %1083 = math.absf %1082 : vector<16x16xf32>
    %1084 = vector.broadcast %1077 : vector<1x1xf32> to vector<16x16xf32>
    %1085 = arith.mulf %1084, %1083 : vector<16x16xf32>
    %1086 = arith.addf %1076, %1085 : vector<16x16xf32>
    %cst_85 = arith.constant dense<0xFF800000> : vector<16xf32>
    %1087 = vector.multi_reduction <maximumf>, %1086, %cst_85 [1] : vector<16x16xf32> to vector<16xf32>
    %1088 = vector.shape_cast %1087 : vector<16xf32> to vector<16x1xf32>
    %1089 = vector.broadcast %1088 : vector<16x1xf32> to vector<16x16xf32>
    %1090 = arith.subf %1086, %1089 : vector<16x16xf32>
    %1091 = math.exp %1090 : vector<16x16xf32>
    %cst_86 = arith.constant dense<0.000000e+00> : vector<16xf32>
    %1092 = vector.multi_reduction <add>, %1091, %cst_86 [1] : vector<16x16xf32> to vector<16xf32>
    %1093 = vector.shape_cast %1092 : vector<16xf32> to vector<16x1xf32>
    %1094 = tpu.reciprocal %1093 {approx = true} : vector<16x1xf32> -> vector<16x1xf32>
    %1095 = vector.broadcast %1094 : vector<16x1xf32> to vector<16x16xf32>
    %1096 = arith.mulf %1091, %1095 : vector<16x16xf32>
    %1097 = arith.truncf %1096 : vector<16x16xf32> to vector<16x16xbf16>
    %1098 = arith.truncf %1034 : vector<16x4xf32> to vector<16x4xbf16>
    %cst_87 = arith.constant dense<0.000000e+00> : vector<16x4xf32>
    %1099 = tpu.matmul %1097, %1098, %cst_87 {dimension_numbers = #tpu.dot_dimension_numbers<[1], [0], [0], [1], [0, 0, 1, 1], [], []>} : vector<16x16xbf16>, vector<16x4xbf16>, vector<16x4xf32> -> vector<16x4xf32>
    %1100 = arith.addf %1033, %1099 : vector<16x4xf32>
    %1101 = vector.extract_strided_slice %896 {offsets = [0, 12], sizes = [16, 4], strides = [1, 1]} : vector<16x32xf32> to vector<16x4xf32>
    %1102 = vector.extract_strided_slice %897 {offsets = [0, 12], sizes = [16, 4], strides = [1, 1]} : vector<16x32xf32> to vector<16x4xf32>
    %1103 = vector.extract_strided_slice %898 {offsets = [12, 0], sizes = [4, 16], strides = [1, 1]} : vector<32x16xf32> to vector<4x16xf32>
    %1104 = vector.extract_strided_slice %890 {offsets = [3, 0], sizes = [1, 4], strides = [1, 1]} : vector<8x4xf32> to vector<1x4xf32>
    %1105 = vector.broadcast %1104 : vector<1x4xf32> to vector<16x4xf32>
    %1106 = arith.mulf %1102, %1105 : vector<16x4xf32>
    %cst_88 = arith.constant dense<0.000000e+00> : vector<16xf32>
    %1107 = vector.multi_reduction <add>, %1106, %cst_88 [1] : vector<16x4xf32> to vector<16xf32>
    %1108 = vector.shape_cast %1107 : vector<16xf32> to vector<16x1xf32>
    %cst_89 = arith.constant dense<0.000000e+00> : vector<1x16xf32>
    %1109 = tpu.matmul %1104, %1103, %cst_89 {dimension_numbers = #tpu.dot_dimension_numbers<[1], [0], [0], [1], [0, 0, 1, 1], [], []>} : vector<1x4xf32>, vector<4x16xf32>, vector<1x16xf32> -> vector<1x16xf32>
    %1110 = vector.broadcast %1108 : vector<16x1xf32> to vector<16x16xf32>
    %1111 = arith.addf %6, %1110 : vector<16x16xf32>
    %1112 = vector.broadcast %1109 : vector<1x16xf32> to vector<16x16xf32>
    %1113 = arith.addf %1111, %1112 : vector<16x16xf32>
    %1114 = vector.extract_strided_slice %891 {offsets = [3, 0], sizes = [1, 1], strides = [1, 1]} : vector<8x4xf32> to vector<1x1xf32>
    %1115 = vector.extract_strided_slice %1102 {offsets = [0, 0], sizes = [16, 1], strides = [1, 1]} : vector<16x4xf32> to vector<16x1xf32>
    %1116 = vector.extract_strided_slice %1103 {offsets = [0, 0], sizes = [1, 16], strides = [1, 1]} : vector<4x16xf32> to vector<1x16xf32>
    %1117 = vector.broadcast %1115 : vector<16x1xf32> to vector<16x16xf32>
    %1118 = vector.broadcast %1116 : vector<1x16xf32> to vector<16x16xf32>
    %1119 = arith.addf %1117, %1118 : vector<16x16xf32>
    %1120 = math.absf %1119 : vector<16x16xf32>
    %1121 = vector.broadcast %1114 : vector<1x1xf32> to vector<16x16xf32>
    %1122 = arith.mulf %1121, %1120 : vector<16x16xf32>
    %1123 = arith.addf %1113, %1122 : vector<16x16xf32>
    %1124 = vector.extract_strided_slice %891 {offsets = [3, 1], sizes = [1, 1], strides = [1, 1]} : vector<8x4xf32> to vector<1x1xf32>
    %1125 = vector.extract_strided_slice %1102 {offsets = [0, 1], sizes = [16, 1], strides = [1, 1]} : vector<16x4xf32> to vector<16x1xf32>
    %1126 = vector.extract_strided_slice %1103 {offsets = [1, 0], sizes = [1, 16], strides = [1, 1]} : vector<4x16xf32> to vector<1x16xf32>
    %1127 = vector.broadcast %1125 : vector<16x1xf32> to vector<16x16xf32>
    %1128 = vector.broadcast %1126 : vector<1x16xf32> to vector<16x16xf32>
    %1129 = arith.addf %1127, %1128 : vector<16x16xf32>
    %1130 = math.absf %1129 : vector<16x16xf32>
    %1131 = vector.broadcast %1124 : vector<1x1xf32> to vector<16x16xf32>
    %1132 = arith.mulf %1131, %1130 : vector<16x16xf32>
    %1133 = arith.addf %1123, %1132 : vector<16x16xf32>
    %1134 = vector.extract_strided_slice %891 {offsets = [3, 2], sizes = [1, 1], strides = [1, 1]} : vector<8x4xf32> to vector<1x1xf32>
    %1135 = vector.extract_strided_slice %1102 {offsets = [0, 2], sizes = [16, 1], strides = [1, 1]} : vector<16x4xf32> to vector<16x1xf32>
    %1136 = vector.extract_strided_slice %1103 {offsets = [2, 0], sizes = [1, 16], strides = [1, 1]} : vector<4x16xf32> to vector<1x16xf32>
    %1137 = vector.broadcast %1135 : vector<16x1xf32> to vector<16x16xf32>
    %1138 = vector.broadcast %1136 : vector<1x16xf32> to vector<16x16xf32>
    %1139 = arith.addf %1137, %1138 : vector<16x16xf32>
    %1140 = math.absf %1139 : vector<16x16xf32>
    %1141 = vector.broadcast %1134 : vector<1x1xf32> to vector<16x16xf32>
    %1142 = arith.mulf %1141, %1140 : vector<16x16xf32>
    %1143 = arith.addf %1133, %1142 : vector<16x16xf32>
    %1144 = vector.extract_strided_slice %891 {offsets = [3, 3], sizes = [1, 1], strides = [1, 1]} : vector<8x4xf32> to vector<1x1xf32>
    %1145 = vector.extract_strided_slice %1102 {offsets = [0, 3], sizes = [16, 1], strides = [1, 1]} : vector<16x4xf32> to vector<16x1xf32>
    %1146 = vector.extract_strided_slice %1103 {offsets = [3, 0], sizes = [1, 16], strides = [1, 1]} : vector<4x16xf32> to vector<1x16xf32>
    %1147 = vector.broadcast %1145 : vector<16x1xf32> to vector<16x16xf32>
    %1148 = vector.broadcast %1146 : vector<1x16xf32> to vector<16x16xf32>
    %1149 = arith.addf %1147, %1148 : vector<16x16xf32>
    %1150 = math.absf %1149 : vector<16x16xf32>
    %1151 = vector.broadcast %1144 : vector<1x1xf32> to vector<16x16xf32>
    %1152 = arith.mulf %1151, %1150 : vector<16x16xf32>
    %1153 = arith.addf %1143, %1152 : vector<16x16xf32>
    %cst_90 = arith.constant dense<0xFF800000> : vector<16xf32>
    %1154 = vector.multi_reduction <maximumf>, %1153, %cst_90 [1] : vector<16x16xf32> to vector<16xf32>
    %1155 = vector.shape_cast %1154 : vector<16xf32> to vector<16x1xf32>
    %1156 = vector.broadcast %1155 : vector<16x1xf32> to vector<16x16xf32>
    %1157 = arith.subf %1153, %1156 : vector<16x16xf32>
    %1158 = math.exp %1157 : vector<16x16xf32>
    %cst_91 = arith.constant dense<0.000000e+00> : vector<16xf32>
    %1159 = vector.multi_reduction <add>, %1158, %cst_91 [1] : vector<16x16xf32> to vector<16xf32>
    %1160 = vector.shape_cast %1159 : vector<16xf32> to vector<16x1xf32>
    %1161 = tpu.reciprocal %1160 {approx = true} : vector<16x1xf32> -> vector<16x1xf32>
    %1162 = vector.broadcast %1161 : vector<16x1xf32> to vector<16x16xf32>
    %1163 = arith.mulf %1158, %1162 : vector<16x16xf32>
    %1164 = arith.truncf %1163 : vector<16x16xf32> to vector<16x16xbf16>
    %1165 = arith.truncf %1101 : vector<16x4xf32> to vector<16x4xbf16>
    %cst_92 = arith.constant dense<0.000000e+00> : vector<16x4xf32>
    %1166 = tpu.matmul %1164, %1165, %cst_92 {dimension_numbers = #tpu.dot_dimension_numbers<[1], [0], [0], [1], [0, 0, 1, 1], [], []>} : vector<16x16xbf16>, vector<16x4xbf16>, vector<16x4xf32> -> vector<16x4xf32>
    %1167 = arith.addf %1100, %1166 : vector<16x4xf32>
    %1168 = vector.extract_strided_slice %896 {offsets = [0, 16], sizes = [16, 4], strides = [1, 1]} : vector<16x32xf32> to vector<16x4xf32>
    %1169 = vector.extract_strided_slice %897 {offsets = [0, 16], sizes = [16, 4], strides = [1, 1]} : vector<16x32xf32> to vector<16x4xf32>
    %1170 = vector.extract_strided_slice %898 {offsets = [16, 0], sizes = [4, 16], strides = [1, 1]} : vector<32x16xf32> to vector<4x16xf32>
    %1171 = vector.extract_strided_slice %890 {offsets = [4, 0], sizes = [1, 4], strides = [1, 1]} : vector<8x4xf32> to vector<1x4xf32>
    %1172 = vector.broadcast %1171 : vector<1x4xf32> to vector<16x4xf32>
    %1173 = arith.mulf %1169, %1172 : vector<16x4xf32>
    %cst_93 = arith.constant dense<0.000000e+00> : vector<16xf32>
    %1174 = vector.multi_reduction <add>, %1173, %cst_93 [1] : vector<16x4xf32> to vector<16xf32>
    %1175 = vector.shape_cast %1174 : vector<16xf32> to vector<16x1xf32>
    %cst_94 = arith.constant dense<0.000000e+00> : vector<1x16xf32>
    %1176 = tpu.matmul %1171, %1170, %cst_94 {dimension_numbers = #tpu.dot_dimension_numbers<[1], [0], [0], [1], [0, 0, 1, 1], [], []>} : vector<1x4xf32>, vector<4x16xf32>, vector<1x16xf32> -> vector<1x16xf32>
    %1177 = vector.broadcast %1175 : vector<16x1xf32> to vector<16x16xf32>
    %1178 = arith.addf %6, %1177 : vector<16x16xf32>
    %1179 = vector.broadcast %1176 : vector<1x16xf32> to vector<16x16xf32>
    %1180 = arith.addf %1178, %1179 : vector<16x16xf32>
    %1181 = vector.extract_strided_slice %891 {offsets = [4, 0], sizes = [1, 1], strides = [1, 1]} : vector<8x4xf32> to vector<1x1xf32>
    %1182 = vector.extract_strided_slice %1169 {offsets = [0, 0], sizes = [16, 1], strides = [1, 1]} : vector<16x4xf32> to vector<16x1xf32>
    %1183 = vector.extract_strided_slice %1170 {offsets = [0, 0], sizes = [1, 16], strides = [1, 1]} : vector<4x16xf32> to vector<1x16xf32>
    %1184 = vector.broadcast %1182 : vector<16x1xf32> to vector<16x16xf32>
    %1185 = vector.broadcast %1183 : vector<1x16xf32> to vector<16x16xf32>
    %1186 = arith.addf %1184, %1185 : vector<16x16xf32>
    %1187 = math.absf %1186 : vector<16x16xf32>
    %1188 = vector.broadcast %1181 : vector<1x1xf32> to vector<16x16xf32>
    %1189 = arith.mulf %1188, %1187 : vector<16x16xf32>
    %1190 = arith.addf %1180, %1189 : vector<16x16xf32>
    %1191 = vector.extract_strided_slice %891 {offsets = [4, 1], sizes = [1, 1], strides = [1, 1]} : vector<8x4xf32> to vector<1x1xf32>
    %1192 = vector.extract_strided_slice %1169 {offsets = [0, 1], sizes = [16, 1], strides = [1, 1]} : vector<16x4xf32> to vector<16x1xf32>
    %1193 = vector.extract_strided_slice %1170 {offsets = [1, 0], sizes = [1, 16], strides = [1, 1]} : vector<4x16xf32> to vector<1x16xf32>
    %1194 = vector.broadcast %1192 : vector<16x1xf32> to vector<16x16xf32>
    %1195 = vector.broadcast %1193 : vector<1x16xf32> to vector<16x16xf32>
    %1196 = arith.addf %1194, %1195 : vector<16x16xf32>
    %1197 = math.absf %1196 : vector<16x16xf32>
    %1198 = vector.broadcast %1191 : vector<1x1xf32> to vector<16x16xf32>
    %1199 = arith.mulf %1198, %1197 : vector<16x16xf32>
    %1200 = arith.addf %1190, %1199 : vector<16x16xf32>
    %1201 = vector.extract_strided_slice %891 {offsets = [4, 2], sizes = [1, 1], strides = [1, 1]} : vector<8x4xf32> to vector<1x1xf32>
    %1202 = vector.extract_strided_slice %1169 {offsets = [0, 2], sizes = [16, 1], strides = [1, 1]} : vector<16x4xf32> to vector<16x1xf32>
    %1203 = vector.extract_strided_slice %1170 {offsets = [2, 0], sizes = [1, 16], strides = [1, 1]} : vector<4x16xf32> to vector<1x16xf32>
    %1204 = vector.broadcast %1202 : vector<16x1xf32> to vector<16x16xf32>
    %1205 = vector.broadcast %1203 : vector<1x16xf32> to vector<16x16xf32>
    %1206 = arith.addf %1204, %1205 : vector<16x16xf32>
    %1207 = math.absf %1206 : vector<16x16xf32>
    %1208 = vector.broadcast %1201 : vector<1x1xf32> to vector<16x16xf32>
    %1209 = arith.mulf %1208, %1207 : vector<16x16xf32>
    %1210 = arith.addf %1200, %1209 : vector<16x16xf32>
    %1211 = vector.extract_strided_slice %891 {offsets = [4, 3], sizes = [1, 1], strides = [1, 1]} : vector<8x4xf32> to vector<1x1xf32>
    %1212 = vector.extract_strided_slice %1169 {offsets = [0, 3], sizes = [16, 1], strides = [1, 1]} : vector<16x4xf32> to vector<16x1xf32>
    %1213 = vector.extract_strided_slice %1170 {offsets = [3, 0], sizes = [1, 16], strides = [1, 1]} : vector<4x16xf32> to vector<1x16xf32>
    %1214 = vector.broadcast %1212 : vector<16x1xf32> to vector<16x16xf32>
    %1215 = vector.broadcast %1213 : vector<1x16xf32> to vector<16x16xf32>
    %1216 = arith.addf %1214, %1215 : vector<16x16xf32>
    %1217 = math.absf %1216 : vector<16x16xf32>
    %1218 = vector.broadcast %1211 : vector<1x1xf32> to vector<16x16xf32>
    %1219 = arith.mulf %1218, %1217 : vector<16x16xf32>
    %1220 = arith.addf %1210, %1219 : vector<16x16xf32>
    %cst_95 = arith.constant dense<0xFF800000> : vector<16xf32>
    %1221 = vector.multi_reduction <maximumf>, %1220, %cst_95 [1] : vector<16x16xf32> to vector<16xf32>
    %1222 = vector.shape_cast %1221 : vector<16xf32> to vector<16x1xf32>
    %1223 = vector.broadcast %1222 : vector<16x1xf32> to vector<16x16xf32>
    %1224 = arith.subf %1220, %1223 : vector<16x16xf32>
    %1225 = math.exp %1224 : vector<16x16xf32>
    %cst_96 = arith.constant dense<0.000000e+00> : vector<16xf32>
    %1226 = vector.multi_reduction <add>, %1225, %cst_96 [1] : vector<16x16xf32> to vector<16xf32>
    %1227 = vector.shape_cast %1226 : vector<16xf32> to vector<16x1xf32>
    %1228 = tpu.reciprocal %1227 {approx = true} : vector<16x1xf32> -> vector<16x1xf32>
    %1229 = vector.broadcast %1228 : vector<16x1xf32> to vector<16x16xf32>
    %1230 = arith.mulf %1225, %1229 : vector<16x16xf32>
    %1231 = arith.truncf %1230 : vector<16x16xf32> to vector<16x16xbf16>
    %1232 = arith.truncf %1168 : vector<16x4xf32> to vector<16x4xbf16>
    %cst_97 = arith.constant dense<0.000000e+00> : vector<16x4xf32>
    %1233 = tpu.matmul %1231, %1232, %cst_97 {dimension_numbers = #tpu.dot_dimension_numbers<[1], [0], [0], [1], [0, 0, 1, 1], [], []>} : vector<16x16xbf16>, vector<16x4xbf16>, vector<16x4xf32> -> vector<16x4xf32>
    %1234 = arith.addf %1167, %1233 : vector<16x4xf32>
    %1235 = vector.extract_strided_slice %896 {offsets = [0, 20], sizes = [16, 4], strides = [1, 1]} : vector<16x32xf32> to vector<16x4xf32>
    %1236 = vector.extract_strided_slice %897 {offsets = [0, 20], sizes = [16, 4], strides = [1, 1]} : vector<16x32xf32> to vector<16x4xf32>
    %1237 = vector.extract_strided_slice %898 {offsets = [20, 0], sizes = [4, 16], strides = [1, 1]} : vector<32x16xf32> to vector<4x16xf32>
    %1238 = vector.extract_strided_slice %890 {offsets = [5, 0], sizes = [1, 4], strides = [1, 1]} : vector<8x4xf32> to vector<1x4xf32>
    %1239 = vector.broadcast %1238 : vector<1x4xf32> to vector<16x4xf32>
    %1240 = arith.mulf %1236, %1239 : vector<16x4xf32>
    %cst_98 = arith.constant dense<0.000000e+00> : vector<16xf32>
    %1241 = vector.multi_reduction <add>, %1240, %cst_98 [1] : vector<16x4xf32> to vector<16xf32>
    %1242 = vector.shape_cast %1241 : vector<16xf32> to vector<16x1xf32>
    %cst_99 = arith.constant dense<0.000000e+00> : vector<1x16xf32>
    %1243 = tpu.matmul %1238, %1237, %cst_99 {dimension_numbers = #tpu.dot_dimension_numbers<[1], [0], [0], [1], [0, 0, 1, 1], [], []>} : vector<1x4xf32>, vector<4x16xf32>, vector<1x16xf32> -> vector<1x16xf32>
    %1244 = vector.broadcast %1242 : vector<16x1xf32> to vector<16x16xf32>
    %1245 = arith.addf %6, %1244 : vector<16x16xf32>
    %1246 = vector.broadcast %1243 : vector<1x16xf32> to vector<16x16xf32>
    %1247 = arith.addf %1245, %1246 : vector<16x16xf32>
    %1248 = vector.extract_strided_slice %891 {offsets = [5, 0], sizes = [1, 1], strides = [1, 1]} : vector<8x4xf32> to vector<1x1xf32>
    %1249 = vector.extract_strided_slice %1236 {offsets = [0, 0], sizes = [16, 1], strides = [1, 1]} : vector<16x4xf32> to vector<16x1xf32>
    %1250 = vector.extract_strided_slice %1237 {offsets = [0, 0], sizes = [1, 16], strides = [1, 1]} : vector<4x16xf32> to vector<1x16xf32>
    %1251 = vector.broadcast %1249 : vector<16x1xf32> to vector<16x16xf32>
    %1252 = vector.broadcast %1250 : vector<1x16xf32> to vector<16x16xf32>
    %1253 = arith.addf %1251, %1252 : vector<16x16xf32>
    %1254 = math.absf %1253 : vector<16x16xf32>
    %1255 = vector.broadcast %1248 : vector<1x1xf32> to vector<16x16xf32>
    %1256 = arith.mulf %1255, %1254 : vector<16x16xf32>
    %1257 = arith.addf %1247, %1256 : vector<16x16xf32>
    %1258 = vector.extract_strided_slice %891 {offsets = [5, 1], sizes = [1, 1], strides = [1, 1]} : vector<8x4xf32> to vector<1x1xf32>
    %1259 = vector.extract_strided_slice %1236 {offsets = [0, 1], sizes = [16, 1], strides = [1, 1]} : vector<16x4xf32> to vector<16x1xf32>
    %1260 = vector.extract_strided_slice %1237 {offsets = [1, 0], sizes = [1, 16], strides = [1, 1]} : vector<4x16xf32> to vector<1x16xf32>
    %1261 = vector.broadcast %1259 : vector<16x1xf32> to vector<16x16xf32>
    %1262 = vector.broadcast %1260 : vector<1x16xf32> to vector<16x16xf32>
    %1263 = arith.addf %1261, %1262 : vector<16x16xf32>
    %1264 = math.absf %1263 : vector<16x16xf32>
    %1265 = vector.broadcast %1258 : vector<1x1xf32> to vector<16x16xf32>
    %1266 = arith.mulf %1265, %1264 : vector<16x16xf32>
    %1267 = arith.addf %1257, %1266 : vector<16x16xf32>
    %1268 = vector.extract_strided_slice %891 {offsets = [5, 2], sizes = [1, 1], strides = [1, 1]} : vector<8x4xf32> to vector<1x1xf32>
    %1269 = vector.extract_strided_slice %1236 {offsets = [0, 2], sizes = [16, 1], strides = [1, 1]} : vector<16x4xf32> to vector<16x1xf32>
    %1270 = vector.extract_strided_slice %1237 {offsets = [2, 0], sizes = [1, 16], strides = [1, 1]} : vector<4x16xf32> to vector<1x16xf32>
    %1271 = vector.broadcast %1269 : vector<16x1xf32> to vector<16x16xf32>
    %1272 = vector.broadcast %1270 : vector<1x16xf32> to vector<16x16xf32>
    %1273 = arith.addf %1271, %1272 : vector<16x16xf32>
    %1274 = math.absf %1273 : vector<16x16xf32>
    %1275 = vector.broadcast %1268 : vector<1x1xf32> to vector<16x16xf32>
    %1276 = arith.mulf %1275, %1274 : vector<16x16xf32>
    %1277 = arith.addf %1267, %1276 : vector<16x16xf32>
    %1278 = vector.extract_strided_slice %891 {offsets = [5, 3], sizes = [1, 1], strides = [1, 1]} : vector<8x4xf32> to vector<1x1xf32>
    %1279 = vector.extract_strided_slice %1236 {offsets = [0, 3], sizes = [16, 1], strides = [1, 1]} : vector<16x4xf32> to vector<16x1xf32>
    %1280 = vector.extract_strided_slice %1237 {offsets = [3, 0], sizes = [1, 16], strides = [1, 1]} : vector<4x16xf32> to vector<1x16xf32>
    %1281 = vector.broadcast %1279 : vector<16x1xf32> to vector<16x16xf32>
    %1282 = vector.broadcast %1280 : vector<1x16xf32> to vector<16x16xf32>
    %1283 = arith.addf %1281, %1282 : vector<16x16xf32>
    %1284 = math.absf %1283 : vector<16x16xf32>
    %1285 = vector.broadcast %1278 : vector<1x1xf32> to vector<16x16xf32>
    %1286 = arith.mulf %1285, %1284 : vector<16x16xf32>
    %1287 = arith.addf %1277, %1286 : vector<16x16xf32>
    %cst_100 = arith.constant dense<0xFF800000> : vector<16xf32>
    %1288 = vector.multi_reduction <maximumf>, %1287, %cst_100 [1] : vector<16x16xf32> to vector<16xf32>
    %1289 = vector.shape_cast %1288 : vector<16xf32> to vector<16x1xf32>
    %1290 = vector.broadcast %1289 : vector<16x1xf32> to vector<16x16xf32>
    %1291 = arith.subf %1287, %1290 : vector<16x16xf32>
    %1292 = math.exp %1291 : vector<16x16xf32>
    %cst_101 = arith.constant dense<0.000000e+00> : vector<16xf32>
    %1293 = vector.multi_reduction <add>, %1292, %cst_101 [1] : vector<16x16xf32> to vector<16xf32>
    %1294 = vector.shape_cast %1293 : vector<16xf32> to vector<16x1xf32>
    %1295 = tpu.reciprocal %1294 {approx = true} : vector<16x1xf32> -> vector<16x1xf32>
    %1296 = vector.broadcast %1295 : vector<16x1xf32> to vector<16x16xf32>
    %1297 = arith.mulf %1292, %1296 : vector<16x16xf32>
    %1298 = arith.truncf %1297 : vector<16x16xf32> to vector<16x16xbf16>
    %1299 = arith.truncf %1235 : vector<16x4xf32> to vector<16x4xbf16>
    %cst_102 = arith.constant dense<0.000000e+00> : vector<16x4xf32>
    %1300 = tpu.matmul %1298, %1299, %cst_102 {dimension_numbers = #tpu.dot_dimension_numbers<[1], [0], [0], [1], [0, 0, 1, 1], [], []>} : vector<16x16xbf16>, vector<16x4xbf16>, vector<16x4xf32> -> vector<16x4xf32>
    %1301 = arith.addf %1234, %1300 : vector<16x4xf32>
    %1302 = vector.extract_strided_slice %896 {offsets = [0, 24], sizes = [16, 4], strides = [1, 1]} : vector<16x32xf32> to vector<16x4xf32>
    %1303 = vector.extract_strided_slice %897 {offsets = [0, 24], sizes = [16, 4], strides = [1, 1]} : vector<16x32xf32> to vector<16x4xf32>
    %1304 = vector.extract_strided_slice %898 {offsets = [24, 0], sizes = [4, 16], strides = [1, 1]} : vector<32x16xf32> to vector<4x16xf32>
    %1305 = vector.extract_strided_slice %890 {offsets = [6, 0], sizes = [1, 4], strides = [1, 1]} : vector<8x4xf32> to vector<1x4xf32>
    %1306 = vector.broadcast %1305 : vector<1x4xf32> to vector<16x4xf32>
    %1307 = arith.mulf %1303, %1306 : vector<16x4xf32>
    %cst_103 = arith.constant dense<0.000000e+00> : vector<16xf32>
    %1308 = vector.multi_reduction <add>, %1307, %cst_103 [1] : vector<16x4xf32> to vector<16xf32>
    %1309 = vector.shape_cast %1308 : vector<16xf32> to vector<16x1xf32>
    %cst_104 = arith.constant dense<0.000000e+00> : vector<1x16xf32>
    %1310 = tpu.matmul %1305, %1304, %cst_104 {dimension_numbers = #tpu.dot_dimension_numbers<[1], [0], [0], [1], [0, 0, 1, 1], [], []>} : vector<1x4xf32>, vector<4x16xf32>, vector<1x16xf32> -> vector<1x16xf32>
    %1311 = vector.broadcast %1309 : vector<16x1xf32> to vector<16x16xf32>
    %1312 = arith.addf %6, %1311 : vector<16x16xf32>
    %1313 = vector.broadcast %1310 : vector<1x16xf32> to vector<16x16xf32>
    %1314 = arith.addf %1312, %1313 : vector<16x16xf32>
    %1315 = vector.extract_strided_slice %891 {offsets = [6, 0], sizes = [1, 1], strides = [1, 1]} : vector<8x4xf32> to vector<1x1xf32>
    %1316 = vector.extract_strided_slice %1303 {offsets = [0, 0], sizes = [16, 1], strides = [1, 1]} : vector<16x4xf32> to vector<16x1xf32>
    %1317 = vector.extract_strided_slice %1304 {offsets = [0, 0], sizes = [1, 16], strides = [1, 1]} : vector<4x16xf32> to vector<1x16xf32>
    %1318 = vector.broadcast %1316 : vector<16x1xf32> to vector<16x16xf32>
    %1319 = vector.broadcast %1317 : vector<1x16xf32> to vector<16x16xf32>
    %1320 = arith.addf %1318, %1319 : vector<16x16xf32>
    %1321 = math.absf %1320 : vector<16x16xf32>
    %1322 = vector.broadcast %1315 : vector<1x1xf32> to vector<16x16xf32>
    %1323 = arith.mulf %1322, %1321 : vector<16x16xf32>
    %1324 = arith.addf %1314, %1323 : vector<16x16xf32>
    %1325 = vector.extract_strided_slice %891 {offsets = [6, 1], sizes = [1, 1], strides = [1, 1]} : vector<8x4xf32> to vector<1x1xf32>
    %1326 = vector.extract_strided_slice %1303 {offsets = [0, 1], sizes = [16, 1], strides = [1, 1]} : vector<16x4xf32> to vector<16x1xf32>
    %1327 = vector.extract_strided_slice %1304 {offsets = [1, 0], sizes = [1, 16], strides = [1, 1]} : vector<4x16xf32> to vector<1x16xf32>
    %1328 = vector.broadcast %1326 : vector<16x1xf32> to vector<16x16xf32>
    %1329 = vector.broadcast %1327 : vector<1x16xf32> to vector<16x16xf32>
    %1330 = arith.addf %1328, %1329 : vector<16x16xf32>
    %1331 = math.absf %1330 : vector<16x16xf32>
    %1332 = vector.broadcast %1325 : vector<1x1xf32> to vector<16x16xf32>
    %1333 = arith.mulf %1332, %1331 : vector<16x16xf32>
    %1334 = arith.addf %1324, %1333 : vector<16x16xf32>
    %1335 = vector.extract_strided_slice %891 {offsets = [6, 2], sizes = [1, 1], strides = [1, 1]} : vector<8x4xf32> to vector<1x1xf32>
    %1336 = vector.extract_strided_slice %1303 {offsets = [0, 2], sizes = [16, 1], strides = [1, 1]} : vector<16x4xf32> to vector<16x1xf32>
    %1337 = vector.extract_strided_slice %1304 {offsets = [2, 0], sizes = [1, 16], strides = [1, 1]} : vector<4x16xf32> to vector<1x16xf32>
    %1338 = vector.broadcast %1336 : vector<16x1xf32> to vector<16x16xf32>
    %1339 = vector.broadcast %1337 : vector<1x16xf32> to vector<16x16xf32>
    %1340 = arith.addf %1338, %1339 : vector<16x16xf32>
    %1341 = math.absf %1340 : vector<16x16xf32>
    %1342 = vector.broadcast %1335 : vector<1x1xf32> to vector<16x16xf32>
    %1343 = arith.mulf %1342, %1341 : vector<16x16xf32>
    %1344 = arith.addf %1334, %1343 : vector<16x16xf32>
    %1345 = vector.extract_strided_slice %891 {offsets = [6, 3], sizes = [1, 1], strides = [1, 1]} : vector<8x4xf32> to vector<1x1xf32>
    %1346 = vector.extract_strided_slice %1303 {offsets = [0, 3], sizes = [16, 1], strides = [1, 1]} : vector<16x4xf32> to vector<16x1xf32>
    %1347 = vector.extract_strided_slice %1304 {offsets = [3, 0], sizes = [1, 16], strides = [1, 1]} : vector<4x16xf32> to vector<1x16xf32>
    %1348 = vector.broadcast %1346 : vector<16x1xf32> to vector<16x16xf32>
    %1349 = vector.broadcast %1347 : vector<1x16xf32> to vector<16x16xf32>
    %1350 = arith.addf %1348, %1349 : vector<16x16xf32>
    %1351 = math.absf %1350 : vector<16x16xf32>
    %1352 = vector.broadcast %1345 : vector<1x1xf32> to vector<16x16xf32>
    %1353 = arith.mulf %1352, %1351 : vector<16x16xf32>
    %1354 = arith.addf %1344, %1353 : vector<16x16xf32>
    %cst_105 = arith.constant dense<0xFF800000> : vector<16xf32>
    %1355 = vector.multi_reduction <maximumf>, %1354, %cst_105 [1] : vector<16x16xf32> to vector<16xf32>
    %1356 = vector.shape_cast %1355 : vector<16xf32> to vector<16x1xf32>
    %1357 = vector.broadcast %1356 : vector<16x1xf32> to vector<16x16xf32>
    %1358 = arith.subf %1354, %1357 : vector<16x16xf32>
    %1359 = math.exp %1358 : vector<16x16xf32>
    %cst_106 = arith.constant dense<0.000000e+00> : vector<16xf32>
    %1360 = vector.multi_reduction <add>, %1359, %cst_106 [1] : vector<16x16xf32> to vector<16xf32>
    %1361 = vector.shape_cast %1360 : vector<16xf32> to vector<16x1xf32>
    %1362 = tpu.reciprocal %1361 {approx = true} : vector<16x1xf32> -> vector<16x1xf32>
    %1363 = vector.broadcast %1362 : vector<16x1xf32> to vector<16x16xf32>
    %1364 = arith.mulf %1359, %1363 : vector<16x16xf32>
    %1365 = arith.truncf %1364 : vector<16x16xf32> to vector<16x16xbf16>
    %1366 = arith.truncf %1302 : vector<16x4xf32> to vector<16x4xbf16>
    %cst_107 = arith.constant dense<0.000000e+00> : vector<16x4xf32>
    %1367 = tpu.matmul %1365, %1366, %cst_107 {dimension_numbers = #tpu.dot_dimension_numbers<[1], [0], [0], [1], [0, 0, 1, 1], [], []>} : vector<16x16xbf16>, vector<16x4xbf16>, vector<16x4xf32> -> vector<16x4xf32>
    %1368 = arith.addf %1301, %1367 : vector<16x4xf32>
    %1369 = vector.extract_strided_slice %896 {offsets = [0, 28], sizes = [16, 4], strides = [1, 1]} : vector<16x32xf32> to vector<16x4xf32>
    %1370 = vector.extract_strided_slice %897 {offsets = [0, 28], sizes = [16, 4], strides = [1, 1]} : vector<16x32xf32> to vector<16x4xf32>
    %1371 = vector.extract_strided_slice %898 {offsets = [28, 0], sizes = [4, 16], strides = [1, 1]} : vector<32x16xf32> to vector<4x16xf32>
    %1372 = vector.extract_strided_slice %890 {offsets = [7, 0], sizes = [1, 4], strides = [1, 1]} : vector<8x4xf32> to vector<1x4xf32>
    %1373 = vector.broadcast %1372 : vector<1x4xf32> to vector<16x4xf32>
    %1374 = arith.mulf %1370, %1373 : vector<16x4xf32>
    %cst_108 = arith.constant dense<0.000000e+00> : vector<16xf32>
    %1375 = vector.multi_reduction <add>, %1374, %cst_108 [1] : vector<16x4xf32> to vector<16xf32>
    %1376 = vector.shape_cast %1375 : vector<16xf32> to vector<16x1xf32>
    %cst_109 = arith.constant dense<0.000000e+00> : vector<1x16xf32>
    %1377 = tpu.matmul %1372, %1371, %cst_109 {dimension_numbers = #tpu.dot_dimension_numbers<[1], [0], [0], [1], [0, 0, 1, 1], [], []>} : vector<1x4xf32>, vector<4x16xf32>, vector<1x16xf32> -> vector<1x16xf32>
    %1378 = vector.broadcast %1376 : vector<16x1xf32> to vector<16x16xf32>
    %1379 = arith.addf %6, %1378 : vector<16x16xf32>
    %1380 = vector.broadcast %1377 : vector<1x16xf32> to vector<16x16xf32>
    %1381 = arith.addf %1379, %1380 : vector<16x16xf32>
    %1382 = vector.extract_strided_slice %891 {offsets = [7, 0], sizes = [1, 1], strides = [1, 1]} : vector<8x4xf32> to vector<1x1xf32>
    %1383 = vector.extract_strided_slice %1370 {offsets = [0, 0], sizes = [16, 1], strides = [1, 1]} : vector<16x4xf32> to vector<16x1xf32>
    %1384 = vector.extract_strided_slice %1371 {offsets = [0, 0], sizes = [1, 16], strides = [1, 1]} : vector<4x16xf32> to vector<1x16xf32>
    %1385 = vector.broadcast %1383 : vector<16x1xf32> to vector<16x16xf32>
    %1386 = vector.broadcast %1384 : vector<1x16xf32> to vector<16x16xf32>
    %1387 = arith.addf %1385, %1386 : vector<16x16xf32>
    %1388 = math.absf %1387 : vector<16x16xf32>
    %1389 = vector.broadcast %1382 : vector<1x1xf32> to vector<16x16xf32>
    %1390 = arith.mulf %1389, %1388 : vector<16x16xf32>
    %1391 = arith.addf %1381, %1390 : vector<16x16xf32>
    %1392 = vector.extract_strided_slice %891 {offsets = [7, 1], sizes = [1, 1], strides = [1, 1]} : vector<8x4xf32> to vector<1x1xf32>
    %1393 = vector.extract_strided_slice %1370 {offsets = [0, 1], sizes = [16, 1], strides = [1, 1]} : vector<16x4xf32> to vector<16x1xf32>
    %1394 = vector.extract_strided_slice %1371 {offsets = [1, 0], sizes = [1, 16], strides = [1, 1]} : vector<4x16xf32> to vector<1x16xf32>
    %1395 = vector.broadcast %1393 : vector<16x1xf32> to vector<16x16xf32>
    %1396 = vector.broadcast %1394 : vector<1x16xf32> to vector<16x16xf32>
    %1397 = arith.addf %1395, %1396 : vector<16x16xf32>
    %1398 = math.absf %1397 : vector<16x16xf32>
    %1399 = vector.broadcast %1392 : vector<1x1xf32> to vector<16x16xf32>
    %1400 = arith.mulf %1399, %1398 : vector<16x16xf32>
    %1401 = arith.addf %1391, %1400 : vector<16x16xf32>
    %1402 = vector.extract_strided_slice %891 {offsets = [7, 2], sizes = [1, 1], strides = [1, 1]} : vector<8x4xf32> to vector<1x1xf32>
    %1403 = vector.extract_strided_slice %1370 {offsets = [0, 2], sizes = [16, 1], strides = [1, 1]} : vector<16x4xf32> to vector<16x1xf32>
    %1404 = vector.extract_strided_slice %1371 {offsets = [2, 0], sizes = [1, 16], strides = [1, 1]} : vector<4x16xf32> to vector<1x16xf32>
    %1405 = vector.broadcast %1403 : vector<16x1xf32> to vector<16x16xf32>
    %1406 = vector.broadcast %1404 : vector<1x16xf32> to vector<16x16xf32>
    %1407 = arith.addf %1405, %1406 : vector<16x16xf32>
    %1408 = math.absf %1407 : vector<16x16xf32>
    %1409 = vector.broadcast %1402 : vector<1x1xf32> to vector<16x16xf32>
    %1410 = arith.mulf %1409, %1408 : vector<16x16xf32>
    %1411 = arith.addf %1401, %1410 : vector<16x16xf32>
    %1412 = vector.extract_strided_slice %891 {offsets = [7, 3], sizes = [1, 1], strides = [1, 1]} : vector<8x4xf32> to vector<1x1xf32>
    %1413 = vector.extract_strided_slice %1370 {offsets = [0, 3], sizes = [16, 1], strides = [1, 1]} : vector<16x4xf32> to vector<16x1xf32>
    %1414 = vector.extract_strided_slice %1371 {offsets = [3, 0], sizes = [1, 16], strides = [1, 1]} : vector<4x16xf32> to vector<1x16xf32>
    %1415 = vector.broadcast %1413 : vector<16x1xf32> to vector<16x16xf32>
    %1416 = vector.broadcast %1414 : vector<1x16xf32> to vector<16x16xf32>
    %1417 = arith.addf %1415, %1416 : vector<16x16xf32>
    %1418 = math.absf %1417 : vector<16x16xf32>
    %1419 = vector.broadcast %1412 : vector<1x1xf32> to vector<16x16xf32>
    %1420 = arith.mulf %1419, %1418 : vector<16x16xf32>
    %1421 = arith.addf %1411, %1420 : vector<16x16xf32>
    %cst_110 = arith.constant dense<0xFF800000> : vector<16xf32>
    %1422 = vector.multi_reduction <maximumf>, %1421, %cst_110 [1] : vector<16x16xf32> to vector<16xf32>
    %1423 = vector.shape_cast %1422 : vector<16xf32> to vector<16x1xf32>
    %1424 = vector.broadcast %1423 : vector<16x1xf32> to vector<16x16xf32>
    %1425 = arith.subf %1421, %1424 : vector<16x16xf32>
    %1426 = math.exp %1425 : vector<16x16xf32>
    %cst_111 = arith.constant dense<0.000000e+00> : vector<16xf32>
    %1427 = vector.multi_reduction <add>, %1426, %cst_111 [1] : vector<16x16xf32> to vector<16xf32>
    %1428 = vector.shape_cast %1427 : vector<16xf32> to vector<16x1xf32>
    %1429 = tpu.reciprocal %1428 {approx = true} : vector<16x1xf32> -> vector<16x1xf32>
    %1430 = vector.broadcast %1429 : vector<16x1xf32> to vector<16x16xf32>
    %1431 = arith.mulf %1426, %1430 : vector<16x16xf32>
    %1432 = arith.truncf %1431 : vector<16x16xf32> to vector<16x16xbf16>
    %1433 = arith.truncf %1369 : vector<16x4xf32> to vector<16x4xbf16>
    %cst_112 = arith.constant dense<0.000000e+00> : vector<16x4xf32>
    %1434 = tpu.matmul %1432, %1433, %cst_112 {dimension_numbers = #tpu.dot_dimension_numbers<[1], [0], [0], [1], [0, 0, 1, 1], [], []>} : vector<16x16xbf16>, vector<16x4xbf16>, vector<16x4xf32> -> vector<16x4xf32>
    %1435 = arith.addf %1368, %1434 : vector<16x4xf32>
    %cst_113 = arith.constant 1.250000e-01 : f32
    %1436 = vector.broadcast %cst_113 : f32 to vector<16x4xf32>
    %1437 = arith.mulf %1435, %1436 : vector<16x4xf32>
    %c0_114 = arith.constant 0 : index
    %c0_115 = arith.constant 0 : index
    %1438 = vector.load %arg11[%c0_114, %c0_115] : memref<1x4xf32, #tpu.memory_space<vmem>>, vector<1x4xf32>
    %1439 = vector.broadcast %1438 : vector<1x4xf32> to vector<16x4xf32>
    %1440 = arith.addf %1437, %1439 : vector<16x4xf32>
    %1441 = arith.addf %1440, %12 : vector<16x4xf32>
    %c0_116 = arith.constant 0 : index
    %c0_117 = arith.constant 0 : index
    %1442 = vector.load %arg14[%c0_116, %c0_117] : memref<16x4xf32, #tpu.memory_space<vmem>>, vector<16x4xf32>
    tpu.vector_store %arg14[%c0_116, %c0_117], %1441 {strides = array<i32>} : memref<16x4xf32, #tpu.memory_space<vmem>>, vector<16x4xf32>,
    return
  }
}

</mosaic_0001>

<llo_original>
// kernel: gat_forward.1
$region0: #{gat_forward.1}
  #allocation0 [shape = 'u32[]', space=smem, size = 0x4, offset = 0x4, fixed_abs, tag = 'smem constant byte address 0x4 - core index']
  #allocation1 [shape = 'u32[144,128]{1,0:T(1,128)}', space=vmem, size = 0x12000, scoped, tag = 'internal scratch']
  %s0 = inlined_call_operand.vmem [shape: f32[16,8], index: 0, kind: input, shape index: {}]
  %s1 = inlined_call_operand.vmem [shape: bf16[16,16], index: 1, kind: input, shape index: {}]
  %s2 = inlined_call_operand.vmem [shape: bf16[8,128], index: 2, kind: input, shape index: {}]
  %s3 = inlined_call_operand.vmem [shape: f32[1,128], index: 3, kind: input, shape index: {}]
  %s4 = inlined_call_operand.vmem [shape: f32[8,8], index: 4, kind: input, shape index: {}]
  %s5 = inlined_call_operand.vmem [shape: f32[8,8], index: 5, kind: input, shape index: {}]
  %s6 = inlined_call_operand.vmem [shape: f32[1,8], index: 6, kind: input, shape index: {}]
  %s7 = inlined_call_operand.vmem [shape: bf16[8,64], index: 7, kind: input, shape index: {}]
  %s8 = inlined_call_operand.vmem [shape: f32[1,64], index: 8, kind: input, shape index: {}]
  %s9 = inlined_call_operand.vmem [shape: f32[8,4], index: 9, kind: input, shape index: {}]
  %s10 = inlined_call_operand.vmem [shape: f32[8,4], index: 10, kind: input, shape index: {}]
  %s11 = inlined_call_operand.vmem [shape: f32[1,4], index: 11, kind: input, shape index: {}]
  %s12 = inlined_call_operand.vmem [shape: bf16[8,4], index: 12, kind: input, shape index: {}]
  %s13 = inlined_call_operand.vmem [shape: f32[1,4], index: 13, kind: input, shape index: {}]
  %s14 = inlined_call_operand.vmem [shape: f32[16,4], index: 14, kind: output, shape index: {}]
  %s15 = sld [smem:[#allocation0]]
  $region66: #{gat_forward.1} parent=0
    _
  %s17 = ssub.s32 1, %s15
  %s18 = scalar_select 0, %s17, %s15
  // Predicated region
  $region2: #{gat_forward.1} parent=0 // pred_check
    _
  $region3: #{gat_forward.1} parent=0 // pred_check_branch
    %20 = sbr.rel (0) target = $region5
  $region4: #{gat_forward.1} parent=0 // pred_region
    _
  $region5: #{gat_forward.1} parent=0 // pred_fallthru
    _
  // Predicated region
  $region6: #{gat_forward.1} parent=0 // pred_check
    _
  $region7: #{gat_forward.1} parent=0 // pred_check_branch
    %22 = sbr.rel (0) target = $region9
  $region8: #{gat_forward.1} parent=0 // pred_region
    _
  $region9: #{gat_forward.1} parent=0 // pred_fallthru
    _
  // Predicated region
  $region10: #{gat_forward.1} parent=0 // pred_check
    _
  $region11: #{gat_forward.1} parent=0 // pred_check_branch
    %24 = sbr.rel (0) target = $region13
  $region12: #{gat_forward.1} parent=0 // pred_region
    _
  $region13: #{gat_forward.1} parent=0 // pred_fallthru
    _
  // Predicated region
  $region14: #{gat_forward.1} parent=0 // pred_check
    _
  $region15: #{gat_forward.1} parent=0 // pred_check_branch
    %26 = sbr.rel (0) target = $region17
  $region16: #{gat_forward.1} parent=0 // pred_region
    _
  $region17: #{gat_forward.1} parent=0 // pred_fallthru
    _
  // Predicated region
  $region18: #{gat_forward.1} parent=0 // pred_check
    _
  $region19: #{gat_forward.1} parent=0 // pred_check_branch
    %28 = sbr.rel (0) target = $region21
  $region20: #{gat_forward.1} parent=0 // pred_region
    _
  $region21: #{gat_forward.1} parent=0 // pred_fallthru
    _
  // Predicated region
  $region22: #{gat_forward.1} parent=0 // pred_check
    _
  $region23: #{gat_forward.1} parent=0 // pred_check_branch
    %30 = sbr.rel (0) target = $region25
  $region24: #{gat_forward.1} parent=0 // pred_region
    _
  $region25: #{gat_forward.1} parent=0 // pred_fallthru
    _
  // Predicated region
  $region26: #{gat_forward.1} parent=0 // pred_check
    _
  $region27: #{gat_forward.1} parent=0 // pred_check_branch
    %32 = sbr.rel (0) target = $region29
  $region28: #{gat_forward.1} parent=0 // pred_region
    _
  $region29: #{gat_forward.1} parent=0 // pred_fallthru
    _
  // Predicated region
  $region30: #{gat_forward.1} parent=0 // pred_check
    _
  $region31: #{gat_forward.1} parent=0 // pred_check_branch
    %34 = sbr.rel (0) target = $region33
  $region32: #{gat_forward.1} parent=0 // pred_region
    _
  $region33: #{gat_forward.1} parent=0 // pred_fallthru
    _
  // Predicated region
  $region34: #{gat_forward.1} parent=0 // pred_check
    _
  $region35: #{gat_forward.1} parent=0 // pred_check_branch
    %36 = sbr.rel (0) target = $region37
  $region36: #{gat_forward.1} parent=0 // pred_region
    _
  $region37: #{gat_forward.1} parent=0 // pred_fallthru
    _
  // Predicated region
  $region38: #{gat_forward.1} parent=0 // pred_check
    _
  $region39: #{gat_forward.1} parent=0 // pred_check_branch
    %38 = sbr.rel (0) target = $region41
  $region40: #{gat_forward.1} parent=0 // pred_region
    _
  $region41: #{gat_forward.1} parent=0 // pred_fallthru
    _
  // Predicated region
  $region42: #{gat_forward.1} parent=0 // pred_check
    _
  $region43: #{gat_forward.1} parent=0 // pred_check_branch
    %40 = sbr.rel (0) target = $region45
  $region44: #{gat_forward.1} parent=0 // pred_region
    _
  $region45: #{gat_forward.1} parent=0 // pred_fallthru
    _
  // Predicated region
  $region46: #{gat_forward.1} parent=0 // pred_check
    _
  $region47: #{gat_forward.1} parent=0 // pred_check_branch
    %42 = sbr.rel (0) target = $region49
  $region48: #{gat_forward.1} parent=0 // pred_region
    _
  $region49: #{gat_forward.1} parent=0 // pred_fallthru
    _
  // Predicated region
  $region50: #{gat_forward.1} parent=0 // pred_check
    _
  $region51: #{gat_forward.1} parent=0 // pred_check_branch
    %44 = sbr.rel (0) target = $region53
  $region52: #{gat_forward.1} parent=0 // pred_region
    _
  $region53: #{gat_forward.1} parent=0 // pred_fallthru
    _
  // Predicated region
  $region54: #{gat_forward.1} parent=0 // pred_check
    _
  $region55: #{gat_forward.1} parent=0 // pred_check_branch
    %46 = sbr.rel (0) target = $region57
  $region56: #{gat_forward.1} parent=0 // pred_region
    _
  $region57: #{gat_forward.1} parent=0 // pred_fallthru
    _
  %v48 = vld [vmem:[%s0] sm:$0xff]
  %v49 = vld [vmem:[%s0 + $0x8] sm:$0xff]
  %v50 = vld [vmem:[%s1] sm:$0xf]
  %v51 = vld [vmem:[%s1 + $0x4] sm:$0xf]
  %v52 = vunpack.c.l.bf16 %v50
  %v53 = vunpack.c.l.bf16 %v51
  %v54 = vsub.f32 %v52, 1.0
  %v55 = vsub.f32 %v53, 1.0
  %v56 = vmul.f32 %v54, 1e+30
  %v57 = vmul.f32 %v55, 1e+30
  %v58 = vpack.c.bf16 %v49, %v48
  %v59 = vld [vmem:[%s12] sm:$0xf]
  %v60 = vld [vmem:[%s13] sm:$0x1]
  %v62 = vlaneseq
  %v63 = vshrl.u32 %v62, 7
  %v64 = vsub.s32 0, %v63
  %v65 = vrot.slane %v60, %v64
  %vm67 = vcmask 64512
  %v69 = vsel %vm67, %v58, 0
  %vm71 = vcmask 1043456
  %v73 = vsel %vm71, %v59, 0
  %75 = vmatprep.subr.bf16.mxu0 0
  %76 = vmatpush1.bf16.msra.mxu0 %v73
  %77 = vmatprep.subr.bf16.mxu0 0
  %78 = vmatpush1.bf16.msra.mxu0 0
  %79 = vmatprep.subr.bf16.mxu0 0
  %80 = vmatpush1.bf16.msra.mxu0 0
  %81 = vmatprep.subr.bf16.mxu0 0
  %82 = vmatpush1.bf16.msra.mxu0 0
  %83 = vmatprep.subr.bf16.mxu0 0
  %84 = vmatpush1.bf16.msra.mxu0 0
  %85 = vmatprep.subr.bf16.mxu0 0
  %86 = vmatpush1.bf16.msra.mxu0 0
  %87 = vmatprep.subr.bf16.mxu0 0
  %88 = vmatpush1.bf16.msra.mxu0 0
  %89 = vmatprep.subr.bf16.mxu0 0
  %90 = vmatpush1.bf16.msra.mxu0 0
  %91 = vmatprep.subr.bf16.mxu0 0
  %92 = vmatpush1.bf16.msra.mxu0 0
  %93 = vmatprep.subr.bf16.mxu0 0
  %94 = vmatpush1.bf16.msra.mxu0 0
  %95 = vmatprep.subr.bf16.mxu0 0
  %96 = vmatpush1.bf16.msra.mxu0 0
  %97 = vmatprep.subr.bf16.mxu0 0
  %98 = vmatpush1.bf16.msra.mxu0 0
  %99 = vmatprep.subr.bf16.mxu0 0
  %100 = vmatpush1.bf16.msra.mxu0 0
  %101 = vmatprep.subr.bf16.mxu0 0
  %102 = vmatpush1.bf16.msra.mxu0 0
  %103 = vmatprep.subr.bf16.mxu0 0
  %104 = vmatpush1.bf16.msra.mxu0 0
  %105 = vmatprep.subr.bf16.mxu0 0
  %106 = vmatpush1.bf16.msra.mxu0 0
  %107 = vmatprep.mubr.bf16.mxu0 0
  %108 = vmatmul.mubr.bf16.gmra.mrb[0].mxu0 %v69
  %v109 = vpop.f32.mrb[0].mxu0
  %v110 = vadd.f32 %v65, %v109
  %v111 = vpop.f32.mrb[0].mxu0
  %v112 = vpop.f32.mrb[0].mxu0
  %v113 = vadd.f32 %v65, %v112
  %v114 = vpop.f32.mrb[0].mxu0
  %115 = vdwg.mxu0
  %v116 = vld [vmem:[%s2] sm:$0xf]
  %v117 = vld [vmem:[%s3] sm:$0x1]
  %v118 = vld [vmem:[%s4] sm:$0xff]
  %v119 = vld [vmem:[%s5] sm:$0xff]
  %v121 = vlaneseq
  %v122 = vshrl.u32 %v121, 7
  %v123 = vsub.s32 0, %v122
  %v124 = vrot.slane %v117, %v123
  %v127 = vsel %vm71, %v116, 0
  %129 = vmatprep.subr.bf16.mxu0 0
  %130 = vmatpush1.bf16.msra.mxu0 %v127
  %131 = vmatprep.subr.bf16.mxu0 0
  %132 = vmatpush1.bf16.msra.mxu0 0
  %133 = vmatprep.subr.bf16.mxu0 0
  %134 = vmatpush1.bf16.msra.mxu0 0
  %135 = vmatprep.subr.bf16.mxu0 0
  %136 = vmatpush1.bf16.msra.mxu0 0
  %137 = vmatprep.subr.bf16.mxu0 0
  %138 = vmatpush1.bf16.msra.mxu0 0
  %139 = vmatprep.subr.bf16.mxu0 0
  %140 = vmatpush1.bf16.msra.mxu0 0
  %141 = vmatprep.subr.bf16.mxu0 0
  %142 = vmatpush1.bf16.msra.mxu0 0
  %143 = vmatprep.subr.bf16.mxu0 0
  %144 = vmatpush1.bf16.msra.mxu0 0
  %145 = vmatprep.subr.bf16.mxu0 0
  %146 = vmatpush1.bf16.msra.mxu0 0
  %147 = vmatprep.subr.bf16.mxu0 0
  %148 = vmatpush1.bf16.msra.mxu0 0
  %149 = vmatprep.subr.bf16.mxu0 0
  %150 = vmatpush1.bf16.msra.mxu0 0
  %151 = vmatprep.subr.bf16.mxu0 0
  %152 = vmatpush1.bf16.msra.mxu0 0
  %153 = vmatprep.subr.bf16.mxu0 0
  %154 = vmatpush1.bf16.msra.mxu0 0
  %155 = vmatprep.subr.bf16.mxu0 0
  %156 = vmatpush1.bf16.msra.mxu0 0
  %157 = vmatprep.subr.bf16.mxu0 0
  %158 = vmatpush1.bf16.msra.mxu0 0
  %159 = vmatprep.subr.bf16.mxu0 0
  %160 = vmatpush1.bf16.msra.mxu0 0
  %161 = vmatprep.mubr.bf16.mxu0 0
  %162 = vmatmul.mubr.bf16.gmra.mrb[0].mxu0 %v69
  %v163 = vpop.f32.mrb[0].mxu0
  %v164 = vadd.f32 %v124, %v163
  %v165 = vpop.f32.mrb[0].mxu0
  %v166 = vpop.f32.mrb[0].mxu0
  %v167 = vadd.f32 %v124, %v166
  %v168 = vpop.f32.mrb[0].mxu0
  %169 = vdwg.mxu0
  %170 = vxpose.xlu0.b32.start [1/16] %v164, 128
  %171 = vxpose.xlu0.b32.cont [2/16] %v167, 128
  %172 = vxpose.xlu0.b32.cont [3/16] 0.0, 128
  %173 = vxpose.xlu0.b32.cont [4/16] 0.0, 128
  %174 = vxpose.xlu0.b32.cont [5/16] 0.0, 128
  %175 = vxpose.xlu0.b32.cont [6/16] 0.0, 128
  %176 = vxpose.xlu0.b32.cont [7/16] 0.0, 128
  %177 = vxpose.xlu0.b32.cont [8/16] 0.0, 128
  %178 = vxpose.xlu0.b32.cont [9/16] 0.0, 128
  %179 = vxpose.xlu0.b32.cont [10/16] 0.0, 128
  %180 = vxpose.xlu0.b32.cont [11/16] 0.0, 128
  %181 = vxpose.xlu0.b32.cont [12/16] 0.0, 128
  %182 = vxpose.xlu0.b32.cont [13/16] 0.0, 128
  %183 = vxpose.xlu0.b32.cont [14/16] 0.0, 128
  %184 = vxpose.xlu0.b32.cont [15/16] 0.0, 128
  %185 = vxpose.xlu0.b32.end [16/16] 0.0, 128
  %v186 = vpop.trf.xlu0
  %v187 = vpop.trf.xlu0
  %v188 = vpop.trf.xlu0
  %v189 = vpop.trf.xlu0
  %v190 = vpop.trf.xlu0
  %v191 = vpop.trf.xlu0
  %v192 = vpop.trf.xlu0
  %v193 = vpop.trf.xlu0
  %v194 = vpop.trf.xlu0
  %v195 = vpop.trf.xlu0
  %v196 = vpop.trf.xlu0
  %v197 = vpop.trf.xlu0
  %v198 = vpop.trf.xlu0
  %v199 = vpop.trf.xlu0
  %v200 = vpop.trf.xlu0
  %v201 = vpop.trf.xlu0
  %v202 = vlaneseq
  %v203 = vshrl.u32 %v202, 7
  %v204 = vsub.s32 0, %v203
  %v205 = vrot.slane %v118, %v204
  %207 = vrot.lane.b32.xlu0 %v205, 64
  %v208 = vpop.permute.xlu0 %207
  %v210 = vmul.f32 %v164, %v208
  %v211 = vmul.f32 %v167, %v208
  %214 = vrot.lane.b32.xlu0 %v210, 64
  %v215 = vpop.permute.xlu0 %214
  %216 = vrot.lane.b32.xlu0 %v211, 64
  %v217 = vpop.permute.xlu0 %216
  %v220 = vsel %vm67, %v215, 0.0
  %221 = vadd.xlane.f32.xlu0 %v220
  %v222 = vpop.xlane.xlu0 %221
  %v223 = vsel %vm67, %v217, 0.0
  %224 = vadd.xlane.f32.xlu0 %v223
  %v225 = vpop.xlane.xlu0 %224
  %v227 = vsel %vm67, %v118, 0
  %229 = vmatprep.subr.mxu0 0.0
  %230 = vmatpush1.msra.mxu0 %v186
  %231 = vmatprep.subr.mxu0 0.0
  %232 = vmatpush1.msra.mxu0 0.0
  %233 = vmatprep.subr.mxu0 0.0
  %234 = vmatpush1.msra.mxu0 0.0
  %235 = vmatprep.subr.mxu0 0.0
  %236 = vmatpush1.msra.mxu0 0.0
  %237 = vmatprep.subr.mxu0 0.0
  %238 = vmatpush1.msra.mxu0 0.0
  %239 = vmatprep.subr.mxu0 0.0
  %240 = vmatpush1.msra.mxu0 0.0
  %241 = vmatprep.subr.mxu0 0.0
  %242 = vmatpush1.msra.mxu0 0.0
  %243 = vmatprep.subr.mxu0 0.0
  %244 = vmatpush1.msra.mxu0 0.0
  %245 = vmatprep.subr.mxu0 0.0
  %246 = vmatpush1.msra.mxu0 0.0
  %247 = vmatprep.subr.mxu0 0.0
  %248 = vmatpush1.msra.mxu0 0.0
  %249 = vmatprep.subr.mxu0 0.0
  %250 = vmatpush1.msra.mxu0 0.0
  %251 = vmatprep.subr.mxu0 0.0
  %252 = vmatpush1.msra.mxu0 0.0
  %253 = vmatprep.subr.mxu0 0.0
  %254 = vmatpush1.msra.mxu0 0.0
  %255 = vmatprep.subr.mxu0 0.0
  %256 = vmatpush1.msra.mxu0 0.0
  %257 = vmatprep.subr.mxu0 0.0
  %258 = vmatpush1.msra.mxu0 0.0
  %259 = vmatprep.subr.mxu0 0.0
  %260 = vmatpush1.msra.mxu0 0.0
  %261 = vmatprep.subr.mxu0 0.0
  %262 = vmatpush1.msra.mxu0 0.0
  %263 = vmatprep.subr.mxu0 0.0
  %264 = vmatpush1.msra.mxu0 0.0
  %265 = vmatprep.subr.mxu0 0.0
  %266 = vmatpush1.msra.mxu0 0.0
  %267 = vmatprep.subr.mxu0 0.0
  %268 = vmatpush1.msra.mxu0 0.0
  %269 = vmatprep.subr.mxu0 0.0
  %270 = vmatpush1.msra.mxu0 0.0
  %271 = vmatprep.subr.mxu0 0.0
  %272 = vmatpush1.msra.mxu0 0.0
  %273 = vmatprep.subr.mxu0 0.0
  %274 = vmatpush1.msra.mxu0 0.0
  %275 = vmatprep.subr.mxu0 0.0
  %276 = vmatpush1.msra.mxu0 0.0
  %277 = vmatprep.subr.mxu0 0.0
  %278 = vmatpush1.msra.mxu0 0.0
  %279 = vmatprep.subr.mxu0 0.0
  %280 = vmatpush1.msra.mxu0 0.0
  %281 = vmatprep.subr.mxu0 0.0
  %282 = vmatpush1.msra.mxu0 0.0
  %283 = vmatprep.subr.mxu0 0.0
  %284 = vmatpush1.msra.mxu0 0.0
  %285 = vmatprep.subr.mxu0 0.0
  %286 = vmatpush1.msra.mxu0 0.0
  %287 = vmatprep.subr.mxu0 0.0
  %288 = vmatpush1.msra.mxu0 0.0
  %289 = vmatprep.subr.mxu0 0.0
  %290 = vmatpush1.msra.mxu0 0.0
  %291 = vmatprep.subr.mxu0 0.0
  %292 = vmatpush1.msra.mxu0 0.0
  %293 = vmatprep.mubr.f32.mxu0 0.0
  %294 = vmatmul.mubr.f32.gmra.mrb[0].mxu0 %v227
  %v295 = vpop.f32.mrb[0].mxu0
  %v296 = vadd.f32 0.0, %v295
  %v297 = vpop.f32.mrb[0].mxu0
  %298 = vdwg.mxu0
  %v299 = vadd.f32 %v56, %v222
  %v300 = vadd.f32 %v57, %v225
  %v301 = vlaneseq
  %v302 = vshrl.u32 %v301, 7
  %v303 = vsub.s32 0, %v302
  %v304 = vrot.slane %v296, %v303
  %v305 = vadd.f32 %v299, %v304
  %v306 = vadd.f32 %v300, %v304
  %308 = vset.pattern.permute.xlu0 64
  %309 = vperm.xlu0 %308, %v164
  %v310 = vpop.permute.xlu0 %309
  %313 = vset.pattern.permute.xlu0 64
  %314 = vperm.xlu0 %313, %v167
  %v315 = vpop.permute.xlu0 %314
  %v317 = vlaneseq
  %v318 = vshrl.u32 %v317, 7
  %v319 = vsub.s32 0, %v318
  %v320 = vrot.slane %v186, %v319
  %v321 = vadd.f32 %v310, %v320
  %v322 = vadd.f32 %v315, %v320
  %v323 = vand.u32 2147483647, %v321
  %v324 = vand.u32 2147483647, %v322
  %s326 = vtos %v119
  %v327 = vstv %s326
  %v329 = vmul.f32 %v327, %v323
  %v330 = vmul.f32 %v327, %v324
  %v331 = vadd.f32 %v305, %v329
  %v332 = vadd.f32 %v306, %v330
  %333 = vset.pattern.permute.xlu0 65
  %334 = vperm.xlu0 %333, %v164
  %v335 = vpop.permute.xlu0 %334
  %337 = vset.pattern.permute.xlu0 65
  %338 = vperm.xlu0 %337, %v167
  %v339 = vpop.permute.xlu0 %338
  %v341 = vlaneseq
  %v342 = vshrl.u32 %v341, 7
  %v343 = vsub.s32 1, %v342
  %v344 = vrot.slane %v186, %v343
  %v345 = vadd.f32 %v335, %v344
  %v346 = vadd.f32 %v339, %v344
  %v347 = vand.u32 2147483647, %v345
  %v348 = vand.u32 2147483647, %v346
  %349 = vrot.lane.b32.xlu0 %v119, 127
  %v350 = vpop.permute.xlu0 %349
  %s351 = vtos %v350
  %v352 = vstv %s351
  %v354 = vmul.f32 %v352, %v347
  %v355 = vmul.f32 %v352, %v348
  %v356 = vadd.f32 %v331, %v354
  %v357 = vadd.f32 %v332, %v355
  %358 = vset.pattern.permute.xlu0 66
  %359 = vperm.xlu0 %358, %v164
  %v360 = vpop.permute.xlu0 %359
  %362 = vset.pattern.permute.xlu0 66
  %363 = vperm.xlu0 %362, %v167
  %v364 = vpop.permute.xlu0 %363
  %v366 = vlaneseq
  %v367 = vshrl.u32 %v366, 7
  %v368 = vsub.s32 2, %v367
  %v369 = vrot.slane %v186, %v368
  %v370 = vadd.f32 %v360, %v369
  %v371 = vadd.f32 %v364, %v369
  %v372 = vand.u32 2147483647, %v370
  %v373 = vand.u32 2147483647, %v371
  %374 = vrot.lane.b32.xlu0 %v119, 126
  %v375 = vpop.permute.xlu0 %374
  %s376 = vtos %v375
  %v377 = vstv %s376
  %v379 = vmul.f32 %v377, %v372
  %v380 = vmul.f32 %v377, %v373
  %v381 = vadd.f32 %v356, %v379
  %v382 = vadd.f32 %v357, %v380
  %383 = vset.pattern.permute.xlu0 67
  %384 = vperm.xlu0 %383, %v164
  %v385 = vpop.permute.xlu0 %384
  %387 = vset.pattern.permute.xlu0 67
  %388 = vperm.xlu0 %387, %v167
  %v389 = vpop.permute.xlu0 %388
  %v391 = vlaneseq
  %v392 = vshrl.u32 %v391, 7
  %v393 = vsub.s32 3, %v392
  %v394 = vrot.slane %v186, %v393
  %v395 = vadd.f32 %v385, %v394
  %v396 = vadd.f32 %v389, %v394
  %v397 = vand.u32 2147483647, %v395
  %v398 = vand.u32 2147483647, %v396
  %399 = vrot.lane.b32.xlu0 %v119, 125
  %v400 = vpop.permute.xlu0 %399
  %s401 = vtos %v400
  %v402 = vstv %s401
  %v404 = vmul.f32 %v402, %v397
  %v405 = vmul.f32 %v402, %v398
  %v406 = vadd.f32 %v381, %v404
  %v407 = vadd.f32 %v382, %v405
  %408 = vset.pattern.permute.xlu0 68
  %409 = vperm.xlu0 %408, %v164
  %v410 = vpop.permute.xlu0 %409
  %412 = vset.pattern.permute.xlu0 68
  %413 = vperm.xlu0 %412, %v167
  %v414 = vpop.permute.xlu0 %413
  %v416 = vlaneseq
  %v417 = vshrl.u32 %v416, 7
  %v418 = vsub.s32 4, %v417
  %v419 = vrot.slane %v186, %v418
  %v420 = vadd.f32 %v410, %v419
  %v421 = vadd.f32 %v414, %v419
  %v422 = vand.u32 2147483647, %v420
  %v423 = vand.u32 2147483647, %v421
  %424 = vrot.lane.b32.xlu0 %v119, 124
  %v425 = vpop.permute.xlu0 %424
  %s426 = vtos %v425
  %v427 = vstv %s426
  %v429 = vmul.f32 %v427, %v422
  %v430 = vmul.f32 %v427, %v423
  %v431 = vadd.f32 %v406, %v429
  %v432 = vadd.f32 %v407, %v430
  %433 = vset.pattern.permute.xlu0 69
  %434 = vperm.xlu0 %433, %v164
  %v435 = vpop.permute.xlu0 %434
  %437 = vset.pattern.permute.xlu0 69
  %438 = vperm.xlu0 %437, %v167
  %v439 = vpop.permute.xlu0 %438
  %v441 = vlaneseq
  %v442 = vshrl.u32 %v441, 7
  %v443 = vsub.s32 5, %v442
  %v444 = vrot.slane %v186, %v443
  %v445 = vadd.f32 %v435, %v444
  %v446 = vadd.f32 %v439, %v444
  %v447 = vand.u32 2147483647, %v445
  %v448 = vand.u32 2147483647, %v446
  %449 = vrot.lane.b32.xlu0 %v119, 123
  %v450 = vpop.permute.xlu0 %449
  %s451 = vtos %v450
  %v452 = vstv %s451
  %v454 = vmul.f32 %v452, %v447
  %v455 = vmul.f32 %v452, %v448
  %v456 = vadd.f32 %v431, %v454
  %v457 = vadd.f32 %v432, %v455
  %458 = vset.pattern.permute.xlu0 70
  %459 = vperm.xlu0 %458, %v164
  %v460 = vpop.permute.xlu0 %459
  %462 = vset.pattern.permute.xlu0 70
  %463 = vperm.xlu0 %462, %v167
  %v464 = vpop.permute.xlu0 %463
  %v466 = vlaneseq
  %v467 = vshrl.u32 %v466, 7
  %v468 = vsub.s32 6, %v467
  %v469 = vrot.slane %v186, %v468
  %v470 = vadd.f32 %v460, %v469
  %v471 = vadd.f32 %v464, %v469
  %v472 = vand.u32 2147483647, %v470
  %v473 = vand.u32 2147483647, %v471
  %474 = vrot.lane.b32.xlu0 %v119, 122
  %v475 = vpop.permute.xlu0 %474
  %s476 = vtos %v475
  %v477 = vstv %s476
  %v479 = vmul.f32 %v477, %v472
  %v480 = vmul.f32 %v477, %v473
  %v481 = vadd.f32 %v456, %v479
  %v482 = vadd.f32 %v457, %v480
  %483 = vset.pattern.permute.xlu0 71
  %484 = vperm.xlu0 %483, %v164
  %v485 = vpop.permute.xlu0 %484
  %487 = vset.pattern.permute.xlu0 71
  %488 = vperm.xlu0 %487, %v167
  %v489 = vpop.permute.xlu0 %488
  %v491 = vlaneseq
  %v492 = vshrl.u32 %v491, 7
  %v493 = vsub.s32 7, %v492
  %v494 = vrot.slane %v186, %v493
  %v495 = vadd.f32 %v485, %v494
  %v496 = vadd.f32 %v489, %v494
  %v497 = vand.u32 2147483647, %v495
  %v498 = vand.u32 2147483647, %v496
  %499 = vrot.lane.b32.xlu0 %v119, 121
  %v500 = vpop.permute.xlu0 %499
  %s501 = vtos %v500
  %v502 = vstv %s501
  %v504 = vmul.f32 %v502, %v497
  %v505 = vmul.f32 %v502, %v498
  %v506 = vadd.f32 %v481, %v504
  %v507 = vadd.f32 %v482, %v505
  %vm508 = vcmask 130048
  %v509 = vsel %vm508, %v506, -inf
  %510 = vmax.xlane.f32.xlu0 %v509
  %v511 = vpop.xlane.xlu0 %510
  %v512 = vsel %vm508, %v507, -inf
  %513 = vmax.xlane.f32.xlu0 %v512
  %v514 = vpop.xlane.xlu0 %513
  %v515 = vsub.f32 %v506, %v511
  %v516 = vsub.f32 %v507, %v514
  %v517 = vmul.f32 %v515, 1.442695
  %v518 = vpow.pop %v517
  %v519 = vmul.f32 %v516, 1.442695
  %v520 = vpow.pop %v519
  %v521 = vsel %vm508, %v518, 0.0
  %522 = vadd.xlane.f32.xlu0 %v521
  %v523 = vpop.xlane.xlu0 %522
  %v524 = vsel %vm508, %v520, 0.0
  %525 = vadd.xlane.f32.xlu0 %v524
  %v526 = vpop.xlane.xlu0 %525
  %v527 = vrcp.pop %v523
  %v528 = vrcp.pop %v526
  %v529 = vmul.f32 %v518, %v527
  %v530 = vmul.f32 %v520, %v528
  %v531 = vpack.c.bf16 %v530, %v529
  %v532 = vpack.c.bf16 %v167, %v164
  %v533 = vlaneseq
  %v534 = vshrl.u32 %v533, 7
  %v535 = vsub.s32 1, %v534
  %v536 = vrot.slane %v118, %v535
  %538 = vrot.lane.b32.xlu0 %v536, 72
  %v539 = vpop.permute.xlu0 %538
  %v541 = vmul.f32 %v164, %v539
  %v542 = vmul.f32 %v167, %v539
  %545 = vrot.lane.b32.xlu0 %v541, 56
  %v546 = vpop.permute.xlu0 %545
  %547 = vrot.lane.b32.xlu0 %v542, 56
  %v548 = vpop.permute.xlu0 %547
  %v551 = vsel %vm67, %v546, 0.0
  %552 = vadd.xlane.f32.xlu0 %v551
  %v553 = vpop.xlane.xlu0 %552
  %v554 = vsel %vm67, %v548, 0.0
  %555 = vadd.xlane.f32.xlu0 %v554
  %v556 = vpop.xlane.xlu0 %555
  %v557 = vrot.slane %v118, 1
  %v558 = vsel %vm67, %v557, 0
  %560 = vmatprep.subr.mxu0 0.0
  %561 = vmatpush1.msra.mxu0 %v187
  %562 = vmatprep.subr.mxu0 0.0
  %563 = vmatpush1.msra.mxu0 0.0
  %564 = vmatprep.subr.mxu0 0.0
  %565 = vmatpush1.msra.mxu0 0.0
  %566 = vmatprep.subr.mxu0 0.0
  %567 = vmatpush1.msra.mxu0 0.0
  %568 = vmatprep.subr.mxu0 0.0
  %569 = vmatpush1.msra.mxu0 0.0
  %570 = vmatprep.subr.mxu0 0.0
  %571 = vmatpush1.msra.mxu0 0.0
  %572 = vmatprep.subr.mxu0 0.0
  %573 = vmatpush1.msra.mxu0 0.0
  %574 = vmatprep.subr.mxu0 0.0
  %575 = vmatpush1.msra.mxu0 0.0
  %576 = vmatprep.subr.mxu0 0.0
  %577 = vmatpush1.msra.mxu0 0.0
  %578 = vmatprep.subr.mxu0 0.0
  %579 = vmatpush1.msra.mxu0 0.0
  %580 = vmatprep.subr.mxu0 0.0
  %581 = vmatpush1.msra.mxu0 0.0
  %582 = vmatprep.subr.mxu0 0.0
  %583 = vmatpush1.msra.mxu0 0.0
  %584 = vmatprep.subr.mxu0 0.0
  %585 = vmatpush1.msra.mxu0 0.0
  %586 = vmatprep.subr.mxu0 0.0
  %587 = vmatpush1.msra.mxu0 0.0
  %588 = vmatprep.subr.mxu0 0.0
  %589 = vmatpush1.msra.mxu0 0.0
  %590 = vmatprep.subr.mxu0 0.0
  %591 = vmatpush1.msra.mxu0 0.0
  %592 = vmatprep.subr.mxu0 0.0
  %593 = vmatpush1.msra.mxu0 0.0
  %594 = vmatprep.subr.mxu0 0.0
  %595 = vmatpush1.msra.mxu0 0.0
  %596 = vmatprep.subr.mxu0 0.0
  %597 = vmatpush1.msra.mxu0 0.0
  %598 = vmatprep.subr.mxu0 0.0
  %599 = vmatpush1.msra.mxu0 0.0
  %600 = vmatprep.subr.mxu0 0.0
  %601 = vmatpush1.msra.mxu0 0.0
  %602 = vmatprep.subr.mxu0 0.0
  %603 = vmatpush1.msra.mxu0 0.0
  %604 = vmatprep.subr.mxu0 0.0
  %605 = vmatpush1.msra.mxu0 0.0
  %606 = vmatprep.subr.mxu0 0.0
  %607 = vmatpush1.msra.mxu0 0.0
  %608 = vmatprep.subr.mxu0 0.0
  %609 = vmatpush1.msra.mxu0 0.0
  %610 = vmatprep.subr.mxu0 0.0
  %611 = vmatpush1.msra.mxu0 0.0
  %612 = vmatprep.subr.mxu0 0.0
  %613 = vmatpush1.msra.mxu0 0.0
  %614 = vmatprep.subr.mxu0 0.0
  %615 = vmatpush1.msra.mxu0 0.0
  %616 = vmatprep.subr.mxu0 0.0
  %617 = vmatpush1.msra.mxu0 0.0
  %618 = vmatprep.subr.mxu0 0.0
  %619 = vmatpush1.msra.mxu0 0.0
  %620 = vmatprep.subr.mxu0 0.0
  %621 = vmatpush1.msra.mxu0 0.0
  %622 = vmatprep.subr.mxu0 0.0
  %623 = vmatpush1.msra.mxu0 0.0
  %624 = vmatprep.mubr.f32.mxu0 0.0
  %625 = vmatmul.mubr.f32.gmra.mrb[0].mxu0 %v558
  %v626 = vpop.f32.mrb[0].mxu0
  %v627 = vadd.f32 0.0, %v626
  %v628 = vpop.f32.mrb[0].mxu0
  %629 = vdwg.mxu0
  %v630 = vadd.f32 %v56, %v553
  %v631 = vadd.f32 %v57, %v556
  %v632 = vlaneseq
  %v633 = vshrl.u32 %v632, 7
  %v634 = vsub.s32 0, %v633
  %v635 = vrot.slane %v627, %v634
  %v636 = vadd.f32 %v630, %v635
  %v637 = vadd.f32 %v631, %v635
  %638 = vset.pattern.permute.xlu0 72
  %639 = vperm.xlu0 %638, %v164
  %v640 = vpop.permute.xlu0 %639
  %642 = vset.pattern.permute.xlu0 72
  %643 = vperm.xlu0 %642, %v167
  %v644 = vpop.permute.xlu0 %643
  %v646 = vlaneseq
  %v647 = vshrl.u32 %v646, 7
  %v648 = vsub.s32 0, %v647
  %v649 = vrot.slane %v187, %v648
  %v650 = vadd.f32 %v640, %v649
  %v651 = vadd.f32 %v644, %v649
  %v652 = vand.u32 2147483647, %v650
  %v653 = vand.u32 2147483647, %v651
  %v654 = vrot.slane %v119, 1
  %s655 = vtos %v654
  %v656 = vstv %s655
  %v658 = vmul.f32 %v656, %v652
  %v659 = vmul.f32 %v656, %v653
  %v660 = vadd.f32 %v636, %v658
  %v661 = vadd.f32 %v637, %v659
  %662 = vset.pattern.permute.xlu0 73
  %663 = vperm.xlu0 %662, %v164
  %v664 = vpop.permute.xlu0 %663
  %666 = vset.pattern.permute.xlu0 73
  %667 = vperm.xlu0 %666, %v167
  %v668 = vpop.permute.xlu0 %667
  %v670 = vlaneseq
  %v671 = vshrl.u32 %v670, 7
  %v672 = vsub.s32 1, %v671
  %v673 = vrot.slane %v187, %v672
  %v674 = vadd.f32 %v664, %v673
  %v675 = vadd.f32 %v668, %v673
  %v676 = vand.u32 2147483647, %v674
  %v677 = vand.u32 2147483647, %v675
  %678 = vrot.lane.b32.xlu0 %v654, 127
  %v679 = vpop.permute.xlu0 %678
  %s680 = vtos %v679
  %v681 = vstv %s680
  %v683 = vmul.f32 %v681, %v676
  %v684 = vmul.f32 %v681, %v677
  %v685 = vadd.f32 %v660, %v683
  %v686 = vadd.f32 %v661, %v684
  %687 = vset.pattern.permute.xlu0 74
  %688 = vperm.xlu0 %687, %v164
  %v689 = vpop.permute.xlu0 %688
  %691 = vset.pattern.permute.xlu0 74
  %692 = vperm.xlu0 %691, %v167
  %v693 = vpop.permute.xlu0 %692
  %v695 = vlaneseq
  %v696 = vshrl.u32 %v695, 7
  %v697 = vsub.s32 2, %v696
  %v698 = vrot.slane %v187, %v697
  %v699 = vadd.f32 %v689, %v698
  %v700 = vadd.f32 %v693, %v698
  %v701 = vand.u32 2147483647, %v699
  %v702 = vand.u32 2147483647, %v700
  %703 = vrot.lane.b32.xlu0 %v654, 126
  %v704 = vpop.permute.xlu0 %703
  %s705 = vtos %v704
  %v706 = vstv %s705
  %v708 = vmul.f32 %v706, %v701
  %v709 = vmul.f32 %v706, %v702
  %v710 = vadd.f32 %v685, %v708
  %v711 = vadd.f32 %v686, %v709
  %712 = vset.pattern.permute.xlu0 75
  %713 = vperm.xlu0 %712, %v164
  %v714 = vpop.permute.xlu0 %713
  %716 = vset.pattern.permute.xlu0 75
  %717 = vperm.xlu0 %716, %v167
  %v718 = vpop.permute.xlu0 %717
  %v720 = vlaneseq
  %v721 = vshrl.u32 %v720, 7
  %v722 = vsub.s32 3, %v721
  %v723 = vrot.slane %v187, %v722
  %v724 = vadd.f32 %v714, %v723
  %v725 = vadd.f32 %v718, %v723
  %v726 = vand.u32 2147483647, %v724
  %v727 = vand.u32 2147483647, %v725
  %728 = vrot.lane.b32.xlu0 %v654, 125
  %v729 = vpop.permute.xlu0 %728
  %s730 = vtos %v729
  %v731 = vstv %s730
  %v733 = vmul.f32 %v731, %v726
  %v734 = vmul.f32 %v731, %v727
  %v735 = vadd.f32 %v710, %v733
  %v736 = vadd.f32 %v711, %v734
  %737 = vset.pattern.permute.xlu0 76
  %738 = vperm.xlu0 %737, %v164
  %v739 = vpop.permute.xlu0 %738
  %741 = vset.pattern.permute.xlu0 76
  %742 = vperm.xlu0 %741, %v167
  %v743 = vpop.permute.xlu0 %742
  %v745 = vlaneseq
  %v746 = vshrl.u32 %v745, 7
  %v747 = vsub.s32 4, %v746
  %v748 = vrot.slane %v187, %v747
  %v749 = vadd.f32 %v739, %v748
  %v750 = vadd.f32 %v743, %v748
  %v751 = vand.u32 2147483647, %v749
  %v752 = vand.u32 2147483647, %v750
  %753 = vrot.lane.b32.xlu0 %v654, 124
  %v754 = vpop.permute.xlu0 %753
  %s755 = vtos %v754
  %v756 = vstv %s755
  %v758 = vmul.f32 %v756, %v751
  %v759 = vmul.f32 %v756, %v752
  %v760 = vadd.f32 %v735, %v758
  %v761 = vadd.f32 %v736, %v759
  %762 = vset.pattern.permute.xlu0 77
  %763 = vperm.xlu0 %762, %v164
  %v764 = vpop.permute.xlu0 %763
  %766 = vset.pattern.permute.xlu0 77
  %767 = vperm.xlu0 %766, %v167
  %v768 = vpop.permute.xlu0 %767
  %v770 = vlaneseq
  %v771 = vshrl.u32 %v770, 7
  %v772 = vsub.s32 5, %v771
  %v773 = vrot.slane %v187, %v772
  %v774 = vadd.f32 %v764, %v773
  %v775 = vadd.f32 %v768, %v773
  %v776 = vand.u32 2147483647, %v774
  %v777 = vand.u32 2147483647, %v775
  %778 = vrot.lane.b32.xlu0 %v654, 123
  %v779 = vpop.permute.xlu0 %778
  %s780 = vtos %v779
  %v781 = vstv %s780
  %v783 = vmul.f32 %v781, %v776
  %v784 = vmul.f32 %v781, %v777
  %v785 = vadd.f32 %v760, %v783
  %v786 = vadd.f32 %v761, %v784
  %787 = vset.pattern.permute.xlu0 78
  %788 = vperm.xlu0 %787, %v164
  %v789 = vpop.permute.xlu0 %788
  %791 = vset.pattern.permute.xlu0 78
  %792 = vperm.xlu0 %791, %v167
  %v793 = vpop.permute.xlu0 %792
  %v795 = vlaneseq
  %v796 = vshrl.u32 %v795, 7
  %v797 = vsub.s32 6, %v796
  %v798 = vrot.slane %v187, %v797
  %v799 = vadd.f32 %v789, %v798
  %v800 = vadd.f32 %v793, %v798
  %v801 = vand.u32 2147483647, %v799
  %v802 = vand.u32 2147483647, %v800
  %803 = vrot.lane.b32.xlu0 %v654, 122
  %v804 = vpop.permute.xlu0 %803
  %s805 = vtos %v804
  %v806 = vstv %s805
  %v808 = vmul.f32 %v806, %v801
  %v809 = vmul.f32 %v806, %v802
  %v810 = vadd.f32 %v785, %v808
  %v811 = vadd.f32 %v786, %v809
  %812 = vset.pattern.permute.xlu0 79
  %813 = vperm.xlu0 %812, %v164
  %v814 = vpop.permute.xlu0 %813
  %816 = vset.pattern.permute.xlu0 79
  %817 = vperm.xlu0 %816, %v167
  %v818 = vpop.permute.xlu0 %817
  %v820 = vlaneseq
  %v821 = vshrl.u32 %v820, 7
  %v822 = vsub.s32 7, %v821
  %v823 = vrot.slane %v187, %v822
  %v824 = vadd.f32 %v814, %v823
  %v825 = vadd.f32 %v818, %v823
  %v826 = vand.u32 2147483647, %v824
  %v827 = vand.u32 2147483647, %v825
  %828 = vrot.lane.b32.xlu0 %v654, 121
  %v829 = vpop.permute.xlu0 %828
  %s830 = vtos %v829
  %v831 = vstv %s830
  %v833 = vmul.f32 %v831, %v826
  %v834 = vmul.f32 %v831, %v827
  %v835 = vadd.f32 %v810, %v833
  %v836 = vadd.f32 %v811, %v834
  %v837 = vsel %vm508, %v835, -inf
  %838 = vmax.xlane.f32.xlu0 %v837
  %v839 = vpop.xlane.xlu0 %838
  %v840 = vsel %vm508, %v836, -inf
  %841 = vmax.xlane.f32.xlu0 %v840
  %v842 = vpop.xlane.xlu0 %841
  %v843 = vsub.f32 %v835, %v839
  %v844 = vsub.f32 %v836, %v842
  %v845 = vmul.f32 %v843, 1.442695
  %v846 = vpow.pop %v845
  %v847 = vmul.f32 %v844, 1.442695
  %v848 = vpow.pop %v847
  %v849 = vsel %vm508, %v846, 0.0
  %850 = vadd.xlane.f32.xlu0 %v849
  %v851 = vpop.xlane.xlu0 %850
  %v852 = vsel %vm508, %v848, 0.0
  %853 = vadd.xlane.f32.xlu0 %v852
  %v854 = vpop.xlane.xlu0 %853
  %v855 = vrcp.pop %v851
  %v856 = vrcp.pop %v854
  %v857 = vmul.f32 %v846, %v855
  %v858 = vmul.f32 %v848, %v856
  %v859 = vpack.c.bf16 %v858, %v857
  %861 = vrot.lane.b32.xlu0 %v532, 120
  %v862 = vpop.permute.xlu0 %861
  %v865 = vsel %vm508, %v859, 0
  %867 = vmatprep.subr.bf16.mxu0 0
  %868 = vmatpush1.bf16.msra.mxu0 %v862
  %869 = vmatprep.subr.bf16.mxu0 0
  %870 = vmatpush1.bf16.msra.mxu0 0
  %871 = vmatprep.subr.bf16.mxu0 0
  %872 = vmatpush1.bf16.msra.mxu0 0
  %873 = vmatprep.subr.bf16.mxu0 0
  %874 = vmatpush1.bf16.msra.mxu0 0
  %875 = vmatprep.subr.bf16.mxu0 0
  %876 = vmatpush1.bf16.msra.mxu0 0
  %877 = vmatprep.subr.bf16.mxu0 0
  %878 = vmatpush1.bf16.msra.mxu0 0
  %879 = vmatprep.subr.bf16.mxu0 0
  %880 = vmatpush1.bf16.msra.mxu0 0
  %881 = vmatprep.subr.bf16.mxu0 0
  %882 = vmatpush1.bf16.msra.mxu0 0
  %883 = vmatprep.subr.bf16.mxu0 0
  %884 = vmatpush1.bf16.msra.mxu0 0
  %885 = vmatprep.subr.bf16.mxu0 0
  %886 = vmatpush1.bf16.msra.mxu0 0
  %887 = vmatprep.subr.bf16.mxu0 0
  %888 = vmatpush1.bf16.msra.mxu0 0
  %889 = vmatprep.subr.bf16.mxu0 0
  %890 = vmatpush1.bf16.msra.mxu0 0
  %891 = vmatprep.subr.bf16.mxu0 0
  %892 = vmatpush1.bf16.msra.mxu0 0
  %893 = vmatprep.subr.bf16.mxu0 0
  %894 = vmatpush1.bf16.msra.mxu0 0
  %895 = vmatprep.subr.bf16.mxu0 0
  %896 = vmatpush1.bf16.msra.mxu0 0
  %897 = vmatprep.subr.bf16.mxu0 0
  %898 = vmatpush1.bf16.msra.mxu0 0
  %899 = vmatprep.mubr.bf16.mxu0 0
  %900 = vmatmul.mubr.bf16.gmra.mrb[0].mxu0 %v865
  %v901 = vpop.f32.mrb[0].mxu0
  %v902 = vadd.f32 0.0, %v901
  %v903 = vpop.f32.mrb[0].mxu0
  %v904 = vpop.f32.mrb[0].mxu0
  %v905 = vadd.f32 0.0, %v904
  %v906 = vpop.f32.mrb[0].mxu0
  %907 = vdwg.mxu0
  %v909 = vsel %vm508, %v531, 0
  %911 = vmatprep.subr.bf16.mxu0 0
  %912 = vmatpush1.bf16.msra.mxu0 %v532
  %913 = vmatprep.subr.bf16.mxu0 0
  %914 = vmatpush1.bf16.msra.mxu0 0
  %915 = vmatprep.subr.bf16.mxu0 0
  %916 = vmatpush1.bf16.msra.mxu0 0
  %917 = vmatprep.subr.bf16.mxu0 0
  %918 = vmatpush1.bf16.msra.mxu0 0
  %919 = vmatprep.subr.bf16.mxu0 0
  %920 = vmatpush1.bf16.msra.mxu0 0
  %921 = vmatprep.subr.bf16.mxu0 0
  %922 = vmatpush1.bf16.msra.mxu0 0
  %923 = vmatprep.subr.bf16.mxu0 0
  %924 = vmatpush1.bf16.msra.mxu0 0
  %925 = vmatprep.subr.bf16.mxu0 0
  %926 = vmatpush1.bf16.msra.mxu0 0
  %927 = vmatprep.subr.bf16.mxu0 0
  %928 = vmatpush1.bf16.msra.mxu0 0
  %929 = vmatprep.subr.bf16.mxu0 0
  %930 = vmatpush1.bf16.msra.mxu0 0
  %931 = vmatprep.subr.bf16.mxu0 0
  %932 = vmatpush1.bf16.msra.mxu0 0
  %933 = vmatprep.subr.bf16.mxu0 0
  %934 = vmatpush1.bf16.msra.mxu0 0
  %935 = vmatprep.subr.bf16.mxu0 0
  %936 = vmatpush1.bf16.msra.mxu0 0
  %937 = vmatprep.subr.bf16.mxu0 0
  %938 = vmatpush1.bf16.msra.mxu0 0
  %939 = vmatprep.subr.bf16.mxu0 0
  %940 = vmatpush1.bf16.msra.mxu0 0
  %941 = vmatprep.subr.bf16.mxu0 0
  %942 = vmatpush1.bf16.msra.mxu0 0
  %943 = vmatprep.mubr.bf16.mxu0 0
  %944 = vmatmul.mubr.bf16.gmra.mrb[0].mxu0 %v909
  %v945 = vpop.f32.mrb[0].mxu0
  %v946 = vadd.f32 %v902, %v945
  %v947 = vpop.f32.mrb[0].mxu0
  %v948 = vpop.f32.mrb[0].mxu0
  %v949 = vadd.f32 %v905, %v948
  %v950 = vpop.f32.mrb[0].mxu0
  %951 = vdwg.mxu0
  %v952 = vlaneseq
  %v953 = vshrl.u32 %v952, 7
  %v954 = vsub.s32 2, %v953
  %v955 = vrot.slane %v118, %v954
  %957 = vrot.lane.b32.xlu0 %v955, 80
  %v958 = vpop.permute.xlu0 %957
  %v960 = vmul.f32 %v164, %v958
  %v961 = vmul.f32 %v167, %v958
  %964 = vrot.lane.b32.xlu0 %v960, 48
  %v965 = vpop.permute.xlu0 %964
  %966 = vrot.lane.b32.xlu0 %v961, 48
  %v967 = vpop.permute.xlu0 %966
  %v970 = vsel %vm67, %v965, 0.0
  %971 = vadd.xlane.f32.xlu0 %v970
  %v972 = vpop.xlane.xlu0 %971
  %v973 = vsel %vm67, %v967, 0.0
  %974 = vadd.xlane.f32.xlu0 %v973
  %v975 = vpop.xlane.xlu0 %974
  %v976 = vrot.slane %v118, 2
  %v977 = vsel %vm67, %v976, 0
  %979 = vmatprep.subr.mxu0 0.0
  %980 = vmatpush1.msra.mxu0 %v188
  %981 = vmatprep.subr.mxu0 0.0
  %982 = vmatpush1.msra.mxu0 0.0
  %983 = vmatprep.subr.mxu0 0.0
  %984 = vmatpush1.msra.mxu0 0.0
  %985 = vmatprep.subr.mxu0 0.0
  %986 = vmatpush1.msra.mxu0 0.0
  %987 = vmatprep.subr.mxu0 0.0
  %988 = vmatpush1.msra.mxu0 0.0
  %989 = vmatprep.subr.mxu0 0.0
  %990 = vmatpush1.msra.mxu0 0.0
  %991 = vmatprep.subr.mxu0 0.0
  %992 = vmatpush1.msra.mxu0 0.0
  %993 = vmatprep.subr.mxu0 0.0
  %994 = vmatpush1.msra.mxu0 0.0
  %995 = vmatprep.subr.mxu0 0.0
  %996 = vmatpush1.msra.mxu0 0.0
  %997 = vmatprep.subr.mxu0 0.0
  %998 = vmatpush1.msra.mxu0 0.0
  %999 = vmatprep.subr.mxu0 0.0
  %1000 = vmatpush1.msra.mxu0 0.0
  %1001 = vmatprep.subr.mxu0 0.0
  %1002 = vmatpush1.msra.mxu0 0.0
  %1003 = vmatprep.subr.mxu0 0.0
  %1004 = vmatpush1.msra.mxu0 0.0
  %1005 = vmatprep.subr.mxu0 0.0
  %1006 = vmatpush1.msra.mxu0 0.0
  %1007 = vmatprep.subr.mxu0 0.0
  %1008 = vmatpush1.msra.mxu0 0.0
  %1009 = vmatprep.subr.mxu0 0.0
  %1010 = vmatpush1.msra.mxu0 0.0
  %1011 = vmatprep.subr.mxu0 0.0
  %1012 = vmatpush1.msra.mxu0 0.0
  %1013 = vmatprep.subr.mxu0 0.0
  %1014 = vmatpush1.msra.mxu0 0.0
  %1015 = vmatprep.subr.mxu0 0.0
  %1016 = vmatpush1.msra.mxu0 0.0
  %1017 = vmatprep.subr.mxu0 0.0
  %1018 = vmatpush1.msra.mxu0 0.0
  %1019 = vmatprep.subr.mxu0 0.0
  %1020 = vmatpush1.msra.mxu0 0.0
  %1021 = vmatprep.subr.mxu0 0.0
  %1022 = vmatpush1.msra.mxu0 0.0
  %1023 = vmatprep.subr.mxu0 0.0
  %1024 = vmatpush1.msra.mxu0 0.0
  %1025 = vmatprep.subr.mxu0 0.0
  %1026 = vmatpush1.msra.mxu0 0.0
  %1027 = vmatprep.subr.mxu0 0.0
  %1028 = vmatpush1.msra.mxu0 0.0
  %1029 = vmatprep.subr.mxu0 0.0
  %1030 = vmatpush1.msra.mxu0 0.0
  %1031 = vmatprep.subr.mxu0 0.0
  %1032 = vmatpush1.msra.mxu0 0.0
  %1033 = vmatprep.subr.mxu0 0.0
  %1034 = vmatpush1.msra.mxu0 0.0
  %1035 = vmatprep.subr.mxu0 0.0
  %1036 = vmatpush1.msra.mxu0 0.0
  %1037 = vmatprep.subr.mxu0 0.0
  %1038 = vmatpush1.msra.mxu0 0.0
  %1039 = vmatprep.subr.mxu0 0.0
  %1040 = vmatpush1.msra.mxu0 0.0
  %1041 = vmatprep.subr.mxu0 0.0
  %1042 = vmatpush1.msra.mxu0 0.0
  %1043 = vmatprep.mubr.f32.mxu0 0.0
  %1044 = vmatmul.mubr.f32.gmra.mrb[0].mxu0 %v977
  %v1045 = vpop.f32.mrb[0].mxu0
  %v1046 = vadd.f32 0.0, %v1045
  %v1047 = vpop.f32.mrb[0].mxu0
  %1048 = vdwg.mxu0
  %v1049 = vadd.f32 %v56, %v972
  %v1050 = vadd.f32 %v57, %v975
  %v1051 = vlaneseq
  %v1052 = vshrl.u32 %v1051, 7
  %v1053 = vsub.s32 0, %v1052
  %v1054 = vrot.slane %v1046, %v1053
  %v1055 = vadd.f32 %v1049, %v1054
  %v1056 = vadd.f32 %v1050, %v1054
  %1057 = vset.pattern.permute.xlu0 80
  %1058 = vperm.xlu0 %1057, %v164
  %v1059 = vpop.permute.xlu0 %1058
  %1061 = vset.pattern.permute.xlu0 80
  %1062 = vperm.xlu0 %1061, %v167
  %v1063 = vpop.permute.xlu0 %1062
  %v1065 = vlaneseq
  %v1066 = vshrl.u32 %v1065, 7
  %v1067 = vsub.s32 0, %v1066
  %v1068 = vrot.slane %v188, %v1067
  %v1069 = vadd.f32 %v1059, %v1068
  %v1070 = vadd.f32 %v1063, %v1068
  %v1071 = vand.u32 2147483647, %v1069
  %v1072 = vand.u32 2147483647, %v1070
  %v1073 = vrot.slane %v119, 2
  %s1074 = vtos %v1073
  %v1075 = vstv %s1074
  %v1077 = vmul.f32 %v1075, %v1071
  %v1078 = vmul.f32 %v1075, %v1072
  %v1079 = vadd.f32 %v1055, %v1077
  %v1080 = vadd.f32 %v1056, %v1078
  %1081 = vset.pattern.permute.xlu0 81
  %1082 = vperm.xlu0 %1081, %v164
  %v1083 = vpop.permute.xlu0 %1082
  %1085 = vset.pattern.permute.xlu0 81
  %1086 = vperm.xlu0 %1085, %v167
  %v1087 = vpop.permute.xlu0 %1086
  %v1089 = vlaneseq
  %v1090 = vshrl.u32 %v1089, 7
  %v1091 = vsub.s32 1, %v1090
  %v1092 = vrot.slane %v188, %v1091
  %v1093 = vadd.f32 %v1083, %v1092
  %v1094 = vadd.f32 %v1087, %v1092
  %v1095 = vand.u32 2147483647, %v1093
  %v1096 = vand.u32 2147483647, %v1094
  %1097 = vrot.lane.b32.xlu0 %v1073, 127
  %v1098 = vpop.permute.xlu0 %1097
  %s1099 = vtos %v1098
  %v1100 = vstv %s1099
  %v1102 = vmul.f32 %v1100, %v1095
  %v1103 = vmul.f32 %v1100, %v1096
  %v1104 = vadd.f32 %v1079, %v1102
  %v1105 = vadd.f32 %v1080, %v1103
  %1106 = vset.pattern.permute.xlu0 82
  %1107 = vperm.xlu0 %1106, %v164
  %v1108 = vpop.permute.xlu0 %1107
  %1110 = vset.pattern.permute.xlu0 82
  %1111 = vperm.xlu0 %1110, %v167
  %v1112 = vpop.permute.xlu0 %1111
  %v1114 = vlaneseq
  %v1115 = vshrl.u32 %v1114, 7
  %v1116 = vsub.s32 2, %v1115
  %v1117 = vrot.slane %v188, %v1116
  %v1118 = vadd.f32 %v1108, %v1117
  %v1119 = vadd.f32 %v1112, %v1117
  %v1120 = vand.u32 2147483647, %v1118
  %v1121 = vand.u32 2147483647, %v1119
  %1122 = vrot.lane.b32.xlu0 %v1073, 126
  %v1123 = vpop.permute.xlu0 %1122
  %s1124 = vtos %v1123
  %v1125 = vstv %s1124
  %v1127 = vmul.f32 %v1125, %v1120
  %v1128 = vmul.f32 %v1125, %v1121
  %v1129 = vadd.f32 %v1104, %v1127
  %v1130 = vadd.f32 %v1105, %v1128
  %1131 = vset.pattern.permute.xlu0 83
  %1132 = vperm.xlu0 %1131, %v164
  %v1133 = vpop.permute.xlu0 %1132
  %1135 = vset.pattern.permute.xlu0 83
  %1136 = vperm.xlu0 %1135, %v167
  %v1137 = vpop.permute.xlu0 %1136
  %v1139 = vlaneseq
  %v1140 = vshrl.u32 %v1139, 7
  %v1141 = vsub.s32 3, %v1140
  %v1142 = vrot.slane %v188, %v1141
  %v1143 = vadd.f32 %v1133, %v1142
  %v1144 = vadd.f32 %v1137, %v1142
  %v1145 = vand.u32 2147483647, %v1143
  %v1146 = vand.u32 2147483647, %v1144
  %1147 = vrot.lane.b32.xlu0 %v1073, 125
  %v1148 = vpop.permute.xlu0 %1147
  %s1149 = vtos %v1148
  %v1150 = vstv %s1149
  %v1152 = vmul.f32 %v1150, %v1145
  %v1153 = vmul.f32 %v1150, %v1146
  %v1154 = vadd.f32 %v1129, %v1152
  %v1155 = vadd.f32 %v1130, %v1153
  %1156 = vset.pattern.permute.xlu0 84
  %1157 = vperm.xlu0 %1156, %v164
  %v1158 = vpop.permute.xlu0 %1157
  %1160 = vset.pattern.permute.xlu0 84
  %1161 = vperm.xlu0 %1160, %v167
  %v1162 = vpop.permute.xlu0 %1161
  %v1164 = vlaneseq
  %v1165 = vshrl.u32 %v1164, 7
  %v1166 = vsub.s32 4, %v1165
  %v1167 = vrot.slane %v188, %v1166
  %v1168 = vadd.f32 %v1158, %v1167
  %v1169 = vadd.f32 %v1162, %v1167
  %v1170 = vand.u32 2147483647, %v1168
  %v1171 = vand.u32 2147483647, %v1169
  %1172 = vrot.lane.b32.xlu0 %v1073, 124
  %v1173 = vpop.permute.xlu0 %1172
  %s1174 = vtos %v1173
  %v1175 = vstv %s1174
  %v1177 = vmul.f32 %v1175, %v1170
  %v1178 = vmul.f32 %v1175, %v1171
  %v1179 = vadd.f32 %v1154, %v1177
  %v1180 = vadd.f32 %v1155, %v1178
  %1181 = vset.pattern.permute.xlu0 85
  %1182 = vperm.xlu0 %1181, %v164
  %v1183 = vpop.permute.xlu0 %1182
  %1185 = vset.pattern.permute.xlu0 85
  %1186 = vperm.xlu0 %1185, %v167
  %v1187 = vpop.permute.xlu0 %1186
  %v1189 = vlaneseq
  %v1190 = vshrl.u32 %v1189, 7
  %v1191 = vsub.s32 5, %v1190
  %v1192 = vrot.slane %v188, %v1191
  %v1193 = vadd.f32 %v1183, %v1192
  %v1194 = vadd.f32 %v1187, %v1192
  %v1195 = vand.u32 2147483647, %v1193
  %v1196 = vand.u32 2147483647, %v1194
  %1197 = vrot.lane.b32.xlu0 %v1073, 123
  %v1198 = vpop.permute.xlu0 %1197
  %s1199 = vtos %v1198
  %v1200 = vstv %s1199
  %v1202 = vmul.f32 %v1200, %v1195
  %v1203 = vmul.f32 %v1200, %v1196
  %v1204 = vadd.f32 %v1179, %v1202
  %v1205 = vadd.f32 %v1180, %v1203
  %1206 = vset.pattern.permute.xlu0 86
  %1207 = vperm.xlu0 %1206, %v164
  %v1208 = vpop.permute.xlu0 %1207
  %1210 = vset.pattern.permute.xlu0 86
  %1211 = vperm.xlu0 %1210, %v167
  %v1212 = vpop.permute.xlu0 %1211
  %v1214 = vlaneseq
  %v1215 = vshrl.u32 %v1214, 7
  %v1216 = vsub.s32 6, %v1215
  %v1217 = vrot.slane %v188, %v1216
  %v1218 = vadd.f32 %v1208, %v1217
  %v1219 = vadd.f32 %v1212, %v1217
  %v1220 = vand.u32 2147483647, %v1218
  %v1221 = vand.u32 2147483647, %v1219
  %1222 = vrot.lane.b32.xlu0 %v1073, 122
  %v1223 = vpop.permute.xlu0 %1222
  %s1224 = vtos %v1223
  %v1225 = vstv %s1224
  %v1227 = vmul.f32 %v1225, %v1220
  %v1228 = vmul.f32 %v1225, %v1221
  %v1229 = vadd.f32 %v1204, %v1227
  %v1230 = vadd.f32 %v1205, %v1228
  %1231 = vset.pattern.permute.xlu0 87
  %1232 = vperm.xlu0 %1231, %v164
  %v1233 = vpop.permute.xlu0 %1232
  %1235 = vset.pattern.permute.xlu0 87
  %1236 = vperm.xlu0 %1235, %v167
  %v1237 = vpop.permute.xlu0 %1236
  %v1239 = vlaneseq
  %v1240 = vshrl.u32 %v1239, 7
  %v1241 = vsub.s32 7, %v1240
  %v1242 = vrot.slane %v188, %v1241
  %v1243 = vadd.f32 %v1233, %v1242
  %v1244 = vadd.f32 %v1237, %v1242
  %v1245 = vand.u32 2147483647, %v1243
  %v1246 = vand.u32 2147483647, %v1244
  %1247 = vrot.lane.b32.xlu0 %v1073, 121
  %v1248 = vpop.permute.xlu0 %1247
  %s1249 = vtos %v1248
  %v1250 = vstv %s1249
  %v1252 = vmul.f32 %v1250, %v1245
  %v1253 = vmul.f32 %v1250, %v1246
  %v1254 = vadd.f32 %v1229, %v1252
  %v1255 = vadd.f32 %v1230, %v1253
  %v1256 = vsel %vm508, %v1254, -inf
  %1257 = vmax.xlane.f32.xlu0 %v1256
  %v1258 = vpop.xlane.xlu0 %1257
  %v1259 = vsel %vm508, %v1255, -inf
  %1260 = vmax.xlane.f32.xlu0 %v1259
  %v1261 = vpop.xlane.xlu0 %1260
  %v1262 = vsub.f32 %v1254, %v1258
  %v1263 = vsub.f32 %v1255, %v1261
  %v1264 = vmul.f32 %v1262, 1.442695
  %v1265 = vpow.pop %v1264
  %v1266 = vmul.f32 %v1263, 1.442695
  %v1267 = vpow.pop %v1266
  %v1268 = vsel %vm508, %v1265, 0.0
  %1269 = vadd.xlane.f32.xlu0 %v1268
  %v1270 = vpop.xlane.xlu0 %1269
  %v1271 = vsel %vm508, %v1267, 0.0
  %1272 = vadd.xlane.f32.xlu0 %v1271
  %v1273 = vpop.xlane.xlu0 %1272
  %v1274 = vrcp.pop %v1270
  %v1275 = vrcp.pop %v1273
  %v1276 = vmul.f32 %v1265, %v1274
  %v1277 = vmul.f32 %v1267, %v1275
  %v1278 = vpack.c.bf16 %v1277, %v1276
  %1279 = vrot.lane.b32.xlu0 %v532, 112
  %v1280 = vpop.permute.xlu0 %1279
  %v1283 = vsel %vm508, %v1278, 0
  %1285 = vmatprep.subr.bf16.mxu0 0
  %1286 = vmatpush1.bf16.msra.mxu0 %v1280
  %1287 = vmatprep.subr.bf16.mxu0 0
  %1288 = vmatpush1.bf16.msra.mxu0 0
  %1289 = vmatprep.subr.bf16.mxu0 0
  %1290 = vmatpush1.bf16.msra.mxu0 0
  %1291 = vmatprep.subr.bf16.mxu0 0
  %1292 = vmatpush1.bf16.msra.mxu0 0
  %1293 = vmatprep.subr.bf16.mxu0 0
  %1294 = vmatpush1.bf16.msra.mxu0 0
  %1295 = vmatprep.subr.bf16.mxu0 0
  %1296 = vmatpush1.bf16.msra.mxu0 0
  %1297 = vmatprep.subr.bf16.mxu0 0
  %1298 = vmatpush1.bf16.msra.mxu0 0
  %1299 = vmatprep.subr.bf16.mxu0 0
  %1300 = vmatpush1.bf16.msra.mxu0 0
  %1301 = vmatprep.subr.bf16.mxu0 0
  %1302 = vmatpush1.bf16.msra.mxu0 0
  %1303 = vmatprep.subr.bf16.mxu0 0
  %1304 = vmatpush1.bf16.msra.mxu0 0
  %1305 = vmatprep.subr.bf16.mxu0 0
  %1306 = vmatpush1.bf16.msra.mxu0 0
  %1307 = vmatprep.subr.bf16.mxu0 0
  %1308 = vmatpush1.bf16.msra.mxu0 0
  %1309 = vmatprep.subr.bf16.mxu0 0
  %1310 = vmatpush1.bf16.msra.mxu0 0
  %1311 = vmatprep.subr.bf16.mxu0 0
  %1312 = vmatpush1.bf16.msra.mxu0 0
  %1313 = vmatprep.subr.bf16.mxu0 0
  %1314 = vmatpush1.bf16.msra.mxu0 0
  %1315 = vmatprep.subr.bf16.mxu0 0
  %1316 = vmatpush1.bf16.msra.mxu0 0
  %1317 = vmatprep.mubr.bf16.mxu0 0
  %1318 = vmatmul.mubr.bf16.gmra.mrb[0].mxu0 %v1283
  %v1319 = vpop.f32.mrb[0].mxu0
  %v1320 = vadd.f32 0.0, %v1319
  %v1321 = vpop.f32.mrb[0].mxu0
  %v1322 = vpop.f32.mrb[0].mxu0
  %v1323 = vadd.f32 0.0, %v1322
  %v1324 = vpop.f32.mrb[0].mxu0
  %1325 = vdwg.mxu0
  %v1326 = vadd.f32 %v946, %v1320
  %v1327 = vadd.f32 %v949, %v1323
  %v1328 = vlaneseq
  %v1329 = vshrl.u32 %v1328, 7
  %v1330 = vsub.s32 3, %v1329
  %v1331 = vrot.slane %v118, %v1330
  %1333 = vrot.lane.b32.xlu0 %v1331, 88
  %v1334 = vpop.permute.xlu0 %1333
  %v1336 = vmul.f32 %v164, %v1334
  %v1337 = vmul.f32 %v167, %v1334
  %1340 = vrot.lane.b32.xlu0 %v1336, 40
  %v1341 = vpop.permute.xlu0 %1340
  %1342 = vrot.lane.b32.xlu0 %v1337, 40
  %v1343 = vpop.permute.xlu0 %1342
  %v1346 = vsel %vm67, %v1341, 0.0
  %1347 = vadd.xlane.f32.xlu0 %v1346
  %v1348 = vpop.xlane.xlu0 %1347
  %v1349 = vsel %vm67, %v1343, 0.0
  %1350 = vadd.xlane.f32.xlu0 %v1349
  %v1351 = vpop.xlane.xlu0 %1350
  %v1352 = vrot.slane %v118, 3
  %v1353 = vsel %vm67, %v1352, 0
  %1355 = vmatprep.subr.mxu0 0.0
  %1356 = vmatpush1.msra.mxu0 %v189
  %1357 = vmatprep.subr.mxu0 0.0
  %1358 = vmatpush1.msra.mxu0 0.0
  %1359 = vmatprep.subr.mxu0 0.0
  %1360 = vmatpush1.msra.mxu0 0.0
  %1361 = vmatprep.subr.mxu0 0.0
  %1362 = vmatpush1.msra.mxu0 0.0
  %1363 = vmatprep.subr.mxu0 0.0
  %1364 = vmatpush1.msra.mxu0 0.0
  %1365 = vmatprep.subr.mxu0 0.0
  %1366 = vmatpush1.msra.mxu0 0.0
  %1367 = vmatprep.subr.mxu0 0.0
  %1368 = vmatpush1.msra.mxu0 0.0
  %1369 = vmatprep.subr.mxu0 0.0
  %1370 = vmatpush1.msra.mxu0 0.0
  %1371 = vmatprep.subr.mxu0 0.0
  %1372 = vmatpush1.msra.mxu0 0.0
  %1373 = vmatprep.subr.mxu0 0.0
  %1374 = vmatpush1.msra.mxu0 0.0
  %1375 = vmatprep.subr.mxu0 0.0
  %1376 = vmatpush1.msra.mxu0 0.0
  %1377 = vmatprep.subr.mxu0 0.0
  %1378 = vmatpush1.msra.mxu0 0.0
  %1379 = vmatprep.subr.mxu0 0.0
  %1380 = vmatpush1.msra.mxu0 0.0
  %1381 = vmatprep.subr.mxu0 0.0
  %1382 = vmatpush1.msra.mxu0 0.0
  %1383 = vmatprep.subr.mxu0 0.0
  %1384 = vmatpush1.msra.mxu0 0.0
  %1385 = vmatprep.subr.mxu0 0.0
  %1386 = vmatpush1.msra.mxu0 0.0
  %1387 = vmatprep.subr.mxu0 0.0
  %1388 = vmatpush1.msra.mxu0 0.0
  %1389 = vmatprep.subr.mxu0 0.0
  %1390 = vmatpush1.msra.mxu0 0.0
  %1391 = vmatprep.subr.mxu0 0.0
  %1392 = vmatpush1.msra.mxu0 0.0
  %1393 = vmatprep.subr.mxu0 0.0
  %1394 = vmatpush1.msra.mxu0 0.0
  %1395 = vmatprep.subr.mxu0 0.0
  %1396 = vmatpush1.msra.mxu0 0.0
  %1397 = vmatprep.subr.mxu0 0.0
  %1398 = vmatpush1.msra.mxu0 0.0
  %1399 = vmatprep.subr.mxu0 0.0
  %1400 = vmatpush1.msra.mxu0 0.0
  %1401 = vmatprep.subr.mxu0 0.0
  %1402 = vmatpush1.msra.mxu0 0.0
  %1403 = vmatprep.subr.mxu0 0.0
  %1404 = vmatpush1.msra.mxu0 0.0
  %1405 = vmatprep.subr.mxu0 0.0
  %1406 = vmatpush1.msra.mxu0 0.0
  %1407 = vmatprep.subr.mxu0 0.0
  %1408 = vmatpush1.msra.mxu0 0.0
  %1409 = vmatprep.subr.mxu0 0.0
  %1410 = vmatpush1.msra.mxu0 0.0
  %1411 = vmatprep.subr.mxu0 0.0
  %1412 = vmatpush1.msra.mxu0 0.0
  %1413 = vmatprep.subr.mxu0 0.0
  %1414 = vmatpush1.msra.mxu0 0.0
  %1415 = vmatprep.subr.mxu0 0.0
  %1416 = vmatpush1.msra.mxu0 0.0
  %1417 = vmatprep.subr.mxu0 0.0
  %1418 = vmatpush1.msra.mxu0 0.0
  %1419 = vmatprep.mubr.f32.mxu0 0.0
  %1420 = vmatmul.mubr.f32.gmra.mrb[0].mxu0 %v1353
  %v1421 = vpop.f32.mrb[0].mxu0
  %v1422 = vadd.f32 0.0, %v1421
  %v1423 = vpop.f32.mrb[0].mxu0
  %1424 = vdwg.mxu0
  %v1425 = vadd.f32 %v56, %v1348
  %v1426 = vadd.f32 %v57, %v1351
  %v1427 = vlaneseq
  %v1428 = vshrl.u32 %v1427, 7
  %v1429 = vsub.s32 0, %v1428
  %v1430 = vrot.slane %v1422, %v1429
  %v1431 = vadd.f32 %v1425, %v1430
  %v1432 = vadd.f32 %v1426, %v1430
  %1433 = vset.pattern.permute.xlu0 88
  %1434 = vperm.xlu0 %1433, %v164
  %v1435 = vpop.permute.xlu0 %1434
  %1437 = vset.pattern.permute.xlu0 88
  %1438 = vperm.xlu0 %1437, %v167
  %v1439 = vpop.permute.xlu0 %1438
  %v1441 = vlaneseq
  %v1442 = vshrl.u32 %v1441, 7
  %v1443 = vsub.s32 0, %v1442
  %v1444 = vrot.slane %v189, %v1443
  %v1445 = vadd.f32 %v1435, %v1444
  %v1446 = vadd.f32 %v1439, %v1444
  %v1447 = vand.u32 2147483647, %v1445
  %v1448 = vand.u32 2147483647, %v1446
  %v1449 = vrot.slane %v119, 3
  %s1450 = vtos %v1449
  %v1451 = vstv %s1450
  %v1453 = vmul.f32 %v1451, %v1447
  %v1454 = vmul.f32 %v1451, %v1448
  %v1455 = vadd.f32 %v1431, %v1453
  %v1456 = vadd.f32 %v1432, %v1454
  %1457 = vset.pattern.permute.xlu0 89
  %1458 = vperm.xlu0 %1457, %v164
  %v1459 = vpop.permute.xlu0 %1458
  %1461 = vset.pattern.permute.xlu0 89
  %1462 = vperm.xlu0 %1461, %v167
  %v1463 = vpop.permute.xlu0 %1462
  %v1465 = vlaneseq
  %v1466 = vshrl.u32 %v1465, 7
  %v1467 = vsub.s32 1, %v1466
  %v1468 = vrot.slane %v189, %v1467
  %v1469 = vadd.f32 %v1459, %v1468
  %v1470 = vadd.f32 %v1463, %v1468
  %v1471 = vand.u32 2147483647, %v1469
  %v1472 = vand.u32 2147483647, %v1470
  %1473 = vrot.lane.b32.xlu0 %v1449, 127
  %v1474 = vpop.permute.xlu0 %1473
  %s1475 = vtos %v1474
  %v1476 = vstv %s1475
  %v1478 = vmul.f32 %v1476, %v1471
  %v1479 = vmul.f32 %v1476, %v1472
  %v1480 = vadd.f32 %v1455, %v1478
  %v1481 = vadd.f32 %v1456, %v1479
  %1482 = vset.pattern.permute.xlu0 90
  %1483 = vperm.xlu0 %1482, %v164
  %v1484 = vpop.permute.xlu0 %1483
  %1486 = vset.pattern.permute.xlu0 90
  %1487 = vperm.xlu0 %1486, %v167
  %v1488 = vpop.permute.xlu0 %1487
  %v1490 = vlaneseq
  %v1491 = vshrl.u32 %v1490, 7
  %v1492 = vsub.s32 2, %v1491
  %v1493 = vrot.slane %v189, %v1492
  %v1494 = vadd.f32 %v1484, %v1493
  %v1495 = vadd.f32 %v1488, %v1493
  %v1496 = vand.u32 2147483647, %v1494
  %v1497 = vand.u32 2147483647, %v1495
  %1498 = vrot.lane.b32.xlu0 %v1449, 126
  %v1499 = vpop.permute.xlu0 %1498
  %s1500 = vtos %v1499
  %v1501 = vstv %s1500
  %v1503 = vmul.f32 %v1501, %v1496
  %v1504 = vmul.f32 %v1501, %v1497
  %v1505 = vadd.f32 %v1480, %v1503
  %v1506 = vadd.f32 %v1481, %v1504
  %1507 = vset.pattern.permute.xlu0 91
  %1508 = vperm.xlu0 %1507, %v164
  %v1509 = vpop.permute.xlu0 %1508
  %1511 = vset.pattern.permute.xlu0 91
  %1512 = vperm.xlu0 %1511, %v167
  %v1513 = vpop.permute.xlu0 %1512
  %v1515 = vlaneseq
  %v1516 = vshrl.u32 %v1515, 7
  %v1517 = vsub.s32 3, %v1516
  %v1518 = vrot.slane %v189, %v1517
  %v1519 = vadd.f32 %v1509, %v1518
  %v1520 = vadd.f32 %v1513, %v1518
  %v1521 = vand.u32 2147483647, %v1519
  %v1522 = vand.u32 2147483647, %v1520
  %1523 = vrot.lane.b32.xlu0 %v1449, 125
  %v1524 = vpop.permute.xlu0 %1523
  %s1525 = vtos %v1524
  %v1526 = vstv %s1525
  %v1528 = vmul.f32 %v1526, %v1521
  %v1529 = vmul.f32 %v1526, %v1522
  %v1530 = vadd.f32 %v1505, %v1528
  %v1531 = vadd.f32 %v1506, %v1529
  %1532 = vset.pattern.permute.xlu0 92
  %1533 = vperm.xlu0 %1532, %v164
  %v1534 = vpop.permute.xlu0 %1533
  %1536 = vset.pattern.permute.xlu0 92
  %1537 = vperm.xlu0 %1536, %v167
  %v1538 = vpop.permute.xlu0 %1537
  %v1540 = vlaneseq
  %v1541 = vshrl.u32 %v1540, 7
  %v1542 = vsub.s32 4, %v1541
  %v1543 = vrot.slane %v189, %v1542
  %v1544 = vadd.f32 %v1534, %v1543
  %v1545 = vadd.f32 %v1538, %v1543
  %v1546 = vand.u32 2147483647, %v1544
  %v1547 = vand.u32 2147483647, %v1545
  %1548 = vrot.lane.b32.xlu0 %v1449, 124
  %v1549 = vpop.permute.xlu0 %1548
  %s1550 = vtos %v1549
  %v1551 = vstv %s1550
  %v1553 = vmul.f32 %v1551, %v1546
  %v1554 = vmul.f32 %v1551, %v1547
  %v1555 = vadd.f32 %v1530, %v1553
  %v1556 = vadd.f32 %v1531, %v1554
  %1557 = vset.pattern.permute.xlu0 93
  %1558 = vperm.xlu0 %1557, %v164
  %v1559 = vpop.permute.xlu0 %1558
  %1561 = vset.pattern.permute.xlu0 93
  %1562 = vperm.xlu0 %1561, %v167
  %v1563 = vpop.permute.xlu0 %1562
  %v1565 = vlaneseq
  %v1566 = vshrl.u32 %v1565, 7
  %v1567 = vsub.s32 5, %v1566
  %v1568 = vrot.slane %v189, %v1567
  %v1569 = vadd.f32 %v1559, %v1568
  %v1570 = vadd.f32 %v1563, %v1568
  %v1571 = vand.u32 2147483647, %v1569
  %v1572 = vand.u32 2147483647, %v1570
  %1573 = vrot.lane.b32.xlu0 %v1449, 123
  %v1574 = vpop.permute.xlu0 %1573
  %s1575 = vtos %v1574
  %v1576 = vstv %s1575
  %v1578 = vmul.f32 %v1576, %v1571
  %v1579 = vmul.f32 %v1576, %v1572
  %v1580 = vadd.f32 %v1555, %v1578
  %v1581 = vadd.f32 %v1556, %v1579
  %1582 = vset.pattern.permute.xlu0 94
  %1583 = vperm.xlu0 %1582, %v164
  %v1584 = vpop.permute.xlu0 %1583
  %1586 = vset.pattern.permute.xlu0 94
  %1587 = vperm.xlu0 %1586, %v167
  %v1588 = vpop.permute.xlu0 %1587
  %v1590 = vlaneseq
  %v1591 = vshrl.u32 %v1590, 7
  %v1592 = vsub.s32 6, %v1591
  %v1593 = vrot.slane %v189, %v1592
  %v1594 = vadd.f32 %v1584, %v1593
  %v1595 = vadd.f32 %v1588, %v1593
  %v1596 = vand.u32 2147483647, %v1594
  %v1597 = vand.u32 2147483647, %v1595
  %1598 = vrot.lane.b32.xlu0 %v1449, 122
  %v1599 = vpop.permute.xlu0 %1598
  %s1600 = vtos %v1599
  %v1601 = vstv %s1600
  %v1603 = vmul.f32 %v1601, %v1596
  %v1604 = vmul.f32 %v1601, %v1597
  %v1605 = vadd.f32 %v1580, %v1603
  %v1606 = vadd.f32 %v1581, %v1604
  %1607 = vset.pattern.permute.xlu0 95
  %1608 = vperm.xlu0 %1607, %v164
  %v1609 = vpop.permute.xlu0 %1608
  %1611 = vset.pattern.permute.xlu0 95
  %1612 = vperm.xlu0 %1611, %v167
  %v1613 = vpop.permute.xlu0 %1612
  %v1615 = vlaneseq
  %v1616 = vshrl.u32 %v1615, 7
  %v1617 = vsub.s32 7, %v1616
  %v1618 = vrot.slane %v189, %v1617
  %v1619 = vadd.f32 %v1609, %v1618
  %v1620 = vadd.f32 %v1613, %v1618
  %v1621 = vand.u32 2147483647, %v1619
  %v1622 = vand.u32 2147483647, %v1620
  %1623 = vrot.lane.b32.xlu0 %v1449, 121
  %v1624 = vpop.permute.xlu0 %1623
  %s1625 = vtos %v1624
  %v1626 = vstv %s1625
  %v1628 = vmul.f32 %v1626, %v1621
  %v1629 = vmul.f32 %v1626, %v1622
  %v1630 = vadd.f32 %v1605, %v1628
  %v1631 = vadd.f32 %v1606, %v1629
  %v1632 = vsel %vm508, %v1630, -inf
  %1633 = vmax.xlane.f32.xlu0 %v1632
  %v1634 = vpop.xlane.xlu0 %1633
  %v1635 = vsel %vm508, %v1631, -inf
  %1636 = vmax.xlane.f32.xlu0 %v1635
  %v1637 = vpop.xlane.xlu0 %1636
  %v1638 = vsub.f32 %v1630, %v1634
  %v1639 = vsub.f32 %v1631, %v1637
  %v1640 = vmul.f32 %v1638, 1.442695
  %v1641 = vpow.pop %v1640
  %v1642 = vmul.f32 %v1639, 1.442695
  %v1643 = vpow.pop %v1642
  %v1644 = vsel %vm508, %v1641, 0.0
  %1645 = vadd.xlane.f32.xlu0 %v1644
  %v1646 = vpop.xlane.xlu0 %1645
  %v1647 = vsel %vm508, %v1643, 0.0
  %1648 = vadd.xlane.f32.xlu0 %v1647
  %v1649 = vpop.xlane.xlu0 %1648
  %v1650 = vrcp.pop %v1646
  %v1651 = vrcp.pop %v1649
  %v1652 = vmul.f32 %v1641, %v1650
  %v1653 = vmul.f32 %v1643, %v1651
  %v1654 = vpack.c.bf16 %v1653, %v1652
  %1655 = vrot.lane.b32.xlu0 %v532, 104
  %v1656 = vpop.permute.xlu0 %1655
  %v1659 = vsel %vm508, %v1654, 0
  %1661 = vmatprep.subr.bf16.mxu0 0
  %1662 = vmatpush1.bf16.msra.mxu0 %v1656
  %1663 = vmatprep.subr.bf16.mxu0 0
  %1664 = vmatpush1.bf16.msra.mxu0 0
  %1665 = vmatprep.subr.bf16.mxu0 0
  %1666 = vmatpush1.bf16.msra.mxu0 0
  %1667 = vmatprep.subr.bf16.mxu0 0
  %1668 = vmatpush1.bf16.msra.mxu0 0
  %1669 = vmatprep.subr.bf16.mxu0 0
  %1670 = vmatpush1.bf16.msra.mxu0 0
  %1671 = vmatprep.subr.bf16.mxu0 0
  %1672 = vmatpush1.bf16.msra.mxu0 0
  %1673 = vmatprep.subr.bf16.mxu0 0
  %1674 = vmatpush1.bf16.msra.mxu0 0
  %1675 = vmatprep.subr.bf16.mxu0 0
  %1676 = vmatpush1.bf16.msra.mxu0 0
  %1677 = vmatprep.subr.bf16.mxu0 0
  %1678 = vmatpush1.bf16.msra.mxu0 0
  %1679 = vmatprep.subr.bf16.mxu0 0
  %1680 = vmatpush1.bf16.msra.mxu0 0
  %1681 = vmatprep.subr.bf16.mxu0 0
  %1682 = vmatpush1.bf16.msra.mxu0 0
  %1683 = vmatprep.subr.bf16.mxu0 0
  %1684 = vmatpush1.bf16.msra.mxu0 0
  %1685 = vmatprep.subr.bf16.mxu0 0
  %1686 = vmatpush1.bf16.msra.mxu0 0
  %1687 = vmatprep.subr.bf16.mxu0 0
  %1688 = vmatpush1.bf16.msra.mxu0 0
  %1689 = vmatprep.subr.bf16.mxu0 0
  %1690 = vmatpush1.bf16.msra.mxu0 0
  %1691 = vmatprep.subr.bf16.mxu0 0
  %1692 = vmatpush1.bf16.msra.mxu0 0
  %1693 = vmatprep.mubr.bf16.mxu0 0
  %1694 = vmatmul.mubr.bf16.gmra.mrb[0].mxu0 %v1659
  %v1695 = vpop.f32.mrb[0].mxu0
  %v1696 = vadd.f32 0.0, %v1695
  %v1697 = vpop.f32.mrb[0].mxu0
  %v1698 = vpop.f32.mrb[0].mxu0
  %v1699 = vadd.f32 0.0, %v1698
  %v1700 = vpop.f32.mrb[0].mxu0
  %1701 = vdwg.mxu0
  %v1702 = vadd.f32 %v1326, %v1696
  %v1703 = vadd.f32 %v1327, %v1699
  %v1704 = vlaneseq
  %v1705 = vshrl.u32 %v1704, 7
  %v1706 = vsub.s32 4, %v1705
  %v1707 = vrot.slane %v118, %v1706
  %1709 = vrot.lane.b32.xlu0 %v1707, 96
  %v1710 = vpop.permute.xlu0 %1709
  %v1712 = vmul.f32 %v164, %v1710
  %v1713 = vmul.f32 %v167, %v1710
  %1716 = vrot.lane.b32.xlu0 %v1712, 32
  %v1717 = vpop.permute.xlu0 %1716
  %1718 = vrot.lane.b32.xlu0 %v1713, 32
  %v1719 = vpop.permute.xlu0 %1718
  %v1722 = vsel %vm67, %v1717, 0.0
  %1723 = vadd.xlane.f32.xlu0 %v1722
  %v1724 = vpop.xlane.xlu0 %1723
  %v1725 = vsel %vm67, %v1719, 0.0
  %1726 = vadd.xlane.f32.xlu0 %v1725
  %v1727 = vpop.xlane.xlu0 %1726
  %v1728 = vrot.slane %v118, 4
  %v1729 = vsel %vm67, %v1728, 0
  %1731 = vmatprep.subr.mxu0 0.0
  %1732 = vmatpush1.msra.mxu0 %v190
  %1733 = vmatprep.subr.mxu0 0.0
  %1734 = vmatpush1.msra.mxu0 0.0
  %1735 = vmatprep.subr.mxu0 0.0
  %1736 = vmatpush1.msra.mxu0 0.0
  %1737 = vmatprep.subr.mxu0 0.0
  %1738 = vmatpush1.msra.mxu0 0.0
  %1739 = vmatprep.subr.mxu0 0.0
  %1740 = vmatpush1.msra.mxu0 0.0
  %1741 = vmatprep.subr.mxu0 0.0
  %1742 = vmatpush1.msra.mxu0 0.0
  %1743 = vmatprep.subr.mxu0 0.0
  %1744 = vmatpush1.msra.mxu0 0.0
  %1745 = vmatprep.subr.mxu0 0.0
  %1746 = vmatpush1.msra.mxu0 0.0
  %1747 = vmatprep.subr.mxu0 0.0
  %1748 = vmatpush1.msra.mxu0 0.0
  %1749 = vmatprep.subr.mxu0 0.0
  %1750 = vmatpush1.msra.mxu0 0.0
  %1751 = vmatprep.subr.mxu0 0.0
  %1752 = vmatpush1.msra.mxu0 0.0
  %1753 = vmatprep.subr.mxu0 0.0
  %1754 = vmatpush1.msra.mxu0 0.0
  %1755 = vmatprep.subr.mxu0 0.0
  %1756 = vmatpush1.msra.mxu0 0.0
  %1757 = vmatprep.subr.mxu0 0.0
  %1758 = vmatpush1.msra.mxu0 0.0
  %1759 = vmatprep.subr.mxu0 0.0
  %1760 = vmatpush1.msra.mxu0 0.0
  %1761 = vmatprep.subr.mxu0 0.0
  %1762 = vmatpush1.msra.mxu0 0.0
  %1763 = vmatprep.subr.mxu0 0.0
  %1764 = vmatpush1.msra.mxu0 0.0
  %1765 = vmatprep.subr.mxu0 0.0
  %1766 = vmatpush1.msra.mxu0 0.0
  %1767 = vmatprep.subr.mxu0 0.0
  %1768 = vmatpush1.msra.mxu0 0.0
  %1769 = vmatprep.subr.mxu0 0.0
  %1770 = vmatpush1.msra.mxu0 0.0
  %1771 = vmatprep.subr.mxu0 0.0
  %1772 = vmatpush1.msra.mxu0 0.0
  %1773 = vmatprep.subr.mxu0 0.0
  %1774 = vmatpush1.msra.mxu0 0.0
  %1775 = vmatprep.subr.mxu0 0.0
  %1776 = vmatpush1.msra.mxu0 0.0
  %1777 = vmatprep.subr.mxu0 0.0
  %1778 = vmatpush1.msra.mxu0 0.0
  %1779 = vmatprep.subr.mxu0 0.0
  %1780 = vmatpush1.msra.mxu0 0.0
  %1781 = vmatprep.subr.mxu0 0.0
  %1782 = vmatpush1.msra.mxu0 0.0
  %1783 = vmatprep.subr.mxu0 0.0
  %1784 = vmatpush1.msra.mxu0 0.0
  %1785 = vmatprep.subr.mxu0 0.0
  %1786 = vmatpush1.msra.mxu0 0.0
  %1787 = vmatprep.subr.mxu0 0.0
  %1788 = vmatpush1.msra.mxu0 0.0
  %1789 = vmatprep.subr.mxu0 0.0
  %1790 = vmatpush1.msra.mxu0 0.0
  %1791 = vmatprep.subr.mxu0 0.0
  %1792 = vmatpush1.msra.mxu0 0.0
  %1793 = vmatprep.subr.mxu0 0.0
  %1794 = vmatpush1.msra.mxu0 0.0
  %1795 = vmatprep.mubr.f32.mxu0 0.0
  %1796 = vmatmul.mubr.f32.gmra.mrb[0].mxu0 %v1729
  %v1797 = vpop.f32.mrb[0].mxu0
  %v1798 = vadd.f32 0.0, %v1797
  %v1799 = vpop.f32.mrb[0].mxu0
  %1800 = vdwg.mxu0
  %v1801 = vadd.f32 %v56, %v1724
  %v1802 = vadd.f32 %v57, %v1727
  %v1803 = vlaneseq
  %v1804 = vshrl.u32 %v1803, 7
  %v1805 = vsub.s32 0, %v1804
  %v1806 = vrot.slane %v1798, %v1805
  %v1807 = vadd.f32 %v1801, %v1806
  %v1808 = vadd.f32 %v1802, %v1806
  %1809 = vset.pattern.permute.xlu0 96
  %1810 = vperm.xlu0 %1809, %v164
  %v1811 = vpop.permute.xlu0 %1810
  %1813 = vset.pattern.permute.xlu0 96
  %1814 = vperm.xlu0 %1813, %v167
  %v1815 = vpop.permute.xlu0 %1814
  %v1817 = vlaneseq
  %v1818 = vshrl.u32 %v1817, 7
  %v1819 = vsub.s32 0, %v1818
  %v1820 = vrot.slane %v190, %v1819
  %v1821 = vadd.f32 %v1811, %v1820
  %v1822 = vadd.f32 %v1815, %v1820
  %v1823 = vand.u32 2147483647, %v1821
  %v1824 = vand.u32 2147483647, %v1822
  %v1825 = vrot.slane %v119, 4
  %s1826 = vtos %v1825
  %v1827 = vstv %s1826
  %v1829 = vmul.f32 %v1827, %v1823
  %v1830 = vmul.f32 %v1827, %v1824
  %v1831 = vadd.f32 %v1807, %v1829
  %v1832 = vadd.f32 %v1808, %v1830
  %1833 = vset.pattern.permute.xlu0 97
  %1834 = vperm.xlu0 %1833, %v164
  %v1835 = vpop.permute.xlu0 %1834
  %1837 = vset.pattern.permute.xlu0 97
  %1838 = vperm.xlu0 %1837, %v167
  %v1839 = vpop.permute.xlu0 %1838
  %v1841 = vlaneseq
  %v1842 = vshrl.u32 %v1841, 7
  %v1843 = vsub.s32 1, %v1842
  %v1844 = vrot.slane %v190, %v1843
  %v1845 = vadd.f32 %v1835, %v1844
  %v1846 = vadd.f32 %v1839, %v1844
  %v1847 = vand.u32 2147483647, %v1845
  %v1848 = vand.u32 2147483647, %v1846
  %1849 = vrot.lane.b32.xlu0 %v1825, 127
  %v1850 = vpop.permute.xlu0 %1849
  %s1851 = vtos %v1850
  %v1852 = vstv %s1851
  %v1854 = vmul.f32 %v1852, %v1847
  %v1855 = vmul.f32 %v1852, %v1848
  %v1856 = vadd.f32 %v1831, %v1854
  %v1857 = vadd.f32 %v1832, %v1855
  %1858 = vset.pattern.permute.xlu0 98
  %1859 = vperm.xlu0 %1858, %v164
  %v1860 = vpop.permute.xlu0 %1859
  %1862 = vset.pattern.permute.xlu0 98
  %1863 = vperm.xlu0 %1862, %v167
  %v1864 = vpop.permute.xlu0 %1863
  %v1866 = vlaneseq
  %v1867 = vshrl.u32 %v1866, 7
  %v1868 = vsub.s32 2, %v1867
  %v1869 = vrot.slane %v190, %v1868
  %v1870 = vadd.f32 %v1860, %v1869
  %v1871 = vadd.f32 %v1864, %v1869
  %v1872 = vand.u32 2147483647, %v1870
  %v1873 = vand.u32 2147483647, %v1871
  %1874 = vrot.lane.b32.xlu0 %v1825, 126
  %v1875 = vpop.permute.xlu0 %1874
  %s1876 = vtos %v1875
  %v1877 = vstv %s1876
  %v1879 = vmul.f32 %v1877, %v1872
  %v1880 = vmul.f32 %v1877, %v1873
  %v1881 = vadd.f32 %v1856, %v1879
  %v1882 = vadd.f32 %v1857, %v1880
  %1883 = vset.pattern.permute.xlu0 99
  %1884 = vperm.xlu0 %1883, %v164
  %v1885 = vpop.permute.xlu0 %1884
  %1887 = vset.pattern.permute.xlu0 99
  %1888 = vperm.xlu0 %1887, %v167
  %v1889 = vpop.permute.xlu0 %1888
  %v1891 = vlaneseq
  %v1892 = vshrl.u32 %v1891, 7
  %v1893 = vsub.s32 3, %v1892
  %v1894 = vrot.slane %v190, %v1893
  %v1895 = vadd.f32 %v1885, %v1894
  %v1896 = vadd.f32 %v1889, %v1894
  %v1897 = vand.u32 2147483647, %v1895
  %v1898 = vand.u32 2147483647, %v1896
  %1899 = vrot.lane.b32.xlu0 %v1825, 125
  %v1900 = vpop.permute.xlu0 %1899
  %s1901 = vtos %v1900
  %v1902 = vstv %s1901
  %v1904 = vmul.f32 %v1902, %v1897
  %v1905 = vmul.f32 %v1902, %v1898
  %v1906 = vadd.f32 %v1881, %v1904
  %v1907 = vadd.f32 %v1882, %v1905
  %1908 = vset.pattern.permute.xlu0 100
  %1909 = vperm.xlu0 %1908, %v164
  %v1910 = vpop.permute.xlu0 %1909
  %1912 = vset.pattern.permute.xlu0 100
  %1913 = vperm.xlu0 %1912, %v167
  %v1914 = vpop.permute.xlu0 %1913
  %v1916 = vlaneseq
  %v1917 = vshrl.u32 %v1916, 7
  %v1918 = vsub.s32 4, %v1917
  %v1919 = vrot.slane %v190, %v1918
  %v1920 = vadd.f32 %v1910, %v1919
  %v1921 = vadd.f32 %v1914, %v1919
  %v1922 = vand.u32 2147483647, %v1920
  %v1923 = vand.u32 2147483647, %v1921
  %1924 = vrot.lane.b32.xlu0 %v1825, 124
  %v1925 = vpop.permute.xlu0 %1924
  %s1926 = vtos %v1925
  %v1927 = vstv %s1926
  %v1929 = vmul.f32 %v1927, %v1922
  %v1930 = vmul.f32 %v1927, %v1923
  %v1931 = vadd.f32 %v1906, %v1929
  %v1932 = vadd.f32 %v1907, %v1930
  %1933 = vset.pattern.permute.xlu0 101
  %1934 = vperm.xlu0 %1933, %v164
  %v1935 = vpop.permute.xlu0 %1934
  %1937 = vset.pattern.permute.xlu0 101
  %1938 = vperm.xlu0 %1937, %v167
  %v1939 = vpop.permute.xlu0 %1938
  %v1941 = vlaneseq
  %v1942 = vshrl.u32 %v1941, 7
  %v1943 = vsub.s32 5, %v1942
  %v1944 = vrot.slane %v190, %v1943
  %v1945 = vadd.f32 %v1935, %v1944
  %v1946 = vadd.f32 %v1939, %v1944
  %v1947 = vand.u32 2147483647, %v1945
  %v1948 = vand.u32 2147483647, %v1946
  %1949 = vrot.lane.b32.xlu0 %v1825, 123
  %v1950 = vpop.permute.xlu0 %1949
  %s1951 = vtos %v1950
  %v1952 = vstv %s1951
  %v1954 = vmul.f32 %v1952, %v1947
  %v1955 = vmul.f32 %v1952, %v1948
  %v1956 = vadd.f32 %v1931, %v1954
  %v1957 = vadd.f32 %v1932, %v1955
  %1958 = vset.pattern.permute.xlu0 102
  %1959 = vperm.xlu0 %1958, %v164
  %v1960 = vpop.permute.xlu0 %1959
  %1962 = vset.pattern.permute.xlu0 102
  %1963 = vperm.xlu0 %1962, %v167
  %v1964 = vpop.permute.xlu0 %1963
  %v1966 = vlaneseq
  %v1967 = vshrl.u32 %v1966, 7
  %v1968 = vsub.s32 6, %v1967
  %v1969 = vrot.slane %v190, %v1968
  %v1970 = vadd.f32 %v1960, %v1969
  %v1971 = vadd.f32 %v1964, %v1969
  %v1972 = vand.u32 2147483647, %v1970
  %v1973 = vand.u32 2147483647, %v1971
  %1974 = vrot.lane.b32.xlu0 %v1825, 122
  %v1975 = vpop.permute.xlu0 %1974
  %s1976 = vtos %v1975
  %v1977 = vstv %s1976
  %v1979 = vmul.f32 %v1977, %v1972
  %v1980 = vmul.f32 %v1977, %v1973
  %v1981 = vadd.f32 %v1956, %v1979
  %v1982 = vadd.f32 %v1957, %v1980
  %1983 = vset.pattern.permute.xlu0 103
  %1984 = vperm.xlu0 %1983, %v164
  %v1985 = vpop.permute.xlu0 %1984
  %1987 = vset.pattern.permute.xlu0 103
  %1988 = vperm.xlu0 %1987, %v167
  %v1989 = vpop.permute.xlu0 %1988
  %v1991 = vlaneseq
  %v1992 = vshrl.u32 %v1991, 7
  %v1993 = vsub.s32 7, %v1992
  %v1994 = vrot.slane %v190, %v1993
  %v1995 = vadd.f32 %v1985, %v1994
  %v1996 = vadd.f32 %v1989, %v1994
  %v1997 = vand.u32 2147483647, %v1995
  %v1998 = vand.u32 2147483647, %v1996
  %1999 = vrot.lane.b32.xlu0 %v1825, 121
  %v2000 = vpop.permute.xlu0 %1999
  %s2001 = vtos %v2000
  %v2002 = vstv %s2001
  %v2004 = vmul.f32 %v2002, %v1997
  %v2005 = vmul.f32 %v2002, %v1998
  %v2006 = vadd.f32 %v1981, %v2004
  %v2007 = vadd.f32 %v1982, %v2005
  %v2008 = vsel %vm508, %v2006, -inf
  %2009 = vmax.xlane.f32.xlu0 %v2008
  %v2010 = vpop.xlane.xlu0 %2009
  %v2011 = vsel %vm508, %v2007, -inf
  %2012 = vmax.xlane.f32.xlu0 %v2011
  %v2013 = vpop.xlane.xlu0 %2012
  %v2014 = vsub.f32 %v2006, %v2010
  %v2015 = vsub.f32 %v2007, %v2013
  %v2016 = vmul.f32 %v2014, 1.442695
  %v2017 = vpow.pop %v2016
  %v2018 = vmul.f32 %v2015, 1.442695
  %v2019 = vpow.pop %v2018
  %v2020 = vsel %vm508, %v2017, 0.0
  %2021 = vadd.xlane.f32.xlu0 %v2020
  %v2022 = vpop.xlane.xlu0 %2021
  %v2023 = vsel %vm508, %v2019, 0.0
  %2024 = vadd.xlane.f32.xlu0 %v2023
  %v2025 = vpop.xlane.xlu0 %2024
  %v2026 = vrcp.pop %v2022
  %v2027 = vrcp.pop %v2025
  %v2028 = vmul.f32 %v2017, %v2026
  %v2029 = vmul.f32 %v2019, %v2027
  %v2030 = vpack.c.bf16 %v2029, %v2028
  %2031 = vrot.lane.b32.xlu0 %v532, 96
  %v2032 = vpop.permute.xlu0 %2031
  %v2035 = vsel %vm508, %v2030, 0
  %2037 = vmatprep.subr.bf16.mxu0 0
  %2038 = vmatpush1.bf16.msra.mxu0 %v2032
  %2039 = vmatprep.subr.bf16.mxu0 0
  %2040 = vmatpush1.bf16.msra.mxu0 0
  %2041 = vmatprep.subr.bf16.mxu0 0
  %2042 = vmatpush1.bf16.msra.mxu0 0
  %2043 = vmatprep.subr.bf16.mxu0 0
  %2044 = vmatpush1.bf16.msra.mxu0 0
  %2045 = vmatprep.subr.bf16.mxu0 0
  %2046 = vmatpush1.bf16.msra.mxu0 0
  %2047 = vmatprep.subr.bf16.mxu0 0
  %2048 = vmatpush1.bf16.msra.mxu0 0
  %2049 = vmatprep.subr.bf16.mxu0 0
  %2050 = vmatpush1.bf16.msra.mxu0 0
  %2051 = vmatprep.subr.bf16.mxu0 0
  %2052 = vmatpush1.bf16.msra.mxu0 0
  %2053 = vmatprep.subr.bf16.mxu0 0
  %2054 = vmatpush1.bf16.msra.mxu0 0
  %2055 = vmatprep.subr.bf16.mxu0 0
  %2056 = vmatpush1.bf16.msra.mxu0 0
  %2057 = vmatprep.subr.bf16.mxu0 0
  %2058 = vmatpush1.bf16.msra.mxu0 0
  %2059 = vmatprep.subr.bf16.mxu0 0
  %2060 = vmatpush1.bf16.msra.mxu0 0
  %2061 = vmatprep.subr.bf16.mxu0 0
  %2062 = vmatpush1.bf16.msra.mxu0 0
  %2063 = vmatprep.subr.bf16.mxu0 0
  %2064 = vmatpush1.bf16.msra.mxu0 0
  %2065 = vmatprep.subr.bf16.mxu0 0
  %2066 = vmatpush1.bf16.msra.mxu0 0
  %2067 = vmatprep.subr.bf16.mxu0 0
  %2068 = vmatpush1.bf16.msra.mxu0 0
  %2069 = vmatprep.mubr.bf16.mxu0 0
  %2070 = vmatmul.mubr.bf16.gmra.mrb[0].mxu0 %v2035
  %v2071 = vpop.f32.mrb[0].mxu0
  %v2072 = vadd.f32 0.0, %v2071
  %v2073 = vpop.f32.mrb[0].mxu0
  %v2074 = vpop.f32.mrb[0].mxu0
  %v2075 = vadd.f32 0.0, %v2074
  %v2076 = vpop.f32.mrb[0].mxu0
  %2077 = vdwg.mxu0
  %v2078 = vadd.f32 %v1702, %v2072
  %v2079 = vadd.f32 %v1703, %v2075
  %v2080 = vlaneseq
  %v2081 = vshrl.u32 %v2080, 7
  %v2082 = vsub.s32 5, %v2081
  %v2083 = vrot.slane %v118, %v2082
  %2085 = vrot.lane.b32.xlu0 %v2083, 104
  %v2086 = vpop.permute.xlu0 %2085
  %v2088 = vmul.f32 %v164, %v2086
  %v2089 = vmul.f32 %v167, %v2086
  %2092 = vrot.lane.b32.xlu0 %v2088, 24
  %v2093 = vpop.permute.xlu0 %2092
  %2094 = vrot.lane.b32.xlu0 %v2089, 24
  %v2095 = vpop.permute.xlu0 %2094
  %v2098 = vsel %vm67, %v2093, 0.0
  %2099 = vadd.xlane.f32.xlu0 %v2098
  %v2100 = vpop.xlane.xlu0 %2099
  %v2101 = vsel %vm67, %v2095, 0.0
  %2102 = vadd.xlane.f32.xlu0 %v2101
  %v2103 = vpop.xlane.xlu0 %2102
  %v2104 = vrot.slane %v118, 5
  %v2105 = vsel %vm67, %v2104, 0
  %2107 = vmatprep.subr.mxu0 0.0
  %2108 = vmatpush1.msra.mxu0 %v191
  %2109 = vmatprep.subr.mxu0 0.0
  %2110 = vmatpush1.msra.mxu0 0.0
  %2111 = vmatprep.subr.mxu0 0.0
  %2112 = vmatpush1.msra.mxu0 0.0
  %2113 = vmatprep.subr.mxu0 0.0
  %2114 = vmatpush1.msra.mxu0 0.0
  %2115 = vmatprep.subr.mxu0 0.0
  %2116 = vmatpush1.msra.mxu0 0.0
  %2117 = vmatprep.subr.mxu0 0.0
  %2118 = vmatpush1.msra.mxu0 0.0
  %2119 = vmatprep.subr.mxu0 0.0
  %2120 = vmatpush1.msra.mxu0 0.0
  %2121 = vmatprep.subr.mxu0 0.0
  %2122 = vmatpush1.msra.mxu0 0.0
  %2123 = vmatprep.subr.mxu0 0.0
  %2124 = vmatpush1.msra.mxu0 0.0
  %2125 = vmatprep.subr.mxu0 0.0
  %2126 = vmatpush1.msra.mxu0 0.0
  %2127 = vmatprep.subr.mxu0 0.0
  %2128 = vmatpush1.msra.mxu0 0.0
  %2129 = vmatprep.subr.mxu0 0.0
  %2130 = vmatpush1.msra.mxu0 0.0
  %2131 = vmatprep.subr.mxu0 0.0
  %2132 = vmatpush1.msra.mxu0 0.0
  %2133 = vmatprep.subr.mxu0 0.0
  %2134 = vmatpush1.msra.mxu0 0.0
  %2135 = vmatprep.subr.mxu0 0.0
  %2136 = vmatpush1.msra.mxu0 0.0
  %2137 = vmatprep.subr.mxu0 0.0
  %2138 = vmatpush1.msra.mxu0 0.0
  %2139 = vmatprep.subr.mxu0 0.0
  %2140 = vmatpush1.msra.mxu0 0.0
  %2141 = vmatprep.subr.mxu0 0.0
  %2142 = vmatpush1.msra.mxu0 0.0
  %2143 = vmatprep.subr.mxu0 0.0
  %2144 = vmatpush1.msra.mxu0 0.0
  %2145 = vmatprep.subr.mxu0 0.0
  %2146 = vmatpush1.msra.mxu0 0.0
  %2147 = vmatprep.subr.mxu0 0.0
  %2148 = vmatpush1.msra.mxu0 0.0
  %2149 = vmatprep.subr.mxu0 0.0
  %2150 = vmatpush1.msra.mxu0 0.0
  %2151 = vmatprep.subr.mxu0 0.0
  %2152 = vmatpush1.msra.mxu0 0.0
  %2153 = vmatprep.subr.mxu0 0.0
  %2154 = vmatpush1.msra.mxu0 0.0
  %2155 = vmatprep.subr.mxu0 0.0
  %2156 = vmatpush1.msra.mxu0 0.0
  %2157 = vmatprep.subr.mxu0 0.0
  %2158 = vmatpush1.msra.mxu0 0.0
  %2159 = vmatprep.subr.mxu0 0.0
  %2160 = vmatpush1.msra.mxu0 0.0
  %2161 = vmatprep.subr.mxu0 0.0
  %2162 = vmatpush1.msra.mxu0 0.0
  %2163 = vmatprep.subr.mxu0 0.0
  %2164 = vmatpush1.msra.mxu0 0.0
  %2165 = vmatprep.subr.mxu0 0.0
  %2166 = vmatpush1.msra.mxu0 0.0
  %2167 = vmatprep.subr.mxu0 0.0
  %2168 = vmatpush1.msra.mxu0 0.0
  %2169 = vmatprep.subr.mxu0 0.0
  %2170 = vmatpush1.msra.mxu0 0.0
  %2171 = vmatprep.mubr.f32.mxu0 0.0
  %2172 = vmatmul.mubr.f32.gmra.mrb[0].mxu0 %v2105
  %v2173 = vpop.f32.mrb[0].mxu0
  %v2174 = vadd.f32 0.0, %v2173
  %v2175 = vpop.f32.mrb[0].mxu0
  %2176 = vdwg.mxu0
  %v2177 = vadd.f32 %v56, %v2100
  %v2178 = vadd.f32 %v57, %v2103
  %v2179 = vlaneseq
  %v2180 = vshrl.u32 %v2179, 7
  %v2181 = vsub.s32 0, %v2180
  %v2182 = vrot.slane %v2174, %v2181
  %v2183 = vadd.f32 %v2177, %v2182
  %v2184 = vadd.f32 %v2178, %v2182
  %2185 = vset.pattern.permute.xlu0 104
  %2186 = vperm.xlu0 %2185, %v164
  %v2187 = vpop.permute.xlu0 %2186
  %2189 = vset.pattern.permute.xlu0 104
  %2190 = vperm.xlu0 %2189, %v167
  %v2191 = vpop.permute.xlu0 %2190
  %v2193 = vlaneseq
  %v2194 = vshrl.u32 %v2193, 7
  %v2195 = vsub.s32 0, %v2194
  %v2196 = vrot.slane %v191, %v2195
  %v2197 = vadd.f32 %v2187, %v2196
  %v2198 = vadd.f32 %v2191, %v2196
  %v2199 = vand.u32 2147483647, %v2197
  %v2200 = vand.u32 2147483647, %v2198
  %v2201 = vrot.slane %v119, 5
  %s2202 = vtos %v2201
  %v2203 = vstv %s2202
  %v2205 = vmul.f32 %v2203, %v2199
  %v2206 = vmul.f32 %v2203, %v2200
  %v2207 = vadd.f32 %v2183, %v2205
  %v2208 = vadd.f32 %v2184, %v2206
  %2209 = vset.pattern.permute.xlu0 105
  %2210 = vperm.xlu0 %2209, %v164
  %v2211 = vpop.permute.xlu0 %2210
  %2213 = vset.pattern.permute.xlu0 105
  %2214 = vperm.xlu0 %2213, %v167
  %v2215 = vpop.permute.xlu0 %2214
  %v2217 = vlaneseq
  %v2218 = vshrl.u32 %v2217, 7
  %v2219 = vsub.s32 1, %v2218
  %v2220 = vrot.slane %v191, %v2219
  %v2221 = vadd.f32 %v2211, %v2220
  %v2222 = vadd.f32 %v2215, %v2220
  %v2223 = vand.u32 2147483647, %v2221
  %v2224 = vand.u32 2147483647, %v2222
  %2225 = vrot.lane.b32.xlu0 %v2201, 127
  %v2226 = vpop.permute.xlu0 %2225
  %s2227 = vtos %v2226
  %v2228 = vstv %s2227
  %v2230 = vmul.f32 %v2228, %v2223
  %v2231 = vmul.f32 %v2228, %v2224
  %v2232 = vadd.f32 %v2207, %v2230
  %v2233 = vadd.f32 %v2208, %v2231
  %2234 = vset.pattern.permute.xlu0 106
  %2235 = vperm.xlu0 %2234, %v164
  %v2236 = vpop.permute.xlu0 %2235
  %2238 = vset.pattern.permute.xlu0 106
  %2239 = vperm.xlu0 %2238, %v167
  %v2240 = vpop.permute.xlu0 %2239
  %v2242 = vlaneseq
  %v2243 = vshrl.u32 %v2242, 7
  %v2244 = vsub.s32 2, %v2243
  %v2245 = vrot.slane %v191, %v2244
  %v2246 = vadd.f32 %v2236, %v2245
  %v2247 = vadd.f32 %v2240, %v2245
  %v2248 = vand.u32 2147483647, %v2246
  %v2249 = vand.u32 2147483647, %v2247
  %2250 = vrot.lane.b32.xlu0 %v2201, 126
  %v2251 = vpop.permute.xlu0 %2250
  %s2252 = vtos %v2251
  %v2253 = vstv %s2252
  %v2255 = vmul.f32 %v2253, %v2248
  %v2256 = vmul.f32 %v2253, %v2249
  %v2257 = vadd.f32 %v2232, %v2255
  %v2258 = vadd.f32 %v2233, %v2256
  %2259 = vset.pattern.permute.xlu0 107
  %2260 = vperm.xlu0 %2259, %v164
  %v2261 = vpop.permute.xlu0 %2260
  %2263 = vset.pattern.permute.xlu0 107
  %2264 = vperm.xlu0 %2263, %v167
  %v2265 = vpop.permute.xlu0 %2264
  %v2267 = vlaneseq
  %v2268 = vshrl.u32 %v2267, 7
  %v2269 = vsub.s32 3, %v2268
  %v2270 = vrot.slane %v191, %v2269
  %v2271 = vadd.f32 %v2261, %v2270
  %v2272 = vadd.f32 %v2265, %v2270
  %v2273 = vand.u32 2147483647, %v2271
  %v2274 = vand.u32 2147483647, %v2272
  %2275 = vrot.lane.b32.xlu0 %v2201, 125
  %v2276 = vpop.permute.xlu0 %2275
  %s2277 = vtos %v2276
  %v2278 = vstv %s2277
  %v2280 = vmul.f32 %v2278, %v2273
  %v2281 = vmul.f32 %v2278, %v2274
  %v2282 = vadd.f32 %v2257, %v2280
  %v2283 = vadd.f32 %v2258, %v2281
  %2284 = vset.pattern.permute.xlu0 108
  %2285 = vperm.xlu0 %2284, %v164
  %v2286 = vpop.permute.xlu0 %2285
  %2288 = vset.pattern.permute.xlu0 108
  %2289 = vperm.xlu0 %2288, %v167
  %v2290 = vpop.permute.xlu0 %2289
  %v2292 = vlaneseq
  %v2293 = vshrl.u32 %v2292, 7
  %v2294 = vsub.s32 4, %v2293
  %v2295 = vrot.slane %v191, %v2294
  %v2296 = vadd.f32 %v2286, %v2295
  %v2297 = vadd.f32 %v2290, %v2295
  %v2298 = vand.u32 2147483647, %v2296
  %v2299 = vand.u32 2147483647, %v2297
  %2300 = vrot.lane.b32.xlu0 %v2201, 124
  %v2301 = vpop.permute.xlu0 %2300
  %s2302 = vtos %v2301
  %v2303 = vstv %s2302
  %v2305 = vmul.f32 %v2303, %v2298
  %v2306 = vmul.f32 %v2303, %v2299
  %v2307 = vadd.f32 %v2282, %v2305
  %v2308 = vadd.f32 %v2283, %v2306
  %2309 = vset.pattern.permute.xlu0 109
  %2310 = vperm.xlu0 %2309, %v164
  %v2311 = vpop.permute.xlu0 %2310
  %2313 = vset.pattern.permute.xlu0 109
  %2314 = vperm.xlu0 %2313, %v167
  %v2315 = vpop.permute.xlu0 %2314
  %v2317 = vlaneseq
  %v2318 = vshrl.u32 %v2317, 7
  %v2319 = vsub.s32 5, %v2318
  %v2320 = vrot.slane %v191, %v2319
  %v2321 = vadd.f32 %v2311, %v2320
  %v2322 = vadd.f32 %v2315, %v2320
  %v2323 = vand.u32 2147483647, %v2321
  %v2324 = vand.u32 2147483647, %v2322
  %2325 = vrot.lane.b32.xlu0 %v2201, 123
  %v2326 = vpop.permute.xlu0 %2325
  %s2327 = vtos %v2326
  %v2328 = vstv %s2327
  %v2330 = vmul.f32 %v2328, %v2323
  %v2331 = vmul.f32 %v2328, %v2324
  %v2332 = vadd.f32 %v2307, %v2330
  %v2333 = vadd.f32 %v2308, %v2331
  %2334 = vset.pattern.permute.xlu0 110
  %2335 = vperm.xlu0 %2334, %v164
  %v2336 = vpop.permute.xlu0 %2335
  %2338 = vset.pattern.permute.xlu0 110
  %2339 = vperm.xlu0 %2338, %v167
  %v2340 = vpop.permute.xlu0 %2339
  %v2342 = vlaneseq
  %v2343 = vshrl.u32 %v2342, 7
  %v2344 = vsub.s32 6, %v2343
  %v2345 = vrot.slane %v191, %v2344
  %v2346 = vadd.f32 %v2336, %v2345
  %v2347 = vadd.f32 %v2340, %v2345
  %v2348 = vand.u32 2147483647, %v2346
  %v2349 = vand.u32 2147483647, %v2347
  %2350 = vrot.lane.b32.xlu0 %v2201, 122
  %v2351 = vpop.permute.xlu0 %2350
  %s2352 = vtos %v2351
  %v2353 = vstv %s2352
  %v2355 = vmul.f32 %v2353, %v2348
  %v2356 = vmul.f32 %v2353, %v2349
  %v2357 = vadd.f32 %v2332, %v2355
  %v2358 = vadd.f32 %v2333, %v2356
  %2359 = vset.pattern.permute.xlu0 111
  %2360 = vperm.xlu0 %2359, %v164
  %v2361 = vpop.permute.xlu0 %2360
  %2363 = vset.pattern.permute.xlu0 111
  %2364 = vperm.xlu0 %2363, %v167
  %v2365 = vpop.permute.xlu0 %2364
  %v2367 = vlaneseq
  %v2368 = vshrl.u32 %v2367, 7
  %v2369 = vsub.s32 7, %v2368
  %v2370 = vrot.slane %v191, %v2369
  %v2371 = vadd.f32 %v2361, %v2370
  %v2372 = vadd.f32 %v2365, %v2370
  %v2373 = vand.u32 2147483647, %v2371
  %v2374 = vand.u32 2147483647, %v2372
  %2375 = vrot.lane.b32.xlu0 %v2201, 121
  %v2376 = vpop.permute.xlu0 %2375
  %s2377 = vtos %v2376
  %v2378 = vstv %s2377
  %v2380 = vmul.f32 %v2378, %v2373
  %v2381 = vmul.f32 %v2378, %v2374
  %v2382 = vadd.f32 %v2357, %v2380
  %v2383 = vadd.f32 %v2358, %v2381
  %v2384 = vsel %vm508, %v2382, -inf
  %2385 = vmax.xlane.f32.xlu0 %v2384
  %v2386 = vpop.xlane.xlu0 %2385
  %v2387 = vsel %vm508, %v2383, -inf
  %2388 = vmax.xlane.f32.xlu0 %v2387
  %v2389 = vpop.xlane.xlu0 %2388
  %v2390 = vsub.f32 %v2382, %v2386
  %v2391 = vsub.f32 %v2383, %v2389
  %v2392 = vmul.f32 %v2390, 1.442695
  %v2393 = vpow.pop %v2392
  %v2394 = vmul.f32 %v2391, 1.442695
  %v2395 = vpow.pop %v2394
  %v2396 = vsel %vm508, %v2393, 0.0
  %2397 = vadd.xlane.f32.xlu0 %v2396
  %v2398 = vpop.xlane.xlu0 %2397
  %v2399 = vsel %vm508, %v2395, 0.0
  %2400 = vadd.xlane.f32.xlu0 %v2399
  %v2401 = vpop.xlane.xlu0 %2400
  %v2402 = vrcp.pop %v2398
  %v2403 = vrcp.pop %v2401
  %v2404 = vmul.f32 %v2393, %v2402
  %v2405 = vmul.f32 %v2395, %v2403
  %v2406 = vpack.c.bf16 %v2405, %v2404
  %2407 = vrot.lane.b32.xlu0 %v532, 88
  %v2408 = vpop.permute.xlu0 %2407
  %v2411 = vsel %vm508, %v2406, 0
  %2413 = vmatprep.subr.bf16.mxu0 0
  %2414 = vmatpush1.bf16.msra.mxu0 %v2408
  %2415 = vmatprep.subr.bf16.mxu0 0
  %2416 = vmatpush1.bf16.msra.mxu0 0
  %2417 = vmatprep.subr.bf16.mxu0 0
  %2418 = vmatpush1.bf16.msra.mxu0 0
  %2419 = vmatprep.subr.bf16.mxu0 0
  %2420 = vmatpush1.bf16.msra.mxu0 0
  %2421 = vmatprep.subr.bf16.mxu0 0
  %2422 = vmatpush1.bf16.msra.mxu0 0
  %2423 = vmatprep.subr.bf16.mxu0 0
  %2424 = vmatpush1.bf16.msra.mxu0 0
  %2425 = vmatprep.subr.bf16.mxu0 0
  %2426 = vmatpush1.bf16.msra.mxu0 0
  %2427 = vmatprep.subr.bf16.mxu0 0
  %2428 = vmatpush1.bf16.msra.mxu0 0
  %2429 = vmatprep.subr.bf16.mxu0 0
  %2430 = vmatpush1.bf16.msra.mxu0 0
  %2431 = vmatprep.subr.bf16.mxu0 0
  %2432 = vmatpush1.bf16.msra.mxu0 0
  %2433 = vmatprep.subr.bf16.mxu0 0
  %2434 = vmatpush1.bf16.msra.mxu0 0
  %2435 = vmatprep.subr.bf16.mxu0 0
  %2436 = vmatpush1.bf16.msra.mxu0 0
  %2437 = vmatprep.subr.bf16.mxu0 0
  %2438 = vmatpush1.bf16.msra.mxu0 0
  %2439 = vmatprep.subr.bf16.mxu0 0
  %2440 = vmatpush1.bf16.msra.mxu0 0
  %2441 = vmatprep.subr.bf16.mxu0 0
  %2442 = vmatpush1.bf16.msra.mxu0 0
  %2443 = vmatprep.subr.bf16.mxu0 0
  %2444 = vmatpush1.bf16.msra.mxu0 0
  %2445 = vmatprep.mubr.bf16.mxu0 0
  %2446 = vmatmul.mubr.bf16.gmra.mrb[0].mxu0 %v2411
  %v2447 = vpop.f32.mrb[0].mxu0
  %v2448 = vadd.f32 0.0, %v2447
  %v2449 = vpop.f32.mrb[0].mxu0
  %v2450 = vpop.f32.mrb[0].mxu0
  %v2451 = vadd.f32 0.0, %v2450
  %v2452 = vpop.f32.mrb[0].mxu0
  %2453 = vdwg.mxu0
  %v2454 = vadd.f32 %v2078, %v2448
  %v2455 = vadd.f32 %v2079, %v2451
  %v2456 = vlaneseq
  %v2457 = vshrl.u32 %v2456, 7
  %v2458 = vsub.s32 6, %v2457
  %v2459 = vrot.slane %v118, %v2458
  %2461 = vrot.lane.b32.xlu0 %v2459, 112
  %v2462 = vpop.permute.xlu0 %2461
  %v2464 = vmul.f32 %v164, %v2462
  %v2465 = vmul.f32 %v167, %v2462
  %2468 = vrot.lane.b32.xlu0 %v2464, 16
  %v2469 = vpop.permute.xlu0 %2468
  %2470 = vrot.lane.b32.xlu0 %v2465, 16
  %v2471 = vpop.permute.xlu0 %2470
  %v2474 = vsel %vm67, %v2469, 0.0
  %2475 = vadd.xlane.f32.xlu0 %v2474
  %v2476 = vpop.xlane.xlu0 %2475
  %v2477 = vsel %vm67, %v2471, 0.0
  %2478 = vadd.xlane.f32.xlu0 %v2477
  %v2479 = vpop.xlane.xlu0 %2478
  %v2480 = vrot.slane %v118, 6
  %v2481 = vsel %vm67, %v2480, 0
  %2483 = vmatprep.subr.mxu0 0.0
  %2484 = vmatpush1.msra.mxu0 %v192
  %2485 = vmatprep.subr.mxu0 0.0
  %2486 = vmatpush1.msra.mxu0 0.0
  %2487 = vmatprep.subr.mxu0 0.0
  %2488 = vmatpush1.msra.mxu0 0.0
  %2489 = vmatprep.subr.mxu0 0.0
  %2490 = vmatpush1.msra.mxu0 0.0
  %2491 = vmatprep.subr.mxu0 0.0
  %2492 = vmatpush1.msra.mxu0 0.0
  %2493 = vmatprep.subr.mxu0 0.0
  %2494 = vmatpush1.msra.mxu0 0.0
  %2495 = vmatprep.subr.mxu0 0.0
  %2496 = vmatpush1.msra.mxu0 0.0
  %2497 = vmatprep.subr.mxu0 0.0
  %2498 = vmatpush1.msra.mxu0 0.0
  %2499 = vmatprep.subr.mxu0 0.0
  %2500 = vmatpush1.msra.mxu0 0.0
  %2501 = vmatprep.subr.mxu0 0.0
  %2502 = vmatpush1.msra.mxu0 0.0
  %2503 = vmatprep.subr.mxu0 0.0
  %2504 = vmatpush1.msra.mxu0 0.0
  %2505 = vmatprep.subr.mxu0 0.0
  %2506 = vmatpush1.msra.mxu0 0.0
  %2507 = vmatprep.subr.mxu0 0.0
  %2508 = vmatpush1.msra.mxu0 0.0
  %2509 = vmatprep.subr.mxu0 0.0
  %2510 = vmatpush1.msra.mxu0 0.0
  %2511 = vmatprep.subr.mxu0 0.0
  %2512 = vmatpush1.msra.mxu0 0.0
  %2513 = vmatprep.subr.mxu0 0.0
  %2514 = vmatpush1.msra.mxu0 0.0
  %2515 = vmatprep.subr.mxu0 0.0
  %2516 = vmatpush1.msra.mxu0 0.0
  %2517 = vmatprep.subr.mxu0 0.0
  %2518 = vmatpush1.msra.mxu0 0.0
  %2519 = vmatprep.subr.mxu0 0.0
  %2520 = vmatpush1.msra.mxu0 0.0
  %2521 = vmatprep.subr.mxu0 0.0
  %2522 = vmatpush1.msra.mxu0 0.0
  %2523 = vmatprep.subr.mxu0 0.0
  %2524 = vmatpush1.msra.mxu0 0.0
  %2525 = vmatprep.subr.mxu0 0.0
  %2526 = vmatpush1.msra.mxu0 0.0
  %2527 = vmatprep.subr.mxu0 0.0
  %2528 = vmatpush1.msra.mxu0 0.0
  %2529 = vmatprep.subr.mxu0 0.0
  %2530 = vmatpush1.msra.mxu0 0.0
  %2531 = vmatprep.subr.mxu0 0.0
  %2532 = vmatpush1.msra.mxu0 0.0
  %2533 = vmatprep.subr.mxu0 0.0
  %2534 = vmatpush1.msra.mxu0 0.0
  %2535 = vmatprep.subr.mxu0 0.0
  %2536 = vmatpush1.msra.mxu0 0.0
  %2537 = vmatprep.subr.mxu0 0.0
  %2538 = vmatpush1.msra.mxu0 0.0
  %2539 = vmatprep.subr.mxu0 0.0
  %2540 = vmatpush1.msra.mxu0 0.0
  %2541 = vmatprep.subr.mxu0 0.0
  %2542 = vmatpush1.msra.mxu0 0.0
  %2543 = vmatprep.subr.mxu0 0.0
  %2544 = vmatpush1.msra.mxu0 0.0
  %2545 = vmatprep.subr.mxu0 0.0
  %2546 = vmatpush1.msra.mxu0 0.0
  %2547 = vmatprep.mubr.f32.mxu0 0.0
  %2548 = vmatmul.mubr.f32.gmra.mrb[0].mxu0 %v2481
  %v2549 = vpop.f32.mrb[0].mxu0
  %v2550 = vadd.f32 0.0, %v2549
  %v2551 = vpop.f32.mrb[0].mxu0
  %2552 = vdwg.mxu0
  %v2553 = vadd.f32 %v56, %v2476
  %v2554 = vadd.f32 %v57, %v2479
  %v2555 = vlaneseq
  %v2556 = vshrl.u32 %v2555, 7
  %v2557 = vsub.s32 0, %v2556
  %v2558 = vrot.slane %v2550, %v2557
  %v2559 = vadd.f32 %v2553, %v2558
  %v2560 = vadd.f32 %v2554, %v2558
  %2561 = vset.pattern.permute.xlu0 112
  %2562 = vperm.xlu0 %2561, %v164
  %v2563 = vpop.permute.xlu0 %2562
  %2565 = vset.pattern.permute.xlu0 112
  %2566 = vperm.xlu0 %2565, %v167
  %v2567 = vpop.permute.xlu0 %2566
  %v2569 = vlaneseq
  %v2570 = vshrl.u32 %v2569, 7
  %v2571 = vsub.s32 0, %v2570
  %v2572 = vrot.slane %v192, %v2571
  %v2573 = vadd.f32 %v2563, %v2572
  %v2574 = vadd.f32 %v2567, %v2572
  %v2575 = vand.u32 2147483647, %v2573
  %v2576 = vand.u32 2147483647, %v2574
  %v2577 = vrot.slane %v119, 6
  %s2578 = vtos %v2577
  %v2579 = vstv %s2578
  %v2581 = vmul.f32 %v2579, %v2575
  %v2582 = vmul.f32 %v2579, %v2576
  %v2583 = vadd.f32 %v2559, %v2581
  %v2584 = vadd.f32 %v2560, %v2582
  %2585 = vset.pattern.permute.xlu0 113
  %2586 = vperm.xlu0 %2585, %v164
  %v2587 = vpop.permute.xlu0 %2586
  %2589 = vset.pattern.permute.xlu0 113
  %2590 = vperm.xlu0 %2589, %v167
  %v2591 = vpop.permute.xlu0 %2590
  %v2593 = vlaneseq
  %v2594 = vshrl.u32 %v2593, 7
  %v2595 = vsub.s32 1, %v2594
  %v2596 = vrot.slane %v192, %v2595
  %v2597 = vadd.f32 %v2587, %v2596
  %v2598 = vadd.f32 %v2591, %v2596
  %v2599 = vand.u32 2147483647, %v2597
  %v2600 = vand.u32 2147483647, %v2598
  %2601 = vrot.lane.b32.xlu0 %v2577, 127
  %v2602 = vpop.permute.xlu0 %2601
  %s2603 = vtos %v2602
  %v2604 = vstv %s2603
  %v2606 = vmul.f32 %v2604, %v2599
  %v2607 = vmul.f32 %v2604, %v2600
  %v2608 = vadd.f32 %v2583, %v2606
  %v2609 = vadd.f32 %v2584, %v2607
  %2610 = vset.pattern.permute.xlu0 114
  %2611 = vperm.xlu0 %2610, %v164
  %v2612 = vpop.permute.xlu0 %2611
  %2614 = vset.pattern.permute.xlu0 114
  %2615 = vperm.xlu0 %2614, %v167
  %v2616 = vpop.permute.xlu0 %2615
  %v2618 = vlaneseq
  %v2619 = vshrl.u32 %v2618, 7
  %v2620 = vsub.s32 2, %v2619
  %v2621 = vrot.slane %v192, %v2620
  %v2622 = vadd.f32 %v2612, %v2621
  %v2623 = vadd.f32 %v2616, %v2621
  %v2624 = vand.u32 2147483647, %v2622
  %v2625 = vand.u32 2147483647, %v2623
  %2626 = vrot.lane.b32.xlu0 %v2577, 126
  %v2627 = vpop.permute.xlu0 %2626
  %s2628 = vtos %v2627
  %v2629 = vstv %s2628
  %v2631 = vmul.f32 %v2629, %v2624
  %v2632 = vmul.f32 %v2629, %v2625
  %v2633 = vadd.f32 %v2608, %v2631
  %v2634 = vadd.f32 %v2609, %v2632
  %2635 = vset.pattern.permute.xlu0 115
  %2636 = vperm.xlu0 %2635, %v164
  %v2637 = vpop.permute.xlu0 %2636
  %2639 = vset.pattern.permute.xlu0 115
  %2640 = vperm.xlu0 %2639, %v167
  %v2641 = vpop.permute.xlu0 %2640
  %v2643 = vlaneseq
  %v2644 = vshrl.u32 %v2643, 7
  %v2645 = vsub.s32 3, %v2644
  %v2646 = vrot.slane %v192, %v2645
  %v2647 = vadd.f32 %v2637, %v2646
  %v2648 = vadd.f32 %v2641, %v2646
  %v2649 = vand.u32 2147483647, %v2647
  %v2650 = vand.u32 2147483647, %v2648
  %2651 = vrot.lane.b32.xlu0 %v2577, 125
  %v2652 = vpop.permute.xlu0 %2651
  %s2653 = vtos %v2652
  %v2654 = vstv %s2653
  %v2656 = vmul.f32 %v2654, %v2649
  %v2657 = vmul.f32 %v2654, %v2650
  %v2658 = vadd.f32 %v2633, %v2656
  %v2659 = vadd.f32 %v2634, %v2657
  %2660 = vset.pattern.permute.xlu0 116
  %2661 = vperm.xlu0 %2660, %v164
  %v2662 = vpop.permute.xlu0 %2661
  %2664 = vset.pattern.permute.xlu0 116
  %2665 = vperm.xlu0 %2664, %v167
  %v2666 = vpop.permute.xlu0 %2665
  %v2668 = vlaneseq
  %v2669 = vshrl.u32 %v2668, 7
  %v2670 = vsub.s32 4, %v2669
  %v2671 = vrot.slane %v192, %v2670
  %v2672 = vadd.f32 %v2662, %v2671
  %v2673 = vadd.f32 %v2666, %v2671
  %v2674 = vand.u32 2147483647, %v2672
  %v2675 = vand.u32 2147483647, %v2673
  %2676 = vrot.lane.b32.xlu0 %v2577, 124
  %v2677 = vpop.permute.xlu0 %2676
  %s2678 = vtos %v2677
  %v2679 = vstv %s2678
  %v2681 = vmul.f32 %v2679, %v2674
  %v2682 = vmul.f32 %v2679, %v2675
  %v2683 = vadd.f32 %v2658, %v2681
  %v2684 = vadd.f32 %v2659, %v2682
  %2685 = vset.pattern.permute.xlu0 117
  %2686 = vperm.xlu0 %2685, %v164
  %v2687 = vpop.permute.xlu0 %2686
  %2689 = vset.pattern.permute.xlu0 117
  %2690 = vperm.xlu0 %2689, %v167
  %v2691 = vpop.permute.xlu0 %2690
  %v2693 = vlaneseq
  %v2694 = vshrl.u32 %v2693, 7
  %v2695 = vsub.s32 5, %v2694
  %v2696 = vrot.slane %v192, %v2695
  %v2697 = vadd.f32 %v2687, %v2696
  %v2698 = vadd.f32 %v2691, %v2696
  %v2699 = vand.u32 2147483647, %v2697
  %v2700 = vand.u32 2147483647, %v2698
  %2701 = vrot.lane.b32.xlu0 %v2577, 123
  %v2702 = vpop.permute.xlu0 %2701
  %s2703 = vtos %v2702
  %v2704 = vstv %s2703
  %v2706 = vmul.f32 %v2704, %v2699
  %v2707 = vmul.f32 %v2704, %v2700
  %v2708 = vadd.f32 %v2683, %v2706
  %v2709 = vadd.f32 %v2684, %v2707
  %2710 = vset.pattern.permute.xlu0 118
  %2711 = vperm.xlu0 %2710, %v164
  %v2712 = vpop.permute.xlu0 %2711
  %2714 = vset.pattern.permute.xlu0 118
  %2715 = vperm.xlu0 %2714, %v167
  %v2716 = vpop.permute.xlu0 %2715
  %v2718 = vlaneseq
  %v2719 = vshrl.u32 %v2718, 7
  %v2720 = vsub.s32 6, %v2719
  %v2721 = vrot.slane %v192, %v2720
  %v2722 = vadd.f32 %v2712, %v2721
  %v2723 = vadd.f32 %v2716, %v2721
  %v2724 = vand.u32 2147483647, %v2722
  %v2725 = vand.u32 2147483647, %v2723
  %2726 = vrot.lane.b32.xlu0 %v2577, 122
  %v2727 = vpop.permute.xlu0 %2726
  %s2728 = vtos %v2727
  %v2729 = vstv %s2728
  %v2731 = vmul.f32 %v2729, %v2724
  %v2732 = vmul.f32 %v2729, %v2725
  %v2733 = vadd.f32 %v2708, %v2731
  %v2734 = vadd.f32 %v2709, %v2732
  %2735 = vset.pattern.permute.xlu0 119
  %2736 = vperm.xlu0 %2735, %v164
  %v2737 = vpop.permute.xlu0 %2736
  %2739 = vset.pattern.permute.xlu0 119
  %2740 = vperm.xlu0 %2739, %v167
  %v2741 = vpop.permute.xlu0 %2740
  %v2743 = vlaneseq
  %v2744 = vshrl.u32 %v2743, 7
  %v2745 = vsub.s32 7, %v2744
  %v2746 = vrot.slane %v192, %v2745
  %v2747 = vadd.f32 %v2737, %v2746
  %v2748 = vadd.f32 %v2741, %v2746
  %v2749 = vand.u32 2147483647, %v2747
  %v2750 = vand.u32 2147483647, %v2748
  %2751 = vrot.lane.b32.xlu0 %v2577, 121
  %v2752 = vpop.permute.xlu0 %2751
  %s2753 = vtos %v2752
  %v2754 = vstv %s2753
  %v2756 = vmul.f32 %v2754, %v2749
  %v2757 = vmul.f32 %v2754, %v2750
  %v2758 = vadd.f32 %v2733, %v2756
  %v2759 = vadd.f32 %v2734, %v2757
  %v2760 = vsel %vm508, %v2758, -inf
  %2761 = vmax.xlane.f32.xlu0 %v2760
  %v2762 = vpop.xlane.xlu0 %2761
  %v2763 = vsel %vm508, %v2759, -inf
  %2764 = vmax.xlane.f32.xlu0 %v2763
  %v2765 = vpop.xlane.xlu0 %2764
  %v2766 = vsub.f32 %v2758, %v2762
  %v2767 = vsub.f32 %v2759, %v2765
  %v2768 = vmul.f32 %v2766, 1.442695
  %v2769 = vpow.pop %v2768
  %v2770 = vmul.f32 %v2767, 1.442695
  %v2771 = vpow.pop %v2770
  %v2772 = vsel %vm508, %v2769, 0.0
  %2773 = vadd.xlane.f32.xlu0 %v2772
  %v2774 = vpop.xlane.xlu0 %2773
  %v2775 = vsel %vm508, %v2771, 0.0
  %2776 = vadd.xlane.f32.xlu0 %v2775
  %v2777 = vpop.xlane.xlu0 %2776
  %v2778 = vrcp.pop %v2774
  %v2779 = vrcp.pop %v2777
  %v2780 = vmul.f32 %v2769, %v2778
  %v2781 = vmul.f32 %v2771, %v2779
  %v2782 = vpack.c.bf16 %v2781, %v2780
  %2783 = vrot.lane.b32.xlu0 %v532, 80
  %v2784 = vpop.permute.xlu0 %2783
  %v2787 = vsel %vm508, %v2782, 0
  %2789 = vmatprep.subr.bf16.mxu0 0
  %2790 = vmatpush1.bf16.msra.mxu0 %v2784
  %2791 = vmatprep.subr.bf16.mxu0 0
  %2792 = vmatpush1.bf16.msra.mxu0 0
  %2793 = vmatprep.subr.bf16.mxu0 0
  %2794 = vmatpush1.bf16.msra.mxu0 0
  %2795 = vmatprep.subr.bf16.mxu0 0
  %2796 = vmatpush1.bf16.msra.mxu0 0
  %2797 = vmatprep.subr.bf16.mxu0 0
  %2798 = vmatpush1.bf16.msra.mxu0 0
  %2799 = vmatprep.subr.bf16.mxu0 0
  %2800 = vmatpush1.bf16.msra.mxu0 0
  %2801 = vmatprep.subr.bf16.mxu0 0
  %2802 = vmatpush1.bf16.msra.mxu0 0
  %2803 = vmatprep.subr.bf16.mxu0 0
  %2804 = vmatpush1.bf16.msra.mxu0 0
  %2805 = vmatprep.subr.bf16.mxu0 0
  %2806 = vmatpush1.bf16.msra.mxu0 0
  %2807 = vmatprep.subr.bf16.mxu0 0
  %2808 = vmatpush1.bf16.msra.mxu0 0
  %2809 = vmatprep.subr.bf16.mxu0 0
  %2810 = vmatpush1.bf16.msra.mxu0 0
  %2811 = vmatprep.subr.bf16.mxu0 0
  %2812 = vmatpush1.bf16.msra.mxu0 0
  %2813 = vmatprep.subr.bf16.mxu0 0
  %2814 = vmatpush1.bf16.msra.mxu0 0
  %2815 = vmatprep.subr.bf16.mxu0 0
  %2816 = vmatpush1.bf16.msra.mxu0 0
  %2817 = vmatprep.subr.bf16.mxu0 0
  %2818 = vmatpush1.bf16.msra.mxu0 0
  %2819 = vmatprep.subr.bf16.mxu0 0
  %2820 = vmatpush1.bf16.msra.mxu0 0
  %2821 = vmatprep.mubr.bf16.mxu0 0
  %2822 = vmatmul.mubr.bf16.gmra.mrb[0].mxu0 %v2787
  %v2823 = vpop.f32.mrb[0].mxu0
  %v2824 = vadd.f32 0.0, %v2823
  %v2825 = vpop.f32.mrb[0].mxu0
  %v2826 = vpop.f32.mrb[0].mxu0
  %v2827 = vadd.f32 0.0, %v2826
  %v2828 = vpop.f32.mrb[0].mxu0
  %2829 = vdwg.mxu0
  %v2830 = vadd.f32 %v2454, %v2824
  %v2831 = vadd.f32 %v2455, %v2827
  %v2832 = vlaneseq
  %v2833 = vshrl.u32 %v2832, 7
  %v2834 = vsub.s32 7, %v2833
  %v2835 = vrot.slane %v118, %v2834
  %2837 = vrot.lane.b32.xlu0 %v2835, 120
  %v2838 = vpop.permute.xlu0 %2837
  %v2840 = vmul.f32 %v164, %v2838
  %v2841 = vmul.f32 %v167, %v2838
  %2844 = vrot.lane.b32.xlu0 %v2840, 8
  %v2845 = vpop.permute.xlu0 %2844
  %2846 = vrot.lane.b32.xlu0 %v2841, 8
  %v2847 = vpop.permute.xlu0 %2846
  %v2850 = vsel %vm67, %v2845, 0.0
  %2851 = vadd.xlane.f32.xlu0 %v2850
  %v2852 = vpop.xlane.xlu0 %2851
  %v2853 = vsel %vm67, %v2847, 0.0
  %2854 = vadd.xlane.f32.xlu0 %v2853
  %v2855 = vpop.xlane.xlu0 %2854
  %v2856 = vrot.slane %v118, 7
  %v2857 = vsel %vm67, %v2856, 0
  %2859 = vmatprep.subr.mxu0 0.0
  %2860 = vmatpush1.msra.mxu0 %v193
  %2861 = vmatprep.subr.mxu0 0.0
  %2862 = vmatpush1.msra.mxu0 0.0
  %2863 = vmatprep.subr.mxu0 0.0
  %2864 = vmatpush1.msra.mxu0 0.0
  %2865 = vmatprep.subr.mxu0 0.0
  %2866 = vmatpush1.msra.mxu0 0.0
  %2867 = vmatprep.subr.mxu0 0.0
  %2868 = vmatpush1.msra.mxu0 0.0
  %2869 = vmatprep.subr.mxu0 0.0
  %2870 = vmatpush1.msra.mxu0 0.0
  %2871 = vmatprep.subr.mxu0 0.0
  %2872 = vmatpush1.msra.mxu0 0.0
  %2873 = vmatprep.subr.mxu0 0.0
  %2874 = vmatpush1.msra.mxu0 0.0
  %2875 = vmatprep.subr.mxu0 0.0
  %2876 = vmatpush1.msra.mxu0 0.0
  %2877 = vmatprep.subr.mxu0 0.0
  %2878 = vmatpush1.msra.mxu0 0.0
  %2879 = vmatprep.subr.mxu0 0.0
  %2880 = vmatpush1.msra.mxu0 0.0
  %2881 = vmatprep.subr.mxu0 0.0
  %2882 = vmatpush1.msra.mxu0 0.0
  %2883 = vmatprep.subr.mxu0 0.0
  %2884 = vmatpush1.msra.mxu0 0.0
  %2885 = vmatprep.subr.mxu0 0.0
  %2886 = vmatpush1.msra.mxu0 0.0
  %2887 = vmatprep.subr.mxu0 0.0
  %2888 = vmatpush1.msra.mxu0 0.0
  %2889 = vmatprep.subr.mxu0 0.0
  %2890 = vmatpush1.msra.mxu0 0.0
  %2891 = vmatprep.subr.mxu0 0.0
  %2892 = vmatpush1.msra.mxu0 0.0
  %2893 = vmatprep.subr.mxu0 0.0
  %2894 = vmatpush1.msra.mxu0 0.0
  %2895 = vmatprep.subr.mxu0 0.0
  %2896 = vmatpush1.msra.mxu0 0.0
  %2897 = vmatprep.subr.mxu0 0.0
  %2898 = vmatpush1.msra.mxu0 0.0
  %2899 = vmatprep.subr.mxu0 0.0
  %2900 = vmatpush1.msra.mxu0 0.0
  %2901 = vmatprep.subr.mxu0 0.0
  %2902 = vmatpush1.msra.mxu0 0.0
  %2903 = vmatprep.subr.mxu0 0.0
  %2904 = vmatpush1.msra.mxu0 0.0
  %2905 = vmatprep.subr.mxu0 0.0
  %2906 = vmatpush1.msra.mxu0 0.0
  %2907 = vmatprep.subr.mxu0 0.0
  %2908 = vmatpush1.msra.mxu0 0.0
  %2909 = vmatprep.subr.mxu0 0.0
  %2910 = vmatpush1.msra.mxu0 0.0
  %2911 = vmatprep.subr.mxu0 0.0
  %2912 = vmatpush1.msra.mxu0 0.0
  %2913 = vmatprep.subr.mxu0 0.0
  %2914 = vmatpush1.msra.mxu0 0.0
  %2915 = vmatprep.subr.mxu0 0.0
  %2916 = vmatpush1.msra.mxu0 0.0
  %2917 = vmatprep.subr.mxu0 0.0
  %2918 = vmatpush1.msra.mxu0 0.0
  %2919 = vmatprep.subr.mxu0 0.0
  %2920 = vmatpush1.msra.mxu0 0.0
  %2921 = vmatprep.subr.mxu0 0.0
  %2922 = vmatpush1.msra.mxu0 0.0
  %2923 = vmatprep.mubr.f32.mxu0 0.0
  %2924 = vmatmul.mubr.f32.gmra.mrb[0].mxu0 %v2857
  %v2925 = vpop.f32.mrb[0].mxu0
  %v2926 = vadd.f32 0.0, %v2925
  %v2927 = vpop.f32.mrb[0].mxu0
  %2928 = vdwg.mxu0
  %v2929 = vadd.f32 %v56, %v2852
  %v2930 = vadd.f32 %v57, %v2855
  %v2931 = vlaneseq
  %v2932 = vshrl.u32 %v2931, 7
  %v2933 = vsub.s32 0, %v2932
  %v2934 = vrot.slane %v2926, %v2933
  %v2935 = vadd.f32 %v2929, %v2934
  %v2936 = vadd.f32 %v2930, %v2934
  %2937 = vset.pattern.permute.xlu0 120
  %2938 = vperm.xlu0 %2937, %v164
  %v2939 = vpop.permute.xlu0 %2938
  %2941 = vset.pattern.permute.xlu0 120
  %2942 = vperm.xlu0 %2941, %v167
  %v2943 = vpop.permute.xlu0 %2942
  %v2945 = vlaneseq
  %v2946 = vshrl.u32 %v2945, 7
  %v2947 = vsub.s32 0, %v2946
  %v2948 = vrot.slane %v193, %v2947
  %v2949 = vadd.f32 %v2939, %v2948
  %v2950 = vadd.f32 %v2943, %v2948
  %v2951 = vand.u32 2147483647, %v2949
  %v2952 = vand.u32 2147483647, %v2950
  %v2953 = vrot.slane %v119, 7
  %s2954 = vtos %v2953
  %v2955 = vstv %s2954
  %v2957 = vmul.f32 %v2955, %v2951
  %v2958 = vmul.f32 %v2955, %v2952
  %v2959 = vadd.f32 %v2935, %v2957
  %v2960 = vadd.f32 %v2936, %v2958
  %2961 = vset.pattern.permute.xlu0 121
  %2962 = vperm.xlu0 %2961, %v164
  %v2963 = vpop.permute.xlu0 %2962
  %2965 = vset.pattern.permute.xlu0 121
  %2966 = vperm.xlu0 %2965, %v167
  %v2967 = vpop.permute.xlu0 %2966
  %v2969 = vlaneseq
  %v2970 = vshrl.u32 %v2969, 7
  %v2971 = vsub.s32 1, %v2970
  %v2972 = vrot.slane %v193, %v2971
  %v2973 = vadd.f32 %v2963, %v2972
  %v2974 = vadd.f32 %v2967, %v2972
  %v2975 = vand.u32 2147483647, %v2973
  %v2976 = vand.u32 2147483647, %v2974
  %2977 = vrot.lane.b32.xlu0 %v2953, 127
  %v2978 = vpop.permute.xlu0 %2977
  %s2979 = vtos %v2978
  %v2980 = vstv %s2979
  %v2982 = vmul.f32 %v2980, %v2975
  %v2983 = vmul.f32 %v2980, %v2976
  %v2984 = vadd.f32 %v2959, %v2982
  %v2985 = vadd.f32 %v2960, %v2983
  %2986 = vset.pattern.permute.xlu0 122
  %2987 = vperm.xlu0 %2986, %v164
  %v2988 = vpop.permute.xlu0 %2987
  %2990 = vset.pattern.permute.xlu0 122
  %2991 = vperm.xlu0 %2990, %v167
  %v2992 = vpop.permute.xlu0 %2991
  %v2994 = vlaneseq
  %v2995 = vshrl.u32 %v2994, 7
  %v2996 = vsub.s32 2, %v2995
  %v2997 = vrot.slane %v193, %v2996
  %v2998 = vadd.f32 %v2988, %v2997
  %v2999 = vadd.f32 %v2992, %v2997
  %v3000 = vand.u32 2147483647, %v2998
  %v3001 = vand.u32 2147483647, %v2999
  %3002 = vrot.lane.b32.xlu0 %v2953, 126
  %v3003 = vpop.permute.xlu0 %3002
  %s3004 = vtos %v3003
  %v3005 = vstv %s3004
  %v3007 = vmul.f32 %v3005, %v3000
  %v3008 = vmul.f32 %v3005, %v3001
  %v3009 = vadd.f32 %v2984, %v3007
  %v3010 = vadd.f32 %v2985, %v3008
  %3011 = vset.pattern.permute.xlu0 123
  %3012 = vperm.xlu0 %3011, %v164
  %v3013 = vpop.permute.xlu0 %3012
  %3015 = vset.pattern.permute.xlu0 123
  %3016 = vperm.xlu0 %3015, %v167
  %v3017 = vpop.permute.xlu0 %3016
  %v3019 = vlaneseq
  %v3020 = vshrl.u32 %v3019, 7
  %v3021 = vsub.s32 3, %v3020
  %v3022 = vrot.slane %v193, %v3021
  %v3023 = vadd.f32 %v3013, %v3022
  %v3024 = vadd.f32 %v3017, %v3022
  %v3025 = vand.u32 2147483647, %v3023
  %v3026 = vand.u32 2147483647, %v3024
  %3027 = vrot.lane.b32.xlu0 %v2953, 125
  %v3028 = vpop.permute.xlu0 %3027
  %s3029 = vtos %v3028
  %v3030 = vstv %s3029
  %v3032 = vmul.f32 %v3030, %v3025
  %v3033 = vmul.f32 %v3030, %v3026
  %v3034 = vadd.f32 %v3009, %v3032
  %v3035 = vadd.f32 %v3010, %v3033
  %3036 = vset.pattern.permute.xlu0 124
  %3037 = vperm.xlu0 %3036, %v164
  %v3038 = vpop.permute.xlu0 %3037
  %3040 = vset.pattern.permute.xlu0 124
  %3041 = vperm.xlu0 %3040, %v167
  %v3042 = vpop.permute.xlu0 %3041
  %v3044 = vlaneseq
  %v3045 = vshrl.u32 %v3044, 7
  %v3046 = vsub.s32 4, %v3045
  %v3047 = vrot.slane %v193, %v3046
  %v3048 = vadd.f32 %v3038, %v3047
  %v3049 = vadd.f32 %v3042, %v3047
  %v3050 = vand.u32 2147483647, %v3048
  %v3051 = vand.u32 2147483647, %v3049
  %3052 = vrot.lane.b32.xlu0 %v2953, 124
  %v3053 = vpop.permute.xlu0 %3052
  %s3054 = vtos %v3053
  %v3055 = vstv %s3054
  %v3057 = vmul.f32 %v3055, %v3050
  %v3058 = vmul.f32 %v3055, %v3051
  %v3059 = vadd.f32 %v3034, %v3057
  %v3060 = vadd.f32 %v3035, %v3058
  %3061 = vset.pattern.permute.xlu0 125
  %3062 = vperm.xlu0 %3061, %v164
  %v3063 = vpop.permute.xlu0 %3062
  %3065 = vset.pattern.permute.xlu0 125
  %3066 = vperm.xlu0 %3065, %v167
  %v3067 = vpop.permute.xlu0 %3066
  %v3069 = vlaneseq
  %v3070 = vshrl.u32 %v3069, 7
  %v3071 = vsub.s32 5, %v3070
  %v3072 = vrot.slane %v193, %v3071
  %v3073 = vadd.f32 %v3063, %v3072
  %v3074 = vadd.f32 %v3067, %v3072
  %v3075 = vand.u32 2147483647, %v3073
  %v3076 = vand.u32 2147483647, %v3074
  %3077 = vrot.lane.b32.xlu0 %v2953, 123
  %v3078 = vpop.permute.xlu0 %3077
  %s3079 = vtos %v3078
  %v3080 = vstv %s3079
  %v3082 = vmul.f32 %v3080, %v3075
  %v3083 = vmul.f32 %v3080, %v3076
  %v3084 = vadd.f32 %v3059, %v3082
  %v3085 = vadd.f32 %v3060, %v3083
  %3086 = vset.pattern.permute.xlu0 126
  %3087 = vperm.xlu0 %3086, %v164
  %v3088 = vpop.permute.xlu0 %3087
  %3090 = vset.pattern.permute.xlu0 126
  %3091 = vperm.xlu0 %3090, %v167
  %v3092 = vpop.permute.xlu0 %3091
  %v3094 = vlaneseq
  %v3095 = vshrl.u32 %v3094, 7
  %v3096 = vsub.s32 6, %v3095
  %v3097 = vrot.slane %v193, %v3096
  %v3098 = vadd.f32 %v3088, %v3097
  %v3099 = vadd.f32 %v3092, %v3097
  %v3100 = vand.u32 2147483647, %v3098
  %v3101 = vand.u32 2147483647, %v3099
  %3102 = vrot.lane.b32.xlu0 %v2953, 122
  %v3103 = vpop.permute.xlu0 %3102
  %s3104 = vtos %v3103
  %v3105 = vstv %s3104
  %v3107 = vmul.f32 %v3105, %v3100
  %v3108 = vmul.f32 %v3105, %v3101
  %v3109 = vadd.f32 %v3084, %v3107
  %v3110 = vadd.f32 %v3085, %v3108
  %3111 = vset.pattern.permute.xlu0 127
  %3112 = vperm.xlu0 %3111, %v164
  %v3113 = vpop.permute.xlu0 %3112
  %3115 = vset.pattern.permute.xlu0 127
  %3116 = vperm.xlu0 %3115, %v167
  %v3117 = vpop.permute.xlu0 %3116
  %v3119 = vlaneseq
  %v3120 = vshrl.u32 %v3119, 7
  %v3121 = vsub.s32 7, %v3120
  %v3122 = vrot.slane %v193, %v3121
  %v3123 = vadd.f32 %v3113, %v3122
  %v3124 = vadd.f32 %v3117, %v3122
  %v3125 = vand.u32 2147483647, %v3123
  %v3126 = vand.u32 2147483647, %v3124
  %3127 = vrot.lane.b32.xlu0 %v2953, 121
  %v3128 = vpop.permute.xlu0 %3127
  %s3129 = vtos %v3128
  %v3130 = vstv %s3129
  %v3132 = vmul.f32 %v3130, %v3125
  %v3133 = vmul.f32 %v3130, %v3126
  %v3134 = vadd.f32 %v3109, %v3132
  %v3135 = vadd.f32 %v3110, %v3133
  %v3136 = vsel %vm508, %v3134, -inf
  %3137 = vmax.xlane.f32.xlu0 %v3136
  %v3138 = vpop.xlane.xlu0 %3137
  %v3139 = vsel %vm508, %v3135, -inf
  %3140 = vmax.xlane.f32.xlu0 %v3139
  %v3141 = vpop.xlane.xlu0 %3140
  %v3142 = vsub.f32 %v3134, %v3138
  %v3143 = vsub.f32 %v3135, %v3141
  %v3144 = vmul.f32 %v3142, 1.442695
  %v3145 = vpow.pop %v3144
  %v3146 = vmul.f32 %v3143, 1.442695
  %v3147 = vpow.pop %v3146
  %v3148 = vsel %vm508, %v3145, 0.0
  %3149 = vadd.xlane.f32.xlu0 %v3148
  %v3150 = vpop.xlane.xlu0 %3149
  %v3151 = vsel %vm508, %v3147, 0.0
  %3152 = vadd.xlane.f32.xlu0 %v3151
  %v3153 = vpop.xlane.xlu0 %3152
  %v3154 = vrcp.pop %v3150
  %v3155 = vrcp.pop %v3153
  %v3156 = vmul.f32 %v3145, %v3154
  %v3157 = vmul.f32 %v3147, %v3155
  %v3158 = vpack.c.bf16 %v3157, %v3156
  %3159 = vrot.lane.b32.xlu0 %v532, 72
  %v3160 = vpop.permute.xlu0 %3159
  %v3163 = vsel %vm508, %v3158, 0
  %3165 = vmatprep.subr.bf16.mxu0 0
  %3166 = vmatpush1.bf16.msra.mxu0 %v3160
  %3167 = vmatprep.subr.bf16.mxu0 0
  %3168 = vmatpush1.bf16.msra.mxu0 0
  %3169 = vmatprep.subr.bf16.mxu0 0
  %3170 = vmatpush1.bf16.msra.mxu0 0
  %3171 = vmatprep.subr.bf16.mxu0 0
  %3172 = vmatpush1.bf16.msra.mxu0 0
  %3173 = vmatprep.subr.bf16.mxu0 0
  %3174 = vmatpush1.bf16.msra.mxu0 0
  %3175 = vmatprep.subr.bf16.mxu0 0
  %3176 = vmatpush1.bf16.msra.mxu0 0
  %3177 = vmatprep.subr.bf16.mxu0 0
  %3178 = vmatpush1.bf16.msra.mxu0 0
  %3179 = vmatprep.subr.bf16.mxu0 0
  %3180 = vmatpush1.bf16.msra.mxu0 0
  %3181 = vmatprep.subr.bf16.mxu0 0
  %3182 = vmatpush1.bf16.msra.mxu0 0
  %3183 = vmatprep.subr.bf16.mxu0 0
  %3184 = vmatpush1.bf16.msra.mxu0 0
  %3185 = vmatprep.subr.bf16.mxu0 0
  %3186 = vmatpush1.bf16.msra.mxu0 0
  %3187 = vmatprep.subr.bf16.mxu0 0
  %3188 = vmatpush1.bf16.msra.mxu0 0
  %3189 = vmatprep.subr.bf16.mxu0 0
  %3190 = vmatpush1.bf16.msra.mxu0 0
  %3191 = vmatprep.subr.bf16.mxu0 0
  %3192 = vmatpush1.bf16.msra.mxu0 0
  %3193 = vmatprep.subr.bf16.mxu0 0
  %3194 = vmatpush1.bf16.msra.mxu0 0
  %3195 = vmatprep.subr.bf16.mxu0 0
  %3196 = vmatpush1.bf16.msra.mxu0 0
  %3197 = vmatprep.mubr.bf16.mxu0 0
  %3198 = vmatmul.mubr.bf16.gmra.mrb[0].mxu0 %v3163
  %v3199 = vpop.f32.mrb[0].mxu0
  %v3200 = vadd.f32 0.0, %v3199
  %v3201 = vpop.f32.mrb[0].mxu0
  %v3202 = vpop.f32.mrb[0].mxu0
  %v3203 = vadd.f32 0.0, %v3202
  %v3204 = vpop.f32.mrb[0].mxu0
  %3205 = vdwg.mxu0
  %v3206 = vadd.f32 %v2830, %v3200
  %v3207 = vadd.f32 %v2831, %v3203
  %v3208 = vmul.f32 %v3206, 0.125
  %v3209 = vmul.f32 %v3207, 0.125
  %v3210 = vld [vmem:[%s6] sm:$0x1]
  %v3212 = vlaneseq
  %v3213 = vshrl.u32 %v3212, 7
  %v3214 = vsub.s32 0, %v3213
  %v3215 = vrot.slane %v3210, %v3214
  %v3217 = vadd.f32 %v3208, %v3215
  %v3218 = vadd.f32 %v3209, %v3215
  %v3219 = vmax.f32 %v3217, 0.0
  %v3220 = vmax.f32 %v3218, 0.0
  %v3221 = vld [vmem:[%s7] sm:$0xf]
  %v3222 = vld [vmem:[%s8] sm:$0x1]
  %v3223 = vld [vmem:[%s9] sm:$0xff]
  %v3224 = vld [vmem:[%s10] sm:$0xff]
  %v3225 = vpack.c.bf16 %v3220, %v3219
  %v3227 = vlaneseq
  %v3228 = vshrl.u32 %v3227, 7
  %v3229 = vsub.s32 0, %v3228
  %v3230 = vrot.slane %v3222, %v3229
  %v3233 = vsel %vm67, %v3225, 0
  %v3236 = vsel %vm71, %v3221, 0
  %3238 = vmatprep.subr.bf16.mxu0 0
  %3239 = vmatpush1.bf16.msra.mxu0 %v3236
  %3240 = vmatprep.subr.bf16.mxu0 0
  %3241 = vmatpush1.bf16.msra.mxu0 0
  %3242 = vmatprep.subr.bf16.mxu0 0
  %3243 = vmatpush1.bf16.msra.mxu0 0
  %3244 = vmatprep.subr.bf16.mxu0 0
  %3245 = vmatpush1.bf16.msra.mxu0 0
  %3246 = vmatprep.subr.bf16.mxu0 0
  %3247 = vmatpush1.bf16.msra.mxu0 0
  %3248 = vmatprep.subr.bf16.mxu0 0
  %3249 = vmatpush1.bf16.msra.mxu0 0
  %3250 = vmatprep.subr.bf16.mxu0 0
  %3251 = vmatpush1.bf16.msra.mxu0 0
  %3252 = vmatprep.subr.bf16.mxu0 0
  %3253 = vmatpush1.bf16.msra.mxu0 0
  %3254 = vmatprep.subr.bf16.mxu0 0
  %3255 = vmatpush1.bf16.msra.mxu0 0
  %3256 = vmatprep.subr.bf16.mxu0 0
  %3257 = vmatpush1.bf16.msra.mxu0 0
  %3258 = vmatprep.subr.bf16.mxu0 0
  %3259 = vmatpush1.bf16.msra.mxu0 0
  %3260 = vmatprep.subr.bf16.mxu0 0
  %3261 = vmatpush1.bf16.msra.mxu0 0
  %3262 = vmatprep.subr.bf16.mxu0 0
  %3263 = vmatpush1.bf16.msra.mxu0 0
  %3264 = vmatprep.subr.bf16.mxu0 0
  %3265 = vmatpush1.bf16.msra.mxu0 0
  %3266 = vmatprep.subr.bf16.mxu0 0
  %3267 = vmatpush1.bf16.msra.mxu0 0
  %3268 = vmatprep.subr.bf16.mxu0 0
  %3269 = vmatpush1.bf16.msra.mxu0 0
  %3270 = vmatprep.mubr.bf16.mxu0 0
  %3271 = vmatmul.mubr.bf16.gmra.mrb[0].mxu0 %v3233
  %v3272 = vpop.f32.mrb[0].mxu0
  %v3273 = vadd.f32 %v3230, %v3272
  %v3274 = vpop.f32.mrb[0].mxu0
  %v3275 = vpop.f32.mrb[0].mxu0
  %v3276 = vadd.f32 %v3230, %v3275
  %v3277 = vpop.f32.mrb[0].mxu0
  %3278 = vdwg.mxu0
  %3279 = vxpose.xlu0.b32.start [1/16] %v3273, 128
  %3280 = vxpose.xlu0.b32.cont [2/16] %v3276, 128
  %3281 = vxpose.xlu0.b32.cont [3/16] 0.0, 128
  %3282 = vxpose.xlu0.b32.cont [4/16] 0.0, 128
  %3283 = vxpose.xlu0.b32.cont [5/16] 0.0, 128
  %3284 = vxpose.xlu0.b32.cont [6/16] 0.0, 128
  %3285 = vxpose.xlu0.b32.cont [7/16] 0.0, 128
  %3286 = vxpose.xlu0.b32.cont [8/16] 0.0, 128
  %3287 = vxpose.xlu0.b32.cont [9/16] 0.0, 128
  %3288 = vxpose.xlu0.b32.cont [10/16] 0.0, 128
  %3289 = vxpose.xlu0.b32.cont [11/16] 0.0, 128
  %3290 = vxpose.xlu0.b32.cont [12/16] 0.0, 128
  %3291 = vxpose.xlu0.b32.cont [13/16] 0.0, 128
  %3292 = vxpose.xlu0.b32.cont [14/16] 0.0, 128
  %3293 = vxpose.xlu0.b32.cont [15/16] 0.0, 128
  %3294 = vxpose.xlu0.b32.end [16/16] 0.0, 128
  %v3295 = vpop.trf.xlu0
  %v3296 = vpop.trf.xlu0
  %v3297 = vpop.trf.xlu0
  %v3298 = vpop.trf.xlu0
  %v3299 = vpop.trf.xlu0
  %v3300 = vpop.trf.xlu0
  %v3301 = vpop.trf.xlu0
  %v3302 = vpop.trf.xlu0
  %v3303 = vpop.trf.xlu0
  %v3304 = vpop.trf.xlu0
  %v3305 = vpop.trf.xlu0
  %v3306 = vpop.trf.xlu0
  %v3307 = vpop.trf.xlu0
  %v3308 = vpop.trf.xlu0
  %v3309 = vpop.trf.xlu0
  %v3310 = vpop.trf.xlu0
  %v3311 = vlaneseq
  %v3312 = vshrl.u32 %v3311, 7
  %v3313 = vsub.s32 0, %v3312
  %v3314 = vrot.slane %v3223, %v3313
  %3316 = vrot.lane.b32.xlu0 %v3314, 32
  %v3317 = vpop.permute.xlu0 %3316
  %v3319 = vmul.f32 %v3273, %v3317
  %v3320 = vmul.f32 %v3276, %v3317
  %3323 = vrot.lane.b32.xlu0 %v3319, 96
  %v3324 = vpop.permute.xlu0 %3323
  %3325 = vrot.lane.b32.xlu0 %v3320, 96
  %v3326 = vpop.permute.xlu0 %3325
  %vm3329 = vcmask 31744
  %v3330 = vsel %vm3329, %v3324, 0.0
  %3331 = vadd.xlane.f32.xlu0 %v3330
  %v3332 = vpop.xlane.xlu0 %3331
  %v3333 = vsel %vm3329, %v3326, 0.0
  %3334 = vadd.xlane.f32.xlu0 %v3333
  %v3335 = vpop.xlane.xlu0 %3334
  %v3337 = vsel %vm3329, %v3223, 0
  %v3340 = vsel %vm71, %v3295, 0
  %3342 = vmatprep.subr.mxu0 0.0
  %3343 = vmatpush1.msra.mxu0 %v3340
  %3344 = vmatprep.subr.mxu0 0.0
  %3345 = vmatpush1.msra.mxu0 0.0
  %3346 = vmatprep.subr.mxu0 0.0
  %3347 = vmatpush1.msra.mxu0 0.0
  %3348 = vmatprep.subr.mxu0 0.0
  %3349 = vmatpush1.msra.mxu0 0.0
  %3350 = vmatprep.subr.mxu0 0.0
  %3351 = vmatpush1.msra.mxu0 0.0
  %3352 = vmatprep.subr.mxu0 0.0
  %3353 = vmatpush1.msra.mxu0 0.0
  %3354 = vmatprep.subr.mxu0 0.0
  %3355 = vmatpush1.msra.mxu0 0.0
  %3356 = vmatprep.subr.mxu0 0.0
  %3357 = vmatpush1.msra.mxu0 0.0
  %3358 = vmatprep.subr.mxu0 0.0
  %3359 = vmatpush1.msra.mxu0 0.0
  %3360 = vmatprep.subr.mxu0 0.0
  %3361 = vmatpush1.msra.mxu0 0.0
  %3362 = vmatprep.subr.mxu0 0.0
  %3363 = vmatpush1.msra.mxu0 0.0
  %3364 = vmatprep.subr.mxu0 0.0
  %3365 = vmatpush1.msra.mxu0 0.0
  %3366 = vmatprep.subr.mxu0 0.0
  %3367 = vmatpush1.msra.mxu0 0.0
  %3368 = vmatprep.subr.mxu0 0.0
  %3369 = vmatpush1.msra.mxu0 0.0
  %3370 = vmatprep.subr.mxu0 0.0
  %3371 = vmatpush1.msra.mxu0 0.0
  %3372 = vmatprep.subr.mxu0 0.0
  %3373 = vmatpush1.msra.mxu0 0.0
  %3374 = vmatprep.subr.mxu0 0.0
  %3375 = vmatpush1.msra.mxu0 0.0
  %3376 = vmatprep.subr.mxu0 0.0
  %3377 = vmatpush1.msra.mxu0 0.0
  %3378 = vmatprep.subr.mxu0 0.0
  %3379 = vmatpush1.msra.mxu0 0.0
  %3380 = vmatprep.subr.mxu0 0.0
  %3381 = vmatpush1.msra.mxu0 0.0
  %3382 = vmatprep.subr.mxu0 0.0
  %3383 = vmatpush1.msra.mxu0 0.0
  %3384 = vmatprep.subr.mxu0 0.0
  %3385 = vmatpush1.msra.mxu0 0.0
  %3386 = vmatprep.subr.mxu0 0.0
  %3387 = vmatpush1.msra.mxu0 0.0
  %3388 = vmatprep.subr.mxu0 0.0
  %3389 = vmatpush1.msra.mxu0 0.0
  %3390 = vmatprep.subr.mxu0 0.0
  %3391 = vmatpush1.msra.mxu0 0.0
  %3392 = vmatprep.subr.mxu0 0.0
  %3393 = vmatpush1.msra.mxu0 0.0
  %3394 = vmatprep.subr.mxu0 0.0
  %3395 = vmatpush1.msra.mxu0 0.0
  %3396 = vmatprep.subr.mxu0 0.0
  %3397 = vmatpush1.msra.mxu0 0.0
  %3398 = vmatprep.subr.mxu0 0.0
  %3399 = vmatpush1.msra.mxu0 0.0
  %3400 = vmatprep.subr.mxu0 0.0
  %3401 = vmatpush1.msra.mxu0 0.0
  %3402 = vmatprep.subr.mxu0 0.0
  %3403 = vmatpush1.msra.mxu0 0.0
  %3404 = vmatprep.subr.mxu0 0.0
  %3405 = vmatpush1.msra.mxu0 0.0
  %3406 = vmatprep.mubr.f32.mxu0 0.0
  %3407 = vmatmul.mubr.f32.gmra.mrb[0].mxu0 %v3337
  %v3408 = vpop.f32.mrb[0].mxu0
  %v3409 = vadd.f32 0.0, %v3408
  %v3410 = vpop.f32.mrb[0].mxu0
  %3411 = vdwg.mxu0
  %v3412 = vadd.f32 %v56, %v3332
  %v3413 = vadd.f32 %v57, %v3335
  %v3414 = vlaneseq
  %v3415 = vshrl.u32 %v3414, 7
  %v3416 = vsub.s32 0, %v3415
  %v3417 = vrot.slane %v3409, %v3416
  %v3418 = vadd.f32 %v3412, %v3417
  %v3419 = vadd.f32 %v3413, %v3417
  %3421 = vset.pattern.permute.xlu0 32
  %3422 = vperm.xlu0 %3421, %v3273
  %v3423 = vpop.permute.xlu0 %3422
  %3426 = vset.pattern.permute.xlu0 32
  %3427 = vperm.xlu0 %3426, %v3276
  %v3428 = vpop.permute.xlu0 %3427
  %v3430 = vlaneseq
  %v3431 = vshrl.u32 %v3430, 7
  %v3432 = vsub.s32 0, %v3431
  %v3433 = vrot.slane %v3295, %v3432
  %v3434 = vadd.f32 %v3423, %v3433
  %v3435 = vadd.f32 %v3428, %v3433
  %v3436 = vand.u32 2147483647, %v3434
  %v3437 = vand.u32 2147483647, %v3435
  %s3439 = vtos %v3224
  %v3440 = vstv %s3439
  %v3442 = vmul.f32 %v3440, %v3436
  %v3443 = vmul.f32 %v3440, %v3437
  %v3444 = vadd.f32 %v3418, %v3442
  %v3445 = vadd.f32 %v3419, %v3443
  %3446 = vset.pattern.permute.xlu0 33
  %3447 = vperm.xlu0 %3446, %v3273
  %v3448 = vpop.permute.xlu0 %3447
  %3450 = vset.pattern.permute.xlu0 33
  %3451 = vperm.xlu0 %3450, %v3276
  %v3452 = vpop.permute.xlu0 %3451
  %v3454 = vlaneseq
  %v3455 = vshrl.u32 %v3454, 7
  %v3456 = vsub.s32 1, %v3455
  %v3457 = vrot.slane %v3295, %v3456
  %v3458 = vadd.f32 %v3448, %v3457
  %v3459 = vadd.f32 %v3452, %v3457
  %v3460 = vand.u32 2147483647, %v3458
  %v3461 = vand.u32 2147483647, %v3459
  %3462 = vrot.lane.b32.xlu0 %v3224, 127
  %v3463 = vpop.permute.xlu0 %3462
  %s3464 = vtos %v3463
  %v3465 = vstv %s3464
  %v3467 = vmul.f32 %v3465, %v3460
  %v3468 = vmul.f32 %v3465, %v3461
  %v3469 = vadd.f32 %v3444, %v3467
  %v3470 = vadd.f32 %v3445, %v3468
  %3471 = vset.pattern.permute.xlu0 34
  %3472 = vperm.xlu0 %3471, %v3273
  %v3473 = vpop.permute.xlu0 %3472
  %3475 = vset.pattern.permute.xlu0 34
  %3476 = vperm.xlu0 %3475, %v3276
  %v3477 = vpop.permute.xlu0 %3476
  %v3479 = vlaneseq
  %v3480 = vshrl.u32 %v3479, 7
  %v3481 = vsub.s32 2, %v3480
  %v3482 = vrot.slane %v3295, %v3481
  %v3483 = vadd.f32 %v3473, %v3482
  %v3484 = vadd.f32 %v3477, %v3482
  %v3485 = vand.u32 2147483647, %v3483
  %v3486 = vand.u32 2147483647, %v3484
  %3487 = vrot.lane.b32.xlu0 %v3224, 126
  %v3488 = vpop.permute.xlu0 %3487
  %s3489 = vtos %v3488
  %v3490 = vstv %s3489
  %v3492 = vmul.f32 %v3490, %v3485
  %v3493 = vmul.f32 %v3490, %v3486
  %v3494 = vadd.f32 %v3469, %v3492
  %v3495 = vadd.f32 %v3470, %v3493
  %3496 = vset.pattern.permute.xlu0 35
  %3497 = vperm.xlu0 %3496, %v3273
  %v3498 = vpop.permute.xlu0 %3497
  %3500 = vset.pattern.permute.xlu0 35
  %3501 = vperm.xlu0 %3500, %v3276
  %v3502 = vpop.permute.xlu0 %3501
  %v3504 = vlaneseq
  %v3505 = vshrl.u32 %v3504, 7
  %v3506 = vsub.s32 3, %v3505
  %v3507 = vrot.slane %v3295, %v3506
  %v3508 = vadd.f32 %v3498, %v3507
  %v3509 = vadd.f32 %v3502, %v3507
  %v3510 = vand.u32 2147483647, %v3508
  %v3511 = vand.u32 2147483647, %v3509
  %3512 = vrot.lane.b32.xlu0 %v3224, 125
  %v3513 = vpop.permute.xlu0 %3512
  %s3514 = vtos %v3513
  %v3515 = vstv %s3514
  %v3517 = vmul.f32 %v3515, %v3510
  %v3518 = vmul.f32 %v3515, %v3511
  %v3519 = vadd.f32 %v3494, %v3517
  %v3520 = vadd.f32 %v3495, %v3518
  %v3521 = vsel %vm508, %v3519, -inf
  %3522 = vmax.xlane.f32.xlu0 %v3521
  %v3523 = vpop.xlane.xlu0 %3522
  %v3524 = vsel %vm508, %v3520, -inf
  %3525 = vmax.xlane.f32.xlu0 %v3524
  %v3526 = vpop.xlane.xlu0 %3525
  %v3527 = vsub.f32 %v3519, %v3523
  %v3528 = vsub.f32 %v3520, %v3526
  %v3529 = vmul.f32 %v3527, 1.442695
  %v3530 = vpow.pop %v3529
  %v3531 = vmul.f32 %v3528, 1.442695
  %v3532 = vpow.pop %v3531
  %v3533 = vsel %vm508, %v3530, 0.0
  %3534 = vadd.xlane.f32.xlu0 %v3533
  %v3535 = vpop.xlane.xlu0 %3534
  %v3536 = vsel %vm508, %v3532, 0.0
  %3537 = vadd.xlane.f32.xlu0 %v3536
  %v3538 = vpop.xlane.xlu0 %3537
  %v3539 = vrcp.pop %v3535
  %v3540 = vrcp.pop %v3538
  %v3541 = vmul.f32 %v3530, %v3539
  %v3542 = vmul.f32 %v3532, %v3540
  %v3543 = vpack.c.bf16 %v3542, %v3541
  %v3544 = vpack.c.bf16 %v3276, %v3273
  %v3545 = vlaneseq
  %v3546 = vshrl.u32 %v3545, 7
  %v3547 = vsub.s32 1, %v3546
  %v3548 = vrot.slane %v3223, %v3547
  %3550 = vrot.lane.b32.xlu0 %v3548, 36
  %v3551 = vpop.permute.xlu0 %3550
  %v3553 = vmul.f32 %v3273, %v3551
  %v3554 = vmul.f32 %v3276, %v3551
  %3557 = vrot.lane.b32.xlu0 %v3553, 92
  %v3558 = vpop.permute.xlu0 %3557
  %3559 = vrot.lane.b32.xlu0 %v3554, 92
  %v3560 = vpop.permute.xlu0 %3559
  %v3563 = vsel %vm3329, %v3558, 0.0
  %3564 = vadd.xlane.f32.xlu0 %v3563
  %v3565 = vpop.xlane.xlu0 %3564
  %v3566 = vsel %vm3329, %v3560, 0.0
  %3567 = vadd.xlane.f32.xlu0 %v3566
  %v3568 = vpop.xlane.xlu0 %3567
  %v3569 = vrot.slane %v3223, 1
  %v3570 = vrot.slane %v3295, 4
  %v3571 = vsel %vm3329, %v3569, 0
  %v3573 = vsel %vm71, %v3570, 0
  %3575 = vmatprep.subr.mxu0 0.0
  %3576 = vmatpush1.msra.mxu0 %v3573
  %3577 = vmatprep.subr.mxu0 0.0
  %3578 = vmatpush1.msra.mxu0 0.0
  %3579 = vmatprep.subr.mxu0 0.0
  %3580 = vmatpush1.msra.mxu0 0.0
  %3581 = vmatprep.subr.mxu0 0.0
  %3582 = vmatpush1.msra.mxu0 0.0
  %3583 = vmatprep.subr.mxu0 0.0
  %3584 = vmatpush1.msra.mxu0 0.0
  %3585 = vmatprep.subr.mxu0 0.0
  %3586 = vmatpush1.msra.mxu0 0.0
  %3587 = vmatprep.subr.mxu0 0.0
  %3588 = vmatpush1.msra.mxu0 0.0
  %3589 = vmatprep.subr.mxu0 0.0
  %3590 = vmatpush1.msra.mxu0 0.0
  %3591 = vmatprep.subr.mxu0 0.0
  %3592 = vmatpush1.msra.mxu0 0.0
  %3593 = vmatprep.subr.mxu0 0.0
  %3594 = vmatpush1.msra.mxu0 0.0
  %3595 = vmatprep.subr.mxu0 0.0
  %3596 = vmatpush1.msra.mxu0 0.0
  %3597 = vmatprep.subr.mxu0 0.0
  %3598 = vmatpush1.msra.mxu0 0.0
  %3599 = vmatprep.subr.mxu0 0.0
  %3600 = vmatpush1.msra.mxu0 0.0
  %3601 = vmatprep.subr.mxu0 0.0
  %3602 = vmatpush1.msra.mxu0 0.0
  %3603 = vmatprep.subr.mxu0 0.0
  %3604 = vmatpush1.msra.mxu0 0.0
  %3605 = vmatprep.subr.mxu0 0.0
  %3606 = vmatpush1.msra.mxu0 0.0
  %3607 = vmatprep.subr.mxu0 0.0
  %3608 = vmatpush1.msra.mxu0 0.0
  %3609 = vmatprep.subr.mxu0 0.0
  %3610 = vmatpush1.msra.mxu0 0.0
  %3611 = vmatprep.subr.mxu0 0.0
  %3612 = vmatpush1.msra.mxu0 0.0
  %3613 = vmatprep.subr.mxu0 0.0
  %3614 = vmatpush1.msra.mxu0 0.0
  %3615 = vmatprep.subr.mxu0 0.0
  %3616 = vmatpush1.msra.mxu0 0.0
  %3617 = vmatprep.subr.mxu0 0.0
  %3618 = vmatpush1.msra.mxu0 0.0
  %3619 = vmatprep.subr.mxu0 0.0
  %3620 = vmatpush1.msra.mxu0 0.0
  %3621 = vmatprep.subr.mxu0 0.0
  %3622 = vmatpush1.msra.mxu0 0.0
  %3623 = vmatprep.subr.mxu0 0.0
  %3624 = vmatpush1.msra.mxu0 0.0
  %3625 = vmatprep.subr.mxu0 0.0
  %3626 = vmatpush1.msra.mxu0 0.0
  %3627 = vmatprep.subr.mxu0 0.0
  %3628 = vmatpush1.msra.mxu0 0.0
  %3629 = vmatprep.subr.mxu0 0.0
  %3630 = vmatpush1.msra.mxu0 0.0
  %3631 = vmatprep.subr.mxu0 0.0
  %3632 = vmatpush1.msra.mxu0 0.0
  %3633 = vmatprep.subr.mxu0 0.0
  %3634 = vmatpush1.msra.mxu0 0.0
  %3635 = vmatprep.subr.mxu0 0.0
  %3636 = vmatpush1.msra.mxu0 0.0
  %3637 = vmatprep.subr.mxu0 0.0
  %3638 = vmatpush1.msra.mxu0 0.0
  %3639 = vmatprep.mubr.f32.mxu0 0.0
  %3640 = vmatmul.mubr.f32.gmra.mrb[0].mxu0 %v3571
  %v3641 = vpop.f32.mrb[0].mxu0
  %v3642 = vadd.f32 0.0, %v3641
  %v3643 = vpop.f32.mrb[0].mxu0
  %3644 = vdwg.mxu0
  %v3645 = vadd.f32 %v56, %v3565
  %v3646 = vadd.f32 %v57, %v3568
  %v3647 = vlaneseq
  %v3648 = vshrl.u32 %v3647, 7
  %v3649 = vsub.s32 0, %v3648
  %v3650 = vrot.slane %v3642, %v3649
  %v3651 = vadd.f32 %v3645, %v3650
  %v3652 = vadd.f32 %v3646, %v3650
  %3653 = vset.pattern.permute.xlu0 36
  %3654 = vperm.xlu0 %3653, %v3273
  %v3655 = vpop.permute.xlu0 %3654
  %3657 = vset.pattern.permute.xlu0 36
  %3658 = vperm.xlu0 %3657, %v3276
  %v3659 = vpop.permute.xlu0 %3658
  %v3661 = vlaneseq
  %v3662 = vshrl.u32 %v3661, 7
  %v3663 = vsub.s32 4, %v3662
  %v3664 = vrot.slane %v3295, %v3663
  %v3665 = vadd.f32 %v3655, %v3664
  %v3666 = vadd.f32 %v3659, %v3664
  %v3667 = vand.u32 2147483647, %v3665
  %v3668 = vand.u32 2147483647, %v3666
  %v3669 = vrot.slane %v3224, 1
  %s3670 = vtos %v3669
  %v3671 = vstv %s3670
  %v3673 = vmul.f32 %v3671, %v3667
  %v3674 = vmul.f32 %v3671, %v3668
  %v3675 = vadd.f32 %v3651, %v3673
  %v3676 = vadd.f32 %v3652, %v3674
  %3677 = vset.pattern.permute.xlu0 37
  %3678 = vperm.xlu0 %3677, %v3273
  %v3679 = vpop.permute.xlu0 %3678
  %3681 = vset.pattern.permute.xlu0 37
  %3682 = vperm.xlu0 %3681, %v3276
  %v3683 = vpop.permute.xlu0 %3682
  %v3685 = vlaneseq
  %v3686 = vshrl.u32 %v3685, 7
  %v3687 = vsub.s32 5, %v3686
  %v3688 = vrot.slane %v3295, %v3687
  %v3689 = vadd.f32 %v3679, %v3688
  %v3690 = vadd.f32 %v3683, %v3688
  %v3691 = vand.u32 2147483647, %v3689
  %v3692 = vand.u32 2147483647, %v3690
  %3693 = vrot.lane.b32.xlu0 %v3669, 127
  %v3694 = vpop.permute.xlu0 %3693
  %s3695 = vtos %v3694
  %v3696 = vstv %s3695
  %v3698 = vmul.f32 %v3696, %v3691
  %v3699 = vmul.f32 %v3696, %v3692
  %v3700 = vadd.f32 %v3675, %v3698
  %v3701 = vadd.f32 %v3676, %v3699
  %3702 = vset.pattern.permute.xlu0 38
  %3703 = vperm.xlu0 %3702, %v3273
  %v3704 = vpop.permute.xlu0 %3703
  %3706 = vset.pattern.permute.xlu0 38
  %3707 = vperm.xlu0 %3706, %v3276
  %v3708 = vpop.permute.xlu0 %3707
  %v3710 = vlaneseq
  %v3711 = vshrl.u32 %v3710, 7
  %v3712 = vsub.s32 6, %v3711
  %v3713 = vrot.slane %v3295, %v3712
  %v3714 = vadd.f32 %v3704, %v3713
  %v3715 = vadd.f32 %v3708, %v3713
  %v3716 = vand.u32 2147483647, %v3714
  %v3717 = vand.u32 2147483647, %v3715
  %3718 = vrot.lane.b32.xlu0 %v3669, 126
  %v3719 = vpop.permute.xlu0 %3718
  %s3720 = vtos %v3719
  %v3721 = vstv %s3720
  %v3723 = vmul.f32 %v3721, %v3716
  %v3724 = vmul.f32 %v3721, %v3717
  %v3725 = vadd.f32 %v3700, %v3723
  %v3726 = vadd.f32 %v3701, %v3724
  %3727 = vset.pattern.permute.xlu0 39
  %3728 = vperm.xlu0 %3727, %v3273
  %v3729 = vpop.permute.xlu0 %3728
  %3731 = vset.pattern.permute.xlu0 39
  %3732 = vperm.xlu0 %3731, %v3276
  %v3733 = vpop.permute.xlu0 %3732
  %v3735 = vlaneseq
  %v3736 = vshrl.u32 %v3735, 7
  %v3737 = vsub.s32 7, %v3736
  %v3738 = vrot.slane %v3295, %v3737
  %v3739 = vadd.f32 %v3729, %v3738
  %v3740 = vadd.f32 %v3733, %v3738
  %v3741 = vand.u32 2147483647, %v3739
  %v3742 = vand.u32 2147483647, %v3740
  %3743 = vrot.lane.b32.xlu0 %v3669, 125
  %v3744 = vpop.permute.xlu0 %3743
  %s3745 = vtos %v3744
  %v3746 = vstv %s3745
  %v3748 = vmul.f32 %v3746, %v3741
  %v3749 = vmul.f32 %v3746, %v3742
  %v3750 = vadd.f32 %v3725, %v3748
  %v3751 = vadd.f32 %v3726, %v3749
  %v3752 = vsel %vm508, %v3750, -inf
  %3753 = vmax.xlane.f32.xlu0 %v3752
  %v3754 = vpop.xlane.xlu0 %3753
  %v3755 = vsel %vm508, %v3751, -inf
  %3756 = vmax.xlane.f32.xlu0 %v3755
  %v3757 = vpop.xlane.xlu0 %3756
  %v3758 = vsub.f32 %v3750, %v3754
  %v3759 = vsub.f32 %v3751, %v3757
  %v3760 = vmul.f32 %v3758, 1.442695
  %v3761 = vpow.pop %v3760
  %v3762 = vmul.f32 %v3759, 1.442695
  %v3763 = vpow.pop %v3762
  %v3764 = vsel %vm508, %v3761, 0.0
  %3765 = vadd.xlane.f32.xlu0 %v3764
  %v3766 = vpop.xlane.xlu0 %3765
  %v3767 = vsel %vm508, %v3763, 0.0
  %3768 = vadd.xlane.f32.xlu0 %v3767
  %v3769 = vpop.xlane.xlu0 %3768
  %v3770 = vrcp.pop %v3766
  %v3771 = vrcp.pop %v3769
  %v3772 = vmul.f32 %v3761, %v3770
  %v3773 = vmul.f32 %v3763, %v3771
  %v3774 = vpack.c.bf16 %v3773, %v3772
  %3776 = vrot.lane.b32.xlu0 %v3544, 124
  %v3777 = vpop.permute.xlu0 %3776
  %v3780 = vsel %vm508, %v3774, 0
  %3782 = vmatprep.subr.bf16.mxu0 0
  %3783 = vmatpush1.bf16.msra.mxu0 %v3777
  %3784 = vmatprep.subr.bf16.mxu0 0
  %3785 = vmatpush1.bf16.msra.mxu0 0
  %3786 = vmatprep.subr.bf16.mxu0 0
  %3787 = vmatpush1.bf16.msra.mxu0 0
  %3788 = vmatprep.subr.bf16.mxu0 0
  %3789 = vmatpush1.bf16.msra.mxu0 0
  %3790 = vmatprep.subr.bf16.mxu0 0
  %3791 = vmatpush1.bf16.msra.mxu0 0
  %3792 = vmatprep.subr.bf16.mxu0 0
  %3793 = vmatpush1.bf16.msra.mxu0 0
  %3794 = vmatprep.subr.bf16.mxu0 0
  %3795 = vmatpush1.bf16.msra.mxu0 0
  %3796 = vmatprep.subr.bf16.mxu0 0
  %3797 = vmatpush1.bf16.msra.mxu0 0
  %3798 = vmatprep.subr.bf16.mxu0 0
  %3799 = vmatpush1.bf16.msra.mxu0 0
  %3800 = vmatprep.subr.bf16.mxu0 0
  %3801 = vmatpush1.bf16.msra.mxu0 0
  %3802 = vmatprep.subr.bf16.mxu0 0
  %3803 = vmatpush1.bf16.msra.mxu0 0
  %3804 = vmatprep.subr.bf16.mxu0 0
  %3805 = vmatpush1.bf16.msra.mxu0 0
  %3806 = vmatprep.subr.bf16.mxu0 0
  %3807 = vmatpush1.bf16.msra.mxu0 0
  %3808 = vmatprep.subr.bf16.mxu0 0
  %3809 = vmatpush1.bf16.msra.mxu0 0
  %3810 = vmatprep.subr.bf16.mxu0 0
  %3811 = vmatpush1.bf16.msra.mxu0 0
  %3812 = vmatprep.subr.bf16.mxu0 0
  %3813 = vmatpush1.bf16.msra.mxu0 0
  %3814 = vmatprep.mubr.bf16.mxu0 0
  %3815 = vmatmul.mubr.bf16.gmra.mrb[0].mxu0 %v3780
  %v3816 = vpop.f32.mrb[0].mxu0
  %v3817 = vadd.f32 0.0, %v3816
  %v3818 = vpop.f32.mrb[0].mxu0
  %v3819 = vpop.f32.mrb[0].mxu0
  %v3820 = vadd.f32 0.0, %v3819
  %v3821 = vpop.f32.mrb[0].mxu0
  %3822 = vdwg.mxu0
  %v3824 = vsel %vm508, %v3543, 0
  %3826 = vmatprep.subr.bf16.mxu0 0
  %3827 = vmatpush1.bf16.msra.mxu0 %v3544
  %3828 = vmatprep.subr.bf16.mxu0 0
  %3829 = vmatpush1.bf16.msra.mxu0 0
  %3830 = vmatprep.subr.bf16.mxu0 0
  %3831 = vmatpush1.bf16.msra.mxu0 0
  %3832 = vmatprep.subr.bf16.mxu0 0
  %3833 = vmatpush1.bf16.msra.mxu0 0
  %3834 = vmatprep.subr.bf16.mxu0 0
  %3835 = vmatpush1.bf16.msra.mxu0 0
  %3836 = vmatprep.subr.bf16.mxu0 0
  %3837 = vmatpush1.bf16.msra.mxu0 0
  %3838 = vmatprep.subr.bf16.mxu0 0
  %3839 = vmatpush1.bf16.msra.mxu0 0
  %3840 = vmatprep.subr.bf16.mxu0 0
  %3841 = vmatpush1.bf16.msra.mxu0 0
  %3842 = vmatprep.subr.bf16.mxu0 0
  %3843 = vmatpush1.bf16.msra.mxu0 0
  %3844 = vmatprep.subr.bf16.mxu0 0
  %3845 = vmatpush1.bf16.msra.mxu0 0
  %3846 = vmatprep.subr.bf16.mxu0 0
  %3847 = vmatpush1.bf16.msra.mxu0 0
  %3848 = vmatprep.subr.bf16.mxu0 0
  %3849 = vmatpush1.bf16.msra.mxu0 0
  %3850 = vmatprep.subr.bf16.mxu0 0
  %3851 = vmatpush1.bf16.msra.mxu0 0
  %3852 = vmatprep.subr.bf16.mxu0 0
  %3853 = vmatpush1.bf16.msra.mxu0 0
  %3854 = vmatprep.subr.bf16.mxu0 0
  %3855 = vmatpush1.bf16.msra.mxu0 0
  %3856 = vmatprep.subr.bf16.mxu0 0
  %3857 = vmatpush1.bf16.msra.mxu0 0
  %3858 = vmatprep.mubr.bf16.mxu0 0
  %3859 = vmatmul.mubr.bf16.gmra.mrb[0].mxu0 %v3824
  %v3860 = vpop.f32.mrb[0].mxu0
  %v3861 = vadd.f32 %v3817, %v3860
  %v3862 = vpop.f32.mrb[0].mxu0
  %v3863 = vpop.f32.mrb[0].mxu0
  %v3864 = vadd.f32 %v3820, %v3863
  %v3865 = vpop.f32.mrb[0].mxu0
  %3866 = vdwg.mxu0
  %v3867 = vlaneseq
  %v3868 = vshrl.u32 %v3867, 7
  %v3869 = vsub.s32 2, %v3868
  %v3870 = vrot.slane %v3223, %v3869
  %3872 = vrot.lane.b32.xlu0 %v3870, 40
  %v3873 = vpop.permute.xlu0 %3872
  %v3875 = vmul.f32 %v3273, %v3873
  %v3876 = vmul.f32 %v3276, %v3873
  %3879 = vrot.lane.b32.xlu0 %v3875, 88
  %v3880 = vpop.permute.xlu0 %3879
  %3881 = vrot.lane.b32.xlu0 %v3876, 88
  %v3882 = vpop.permute.xlu0 %3881
  %v3885 = vsel %vm3329, %v3880, 0.0
  %3886 = vadd.xlane.f32.xlu0 %v3885
  %v3887 = vpop.xlane.xlu0 %3886
  %v3888 = vsel %vm3329, %v3882, 0.0
  %3889 = vadd.xlane.f32.xlu0 %v3888
  %v3890 = vpop.xlane.xlu0 %3889
  %v3891 = vrot.slane %v3223, 2
  %v3892 = vsel %vm3329, %v3891, 0
  %v3895 = vsel %vm71, %v3296, 0
  %3897 = vmatprep.subr.mxu0 0.0
  %3898 = vmatpush1.msra.mxu0 %v3895
  %3899 = vmatprep.subr.mxu0 0.0
  %3900 = vmatpush1.msra.mxu0 0.0
  %3901 = vmatprep.subr.mxu0 0.0
  %3902 = vmatpush1.msra.mxu0 0.0
  %3903 = vmatprep.subr.mxu0 0.0
  %3904 = vmatpush1.msra.mxu0 0.0
  %3905 = vmatprep.subr.mxu0 0.0
  %3906 = vmatpush1.msra.mxu0 0.0
  %3907 = vmatprep.subr.mxu0 0.0
  %3908 = vmatpush1.msra.mxu0 0.0
  %3909 = vmatprep.subr.mxu0 0.0
  %3910 = vmatpush1.msra.mxu0 0.0
  %3911 = vmatprep.subr.mxu0 0.0
  %3912 = vmatpush1.msra.mxu0 0.0
  %3913 = vmatprep.subr.mxu0 0.0
  %3914 = vmatpush1.msra.mxu0 0.0
  %3915 = vmatprep.subr.mxu0 0.0
  %3916 = vmatpush1.msra.mxu0 0.0
  %3917 = vmatprep.subr.mxu0 0.0
  %3918 = vmatpush1.msra.mxu0 0.0
  %3919 = vmatprep.subr.mxu0 0.0
  %3920 = vmatpush1.msra.mxu0 0.0
  %3921 = vmatprep.subr.mxu0 0.0
  %3922 = vmatpush1.msra.mxu0 0.0
  %3923 = vmatprep.subr.mxu0 0.0
  %3924 = vmatpush1.msra.mxu0 0.0
  %3925 = vmatprep.subr.mxu0 0.0
  %3926 = vmatpush1.msra.mxu0 0.0
  %3927 = vmatprep.subr.mxu0 0.0
  %3928 = vmatpush1.msra.mxu0 0.0
  %3929 = vmatprep.subr.mxu0 0.0
  %3930 = vmatpush1.msra.mxu0 0.0
  %3931 = vmatprep.subr.mxu0 0.0
  %3932 = vmatpush1.msra.mxu0 0.0
  %3933 = vmatprep.subr.mxu0 0.0
  %3934 = vmatpush1.msra.mxu0 0.0
  %3935 = vmatprep.subr.mxu0 0.0
  %3936 = vmatpush1.msra.mxu0 0.0
  %3937 = vmatprep.subr.mxu0 0.0
  %3938 = vmatpush1.msra.mxu0 0.0
  %3939 = vmatprep.subr.mxu0 0.0
  %3940 = vmatpush1.msra.mxu0 0.0
  %3941 = vmatprep.subr.mxu0 0.0
  %3942 = vmatpush1.msra.mxu0 0.0
  %3943 = vmatprep.subr.mxu0 0.0
  %3944 = vmatpush1.msra.mxu0 0.0
  %3945 = vmatprep.subr.mxu0 0.0
  %3946 = vmatpush1.msra.mxu0 0.0
  %3947 = vmatprep.subr.mxu0 0.0
  %3948 = vmatpush1.msra.mxu0 0.0
  %3949 = vmatprep.subr.mxu0 0.0
  %3950 = vmatpush1.msra.mxu0 0.0
  %3951 = vmatprep.subr.mxu0 0.0
  %3952 = vmatpush1.msra.mxu0 0.0
  %3953 = vmatprep.subr.mxu0 0.0
  %3954 = vmatpush1.msra.mxu0 0.0
  %3955 = vmatprep.subr.mxu0 0.0
  %3956 = vmatpush1.msra.mxu0 0.0
  %3957 = vmatprep.subr.mxu0 0.0
  %3958 = vmatpush1.msra.mxu0 0.0
  %3959 = vmatprep.subr.mxu0 0.0
  %3960 = vmatpush1.msra.mxu0 0.0
  %3961 = vmatprep.mubr.f32.mxu0 0.0
  %3962 = vmatmul.mubr.f32.gmra.mrb[0].mxu0 %v3892
  %v3963 = vpop.f32.mrb[0].mxu0
  %v3964 = vadd.f32 0.0, %v3963
  %v3965 = vpop.f32.mrb[0].mxu0
  %3966 = vdwg.mxu0
  %v3967 = vadd.f32 %v56, %v3887
  %v3968 = vadd.f32 %v57, %v3890
  %v3969 = vlaneseq
  %v3970 = vshrl.u32 %v3969, 7
  %v3971 = vsub.s32 0, %v3970
  %v3972 = vrot.slane %v3964, %v3971
  %v3973 = vadd.f32 %v3967, %v3972
  %v3974 = vadd.f32 %v3968, %v3972
  %3975 = vset.pattern.permute.xlu0 40
  %3976 = vperm.xlu0 %3975, %v3273
  %v3977 = vpop.permute.xlu0 %3976
  %3979 = vset.pattern.permute.xlu0 40
  %3980 = vperm.xlu0 %3979, %v3276
  %v3981 = vpop.permute.xlu0 %3980
  %v3983 = vlaneseq
  %v3984 = vshrl.u32 %v3983, 7
  %v3985 = vsub.s32 0, %v3984
  %v3986 = vrot.slane %v3296, %v3985
  %v3987 = vadd.f32 %v3977, %v3986
  %v3988 = vadd.f32 %v3981, %v3986
  %v3989 = vand.u32 2147483647, %v3987
  %v3990 = vand.u32 2147483647, %v3988
  %v3991 = vrot.slane %v3224, 2
  %s3992 = vtos %v3991
  %v3993 = vstv %s3992
  %v3995 = vmul.f32 %v3993, %v3989
  %v3996 = vmul.f32 %v3993, %v3990
  %v3997 = vadd.f32 %v3973, %v3995
  %v3998 = vadd.f32 %v3974, %v3996
  %3999 = vset.pattern.permute.xlu0 41
  %4000 = vperm.xlu0 %3999, %v3273
  %v4001 = vpop.permute.xlu0 %4000
  %4003 = vset.pattern.permute.xlu0 41
  %4004 = vperm.xlu0 %4003, %v3276
  %v4005 = vpop.permute.xlu0 %4004
  %v4007 = vlaneseq
  %v4008 = vshrl.u32 %v4007, 7
  %v4009 = vsub.s32 1, %v4008
  %v4010 = vrot.slane %v3296, %v4009
  %v4011 = vadd.f32 %v4001, %v4010
  %v4012 = vadd.f32 %v4005, %v4010
  %v4013 = vand.u32 2147483647, %v4011
  %v4014 = vand.u32 2147483647, %v4012
  %4015 = vrot.lane.b32.xlu0 %v3991, 127
  %v4016 = vpop.permute.xlu0 %4015
  %s4017 = vtos %v4016
  %v4018 = vstv %s4017
  %v4020 = vmul.f32 %v4018, %v4013
  %v4021 = vmul.f32 %v4018, %v4014
  %v4022 = vadd.f32 %v3997, %v4020
  %v4023 = vadd.f32 %v3998, %v4021
  %4024 = vset.pattern.permute.xlu0 42
  %4025 = vperm.xlu0 %4024, %v3273
  %v4026 = vpop.permute.xlu0 %4025
  %4028 = vset.pattern.permute.xlu0 42
  %4029 = vperm.xlu0 %4028, %v3276
  %v4030 = vpop.permute.xlu0 %4029
  %v4032 = vlaneseq
  %v4033 = vshrl.u32 %v4032, 7
  %v4034 = vsub.s32 2, %v4033
  %v4035 = vrot.slane %v3296, %v4034
  %v4036 = vadd.f32 %v4026, %v4035
  %v4037 = vadd.f32 %v4030, %v4035
  %v4038 = vand.u32 2147483647, %v4036
  %v4039 = vand.u32 2147483647, %v4037
  %4040 = vrot.lane.b32.xlu0 %v3991, 126
  %v4041 = vpop.permute.xlu0 %4040
  %s4042 = vtos %v4041
  %v4043 = vstv %s4042
  %v4045 = vmul.f32 %v4043, %v4038
  %v4046 = vmul.f32 %v4043, %v4039
  %v4047 = vadd.f32 %v4022, %v4045
  %v4048 = vadd.f32 %v4023, %v4046
  %4049 = vset.pattern.permute.xlu0 43
  %4050 = vperm.xlu0 %4049, %v3273
  %v4051 = vpop.permute.xlu0 %4050
  %4053 = vset.pattern.permute.xlu0 43
  %4054 = vperm.xlu0 %4053, %v3276
  %v4055 = vpop.permute.xlu0 %4054
  %v4057 = vlaneseq
  %v4058 = vshrl.u32 %v4057, 7
  %v4059 = vsub.s32 3, %v4058
  %v4060 = vrot.slane %v3296, %v4059
  %v4061 = vadd.f32 %v4051, %v4060
  %v4062 = vadd.f32 %v4055, %v4060
  %v4063 = vand.u32 2147483647, %v4061
  %v4064 = vand.u32 2147483647, %v4062
  %4065 = vrot.lane.b32.xlu0 %v3991, 125
  %v4066 = vpop.permute.xlu0 %4065
  %s4067 = vtos %v4066
  %v4068 = vstv %s4067
  %v4070 = vmul.f32 %v4068, %v4063
  %v4071 = vmul.f32 %v4068, %v4064
  %v4072 = vadd.f32 %v4047, %v4070
  %v4073 = vadd.f32 %v4048, %v4071
  %v4074 = vsel %vm508, %v4072, -inf
  %4075 = vmax.xlane.f32.xlu0 %v4074
  %v4076 = vpop.xlane.xlu0 %4075
  %v4077 = vsel %vm508, %v4073, -inf
  %4078 = vmax.xlane.f32.xlu0 %v4077
  %v4079 = vpop.xlane.xlu0 %4078
  %v4080 = vsub.f32 %v4072, %v4076
  %v4081 = vsub.f32 %v4073, %v4079
  %v4082 = vmul.f32 %v4080, 1.442695
  %v4083 = vpow.pop %v4082
  %v4084 = vmul.f32 %v4081, 1.442695
  %v4085 = vpow.pop %v4084
  %v4086 = vsel %vm508, %v4083, 0.0
  %4087 = vadd.xlane.f32.xlu0 %v4086
  %v4088 = vpop.xlane.xlu0 %4087
  %v4089 = vsel %vm508, %v4085, 0.0
  %4090 = vadd.xlane.f32.xlu0 %v4089
  %v4091 = vpop.xlane.xlu0 %4090
  %v4092 = vrcp.pop %v4088
  %v4093 = vrcp.pop %v4091
  %v4094 = vmul.f32 %v4083, %v4092
  %v4095 = vmul.f32 %v4085, %v4093
  %v4096 = vpack.c.bf16 %v4095, %v4094
  %4097 = vrot.lane.b32.xlu0 %v3544, 120
  %v4098 = vpop.permute.xlu0 %4097
  %v4101 = vsel %vm508, %v4096, 0
  %4103 = vmatprep.subr.bf16.mxu0 0
  %4104 = vmatpush1.bf16.msra.mxu0 %v4098
  %4105 = vmatprep.subr.bf16.mxu0 0
  %4106 = vmatpush1.bf16.msra.mxu0 0
  %4107 = vmatprep.subr.bf16.mxu0 0
  %4108 = vmatpush1.bf16.msra.mxu0 0
  %4109 = vmatprep.subr.bf16.mxu0 0
  %4110 = vmatpush1.bf16.msra.mxu0 0
  %4111 = vmatprep.subr.bf16.mxu0 0
  %4112 = vmatpush1.bf16.msra.mxu0 0
  %4113 = vmatprep.subr.bf16.mxu0 0
  %4114 = vmatpush1.bf16.msra.mxu0 0
  %4115 = vmatprep.subr.bf16.mxu0 0
  %4116 = vmatpush1.bf16.msra.mxu0 0
  %4117 = vmatprep.subr.bf16.mxu0 0
  %4118 = vmatpush1.bf16.msra.mxu0 0
  %4119 = vmatprep.subr.bf16.mxu0 0
  %4120 = vmatpush1.bf16.msra.mxu0 0
  %4121 = vmatprep.subr.bf16.mxu0 0
  %4122 = vmatpush1.bf16.msra.mxu0 0
  %4123 = vmatprep.subr.bf16.mxu0 0
  %4124 = vmatpush1.bf16.msra.mxu0 0
  %4125 = vmatprep.subr.bf16.mxu0 0
  %4126 = vmatpush1.bf16.msra.mxu0 0
  %4127 = vmatprep.subr.bf16.mxu0 0
  %4128 = vmatpush1.bf16.msra.mxu0 0
  %4129 = vmatprep.subr.bf16.mxu0 0
  %4130 = vmatpush1.bf16.msra.mxu0 0
  %4131 = vmatprep.subr.bf16.mxu0 0
  %4132 = vmatpush1.bf16.msra.mxu0 0
  %4133 = vmatprep.subr.bf16.mxu0 0
  %4134 = vmatpush1.bf16.msra.mxu0 0
  %4135 = vmatprep.mubr.bf16.mxu0 0
  %4136 = vmatmul.mubr.bf16.gmra.mrb[0].mxu0 %v4101
  %v4137 = vpop.f32.mrb[0].mxu0
  %v4138 = vadd.f32 0.0, %v4137
  %v4139 = vpop.f32.mrb[0].mxu0
  %v4140 = vpop.f32.mrb[0].mxu0
  %v4141 = vadd.f32 0.0, %v4140
  %v4142 = vpop.f32.mrb[0].mxu0
  %4143 = vdwg.mxu0
  %v4144 = vadd.f32 %v3861, %v4138
  %v4145 = vadd.f32 %v3864, %v4141
  %v4146 = vlaneseq
  %v4147 = vshrl.u32 %v4146, 7
  %v4148 = vsub.s32 3, %v4147
  %v4149 = vrot.slane %v3223, %v4148
  %4151 = vrot.lane.b32.xlu0 %v4149, 44
  %v4152 = vpop.permute.xlu0 %4151
  %v4154 = vmul.f32 %v3273, %v4152
  %v4155 = vmul.f32 %v3276, %v4152
  %4158 = vrot.lane.b32.xlu0 %v4154, 84
  %v4159 = vpop.permute.xlu0 %4158
  %4160 = vrot.lane.b32.xlu0 %v4155, 84
  %v4161 = vpop.permute.xlu0 %4160
  %v4164 = vsel %vm3329, %v4159, 0.0
  %4165 = vadd.xlane.f32.xlu0 %v4164
  %v4166 = vpop.xlane.xlu0 %4165
  %v4167 = vsel %vm3329, %v4161, 0.0
  %4168 = vadd.xlane.f32.xlu0 %v4167
  %v4169 = vpop.xlane.xlu0 %4168
  %v4170 = vrot.slane %v3223, 3
  %v4171 = vrot.slane %v3296, 4
  %v4172 = vsel %vm3329, %v4170, 0
  %v4174 = vsel %vm71, %v4171, 0
  %4176 = vmatprep.subr.mxu0 0.0
  %4177 = vmatpush1.msra.mxu0 %v4174
  %4178 = vmatprep.subr.mxu0 0.0
  %4179 = vmatpush1.msra.mxu0 0.0
  %4180 = vmatprep.subr.mxu0 0.0
  %4181 = vmatpush1.msra.mxu0 0.0
  %4182 = vmatprep.subr.mxu0 0.0
  %4183 = vmatpush1.msra.mxu0 0.0
  %4184 = vmatprep.subr.mxu0 0.0
  %4185 = vmatpush1.msra.mxu0 0.0
  %4186 = vmatprep.subr.mxu0 0.0
  %4187 = vmatpush1.msra.mxu0 0.0
  %4188 = vmatprep.subr.mxu0 0.0
  %4189 = vmatpush1.msra.mxu0 0.0
  %4190 = vmatprep.subr.mxu0 0.0
  %4191 = vmatpush1.msra.mxu0 0.0
  %4192 = vmatprep.subr.mxu0 0.0
  %4193 = vmatpush1.msra.mxu0 0.0
  %4194 = vmatprep.subr.mxu0 0.0
  %4195 = vmatpush1.msra.mxu0 0.0
  %4196 = vmatprep.subr.mxu0 0.0
  %4197 = vmatpush1.msra.mxu0 0.0
  %4198 = vmatprep.subr.mxu0 0.0
  %4199 = vmatpush1.msra.mxu0 0.0
  %4200 = vmatprep.subr.mxu0 0.0
  %4201 = vmatpush1.msra.mxu0 0.0
  %4202 = vmatprep.subr.mxu0 0.0
  %4203 = vmatpush1.msra.mxu0 0.0
  %4204 = vmatprep.subr.mxu0 0.0
  %4205 = vmatpush1.msra.mxu0 0.0
  %4206 = vmatprep.subr.mxu0 0.0
  %4207 = vmatpush1.msra.mxu0 0.0
  %4208 = vmatprep.subr.mxu0 0.0
  %4209 = vmatpush1.msra.mxu0 0.0
  %4210 = vmatprep.subr.mxu0 0.0
  %4211 = vmatpush1.msra.mxu0 0.0
  %4212 = vmatprep.subr.mxu0 0.0
  %4213 = vmatpush1.msra.mxu0 0.0
  %4214 = vmatprep.subr.mxu0 0.0
  %4215 = vmatpush1.msra.mxu0 0.0
  %4216 = vmatprep.subr.mxu0 0.0
  %4217 = vmatpush1.msra.mxu0 0.0
  %4218 = vmatprep.subr.mxu0 0.0
  %4219 = vmatpush1.msra.mxu0 0.0
  %4220 = vmatprep.subr.mxu0 0.0
  %4221 = vmatpush1.msra.mxu0 0.0
  %4222 = vmatprep.subr.mxu0 0.0
  %4223 = vmatpush1.msra.mxu0 0.0
  %4224 = vmatprep.subr.mxu0 0.0
  %4225 = vmatpush1.msra.mxu0 0.0
  %4226 = vmatprep.subr.mxu0 0.0
  %4227 = vmatpush1.msra.mxu0 0.0
  %4228 = vmatprep.subr.mxu0 0.0
  %4229 = vmatpush1.msra.mxu0 0.0
  %4230 = vmatprep.subr.mxu0 0.0
  %4231 = vmatpush1.msra.mxu0 0.0
  %4232 = vmatprep.subr.mxu0 0.0
  %4233 = vmatpush1.msra.mxu0 0.0
  %4234 = vmatprep.subr.mxu0 0.0
  %4235 = vmatpush1.msra.mxu0 0.0
  %4236 = vmatprep.subr.mxu0 0.0
  %4237 = vmatpush1.msra.mxu0 0.0
  %4238 = vmatprep.subr.mxu0 0.0
  %4239 = vmatpush1.msra.mxu0 0.0
  %4240 = vmatprep.mubr.f32.mxu0 0.0
  %4241 = vmatmul.mubr.f32.gmra.mrb[0].mxu0 %v4172
  %v4242 = vpop.f32.mrb[0].mxu0
  %v4243 = vadd.f32 0.0, %v4242
  %v4244 = vpop.f32.mrb[0].mxu0
  %4245 = vdwg.mxu0
  %v4246 = vadd.f32 %v56, %v4166
  %v4247 = vadd.f32 %v57, %v4169
  %v4248 = vlaneseq
  %v4249 = vshrl.u32 %v4248, 7
  %v4250 = vsub.s32 0, %v4249
  %v4251 = vrot.slane %v4243, %v4250
  %v4252 = vadd.f32 %v4246, %v4251
  %v4253 = vadd.f32 %v4247, %v4251
  %4254 = vset.pattern.permute.xlu0 44
  %4255 = vperm.xlu0 %4254, %v3273
  %v4256 = vpop.permute.xlu0 %4255
  %4258 = vset.pattern.permute.xlu0 44
  %4259 = vperm.xlu0 %4258, %v3276
  %v4260 = vpop.permute.xlu0 %4259
  %v4262 = vlaneseq
  %v4263 = vshrl.u32 %v4262, 7
  %v4264 = vsub.s32 4, %v4263
  %v4265 = vrot.slane %v3296, %v4264
  %v4266 = vadd.f32 %v4256, %v4265
  %v4267 = vadd.f32 %v4260, %v4265
  %v4268 = vand.u32 2147483647, %v4266
  %v4269 = vand.u32 2147483647, %v4267
  %v4270 = vrot.slane %v3224, 3
  %s4271 = vtos %v4270
  %v4272 = vstv %s4271
  %v4274 = vmul.f32 %v4272, %v4268
  %v4275 = vmul.f32 %v4272, %v4269
  %v4276 = vadd.f32 %v4252, %v4274
  %v4277 = vadd.f32 %v4253, %v4275
  %4278 = vset.pattern.permute.xlu0 45
  %4279 = vperm.xlu0 %4278, %v3273
  %v4280 = vpop.permute.xlu0 %4279
  %4282 = vset.pattern.permute.xlu0 45
  %4283 = vperm.xlu0 %4282, %v3276
  %v4284 = vpop.permute.xlu0 %4283
  %v4286 = vlaneseq
  %v4287 = vshrl.u32 %v4286, 7
  %v4288 = vsub.s32 5, %v4287
  %v4289 = vrot.slane %v3296, %v4288
  %v4290 = vadd.f32 %v4280, %v4289
  %v4291 = vadd.f32 %v4284, %v4289
  %v4292 = vand.u32 2147483647, %v4290
  %v4293 = vand.u32 2147483647, %v4291
  %4294 = vrot.lane.b32.xlu0 %v4270, 127
  %v4295 = vpop.permute.xlu0 %4294
  %s4296 = vtos %v4295
  %v4297 = vstv %s4296
  %v4299 = vmul.f32 %v4297, %v4292
  %v4300 = vmul.f32 %v4297, %v4293
  %v4301 = vadd.f32 %v4276, %v4299
  %v4302 = vadd.f32 %v4277, %v4300
  %4303 = vset.pattern.permute.xlu0 46
  %4304 = vperm.xlu0 %4303, %v3273
  %v4305 = vpop.permute.xlu0 %4304
  %4307 = vset.pattern.permute.xlu0 46
  %4308 = vperm.xlu0 %4307, %v3276
  %v4309 = vpop.permute.xlu0 %4308
  %v4311 = vlaneseq
  %v4312 = vshrl.u32 %v4311, 7
  %v4313 = vsub.s32 6, %v4312
  %v4314 = vrot.slane %v3296, %v4313
  %v4315 = vadd.f32 %v4305, %v4314
  %v4316 = vadd.f32 %v4309, %v4314
  %v4317 = vand.u32 2147483647, %v4315
  %v4318 = vand.u32 2147483647, %v4316
  %4319 = vrot.lane.b32.xlu0 %v4270, 126
  %v4320 = vpop.permute.xlu0 %4319
  %s4321 = vtos %v4320
  %v4322 = vstv %s4321
  %v4324 = vmul.f32 %v4322, %v4317
  %v4325 = vmul.f32 %v4322, %v4318
  %v4326 = vadd.f32 %v4301, %v4324
  %v4327 = vadd.f32 %v4302, %v4325
  %4328 = vset.pattern.permute.xlu0 47
  %4329 = vperm.xlu0 %4328, %v3273
  %v4330 = vpop.permute.xlu0 %4329
  %4332 = vset.pattern.permute.xlu0 47
  %4333 = vperm.xlu0 %4332, %v3276
  %v4334 = vpop.permute.xlu0 %4333
  %v4336 = vlaneseq
  %v4337 = vshrl.u32 %v4336, 7
  %v4338 = vsub.s32 7, %v4337
  %v4339 = vrot.slane %v3296, %v4338
  %v4340 = vadd.f32 %v4330, %v4339
  %v4341 = vadd.f32 %v4334, %v4339
  %v4342 = vand.u32 2147483647, %v4340
  %v4343 = vand.u32 2147483647, %v4341
  %4344 = vrot.lane.b32.xlu0 %v4270, 125
  %v4345 = vpop.permute.xlu0 %4344
  %s4346 = vtos %v4345
  %v4347 = vstv %s4346
  %v4349 = vmul.f32 %v4347, %v4342
  %v4350 = vmul.f32 %v4347, %v4343
  %v4351 = vadd.f32 %v4326, %v4349
  %v4352 = vadd.f32 %v4327, %v4350
  %v4353 = vsel %vm508, %v4351, -inf
  %4354 = vmax.xlane.f32.xlu0 %v4353
  %v4355 = vpop.xlane.xlu0 %4354
  %v4356 = vsel %vm508, %v4352, -inf
  %4357 = vmax.xlane.f32.xlu0 %v4356
  %v4358 = vpop.xlane.xlu0 %4357
  %v4359 = vsub.f32 %v4351, %v4355
  %v4360 = vsub.f32 %v4352, %v4358
  %v4361 = vmul.f32 %v4359, 1.442695
  %v4362 = vpow.pop %v4361
  %v4363 = vmul.f32 %v4360, 1.442695
  %v4364 = vpow.pop %v4363
  %v4365 = vsel %vm508, %v4362, 0.0
  %4366 = vadd.xlane.f32.xlu0 %v4365
  %v4367 = vpop.xlane.xlu0 %4366
  %v4368 = vsel %vm508, %v4364, 0.0
  %4369 = vadd.xlane.f32.xlu0 %v4368
  %v4370 = vpop.xlane.xlu0 %4369
  %v4371 = vrcp.pop %v4367
  %v4372 = vrcp.pop %v4370
  %v4373 = vmul.f32 %v4362, %v4371
  %v4374 = vmul.f32 %v4364, %v4372
  %v4375 = vpack.c.bf16 %v4374, %v4373
  %4376 = vrot.lane.b32.xlu0 %v3544, 116
  %v4377 = vpop.permute.xlu0 %4376
  %v4380 = vsel %vm508, %v4375, 0
  %4382 = vmatprep.subr.bf16.mxu0 0
  %4383 = vmatpush1.bf16.msra.mxu0 %v4377
  %4384 = vmatprep.subr.bf16.mxu0 0
  %4385 = vmatpush1.bf16.msra.mxu0 0
  %4386 = vmatprep.subr.bf16.mxu0 0
  %4387 = vmatpush1.bf16.msra.mxu0 0
  %4388 = vmatprep.subr.bf16.mxu0 0
  %4389 = vmatpush1.bf16.msra.mxu0 0
  %4390 = vmatprep.subr.bf16.mxu0 0
  %4391 = vmatpush1.bf16.msra.mxu0 0
  %4392 = vmatprep.subr.bf16.mxu0 0
  %4393 = vmatpush1.bf16.msra.mxu0 0
  %4394 = vmatprep.subr.bf16.mxu0 0
  %4395 = vmatpush1.bf16.msra.mxu0 0
  %4396 = vmatprep.subr.bf16.mxu0 0
  %4397 = vmatpush1.bf16.msra.mxu0 0
  %4398 = vmatprep.subr.bf16.mxu0 0
  %4399 = vmatpush1.bf16.msra.mxu0 0
  %4400 = vmatprep.subr.bf16.mxu0 0
  %4401 = vmatpush1.bf16.msra.mxu0 0
  %4402 = vmatprep.subr.bf16.mxu0 0
  %4403 = vmatpush1.bf16.msra.mxu0 0
  %4404 = vmatprep.subr.bf16.mxu0 0
  %4405 = vmatpush1.bf16.msra.mxu0 0
  %4406 = vmatprep.subr.bf16.mxu0 0
  %4407 = vmatpush1.bf16.msra.mxu0 0
  %4408 = vmatprep.subr.bf16.mxu0 0
  %4409 = vmatpush1.bf16.msra.mxu0 0
  %4410 = vmatprep.subr.bf16.mxu0 0
  %4411 = vmatpush1.bf16.msra.mxu0 0
  %4412 = vmatprep.subr.bf16.mxu0 0
  %4413 = vmatpush1.bf16.msra.mxu0 0
  %4414 = vmatprep.mubr.bf16.mxu0 0
  %4415 = vmatmul.mubr.bf16.gmra.mrb[0].mxu0 %v4380
  %v4416 = vpop.f32.mrb[0].mxu0
  %v4417 = vadd.f32 0.0, %v4416
  %v4418 = vpop.f32.mrb[0].mxu0
  %v4419 = vpop.f32.mrb[0].mxu0
  %v4420 = vadd.f32 0.0, %v4419
  %v4421 = vpop.f32.mrb[0].mxu0
  %4422 = vdwg.mxu0
  %v4423 = vadd.f32 %v4144, %v4417
  %v4424 = vadd.f32 %v4145, %v4420
  %v4425 = vlaneseq
  %v4426 = vshrl.u32 %v4425, 7
  %v4427 = vsub.s32 4, %v4426
  %v4428 = vrot.slane %v3223, %v4427
  %4430 = vrot.lane.b32.xlu0 %v4428, 48
  %v4431 = vpop.permute.xlu0 %4430
  %v4433 = vmul.f32 %v3273, %v4431
  %v4434 = vmul.f32 %v3276, %v4431
  %4437 = vrot.lane.b32.xlu0 %v4433, 80
  %v4438 = vpop.permute.xlu0 %4437
  %4439 = vrot.lane.b32.xlu0 %v4434, 80
  %v4440 = vpop.permute.xlu0 %4439
  %v4443 = vsel %vm3329, %v4438, 0.0
  %4444 = vadd.xlane.f32.xlu0 %v4443
  %v4445 = vpop.xlane.xlu0 %4444
  %v4446 = vsel %vm3329, %v4440, 0.0
  %4447 = vadd.xlane.f32.xlu0 %v4446
  %v4448 = vpop.xlane.xlu0 %4447
  %v4449 = vrot.slane %v3223, 4
  %v4450 = vsel %vm3329, %v4449, 0
  %v4453 = vsel %vm71, %v3297, 0
  %4455 = vmatprep.subr.mxu0 0.0
  %4456 = vmatpush1.msra.mxu0 %v4453
  %4457 = vmatprep.subr.mxu0 0.0
  %4458 = vmatpush1.msra.mxu0 0.0
  %4459 = vmatprep.subr.mxu0 0.0
  %4460 = vmatpush1.msra.mxu0 0.0
  %4461 = vmatprep.subr.mxu0 0.0
  %4462 = vmatpush1.msra.mxu0 0.0
  %4463 = vmatprep.subr.mxu0 0.0
  %4464 = vmatpush1.msra.mxu0 0.0
  %4465 = vmatprep.subr.mxu0 0.0
  %4466 = vmatpush1.msra.mxu0 0.0
  %4467 = vmatprep.subr.mxu0 0.0
  %4468 = vmatpush1.msra.mxu0 0.0
  %4469 = vmatprep.subr.mxu0 0.0
  %4470 = vmatpush1.msra.mxu0 0.0
  %4471 = vmatprep.subr.mxu0 0.0
  %4472 = vmatpush1.msra.mxu0 0.0
  %4473 = vmatprep.subr.mxu0 0.0
  %4474 = vmatpush1.msra.mxu0 0.0
  %4475 = vmatprep.subr.mxu0 0.0
  %4476 = vmatpush1.msra.mxu0 0.0
  %4477 = vmatprep.subr.mxu0 0.0
  %4478 = vmatpush1.msra.mxu0 0.0
  %4479 = vmatprep.subr.mxu0 0.0
  %4480 = vmatpush1.msra.mxu0 0.0
  %4481 = vmatprep.subr.mxu0 0.0
  %4482 = vmatpush1.msra.mxu0 0.0
  %4483 = vmatprep.subr.mxu0 0.0
  %4484 = vmatpush1.msra.mxu0 0.0
  %4485 = vmatprep.subr.mxu0 0.0
  %4486 = vmatpush1.msra.mxu0 0.0
  %4487 = vmatprep.subr.mxu0 0.0
  %4488 = vmatpush1.msra.mxu0 0.0
  %4489 = vmatprep.subr.mxu0 0.0
  %4490 = vmatpush1.msra.mxu0 0.0
  %4491 = vmatprep.subr.mxu0 0.0
  %4492 = vmatpush1.msra.mxu0 0.0
  %4493 = vmatprep.subr.mxu0 0.0
  %4494 = vmatpush1.msra.mxu0 0.0
  %4495 = vmatprep.subr.mxu0 0.0
  %4496 = vmatpush1.msra.mxu0 0.0
  %4497 = vmatprep.subr.mxu0 0.0
  %4498 = vmatpush1.msra.mxu0 0.0
  %4499 = vmatprep.subr.mxu0 0.0
  %4500 = vmatpush1.msra.mxu0 0.0
  %4501 = vmatprep.subr.mxu0 0.0
  %4502 = vmatpush1.msra.mxu0 0.0
  %4503 = vmatprep.subr.mxu0 0.0
  %4504 = vmatpush1.msra.mxu0 0.0
  %4505 = vmatprep.subr.mxu0 0.0
  %4506 = vmatpush1.msra.mxu0 0.0
  %4507 = vmatprep.subr.mxu0 0.0
  %4508 = vmatpush1.msra.mxu0 0.0
  %4509 = vmatprep.subr.mxu0 0.0
  %4510 = vmatpush1.msra.mxu0 0.0
  %4511 = vmatprep.subr.mxu0 0.0
  %4512 = vmatpush1.msra.mxu0 0.0
  %4513 = vmatprep.subr.mxu0 0.0
  %4514 = vmatpush1.msra.mxu0 0.0
  %4515 = vmatprep.subr.mxu0 0.0
  %4516 = vmatpush1.msra.mxu0 0.0
  %4517 = vmatprep.subr.mxu0 0.0
  %4518 = vmatpush1.msra.mxu0 0.0
  %4519 = vmatprep.mubr.f32.mxu0 0.0
  %4520 = vmatmul.mubr.f32.gmra.mrb[0].mxu0 %v4450
  %v4521 = vpop.f32.mrb[0].mxu0
  %v4522 = vadd.f32 0.0, %v4521
  %v4523 = vpop.f32.mrb[0].mxu0
  %4524 = vdwg.mxu0
  %v4525 = vadd.f32 %v56, %v4445
  %v4526 = vadd.f32 %v57, %v4448
  %v4527 = vlaneseq
  %v4528 = vshrl.u32 %v4527, 7
  %v4529 = vsub.s32 0, %v4528
  %v4530 = vrot.slane %v4522, %v4529
  %v4531 = vadd.f32 %v4525, %v4530
  %v4532 = vadd.f32 %v4526, %v4530
  %4533 = vset.pattern.permute.xlu0 48
  %4534 = vperm.xlu0 %4533, %v3273
  %v4535 = vpop.permute.xlu0 %4534
  %4537 = vset.pattern.permute.xlu0 48
  %4538 = vperm.xlu0 %4537, %v3276
  %v4539 = vpop.permute.xlu0 %4538
  %v4541 = vlaneseq
  %v4542 = vshrl.u32 %v4541, 7
  %v4543 = vsub.s32 0, %v4542
  %v4544 = vrot.slane %v3297, %v4543
  %v4545 = vadd.f32 %v4535, %v4544
  %v4546 = vadd.f32 %v4539, %v4544
  %v4547 = vand.u32 2147483647, %v4545
  %v4548 = vand.u32 2147483647, %v4546
  %v4549 = vrot.slane %v3224, 4
  %s4550 = vtos %v4549
  %v4551 = vstv %s4550
  %v4553 = vmul.f32 %v4551, %v4547
  %v4554 = vmul.f32 %v4551, %v4548
  %v4555 = vadd.f32 %v4531, %v4553
  %v4556 = vadd.f32 %v4532, %v4554
  %4557 = vset.pattern.permute.xlu0 49
  %4558 = vperm.xlu0 %4557, %v3273
  %v4559 = vpop.permute.xlu0 %4558
  %4561 = vset.pattern.permute.xlu0 49
  %4562 = vperm.xlu0 %4561, %v3276
  %v4563 = vpop.permute.xlu0 %4562
  %v4565 = vlaneseq
  %v4566 = vshrl.u32 %v4565, 7
  %v4567 = vsub.s32 1, %v4566
  %v4568 = vrot.slane %v3297, %v4567
  %v4569 = vadd.f32 %v4559, %v4568
  %v4570 = vadd.f32 %v4563, %v4568
  %v4571 = vand.u32 2147483647, %v4569
  %v4572 = vand.u32 2147483647, %v4570
  %4573 = vrot.lane.b32.xlu0 %v4549, 127
  %v4574 = vpop.permute.xlu0 %4573
  %s4575 = vtos %v4574
  %v4576 = vstv %s4575
  %v4578 = vmul.f32 %v4576, %v4571
  %v4579 = vmul.f32 %v4576, %v4572
  %v4580 = vadd.f32 %v4555, %v4578
  %v4581 = vadd.f32 %v4556, %v4579
  %4582 = vset.pattern.permute.xlu0 50
  %4583 = vperm.xlu0 %4582, %v3273
  %v4584 = vpop.permute.xlu0 %4583
  %4586 = vset.pattern.permute.xlu0 50
  %4587 = vperm.xlu0 %4586, %v3276
  %v4588 = vpop.permute.xlu0 %4587
  %v4590 = vlaneseq
  %v4591 = vshrl.u32 %v4590, 7
  %v4592 = vsub.s32 2, %v4591
  %v4593 = vrot.slane %v3297, %v4592
  %v4594 = vadd.f32 %v4584, %v4593
  %v4595 = vadd.f32 %v4588, %v4593
  %v4596 = vand.u32 2147483647, %v4594
  %v4597 = vand.u32 2147483647, %v4595
  %4598 = vrot.lane.b32.xlu0 %v4549, 126
  %v4599 = vpop.permute.xlu0 %4598
  %s4600 = vtos %v4599
  %v4601 = vstv %s4600
  %v4603 = vmul.f32 %v4601, %v4596
  %v4604 = vmul.f32 %v4601, %v4597
  %v4605 = vadd.f32 %v4580, %v4603
  %v4606 = vadd.f32 %v4581, %v4604
  %4607 = vset.pattern.permute.xlu0 51
  %4608 = vperm.xlu0 %4607, %v3273
  %v4609 = vpop.permute.xlu0 %4608
  %4611 = vset.pattern.permute.xlu0 51
  %4612 = vperm.xlu0 %4611, %v3276
  %v4613 = vpop.permute.xlu0 %4612
  %v4615 = vlaneseq
  %v4616 = vshrl.u32 %v4615, 7
  %v4617 = vsub.s32 3, %v4616
  %v4618 = vrot.slane %v3297, %v4617
  %v4619 = vadd.f32 %v4609, %v4618
  %v4620 = vadd.f32 %v4613, %v4618
  %v4621 = vand.u32 2147483647, %v4619
  %v4622 = vand.u32 2147483647, %v4620
  %4623 = vrot.lane.b32.xlu0 %v4549, 125
  %v4624 = vpop.permute.xlu0 %4623
  %s4625 = vtos %v4624
  %v4626 = vstv %s4625
  %v4628 = vmul.f32 %v4626, %v4621
  %v4629 = vmul.f32 %v4626, %v4622
  %v4630 = vadd.f32 %v4605, %v4628
  %v4631 = vadd.f32 %v4606, %v4629
  %v4632 = vsel %vm508, %v4630, -inf
  %4633 = vmax.xlane.f32.xlu0 %v4632
  %v4634 = vpop.xlane.xlu0 %4633
  %v4635 = vsel %vm508, %v4631, -inf
  %4636 = vmax.xlane.f32.xlu0 %v4635
  %v4637 = vpop.xlane.xlu0 %4636
  %v4638 = vsub.f32 %v4630, %v4634
  %v4639 = vsub.f32 %v4631, %v4637
  %v4640 = vmul.f32 %v4638, 1.442695
  %v4641 = vpow.pop %v4640
  %v4642 = vmul.f32 %v4639, 1.442695
  %v4643 = vpow.pop %v4642
  %v4644 = vsel %vm508, %v4641, 0.0
  %4645 = vadd.xlane.f32.xlu0 %v4644
  %v4646 = vpop.xlane.xlu0 %4645
  %v4647 = vsel %vm508, %v4643, 0.0
  %4648 = vadd.xlane.f32.xlu0 %v4647
  %v4649 = vpop.xlane.xlu0 %4648
  %v4650 = vrcp.pop %v4646
  %v4651 = vrcp.pop %v4649
  %v4652 = vmul.f32 %v4641, %v4650
  %v4653 = vmul.f32 %v4643, %v4651
  %v4654 = vpack.c.bf16 %v4653, %v4652
  %4655 = vrot.lane.b32.xlu0 %v3544, 112
  %v4656 = vpop.permute.xlu0 %4655
  %v4659 = vsel %vm508, %v4654, 0
  %4661 = vmatprep.subr.bf16.mxu0 0
  %4662 = vmatpush1.bf16.msra.mxu0 %v4656
  %4663 = vmatprep.subr.bf16.mxu0 0
  %4664 = vmatpush1.bf16.msra.mxu0 0
  %4665 = vmatprep.subr.bf16.mxu0 0
  %4666 = vmatpush1.bf16.msra.mxu0 0
  %4667 = vmatprep.subr.bf16.mxu0 0
  %4668 = vmatpush1.bf16.msra.mxu0 0
  %4669 = vmatprep.subr.bf16.mxu0 0
  %4670 = vmatpush1.bf16.msra.mxu0 0
  %4671 = vmatprep.subr.bf16.mxu0 0
  %4672 = vmatpush1.bf16.msra.mxu0 0
  %4673 = vmatprep.subr.bf16.mxu0 0
  %4674 = vmatpush1.bf16.msra.mxu0 0
  %4675 = vmatprep.subr.bf16.mxu0 0
  %4676 = vmatpush1.bf16.msra.mxu0 0
  %4677 = vmatprep.subr.bf16.mxu0 0
  %4678 = vmatpush1.bf16.msra.mxu0 0
  %4679 = vmatprep.subr.bf16.mxu0 0
  %4680 = vmatpush1.bf16.msra.mxu0 0
  %4681 = vmatprep.subr.bf16.mxu0 0
  %4682 = vmatpush1.bf16.msra.mxu0 0
  %4683 = vmatprep.subr.bf16.mxu0 0
  %4684 = vmatpush1.bf16.msra.mxu0 0
  %4685 = vmatprep.subr.bf16.mxu0 0
  %4686 = vmatpush1.bf16.msra.mxu0 0
  %4687 = vmatprep.subr.bf16.mxu0 0
  %4688 = vmatpush1.bf16.msra.mxu0 0
  %4689 = vmatprep.subr.bf16.mxu0 0
  %4690 = vmatpush1.bf16.msra.mxu0 0
  %4691 = vmatprep.subr.bf16.mxu0 0
  %4692 = vmatpush1.bf16.msra.mxu0 0
  %4693 = vmatprep.mubr.bf16.mxu0 0
  %4694 = vmatmul.mubr.bf16.gmra.mrb[0].mxu0 %v4659
  %v4695 = vpop.f32.mrb[0].mxu0
  %v4696 = vadd.f32 0.0, %v4695
  %v4697 = vpop.f32.mrb[0].mxu0
  %v4698 = vpop.f32.mrb[0].mxu0
  %v4699 = vadd.f32 0.0, %v4698
  %v4700 = vpop.f32.mrb[0].mxu0
  %4701 = vdwg.mxu0
  %v4702 = vadd.f32 %v4423, %v4696
  %v4703 = vadd.f32 %v4424, %v4699
  %v4704 = vlaneseq
  %v4705 = vshrl.u32 %v4704, 7
  %v4706 = vsub.s32 5, %v4705
  %v4707 = vrot.slane %v3223, %v4706
  %4709 = vrot.lane.b32.xlu0 %v4707, 52
  %v4710 = vpop.permute.xlu0 %4709
  %v4712 = vmul.f32 %v3273, %v4710
  %v4713 = vmul.f32 %v3276, %v4710
  %4716 = vrot.lane.b32.xlu0 %v4712, 76
  %v4717 = vpop.permute.xlu0 %4716
  %4718 = vrot.lane.b32.xlu0 %v4713, 76
  %v4719 = vpop.permute.xlu0 %4718
  %v4722 = vsel %vm3329, %v4717, 0.0
  %4723 = vadd.xlane.f32.xlu0 %v4722
  %v4724 = vpop.xlane.xlu0 %4723
  %v4725 = vsel %vm3329, %v4719, 0.0
  %4726 = vadd.xlane.f32.xlu0 %v4725
  %v4727 = vpop.xlane.xlu0 %4726
  %v4728 = vrot.slane %v3223, 5
  %v4729 = vrot.slane %v3297, 4
  %v4730 = vsel %vm3329, %v4728, 0
  %v4732 = vsel %vm71, %v4729, 0
  %4734 = vmatprep.subr.mxu0 0.0
  %4735 = vmatpush1.msra.mxu0 %v4732
  %4736 = vmatprep.subr.mxu0 0.0
  %4737 = vmatpush1.msra.mxu0 0.0
  %4738 = vmatprep.subr.mxu0 0.0
  %4739 = vmatpush1.msra.mxu0 0.0
  %4740 = vmatprep.subr.mxu0 0.0
  %4741 = vmatpush1.msra.mxu0 0.0
  %4742 = vmatprep.subr.mxu0 0.0
  %4743 = vmatpush1.msra.mxu0 0.0
  %4744 = vmatprep.subr.mxu0 0.0
  %4745 = vmatpush1.msra.mxu0 0.0
  %4746 = vmatprep.subr.mxu0 0.0
  %4747 = vmatpush1.msra.mxu0 0.0
  %4748 = vmatprep.subr.mxu0 0.0
  %4749 = vmatpush1.msra.mxu0 0.0
  %4750 = vmatprep.subr.mxu0 0.0
  %4751 = vmatpush1.msra.mxu0 0.0
  %4752 = vmatprep.subr.mxu0 0.0
  %4753 = vmatpush1.msra.mxu0 0.0
  %4754 = vmatprep.subr.mxu0 0.0
  %4755 = vmatpush1.msra.mxu0 0.0
  %4756 = vmatprep.subr.mxu0 0.0
  %4757 = vmatpush1.msra.mxu0 0.0
  %4758 = vmatprep.subr.mxu0 0.0
  %4759 = vmatpush1.msra.mxu0 0.0
  %4760 = vmatprep.subr.mxu0 0.0
  %4761 = vmatpush1.msra.mxu0 0.0
  %4762 = vmatprep.subr.mxu0 0.0
  %4763 = vmatpush1.msra.mxu0 0.0
  %4764 = vmatprep.subr.mxu0 0.0
  %4765 = vmatpush1.msra.mxu0 0.0
  %4766 = vmatprep.subr.mxu0 0.0
  %4767 = vmatpush1.msra.mxu0 0.0
  %4768 = vmatprep.subr.mxu0 0.0
  %4769 = vmatpush1.msra.mxu0 0.0
  %4770 = vmatprep.subr.mxu0 0.0
  %4771 = vmatpush1.msra.mxu0 0.0
  %4772 = vmatprep.subr.mxu0 0.0
  %4773 = vmatpush1.msra.mxu0 0.0
  %4774 = vmatprep.subr.mxu0 0.0
  %4775 = vmatpush1.msra.mxu0 0.0
  %4776 = vmatprep.subr.mxu0 0.0
  %4777 = vmatpush1.msra.mxu0 0.0
  %4778 = vmatprep.subr.mxu0 0.0
  %4779 = vmatpush1.msra.mxu0 0.0
  %4780 = vmatprep.subr.mxu0 0.0
  %4781 = vmatpush1.msra.mxu0 0.0
  %4782 = vmatprep.subr.mxu0 0.0
  %4783 = vmatpush1.msra.mxu0 0.0
  %4784 = vmatprep.subr.mxu0 0.0
  %4785 = vmatpush1.msra.mxu0 0.0
  %4786 = vmatprep.subr.mxu0 0.0
  %4787 = vmatpush1.msra.mxu0 0.0
  %4788 = vmatprep.subr.mxu0 0.0
  %4789 = vmatpush1.msra.mxu0 0.0
  %4790 = vmatprep.subr.mxu0 0.0
  %4791 = vmatpush1.msra.mxu0 0.0
  %4792 = vmatprep.subr.mxu0 0.0
  %4793 = vmatpush1.msra.mxu0 0.0
  %4794 = vmatprep.subr.mxu0 0.0
  %4795 = vmatpush1.msra.mxu0 0.0
  %4796 = vmatprep.subr.mxu0 0.0
  %4797 = vmatpush1.msra.mxu0 0.0
  %4798 = vmatprep.mubr.f32.mxu0 0.0
  %4799 = vmatmul.mubr.f32.gmra.mrb[0].mxu0 %v4730
  %v4800 = vpop.f32.mrb[0].mxu0
  %v4801 = vadd.f32 0.0, %v4800
  %v4802 = vpop.f32.mrb[0].mxu0
  %4803 = vdwg.mxu0
  %v4804 = vadd.f32 %v56, %v4724
  %v4805 = vadd.f32 %v57, %v4727
  %v4806 = vlaneseq
  %v4807 = vshrl.u32 %v4806, 7
  %v4808 = vsub.s32 0, %v4807
  %v4809 = vrot.slane %v4801, %v4808
  %v4810 = vadd.f32 %v4804, %v4809
  %v4811 = vadd.f32 %v4805, %v4809
  %4812 = vset.pattern.permute.xlu0 52
  %4813 = vperm.xlu0 %4812, %v3273
  %v4814 = vpop.permute.xlu0 %4813
  %4816 = vset.pattern.permute.xlu0 52
  %4817 = vperm.xlu0 %4816, %v3276
  %v4818 = vpop.permute.xlu0 %4817
  %v4820 = vlaneseq
  %v4821 = vshrl.u32 %v4820, 7
  %v4822 = vsub.s32 4, %v4821
  %v4823 = vrot.slane %v3297, %v4822
  %v4824 = vadd.f32 %v4814, %v4823
  %v4825 = vadd.f32 %v4818, %v4823
  %v4826 = vand.u32 2147483647, %v4824
  %v4827 = vand.u32 2147483647, %v4825
  %v4828 = vrot.slane %v3224, 5
  %s4829 = vtos %v4828
  %v4830 = vstv %s4829
  %v4832 = vmul.f32 %v4830, %v4826
  %v4833 = vmul.f32 %v4830, %v4827
  %v4834 = vadd.f32 %v4810, %v4832
  %v4835 = vadd.f32 %v4811, %v4833
  %4836 = vset.pattern.permute.xlu0 53
  %4837 = vperm.xlu0 %4836, %v3273
  %v4838 = vpop.permute.xlu0 %4837
  %4840 = vset.pattern.permute.xlu0 53
  %4841 = vperm.xlu0 %4840, %v3276
  %v4842 = vpop.permute.xlu0 %4841
  %v4844 = vlaneseq
  %v4845 = vshrl.u32 %v4844, 7
  %v4846 = vsub.s32 5, %v4845
  %v4847 = vrot.slane %v3297, %v4846
  %v4848 = vadd.f32 %v4838, %v4847
  %v4849 = vadd.f32 %v4842, %v4847
  %v4850 = vand.u32 2147483647, %v4848
  %v4851 = vand.u32 2147483647, %v4849
  %4852 = vrot.lane.b32.xlu0 %v4828, 127
  %v4853 = vpop.permute.xlu0 %4852
  %s4854 = vtos %v4853
  %v4855 = vstv %s4854
  %v4857 = vmul.f32 %v4855, %v4850
  %v4858 = vmul.f32 %v4855, %v4851
  %v4859 = vadd.f32 %v4834, %v4857
  %v4860 = vadd.f32 %v4835, %v4858
  %4861 = vset.pattern.permute.xlu0 54
  %4862 = vperm.xlu0 %4861, %v3273
  %v4863 = vpop.permute.xlu0 %4862
  %4865 = vset.pattern.permute.xlu0 54
  %4866 = vperm.xlu0 %4865, %v3276
  %v4867 = vpop.permute.xlu0 %4866
  %v4869 = vlaneseq
  %v4870 = vshrl.u32 %v4869, 7
  %v4871 = vsub.s32 6, %v4870
  %v4872 = vrot.slane %v3297, %v4871
  %v4873 = vadd.f32 %v4863, %v4872
  %v4874 = vadd.f32 %v4867, %v4872
  %v4875 = vand.u32 2147483647, %v4873
  %v4876 = vand.u32 2147483647, %v4874
  %4877 = vrot.lane.b32.xlu0 %v4828, 126
  %v4878 = vpop.permute.xlu0 %4877
  %s4879 = vtos %v4878
  %v4880 = vstv %s4879
  %v4882 = vmul.f32 %v4880, %v4875
  %v4883 = vmul.f32 %v4880, %v4876
  %v4884 = vadd.f32 %v4859, %v4882
  %v4885 = vadd.f32 %v4860, %v4883
  %4886 = vset.pattern.permute.xlu0 55
  %4887 = vperm.xlu0 %4886, %v3273
  %v4888 = vpop.permute.xlu0 %4887
  %4890 = vset.pattern.permute.xlu0 55
  %4891 = vperm.xlu0 %4890, %v3276
  %v4892 = vpop.permute.xlu0 %4891
  %v4894 = vlaneseq
  %v4895 = vshrl.u32 %v4894, 7
  %v4896 = vsub.s32 7, %v4895
  %v4897 = vrot.slane %v3297, %v4896
  %v4898 = vadd.f32 %v4888, %v4897
  %v4899 = vadd.f32 %v4892, %v4897
  %v4900 = vand.u32 2147483647, %v4898
  %v4901 = vand.u32 2147483647, %v4899
  %4902 = vrot.lane.b32.xlu0 %v4828, 125
  %v4903 = vpop.permute.xlu0 %4902
  %s4904 = vtos %v4903
  %v4905 = vstv %s4904
  %v4907 = vmul.f32 %v4905, %v4900
  %v4908 = vmul.f32 %v4905, %v4901
  %v4909 = vadd.f32 %v4884, %v4907
  %v4910 = vadd.f32 %v4885, %v4908
  %v4911 = vsel %vm508, %v4909, -inf
  %4912 = vmax.xlane.f32.xlu0 %v4911
  %v4913 = vpop.xlane.xlu0 %4912
  %v4914 = vsel %vm508, %v4910, -inf
  %4915 = vmax.xlane.f32.xlu0 %v4914
  %v4916 = vpop.xlane.xlu0 %4915
  %v4917 = vsub.f32 %v4909, %v4913
  %v4918 = vsub.f32 %v4910, %v4916
  %v4919 = vmul.f32 %v4917, 1.442695
  %v4920 = vpow.pop %v4919
  %v4921 = vmul.f32 %v4918, 1.442695
  %v4922 = vpow.pop %v4921
  %v4923 = vsel %vm508, %v4920, 0.0
  %4924 = vadd.xlane.f32.xlu0 %v4923
  %v4925 = vpop.xlane.xlu0 %4924
  %v4926 = vsel %vm508, %v4922, 0.0
  %4927 = vadd.xlane.f32.xlu0 %v4926
  %v4928 = vpop.xlane.xlu0 %4927
  %v4929 = vrcp.pop %v4925
  %v4930 = vrcp.pop %v4928
  %v4931 = vmul.f32 %v4920, %v4929
  %v4932 = vmul.f32 %v4922, %v4930
  %v4933 = vpack.c.bf16 %v4932, %v4931
  %4934 = vrot.lane.b32.xlu0 %v3544, 108
  %v4935 = vpop.permute.xlu0 %4934
  %v4938 = vsel %vm508, %v4933, 0
  %4940 = vmatprep.subr.bf16.mxu0 0
  %4941 = vmatpush1.bf16.msra.mxu0 %v4935
  %4942 = vmatprep.subr.bf16.mxu0 0
  %4943 = vmatpush1.bf16.msra.mxu0 0
  %4944 = vmatprep.subr.bf16.mxu0 0
  %4945 = vmatpush1.bf16.msra.mxu0 0
  %4946 = vmatprep.subr.bf16.mxu0 0
  %4947 = vmatpush1.bf16.msra.mxu0 0
  %4948 = vmatprep.subr.bf16.mxu0 0
  %4949 = vmatpush1.bf16.msra.mxu0 0
  %4950 = vmatprep.subr.bf16.mxu0 0
  %4951 = vmatpush1.bf16.msra.mxu0 0
  %4952 = vmatprep.subr.bf16.mxu0 0
  %4953 = vmatpush1.bf16.msra.mxu0 0
  %4954 = vmatprep.subr.bf16.mxu0 0
  %4955 = vmatpush1.bf16.msra.mxu0 0
  %4956 = vmatprep.subr.bf16.mxu0 0
  %4957 = vmatpush1.bf16.msra.mxu0 0
  %4958 = vmatprep.subr.bf16.mxu0 0
  %4959 = vmatpush1.bf16.msra.mxu0 0
  %4960 = vmatprep.subr.bf16.mxu0 0
  %4961 = vmatpush1.bf16.msra.mxu0 0
  %4962 = vmatprep.subr.bf16.mxu0 0
  %4963 = vmatpush1.bf16.msra.mxu0 0
  %4964 = vmatprep.subr.bf16.mxu0 0
  %4965 = vmatpush1.bf16.msra.mxu0 0
  %4966 = vmatprep.subr.bf16.mxu0 0
  %4967 = vmatpush1.bf16.msra.mxu0 0
  %4968 = vmatprep.subr.bf16.mxu0 0
  %4969 = vmatpush1.bf16.msra.mxu0 0
  %4970 = vmatprep.subr.bf16.mxu0 0
  %4971 = vmatpush1.bf16.msra.mxu0 0
  %4972 = vmatprep.mubr.bf16.mxu0 0
  %4973 = vmatmul.mubr.bf16.gmra.mrb[0].mxu0 %v4938
  %v4974 = vpop.f32.mrb[0].mxu0
  %v4975 = vadd.f32 0.0, %v4974
  %v4976 = vpop.f32.mrb[0].mxu0
  %v4977 = vpop.f32.mrb[0].mxu0
  %v4978 = vadd.f32 0.0, %v4977
  %v4979 = vpop.f32.mrb[0].mxu0
  %4980 = vdwg.mxu0
  %v4981 = vadd.f32 %v4702, %v4975
  %v4982 = vadd.f32 %v4703, %v4978
  %v4983 = vlaneseq
  %v4984 = vshrl.u32 %v4983, 7
  %v4985 = vsub.s32 6, %v4984
  %v4986 = vrot.slane %v3223, %v4985
  %4988 = vrot.lane.b32.xlu0 %v4986, 56
  %v4989 = vpop.permute.xlu0 %4988
  %v4991 = vmul.f32 %v3273, %v4989
  %v4992 = vmul.f32 %v3276, %v4989
  %4995 = vrot.lane.b32.xlu0 %v4991, 72
  %v4996 = vpop.permute.xlu0 %4995
  %4997 = vrot.lane.b32.xlu0 %v4992, 72
  %v4998 = vpop.permute.xlu0 %4997
  %v5001 = vsel %vm3329, %v4996, 0.0
  %5002 = vadd.xlane.f32.xlu0 %v5001
  %v5003 = vpop.xlane.xlu0 %5002
  %v5004 = vsel %vm3329, %v4998, 0.0
  %5005 = vadd.xlane.f32.xlu0 %v5004
  %v5006 = vpop.xlane.xlu0 %5005
  %v5007 = vrot.slane %v3223, 6
  %v5008 = vsel %vm3329, %v5007, 0
  %v5011 = vsel %vm71, %v3298, 0
  %5013 = vmatprep.subr.mxu0 0.0
  %5014 = vmatpush1.msra.mxu0 %v5011
  %5015 = vmatprep.subr.mxu0 0.0
  %5016 = vmatpush1.msra.mxu0 0.0
  %5017 = vmatprep.subr.mxu0 0.0
  %5018 = vmatpush1.msra.mxu0 0.0
  %5019 = vmatprep.subr.mxu0 0.0
  %5020 = vmatpush1.msra.mxu0 0.0
  %5021 = vmatprep.subr.mxu0 0.0
  %5022 = vmatpush1.msra.mxu0 0.0
  %5023 = vmatprep.subr.mxu0 0.0
  %5024 = vmatpush1.msra.mxu0 0.0
  %5025 = vmatprep.subr.mxu0 0.0
  %5026 = vmatpush1.msra.mxu0 0.0
  %5027 = vmatprep.subr.mxu0 0.0
  %5028 = vmatpush1.msra.mxu0 0.0
  %5029 = vmatprep.subr.mxu0 0.0
  %5030 = vmatpush1.msra.mxu0 0.0
  %5031 = vmatprep.subr.mxu0 0.0
  %5032 = vmatpush1.msra.mxu0 0.0
  %5033 = vmatprep.subr.mxu0 0.0
  %5034 = vmatpush1.msra.mxu0 0.0
  %5035 = vmatprep.subr.mxu0 0.0
  %5036 = vmatpush1.msra.mxu0 0.0
  %5037 = vmatprep.subr.mxu0 0.0
  %5038 = vmatpush1.msra.mxu0 0.0
  %5039 = vmatprep.subr.mxu0 0.0
  %5040 = vmatpush1.msra.mxu0 0.0
  %5041 = vmatprep.subr.mxu0 0.0
  %5042 = vmatpush1.msra.mxu0 0.0
  %5043 = vmatprep.subr.mxu0 0.0
  %5044 = vmatpush1.msra.mxu0 0.0
  %5045 = vmatprep.subr.mxu0 0.0
  %5046 = vmatpush1.msra.mxu0 0.0
  %5047 = vmatprep.subr.mxu0 0.0
  %5048 = vmatpush1.msra.mxu0 0.0
  %5049 = vmatprep.subr.mxu0 0.0
  %5050 = vmatpush1.msra.mxu0 0.0
  %5051 = vmatprep.subr.mxu0 0.0
  %5052 = vmatpush1.msra.mxu0 0.0
  %5053 = vmatprep.subr.mxu0 0.0
  %5054 = vmatpush1.msra.mxu0 0.0
  %5055 = vmatprep.subr.mxu0 0.0
  %5056 = vmatpush1.msra.mxu0 0.0
  %5057 = vmatprep.subr.mxu0 0.0
  %5058 = vmatpush1.msra.mxu0 0.0
  %5059 = vmatprep.subr.mxu0 0.0
  %5060 = vmatpush1.msra.mxu0 0.0
  %5061 = vmatprep.subr.mxu0 0.0
  %5062 = vmatpush1.msra.mxu0 0.0
  %5063 = vmatprep.subr.mxu0 0.0
  %5064 = vmatpush1.msra.mxu0 0.0
  %5065 = vmatprep.subr.mxu0 0.0
  %5066 = vmatpush1.msra.mxu0 0.0
  %5067 = vmatprep.subr.mxu0 0.0
  %5068 = vmatpush1.msra.mxu0 0.0
  %5069 = vmatprep.subr.mxu0 0.0
  %5070 = vmatpush1.msra.mxu0 0.0
  %5071 = vmatprep.subr.mxu0 0.0
  %5072 = vmatpush1.msra.mxu0 0.0
  %5073 = vmatprep.subr.mxu0 0.0
  %5074 = vmatpush1.msra.mxu0 0.0
  %5075 = vmatprep.subr.mxu0 0.0
  %5076 = vmatpush1.msra.mxu0 0.0
  %5077 = vmatprep.mubr.f32.mxu0 0.0
  %5078 = vmatmul.mubr.f32.gmra.mrb[0].mxu0 %v5008
  %v5079 = vpop.f32.mrb[0].mxu0
  %v5080 = vadd.f32 0.0, %v5079
  %v5081 = vpop.f32.mrb[0].mxu0
  %5082 = vdwg.mxu0
  %v5083 = vadd.f32 %v56, %v5003
  %v5084 = vadd.f32 %v57, %v5006
  %v5085 = vlaneseq
  %v5086 = vshrl.u32 %v5085, 7
  %v5087 = vsub.s32 0, %v5086
  %v5088 = vrot.slane %v5080, %v5087
  %v5089 = vadd.f32 %v5083, %v5088
  %v5090 = vadd.f32 %v5084, %v5088
  %5091 = vset.pattern.permute.xlu0 56
  %5092 = vperm.xlu0 %5091, %v3273
  %v5093 = vpop.permute.xlu0 %5092
  %5095 = vset.pattern.permute.xlu0 56
  %5096 = vperm.xlu0 %5095, %v3276
  %v5097 = vpop.permute.xlu0 %5096
  %v5099 = vlaneseq
  %v5100 = vshrl.u32 %v5099, 7
  %v5101 = vsub.s32 0, %v5100
  %v5102 = vrot.slane %v3298, %v5101
  %v5103 = vadd.f32 %v5093, %v5102
  %v5104 = vadd.f32 %v5097, %v5102
  %v5105 = vand.u32 2147483647, %v5103
  %v5106 = vand.u32 2147483647, %v5104
  %v5107 = vrot.slane %v3224, 6
  %s5108 = vtos %v5107
  %v5109 = vstv %s5108
  %v5111 = vmul.f32 %v5109, %v5105
  %v5112 = vmul.f32 %v5109, %v5106
  %v5113 = vadd.f32 %v5089, %v5111
  %v5114 = vadd.f32 %v5090, %v5112
  %5115 = vset.pattern.permute.xlu0 57
  %5116 = vperm.xlu0 %5115, %v3273
  %v5117 = vpop.permute.xlu0 %5116
  %5119 = vset.pattern.permute.xlu0 57
  %5120 = vperm.xlu0 %5119, %v3276
  %v5121 = vpop.permute.xlu0 %5120
  %v5123 = vlaneseq
  %v5124 = vshrl.u32 %v5123, 7
  %v5125 = vsub.s32 1, %v5124
  %v5126 = vrot.slane %v3298, %v5125
  %v5127 = vadd.f32 %v5117, %v5126
  %v5128 = vadd.f32 %v5121, %v5126
  %v5129 = vand.u32 2147483647, %v5127
  %v5130 = vand.u32 2147483647, %v5128
  %5131 = vrot.lane.b32.xlu0 %v5107, 127
  %v5132 = vpop.permute.xlu0 %5131
  %s5133 = vtos %v5132
  %v5134 = vstv %s5133
  %v5136 = vmul.f32 %v5134, %v5129
  %v5137 = vmul.f32 %v5134, %v5130
  %v5138 = vadd.f32 %v5113, %v5136
  %v5139 = vadd.f32 %v5114, %v5137
  %5140 = vset.pattern.permute.xlu0 58
  %5141 = vperm.xlu0 %5140, %v3273
  %v5142 = vpop.permute.xlu0 %5141
  %5144 = vset.pattern.permute.xlu0 58
  %5145 = vperm.xlu0 %5144, %v3276
  %v5146 = vpop.permute.xlu0 %5145
  %v5148 = vlaneseq
  %v5149 = vshrl.u32 %v5148, 7
  %v5150 = vsub.s32 2, %v5149
  %v5151 = vrot.slane %v3298, %v5150
  %v5152 = vadd.f32 %v5142, %v5151
  %v5153 = vadd.f32 %v5146, %v5151
  %v5154 = vand.u32 2147483647, %v5152
  %v5155 = vand.u32 2147483647, %v5153
  %5156 = vrot.lane.b32.xlu0 %v5107, 126
  %v5157 = vpop.permute.xlu0 %5156
  %s5158 = vtos %v5157
  %v5159 = vstv %s5158
  %v5161 = vmul.f32 %v5159, %v5154
  %v5162 = vmul.f32 %v5159, %v5155
  %v5163 = vadd.f32 %v5138, %v5161
  %v5164 = vadd.f32 %v5139, %v5162
  %5165 = vset.pattern.permute.xlu0 59
  %5166 = vperm.xlu0 %5165, %v3273
  %v5167 = vpop.permute.xlu0 %5166
  %5169 = vset.pattern.permute.xlu0 59
  %5170 = vperm.xlu0 %5169, %v3276
  %v5171 = vpop.permute.xlu0 %5170
  %v5173 = vlaneseq
  %v5174 = vshrl.u32 %v5173, 7
  %v5175 = vsub.s32 3, %v5174
  %v5176 = vrot.slane %v3298, %v5175
  %v5177 = vadd.f32 %v5167, %v5176
  %v5178 = vadd.f32 %v5171, %v5176
  %v5179 = vand.u32 2147483647, %v5177
  %v5180 = vand.u32 2147483647, %v5178
  %5181 = vrot.lane.b32.xlu0 %v5107, 125
  %v5182 = vpop.permute.xlu0 %5181
  %s5183 = vtos %v5182
  %v5184 = vstv %s5183
  %v5186 = vmul.f32 %v5184, %v5179
  %v5187 = vmul.f32 %v5184, %v5180
  %v5188 = vadd.f32 %v5163, %v5186
  %v5189 = vadd.f32 %v5164, %v5187
  %v5190 = vsel %vm508, %v5188, -inf
  %5191 = vmax.xlane.f32.xlu0 %v5190
  %v5192 = vpop.xlane.xlu0 %5191
  %v5193 = vsel %vm508, %v5189, -inf
  %5194 = vmax.xlane.f32.xlu0 %v5193
  %v5195 = vpop.xlane.xlu0 %5194
  %v5196 = vsub.f32 %v5188, %v5192
  %v5197 = vsub.f32 %v5189, %v5195
  %v5198 = vmul.f32 %v5196, 1.442695
  %v5199 = vpow.pop %v5198
  %v5200 = vmul.f32 %v5197, 1.442695
  %v5201 = vpow.pop %v5200
  %v5202 = vsel %vm508, %v5199, 0.0
  %5203 = vadd.xlane.f32.xlu0 %v5202
  %v5204 = vpop.xlane.xlu0 %5203
  %v5205 = vsel %vm508, %v5201, 0.0
  %5206 = vadd.xlane.f32.xlu0 %v5205
  %v5207 = vpop.xlane.xlu0 %5206
  %v5208 = vrcp.pop %v5204
  %v5209 = vrcp.pop %v5207
  %v5210 = vmul.f32 %v5199, %v5208
  %v5211 = vmul.f32 %v5201, %v5209
  %v5212 = vpack.c.bf16 %v5211, %v5210
  %5213 = vrot.lane.b32.xlu0 %v3544, 104
  %v5214 = vpop.permute.xlu0 %5213
  %v5217 = vsel %vm508, %v5212, 0
  %5219 = vmatprep.subr.bf16.mxu0 0
  %5220 = vmatpush1.bf16.msra.mxu0 %v5214
  %5221 = vmatprep.subr.bf16.mxu0 0
  %5222 = vmatpush1.bf16.msra.mxu0 0
  %5223 = vmatprep.subr.bf16.mxu0 0
  %5224 = vmatpush1.bf16.msra.mxu0 0
  %5225 = vmatprep.subr.bf16.mxu0 0
  %5226 = vmatpush1.bf16.msra.mxu0 0
  %5227 = vmatprep.subr.bf16.mxu0 0
  %5228 = vmatpush1.bf16.msra.mxu0 0
  %5229 = vmatprep.subr.bf16.mxu0 0
  %5230 = vmatpush1.bf16.msra.mxu0 0
  %5231 = vmatprep.subr.bf16.mxu0 0
  %5232 = vmatpush1.bf16.msra.mxu0 0
  %5233 = vmatprep.subr.bf16.mxu0 0
  %5234 = vmatpush1.bf16.msra.mxu0 0
  %5235 = vmatprep.subr.bf16.mxu0 0
  %5236 = vmatpush1.bf16.msra.mxu0 0
  %5237 = vmatprep.subr.bf16.mxu0 0
  %5238 = vmatpush1.bf16.msra.mxu0 0
  %5239 = vmatprep.subr.bf16.mxu0 0
  %5240 = vmatpush1.bf16.msra.mxu0 0
  %5241 = vmatprep.subr.bf16.mxu0 0
  %5242 = vmatpush1.bf16.msra.mxu0 0
  %5243 = vmatprep.subr.bf16.mxu0 0
  %5244 = vmatpush1.bf16.msra.mxu0 0
  %5245 = vmatprep.subr.bf16.mxu0 0
  %5246 = vmatpush1.bf16.msra.mxu0 0
  %5247 = vmatprep.subr.bf16.mxu0 0
  %5248 = vmatpush1.bf16.msra.mxu0 0
  %5249 = vmatprep.subr.bf16.mxu0 0
  %5250 = vmatpush1.bf16.msra.mxu0 0
  %5251 = vmatprep.mubr.bf16.mxu0 0
  %5252 = vmatmul.mubr.bf16.gmra.mrb[0].mxu0 %v5217
  %v5253 = vpop.f32.mrb[0].mxu0
  %v5254 = vadd.f32 0.0, %v5253
  %v5255 = vpop.f32.mrb[0].mxu0
  %v5256 = vpop.f32.mrb[0].mxu0
  %v5257 = vadd.f32 0.0, %v5256
  %v5258 = vpop.f32.mrb[0].mxu0
  %5259 = vdwg.mxu0
  %v5260 = vadd.f32 %v4981, %v5254
  %v5261 = vadd.f32 %v4982, %v5257
  %v5262 = vlaneseq
  %v5263 = vshrl.u32 %v5262, 7
  %v5264 = vsub.s32 7, %v5263
  %v5265 = vrot.slane %v3223, %v5264
  %5267 = vrot.lane.b32.xlu0 %v5265, 60
  %v5268 = vpop.permute.xlu0 %5267
  %v5270 = vmul.f32 %v3273, %v5268
  %v5271 = vmul.f32 %v3276, %v5268
  %5274 = vrot.lane.b32.xlu0 %v5270, 68
  %v5275 = vpop.permute.xlu0 %5274
  %5276 = vrot.lane.b32.xlu0 %v5271, 68
  %v5277 = vpop.permute.xlu0 %5276
  %v5280 = vsel %vm3329, %v5275, 0.0
  %5281 = vadd.xlane.f32.xlu0 %v5280
  %v5282 = vpop.xlane.xlu0 %5281
  %v5283 = vsel %vm3329, %v5277, 0.0
  %5284 = vadd.xlane.f32.xlu0 %v5283
  %v5285 = vpop.xlane.xlu0 %5284
  %v5286 = vrot.slane %v3223, 7
  %v5287 = vrot.slane %v3298, 4
  %v5288 = vsel %vm3329, %v5286, 0
  %v5290 = vsel %vm71, %v5287, 0
  %5292 = vmatprep.subr.mxu0 0.0
  %5293 = vmatpush1.msra.mxu0 %v5290
  %5294 = vmatprep.subr.mxu0 0.0
  %5295 = vmatpush1.msra.mxu0 0.0
  %5296 = vmatprep.subr.mxu0 0.0
  %5297 = vmatpush1.msra.mxu0 0.0
  %5298 = vmatprep.subr.mxu0 0.0
  %5299 = vmatpush1.msra.mxu0 0.0
  %5300 = vmatprep.subr.mxu0 0.0
  %5301 = vmatpush1.msra.mxu0 0.0
  %5302 = vmatprep.subr.mxu0 0.0
  %5303 = vmatpush1.msra.mxu0 0.0
  %5304 = vmatprep.subr.mxu0 0.0
  %5305 = vmatpush1.msra.mxu0 0.0
  %5306 = vmatprep.subr.mxu0 0.0
  %5307 = vmatpush1.msra.mxu0 0.0
  %5308 = vmatprep.subr.mxu0 0.0
  %5309 = vmatpush1.msra.mxu0 0.0
  %5310 = vmatprep.subr.mxu0 0.0
  %5311 = vmatpush1.msra.mxu0 0.0
  %5312 = vmatprep.subr.mxu0 0.0
  %5313 = vmatpush1.msra.mxu0 0.0
  %5314 = vmatprep.subr.mxu0 0.0
  %5315 = vmatpush1.msra.mxu0 0.0
  %5316 = vmatprep.subr.mxu0 0.0
  %5317 = vmatpush1.msra.mxu0 0.0
  %5318 = vmatprep.subr.mxu0 0.0
  %5319 = vmatpush1.msra.mxu0 0.0
  %5320 = vmatprep.subr.mxu0 0.0
  %5321 = vmatpush1.msra.mxu0 0.0
  %5322 = vmatprep.subr.mxu0 0.0
  %5323 = vmatpush1.msra.mxu0 0.0
  %5324 = vmatprep.subr.mxu0 0.0
  %5325 = vmatpush1.msra.mxu0 0.0
  %5326 = vmatprep.subr.mxu0 0.0
  %5327 = vmatpush1.msra.mxu0 0.0
  %5328 = vmatprep.subr.mxu0 0.0
  %5329 = vmatpush1.msra.mxu0 0.0
  %5330 = vmatprep.subr.mxu0 0.0
  %5331 = vmatpush1.msra.mxu0 0.0
  %5332 = vmatprep.subr.mxu0 0.0
  %5333 = vmatpush1.msra.mxu0 0.0
  %5334 = vmatprep.subr.mxu0 0.0
  %5335 = vmatpush1.msra.mxu0 0.0
  %5336 = vmatprep.subr.mxu0 0.0
  %5337 = vmatpush1.msra.mxu0 0.0
  %5338 = vmatprep.subr.mxu0 0.0
  %5339 = vmatpush1.msra.mxu0 0.0
  %5340 = vmatprep.subr.mxu0 0.0
  %5341 = vmatpush1.msra.mxu0 0.0
  %5342 = vmatprep.subr.mxu0 0.0
  %5343 = vmatpush1.msra.mxu0 0.0
  %5344 = vmatprep.subr.mxu0 0.0
  %5345 = vmatpush1.msra.mxu0 0.0
  %5346 = vmatprep.subr.mxu0 0.0
  %5347 = vmatpush1.msra.mxu0 0.0
  %5348 = vmatprep.subr.mxu0 0.0
  %5349 = vmatpush1.msra.mxu0 0.0
  %5350 = vmatprep.subr.mxu0 0.0
  %5351 = vmatpush1.msra.mxu0 0.0
  %5352 = vmatprep.subr.mxu0 0.0
  %5353 = vmatpush1.msra.mxu0 0.0
  %5354 = vmatprep.subr.mxu0 0.0
  %5355 = vmatpush1.msra.mxu0 0.0
  %5356 = vmatprep.mubr.f32.mxu0 0.0
  %5357 = vmatmul.mubr.f32.gmra.mrb[0].mxu0 %v5288
  %v5358 = vpop.f32.mrb[0].mxu0
  %v5359 = vadd.f32 0.0, %v5358
  %v5360 = vpop.f32.mrb[0].mxu0
  %5361 = vdwg.mxu0
  %v5362 = vadd.f32 %v56, %v5282
  %v5363 = vadd.f32 %v57, %v5285
  %v5364 = vlaneseq
  %v5365 = vshrl.u32 %v5364, 7
  %v5366 = vsub.s32 0, %v5365
  %v5367 = vrot.slane %v5359, %v5366
  %v5368 = vadd.f32 %v5362, %v5367
  %v5369 = vadd.f32 %v5363, %v5367
  %5370 = vset.pattern.permute.xlu0 60
  %5371 = vperm.xlu0 %5370, %v3273
  %v5372 = vpop.permute.xlu0 %5371
  %5374 = vset.pattern.permute.xlu0 60
  %5375 = vperm.xlu0 %5374, %v3276
  %v5376 = vpop.permute.xlu0 %5375
  %v5378 = vlaneseq
  %v5379 = vshrl.u32 %v5378, 7
  %v5380 = vsub.s32 4, %v5379
  %v5381 = vrot.slane %v3298, %v5380
  %v5382 = vadd.f32 %v5372, %v5381
  %v5383 = vadd.f32 %v5376, %v5381
  %v5384 = vand.u32 2147483647, %v5382
  %v5385 = vand.u32 2147483647, %v5383
  %v5386 = vrot.slane %v3224, 7
  %s5387 = vtos %v5386
  %v5388 = vstv %s5387
  %v5390 = vmul.f32 %v5388, %v5384
  %v5391 = vmul.f32 %v5388, %v5385
  %v5392 = vadd.f32 %v5368, %v5390
  %v5393 = vadd.f32 %v5369, %v5391
  %5394 = vset.pattern.permute.xlu0 61
  %5395 = vperm.xlu0 %5394, %v3273
  %v5396 = vpop.permute.xlu0 %5395
  %5398 = vset.pattern.permute.xlu0 61
  %5399 = vperm.xlu0 %5398, %v3276
  %v5400 = vpop.permute.xlu0 %5399
  %v5402 = vlaneseq
  %v5403 = vshrl.u32 %v5402, 7
  %v5404 = vsub.s32 5, %v5403
  %v5405 = vrot.slane %v3298, %v5404
  %v5406 = vadd.f32 %v5396, %v5405
  %v5407 = vadd.f32 %v5400, %v5405
  %v5408 = vand.u32 2147483647, %v5406
  %v5409 = vand.u32 2147483647, %v5407
  %5410 = vrot.lane.b32.xlu0 %v5386, 127
  %v5411 = vpop.permute.xlu0 %5410
  %s5412 = vtos %v5411
  %v5413 = vstv %s5412
  %v5415 = vmul.f32 %v5413, %v5408
  %v5416 = vmul.f32 %v5413, %v5409
  %v5417 = vadd.f32 %v5392, %v5415
  %v5418 = vadd.f32 %v5393, %v5416
  %5419 = vset.pattern.permute.xlu0 62
  %5420 = vperm.xlu0 %5419, %v3273
  %v5421 = vpop.permute.xlu0 %5420
  %5423 = vset.pattern.permute.xlu0 62
  %5424 = vperm.xlu0 %5423, %v3276
  %v5425 = vpop.permute.xlu0 %5424
  %v5427 = vlaneseq
  %v5428 = vshrl.u32 %v5427, 7
  %v5429 = vsub.s32 6, %v5428
  %v5430 = vrot.slane %v3298, %v5429
  %v5431 = vadd.f32 %v5421, %v5430
  %v5432 = vadd.f32 %v5425, %v5430
  %v5433 = vand.u32 2147483647, %v5431
  %v5434 = vand.u32 2147483647, %v5432
  %5435 = vrot.lane.b32.xlu0 %v5386, 126
  %v5436 = vpop.permute.xlu0 %5435
  %s5437 = vtos %v5436
  %v5438 = vstv %s5437
  %v5440 = vmul.f32 %v5438, %v5433
  %v5441 = vmul.f32 %v5438, %v5434
  %v5442 = vadd.f32 %v5417, %v5440
  %v5443 = vadd.f32 %v5418, %v5441
  %5444 = vset.pattern.permute.xlu0 63
  %5445 = vperm.xlu0 %5444, %v3273
  %v5446 = vpop.permute.xlu0 %5445
  %5448 = vset.pattern.permute.xlu0 63
  %5449 = vperm.xlu0 %5448, %v3276
  %v5450 = vpop.permute.xlu0 %5449
  %v5452 = vlaneseq
  %v5453 = vshrl.u32 %v5452, 7
  %v5454 = vsub.s32 7, %v5453
  %v5455 = vrot.slane %v3298, %v5454
  %v5456 = vadd.f32 %v5446, %v5455
  %v5457 = vadd.f32 %v5450, %v5455
  %v5458 = vand.u32 2147483647, %v5456
  %v5459 = vand.u32 2147483647, %v5457
  %5460 = vrot.lane.b32.xlu0 %v5386, 125
  %v5461 = vpop.permute.xlu0 %5460
  %s5462 = vtos %v5461
  %v5463 = vstv %s5462
  %v5465 = vmul.f32 %v5463, %v5458
  %v5466 = vmul.f32 %v5463, %v5459
  %v5467 = vadd.f32 %v5442, %v5465
  %v5468 = vadd.f32 %v5443, %v5466
  %v5469 = vsel %vm508, %v5467, -inf
  %5470 = vmax.xlane.f32.xlu0 %v5469
  %v5471 = vpop.xlane.xlu0 %5470
  %v5472 = vsel %vm508, %v5468, -inf
  %5473 = vmax.xlane.f32.xlu0 %v5472
  %v5474 = vpop.xlane.xlu0 %5473
  %v5475 = vsub.f32 %v5467, %v5471
  %v5476 = vsub.f32 %v5468, %v5474
  %v5477 = vmul.f32 %v5475, 1.442695
  %v5478 = vpow.pop %v5477
  %v5479 = vmul.f32 %v5476, 1.442695
  %v5480 = vpow.pop %v5479
  %v5481 = vsel %vm508, %v5478, 0.0
  %5482 = vadd.xlane.f32.xlu0 %v5481
  %v5483 = vpop.xlane.xlu0 %5482
  %v5484 = vsel %vm508, %v5480, 0.0
  %5485 = vadd.xlane.f32.xlu0 %v5484
  %v5486 = vpop.xlane.xlu0 %5485
  %v5487 = vrcp.pop %v5483
  %v5488 = vrcp.pop %v5486
  %v5489 = vmul.f32 %v5478, %v5487
  %v5490 = vmul.f32 %v5480, %v5488
  %v5491 = vpack.c.bf16 %v5490, %v5489
  %5492 = vrot.lane.b32.xlu0 %v3544, 100
  %v5493 = vpop.permute.xlu0 %5492
  %v5496 = vsel %vm508, %v5491, 0
  %5498 = vmatprep.subr.bf16.mxu0 0
  %5499 = vmatpush1.bf16.msra.mxu0 %v5493
  %5500 = vmatprep.subr.bf16.mxu0 0
  %5501 = vmatpush1.bf16.msra.mxu0 0
  %5502 = vmatprep.subr.bf16.mxu0 0
  %5503 = vmatpush1.bf16.msra.mxu0 0
  %5504 = vmatprep.subr.bf16.mxu0 0
  %5505 = vmatpush1.bf16.msra.mxu0 0
  %5506 = vmatprep.subr.bf16.mxu0 0
  %5507 = vmatpush1.bf16.msra.mxu0 0
  %5508 = vmatprep.subr.bf16.mxu0 0
  %5509 = vmatpush1.bf16.msra.mxu0 0
  %5510 = vmatprep.subr.bf16.mxu0 0
  %5511 = vmatpush1.bf16.msra.mxu0 0
  %5512 = vmatprep.subr.bf16.mxu0 0
  %5513 = vmatpush1.bf16.msra.mxu0 0
  %5514 = vmatprep.subr.bf16.mxu0 0
  %5515 = vmatpush1.bf16.msra.mxu0 0
  %5516 = vmatprep.subr.bf16.mxu0 0
  %5517 = vmatpush1.bf16.msra.mxu0 0
  %5518 = vmatprep.subr.bf16.mxu0 0
  %5519 = vmatpush1.bf16.msra.mxu0 0
  %5520 = vmatprep.subr.bf16.mxu0 0
  %5521 = vmatpush1.bf16.msra.mxu0 0
  %5522 = vmatprep.subr.bf16.mxu0 0
  %5523 = vmatpush1.bf16.msra.mxu0 0
  %5524 = vmatprep.subr.bf16.mxu0 0
  %5525 = vmatpush1.bf16.msra.mxu0 0
  %5526 = vmatprep.subr.bf16.mxu0 0
  %5527 = vmatpush1.bf16.msra.mxu0 0
  %5528 = vmatprep.subr.bf16.mxu0 0
  %5529 = vmatpush1.bf16.msra.mxu0 0
  %5530 = vmatprep.mubr.bf16.mxu0 0
  %5531 = vmatmul.mubr.bf16.gmra.mrb[0].mxu0 %v5496
  %v5532 = vpop.f32.mrb[0].mxu0
  %v5533 = vadd.f32 0.0, %v5532
  %v5534 = vpop.f32.mrb[0].mxu0
  %v5535 = vpop.f32.mrb[0].mxu0
  %v5536 = vadd.f32 0.0, %v5535
  %v5537 = vpop.f32.mrb[0].mxu0
  %5538 = vdwg.mxu0
  %v5539 = vadd.f32 %v5260, %v5533
  %v5540 = vadd.f32 %v5261, %v5536
  %v5541 = vmul.f32 %v5539, 0.125
  %v5542 = vmul.f32 %v5540, 0.125
  %v5543 = vld [vmem:[%s11] sm:$0x1]
  %v5545 = vlaneseq
  %v5546 = vshrl.u32 %v5545, 7
  %v5547 = vsub.s32 0, %v5546
  %v5548 = vrot.slane %v5543, %v5547
  %v5550 = vadd.f32 %v5541, %v5548
  %v5551 = vadd.f32 %v5542, %v5548
  %v5552 = vadd.f32 %v5550, %v110
  %v5553 = vadd.f32 %v5551, %v113
  %5554 = vst.msk [vmem:[%s14] sm:$0xff] %vm3329, %v5552
  %5555 = vst.msk [vmem:[%s14 + $0x8] sm:$0xff] %vm3329, %v5553
  // Predicated region
  $region58: #{gat_forward.1} parent=0 // pred_check
    _
  $region59: #{gat_forward.1} parent=0 // pred_check_branch
    %5557 = sbr.rel (0) target = $region61
  $region60: #{gat_forward.1} parent=0 // pred_region
    _
  $region61: #{gat_forward.1} parent=0 // pred_fallthru
    _
  // Predicated region
  $region62: #{gat_forward.1} parent=0 // pred_check
    _
  $region63: #{gat_forward.1} parent=0 // pred_check_branch
    %5559 = sbr.rel (0) target = $region65
  $region64: #{gat_forward.1} parent=0 // pred_region
    _
  $region65: #{gat_forward.1} parent=0 // pred_fallthru
    _

</llo_original>
